<compile_context>
chip_gen: v7x
topology: tpu7x:2x2x1
jax: 0.10.0
libtpu: 0.0.40
codegen_flags: <defaults>
</compile_context>

<pallas_src>
import jax
import jax.numpy as jnp
from jax import lax
from jax.experimental import pallas as pl
from jax.experimental.pallas import tpu as pltpu

LN_EPS = 1e-5
_VMEM_LIMIT = 64 * 1024 * 1024          # raise the default scoped-VMEM limit


def _pick_tile(n, cap):
    """Largest divisor of n that is <= cap and (a multiple of 8 or == n).

    Satisfies the Pallas block constraint for a second-to-last block dim
    (multiple of 8, or equal to the full extent)."""
    cap = max(1, min(cap, n))
    for d in range(cap, 0, -1):
        if n % d == 0 and (d % 8 == 0 or d == n):
            return d
    return n                              # full extent is always legal


def _kernel_b_tiles(n, c, hs, budget_bytes=40 * 1024 * 1024):
    """(ti, tj) for the triangle kernel, sized for a 256-row MXU LHS while
    keeping the double-buffered live VMEM below `budget_bytes` (v7x-safe)."""
    ti = _pick_tile(n, 256)
    tj = _pick_tile(n, 256)

    def est(ti_, tj_):
        left = 2 * c * ti_ * n * 2        # bf16, double buffered
        right = 2 * c * tj_ * n * 2
        gate = 2 * ti_ * tj_ * hs * 2
        out = 2 * ti_ * tj_ * hs * 4
        tri = 2 * c * ti_ * tj_ * 4       # f32 accumulator + relayout copy
        return left + right + gate + out + tri

    for _ in range(32):
        if est(ti, tj) <= budget_bytes:
            break
        nti, ntj = ti, tj
        if tj >= ti:
            ntj = _pick_tile(n, max(8, tj // 2))
        else:
            nti = _pick_tile(n, max(8, ti // 2))
        if (nti, ntj) == (ti, tj):
            nti = _pick_tile(n, max(8, ti // 2))
            ntj = _pick_tile(n, max(8, tj // 2))
            if (nti, ntj) == (ti, tj):
                break
        ti, tj = nti, ntj
    return ti, tj


# ---------------------------------------------------------------------------
# Kernel A: input LayerNorm + fused 5-way projection (left/right proj,
# left/right gate, output gate) as a single wide MXU matmul, emitting
# channel-major left/right tiles directly (no HBM transpose afterwards).
# Each grid step handles `ri` rows of the first pair index (ri*N flat rows).
# ---------------------------------------------------------------------------
def proj_kernel(act_ref, mask_ref, ln_w_ref, ln_b_ref, w_all_ref, b_all_ref,
                left_ref, right_ref, gate_ref):
    c, ri, n = left_ref.shape
    hs = gate_ref.shape[-1]

    act = act_ref[...].astype(jnp.float32)                 # [ri*N, HS]
    mask = mask_ref[...].astype(jnp.float32)               # [ri*N, 1]

    # Input LayerNorm (f32 statistics).
    mu = jnp.mean(act, axis=-1, keepdims=True)
    var = jnp.mean((act - mu) ** 2, axis=-1, keepdims=True)
    ln = (act - mu) * lax.rsqrt(var + LN_EPS)
    ln = ln * ln_w_ref[...] + ln_b_ref[...]                # [ri*N, HS]

    # One MXU call for all five projections: bf16 x bf16 -> f32.
    y = jnp.dot(ln.astype(jnp.bfloat16), w_all_ref[...],
                preferred_element_type=jnp.float32)
    y = y + b_all_ref[...]                                 # [ri*N, 4C+HS]

    lp = y[:, 0:c]
    rp = y[:, c:2 * c]
    lg = y[:, 2 * c:3 * c]
    rg = y[:, 3 * c:4 * c]
    g = y[:, 4 * c:]

    # Gate/mask in f32, cast to bf16 only after the sigmoids.
    left = (mask * lp * jax.nn.sigmoid(lg)).astype(jnp.bfloat16)   # [ri*N, C]
    right = (mask * rp * jax.nn.sigmoid(rg)).astype(jnp.bfloat16)
    gate = jax.nn.sigmoid(g).astype(jnp.bfloat16)                  # [ri*N, HS]

    # In-VMEM relayout to channel-major (XLU transpose of one bf16 tile);
    # avoids the two XLA HBM round-trip transposes between the kernels.
    left_ref[...] = jnp.transpose(left).reshape(c, ri, n)          # [C, ri, N]
    right_ref[...] = jnp.transpose(right).reshape(c, ri, n)        # [C, ri, N]
    gate_ref[...] = gate.reshape(ri, n, hs)                        # [ri, N, HS]


# ---------------------------------------------------------------------------
# Kernel B: 2-D grid over (i-tile, j-tile).
#   tri[c, i, j] = sum_k left[c, i, k] * right[c, j, k]   (batched MXU dot,
#                                                           f32 accumulation)
#   out[i, j, :] = (LayerNorm_c(tri) @ w_op + b_op) * gate[i, j, :]
# The center LayerNorm reduces over the leading C axis (no transpose of the
# f32 accumulator); the output projection contracts the leading C dim on the
# MXU.  `tri` never leaves VMEM.
# ---------------------------------------------------------------------------
def tri_out_kernel(left_ref, right_ref, gate_ref,
                   ln_w_ref, ln_b_ref, w_op_ref, b_op_ref, out_ref):
    c, ti, n = left_ref.shape
    tj = right_ref.shape[1]
    hs = out_ref.shape[-1]

    l = left_ref[...]                                      # [C, ti, N]  bf16
    r = right_ref[...]                                     # [C, tj, N]  bf16

    tri = lax.dot_general(l, r, (((2,), (2,)), ((0,), (0,))),
                          preferred_element_type=jnp.float32)   # [C, ti, tj]
    tri = tri.reshape(c, ti * tj)                          # stay channel-major

    # Center LayerNorm across channels = reduction over the leading axis.
    mu = jnp.mean(tri, axis=0, keepdims=True)              # [1, ti*tj]
    var = jnp.mean((tri - mu) ** 2, axis=0, keepdims=True)
    ln = (tri - mu) * lax.rsqrt(var + LN_EPS)
    ln = ln * ln_w_ref[...] + ln_b_ref[...]                # ln_w/ln_b: [C, 1]

    # Output projection: contract the leading C dim directly (A^T @ B on MXU).
    out = lax.dot_general(ln.astype(jnp.bfloat16), w_op_ref[...],
                          (((0,), (0,)), ((), ())),
                          preferred_element_type=jnp.float32)    # [ti*tj, HS]
    out = out + b_op_ref[...]
    out = out * gate_ref[...].reshape(ti * tj, hs).astype(jnp.float32)
    out_ref[...] = out.reshape(ti, tj, hs).astype(out_ref.dtype)


# ---------------------------------------------------------------------------
# Wrapper
# ---------------------------------------------------------------------------
def triangle_multiplication(act, mask, params, *, out_dtype=jnp.float32):
    n1, n2, hs = act.shape
    assert n1 == n2, "triangle multiplication requires a square pair activation"
    n = n1
    c = params["w_lp"].shape[1]
    m = n * n
    p = 4 * c + hs

    # Kernel A tiling: `ri` i-rows (ri*N flattened rows) per grid step.
    ri = _pick_tile(n, max(8, 4096 // max(n, 1)))
    bm = ri * n

    # Kernel B tiling: (ti, tj) under the VMEM budget (v7x: 64 MiB physical).
    ti, tj = _kernel_b_tiles(n, c, hs)

    act_flat = act.reshape(m, hs)
    mask_flat = mask.reshape(m, 1).astype(jnp.float32)

    # Fuse the five projection weights into one wide bf16 MXU operand.
    w_all = jnp.concatenate(
        [params["w_lp"], params["w_rp"], params["w_lg"], params["w_rg"],
         params["w_g"]], axis=1).astype(jnp.bfloat16)       # [HS, 4C+HS]
    b_all = jnp.concatenate(
        [params["b_lp"], params["b_rp"], params["b_lg"], params["b_rg"],
         params["b_g"]], axis=1)                            # [1, 4C+HS] f32

    proj_cost = pl.CostEstimate(
        flops=2 * m * hs * p + 10 * m * hs,
        transcendentals=m * (2 * c + hs),
        bytes_accessed=4 * m * hs + 4 * m + 2 * hs * p + 2 * m * (2 * c + hs))

    # --- Kernel A: LN + fused projections, channel-major bf16 intermediates --
    left_cm, right_cm, gate = pl.pallas_call(
        proj_kernel,
        out_shape=(
            jax.ShapeDtypeStruct((c, n, n), jnp.bfloat16),   # left[c, i, k]
            jax.ShapeDtypeStruct((c, n, n), jnp.bfloat16),   # right[c, j, k]
            jax.ShapeDtypeStruct((n, n, hs), jnp.bfloat16),  # gate[i, j, :]
        ),
        grid=(n // ri,),
        in_specs=[
            pl.BlockSpec((bm, hs), lambda g: (g, 0)),
            pl.BlockSpec((bm, 1), lambda g: (g, 0)),
            pl.BlockSpec((1, hs), lambda g: (0, 0)),
            pl.BlockSpec((1, hs), lambda g: (0, 0)),
            pl.BlockSpec((hs, p), lambda g: (0, 0)),
            pl.BlockSpec((1, p), lambda g: (0, 0)),
        ],
        out_specs=(
            pl.BlockSpec((c, ri, n), lambda g: (0, g, 0)),
            pl.BlockSpec((c, ri, n), lambda g: (0, g, 0)),
            pl.BlockSpec((ri, n, hs), lambda g: (g, 0, 0)),
        ),
        compiler_params=pltpu.CompilerParams(
            dimension_semantics=("parallel",),
            vmem_limit_bytes=_VMEM_LIMIT),
        cost_estimate=proj_cost,
    )(act_flat, mask_flat, params["ln_in_w"], params["ln_in_b"], w_all, b_all)

    # Center-LN params as [C, 1] columns (channel-major broadcast); bf16 w_op.
    ln_c_w = params["ln_c_w"].reshape(c, 1)
    ln_c_b = params["ln_c_b"].reshape(c, 1)
    w_op = params["w_op"].astype(jnp.bfloat16)               # [C, HS]
    b_op = params["b_op"]                                    # [1, HS]

    tri_cost = pl.CostEstimate(
        flops=2 * c * m * n + 2 * m * c * hs + 10 * m * c,
        transcendentals=m,
        bytes_accessed=(n // tj) * 2 * c * m + (n // ti) * 2 * c * m
        + 2 * m * hs + 4 * m * hs + 2 * c * hs)

    # --- Kernel B: triangle einsum + center LN + out proj + gate -------------
    out = pl.pallas_call(
        tri_out_kernel,
        out_shape=jax.ShapeDtypeStruct((n, n, hs), out_dtype),
        grid=(n // ti, n // tj),
        in_specs=[
            pl.BlockSpec((c, ti, n), lambda gi, gj: (0, gi, 0)),
            pl.BlockSpec((c, tj, n), lambda gi, gj: (0, gj, 0)),
            pl.BlockSpec((ti, tj, hs), lambda gi, gj: (gi, gj, 0)),
            pl.BlockSpec((c, 1), lambda gi, gj: (0, 0)),
            pl.BlockSpec((c, 1), lambda gi, gj: (0, 0)),
            pl.BlockSpec((c, hs), lambda gi, gj: (0, 0)),
            pl.BlockSpec((1, hs), lambda gi, gj: (0, 0)),
        ],
        out_specs=pl.BlockSpec((ti, tj, hs), lambda gi, gj: (gi, gj, 0)),
        compiler_params=pltpu.CompilerParams(
            dimension_semantics=("parallel", "parallel"),
            vmem_limit_bytes=_VMEM_LIMIT),
        cost_estimate=tri_cost,
    )(left_cm, right_cm, gate, ln_c_w, ln_c_b, w_op, b_op)

    return out


# ---------------------------------------------------------------------------
# Pure-JAX reference (for correctness check)
# ---------------------------------------------------------------------------
def reference(act, mask, p):
    m = mask[..., None]
    mu = act.mean(-1, keepdims=True)
    var = ((act - mu) ** 2).mean(-1, keepdims=True)
    ln = (act - mu) * lax.rsqrt(var + LN_EPS) * p["ln_in_w"] + p["ln_in_b"]
    lp = m * (ln @ p["w_lp"] + p["b_lp"])
    rp = m * (ln @ p["w_rp"] + p["b_rp"])
    lg = jax.nn.sigmoid(ln @ p["w_lg"] + p["b_lg"])
    rg = jax.nn.sigmoid(ln @ p["w_rg"] + p["b_rg"])
    tri = jnp.einsum("ikc,jkc->ijc", lp * lg, rp * rg)
    mu2 = tri.mean(-1, keepdims=True)
    var2 = ((tri - mu2) ** 2).mean(-1, keepdims=True)
    ln2 = (tri - mu2) * lax.rsqrt(var2 + LN_EPS) * p["ln_c_w"] + p["ln_c_b"]
    out = ln2 @ p["w_op"] + p["b_op"]
    gate = jax.nn.sigmoid(ln @ p["w_g"] + p["b_g"])
    return out * gate


def init_params(key, hs, c):
    ks = jax.random.split(key, 16)

    def w(k, shape, scale=0.1):
        return (scale * jax.random.normal(k, shape)).astype(jnp.float32)

    return {
        "ln_in_w": 1.0 + w(ks[0], (1, hs)),
        "ln_in_b": w(ks[1], (1, hs)),
        "w_lp": w(ks[2], (hs, c)), "b_lp": w(ks[3], (1, c)),
        "w_rp": w(ks[4], (hs, c)), "b_rp": w(ks[5], (1, c)),
        "w_lg": w(ks[6], (hs, c)), "b_lg": w(ks[7], (1, c)),
        "w_rg": w(ks[8], (hs, c)), "b_rg": w(ks[9], (1, c)),
        "ln_c_w": 1.0 + w(ks[10], (1, c)),
        "ln_c_b": w(ks[11], (1, c)),
        "w_op": w(ks[12], (c, hs)), "b_op": w(ks[13], (1, hs)),
        "w_g": w(ks[14], (hs, hs)), "b_g": w(ks[15], (1, hs)),
    }


if __name__ == "__main__":
    # Small shapes consistent with the module: act (B, S, HS), mask (B, S).
    B, S, HS = 16, 16, 32
    NUM_INTERMEDIATE_CHANNEL = 32

    key = jax.random.PRNGKey(0)
    k_act, k_mask, k_param = jax.random.split(key, 3)

    act = jax.random.normal(k_act, (B, S, HS), dtype=jnp.float32)
    mask = jax.random.uniform(k_mask, (B, S), dtype=jnp.float32)
    params = init_params(k_param, HS, NUM_INTERMEDIATE_CHANNEL)

    fn = jax.jit(triangle_multiplication)
    out = jax.block_until_ready(fn(act, mask, params))
    ref = jax.block_until_ready(reference(act, mask, params))

    assert out.shape == (B, S, HS)
    max_err = float(jnp.max(jnp.abs(out - ref)))
    # bf16 intermediates (left/right/gate, bf16 MXU operands) -> loosened tol.
    assert jnp.allclose(out, ref, atol=5e-2, rtol=5e-2), f"max abs err {max_err}"

    print("KERNEL_OK")
</pallas_src>

<mosaic_0001>
module attributes {stable_mosaic.version = 11 : i64} {
  func.func @tri_out_kernel(%arg0: i32, %arg1: i32, %arg2: memref<32x16x16xbf16, #tpu.memory_space<vmem>>, %arg3: memref<32x16x16xbf16, #tpu.memory_space<vmem>>, %arg4: memref<16x16x32xbf16, #tpu.memory_space<vmem>>, %arg5: memref<32x1xf32, #tpu.memory_space<vmem>>, %arg6: memref<32x1xf32, #tpu.memory_space<vmem>>, %arg7: memref<32x32xbf16, #tpu.memory_space<vmem>>, %arg8: memref<1x32xf32, #tpu.memory_space<vmem>>, %arg9: memref<16x16x32xf32, #tpu.memory_space<vmem>>) attributes {dimension_semantics = [#tpu.dimension_semantics<parallel>, #tpu.dimension_semantics<parallel>], iteration_bounds = array<i64: 1, 1>, scalar_prefetch = 0 : i64, scratch_operands = 0 : i64, tpu.core_type = #tpu.core_type<tc>, window_params = [{transform_indices = @transform_0, window_bounds = array<i64: 32, 16, 16>}, {transform_indices = @transform_1, window_bounds = array<i64: 32, 16, 16>}, {transform_indices = @transform_2, window_bounds = array<i64: 16, 16, 32>}, {pipeline_mode = #tpu.pipeline_mode<synchronous>, transform_indices = @transform_3, window_bounds = array<i64: 32, 1>}, {pipeline_mode = #tpu.pipeline_mode<synchronous>, transform_indices = @transform_4, window_bounds = array<i64: 32, 1>}, {pipeline_mode = #tpu.pipeline_mode<synchronous>, transform_indices = @transform_5, window_bounds = array<i64: 32, 32>}, {pipeline_mode = #tpu.pipeline_mode<synchronous>, transform_indices = @transform_6, window_bounds = array<i64: 1, 32>}, {transform_indices = @transform_7, window_bounds = array<i64: 16, 16, 32>}]} {
    %c0 = arith.constant 0 : index
    %c0_0 = arith.constant 0 : index
    %c0_1 = arith.constant 0 : index
    %0 = vector.load %arg2[%c0, %c0_0, %c0_1] : memref<32x16x16xbf16, #tpu.memory_space<vmem>>, vector<32x16x16xbf16>
    %c0_2 = arith.constant 0 : index
    %c0_3 = arith.constant 0 : index
    %c0_4 = arith.constant 0 : index
    %1 = vector.load %arg3[%c0_2, %c0_3, %c0_4] : memref<32x16x16xbf16, #tpu.memory_space<vmem>>, vector<32x16x16xbf16>
    %cst = arith.constant dense<0.000000e+00> : vector<32x16x16xf32>
    %2 = tpu.matmul %0, %1, %cst {dimension_numbers = #tpu.dot_dimension_numbers<[2], [2], [1], [1], [0, 0, 0, 1, 1, 1], [0], [0]>} : vector<32x16x16xbf16>, vector<32x16x16xbf16>, vector<32x16x16xf32> -> vector<32x16x16xf32>
    %3 = vector.shape_cast %2 : vector<32x16x16xf32> to vector<32x256xf32>
    %cst_5 = arith.constant dense<0.000000e+00> : vector<256xf32>
    %4 = vector.multi_reduction <add>, %3, %cst_5 [0] : vector<32x256xf32> to vector<256xf32>
    %5 = vector.shape_cast %4 : vector<256xf32> to vector<1x256xf32>
    %cst_6 = arith.constant 3.200000e+01 : f32
    %6 = vector.broadcast %cst_6 : f32 to vector<1x256xf32>
    %7 = arith.divf %5, %6 : vector<1x256xf32>
    %8 = vector.broadcast %7 : vector<1x256xf32> to vector<32x256xf32>
    %9 = arith.subf %3, %8 : vector<32x256xf32>
    %10 = arith.mulf %9, %9 : vector<32x256xf32>
    %cst_7 = arith.constant dense<0.000000e+00> : vector<256xf32>
    %11 = vector.multi_reduction <add>, %10, %cst_7 [0] : vector<32x256xf32> to vector<256xf32>
    %12 = vector.shape_cast %11 : vector<256xf32> to vector<1x256xf32>
    %cst_8 = arith.constant 3.200000e+01 : f32
    %13 = vector.broadcast %cst_8 : f32 to vector<1x256xf32>
    %14 = arith.divf %12, %13 : vector<1x256xf32>
    %15 = vector.broadcast %7 : vector<1x256xf32> to vector<32x256xf32>
    %16 = arith.subf %3, %15 : vector<32x256xf32>
    %cst_9 = arith.constant 9.99999974E-6 : f32
    %17 = vector.broadcast %cst_9 : f32 to vector<1x256xf32>
    %18 = arith.addf %14, %17 : vector<1x256xf32>
    %19 = math.rsqrt %18 : vector<1x256xf32>
    %20 = vector.broadcast %19 : vector<1x256xf32> to vector<32x256xf32>
    %21 = arith.mulf %16, %20 : vector<32x256xf32>
    %c0_10 = arith.constant 0 : index
    %c0_11 = arith.constant 0 : index
    %22 = vector.load %arg5[%c0_10, %c0_11] : memref<32x1xf32, #tpu.memory_space<vmem>>, vector<32x1xf32>
    %23 = vector.broadcast %22 : vector<32x1xf32> to vector<32x256xf32>
    %24 = arith.mulf %21, %23 : vector<32x256xf32>
    %c0_12 = arith.constant 0 : index
    %c0_13 = arith.constant 0 : index
    %25 = vector.load %arg6[%c0_12, %c0_13] : memref<32x1xf32, #tpu.memory_space<vmem>>, vector<32x1xf32>
    %26 = vector.broadcast %25 : vector<32x1xf32> to vector<32x256xf32>
    %27 = arith.addf %24, %26 : vector<32x256xf32>
    %28 = arith.truncf %27 : vector<32x256xf32> to vector<32x256xbf16>
    %c0_14 = arith.constant 0 : index
    %c0_15 = arith.constant 0 : index
    %29 = vector.load %arg7[%c0_14, %c0_15] : memref<32x32xbf16, #tpu.memory_space<vmem>>, vector<32x32xbf16>
    %cst_16 = arith.constant dense<0.000000e+00> : vector<256x32xf32>
    %30 = tpu.matmul %28, %29, %cst_16 {dimension_numbers = #tpu.dot_dimension_numbers<[0], [0], [1], [1], [0, 1, 1, 1], [], []>} : vector<32x256xbf16>, vector<32x32xbf16>, vector<256x32xf32> -> vector<256x32xf32>
    %c0_17 = arith.constant 0 : index
    %c0_18 = arith.constant 0 : index
    %31 = vector.load %arg8[%c0_17, %c0_18] : memref<1x32xf32, #tpu.memory_space<vmem>>, vector<1x32xf32>
    %32 = vector.broadcast %31 : vector<1x32xf32> to vector<256x32xf32>
    %33 = arith.addf %30, %32 : vector<256x32xf32>
    %c0_19 = arith.constant 0 : index
    %c0_20 = arith.constant 0 : index
    %c0_21 = arith.constant 0 : index
    %34 = vector.load %arg4[%c0_19, %c0_20, %c0_21] : memref<16x16x32xbf16, #tpu.memory_space<vmem>>, vector<16x16x32xbf16>
    %35 = vector.shape_cast %34 : vector<16x16x32xbf16> to vector<256x32xbf16>
    %36 = arith.extf %35 : vector<256x32xbf16> to vector<256x32xf32>
    %37 = arith.mulf %33, %36 : vector<256x32xf32>
    %38 = vector.shape_cast %37 : vector<256x32xf32> to vector<16x16x32xf32>
    %c0_22 = arith.constant 0 : index
    %c0_23 = arith.constant 0 : index
    %c0_24 = arith.constant 0 : index
    %39 = vector.load %arg9[%c0_22, %c0_23, %c0_24] : memref<16x16x32xf32, #tpu.memory_space<vmem>>, vector<16x16x32xf32>
    tpu.vector_store %arg9[%c0_22, %c0_23, %c0_24], %38 {strides = array<i32>} : memref<16x16x32xf32, #tpu.memory_space<vmem>>, vector<16x16x32xf32>,
    return
  }
  func.func @transform_0(%arg0: i32, %arg1: i32) -> (i32, i32, i32) {
    %c0_i32 = arith.constant 0 : i32
    %c0_i32_0 = arith.constant 0 : i32
    %c0_i32_1 = arith.constant 0 : i32
    return %c0_i32, %arg0, %c0_i32_0 : i32, i32, i32
  }
  func.func @transform_1(%arg0: i32, %arg1: i32) -> (i32, i32, i32) {
    %c0_i32 = arith.constant 0 : i32
    %c0_i32_0 = arith.constant 0 : i32
    %c0_i32_1 = arith.constant 0 : i32
    return %c0_i32, %arg1, %c0_i32_0 : i32, i32, i32
  }
  func.func @transform_2(%arg0: i32, %arg1: i32) -> (i32, i32, i32) {
    %c0_i32 = arith.constant 0 : i32
    %c0_i32_0 = arith.constant 0 : i32
    return %arg0, %arg1, %c0_i32 : i32, i32, i32
  }
  func.func @transform_3(%arg0: i32, %arg1: i32) -> (i32, i32) {
    %c0_i32 = arith.constant 0 : i32
    %c0_i32_0 = arith.constant 0 : i32
    %c0_i32_1 = arith.constant 0 : i32
    return %c0_i32, %c0_i32_0 : i32, i32
  }
  func.func @transform_4(%arg0: i32, %arg1: i32) -> (i32, i32) {
    %c0_i32 = arith.constant 0 : i32
    %c0_i32_0 = arith.constant 0 : i32
    %c0_i32_1 = arith.constant 0 : i32
    return %c0_i32, %c0_i32_0 : i32, i32
  }
  func.func @transform_5(%arg0: i32, %arg1: i32) -> (i32, i32) {
    %c0_i32 = arith.constant 0 : i32
    %c0_i32_0 = arith.constant 0 : i32
    %c0_i32_1 = arith.constant 0 : i32
    return %c0_i32, %c0_i32_0 : i32, i32
  }
  func.func @transform_6(%arg0: i32, %arg1: i32) -> (i32, i32) {
    %c0_i32 = arith.constant 0 : i32
    %c0_i32_0 = arith.constant 0 : i32
    %c0_i32_1 = arith.constant 0 : i32
    return %c0_i32, %c0_i32_0 : i32, i32
  }
  func.func @transform_7(%arg0: i32, %arg1: i32) -> (i32, i32, i32) {
    %c0_i32 = arith.constant 0 : i32
    %c0_i32_0 = arith.constant 0 : i32
    return %arg0, %arg1, %c0_i32 : i32, i32, i32
  }
}

module attributes {stable_mosaic.version = 11 : i64} {
  func.func @proj_kernel(%arg0: i32, %arg1: memref<256x32xf32, #tpu.memory_space<vmem>>, %arg2: memref<256x1xf32, #tpu.memory_space<vmem>>, %arg3: memref<1x32xf32, #tpu.memory_space<vmem>>, %arg4: memref<1x32xf32, #tpu.memory_space<vmem>>, %arg5: memref<32x160xbf16, #tpu.memory_space<vmem>>, %arg6: memref<1x160xf32, #tpu.memory_space<vmem>>, %arg7: memref<32x16x16xbf16, #tpu.memory_space<vmem>>, %arg8: memref<32x16x16xbf16, #tpu.memory_space<vmem>>, %arg9: memref<16x16x32xbf16, #tpu.memory_space<vmem>>) attributes {dimension_semantics = [#tpu.dimension_semantics<parallel>], iteration_bounds = array<i64: 1>, scalar_prefetch = 0 : i64, scratch_operands = 0 : i64, tpu.core_type = #tpu.core_type<tc>, window_params = [{transform_indices = @transform_0, window_bounds = array<i64: 256, 32>}, {transform_indices = @transform_1, window_bounds = array<i64: 256, 1>}, {pipeline_mode = #tpu.pipeline_mode<synchronous>, transform_indices = @transform_2, window_bounds = array<i64: 1, 32>}, {pipeline_mode = #tpu.pipeline_mode<synchronous>, transform_indices = @transform_3, window_bounds = array<i64: 1, 32>}, {pipeline_mode = #tpu.pipeline_mode<synchronous>, transform_indices = @transform_4, window_bounds = array<i64: 32, 160>}, {pipeline_mode = #tpu.pipeline_mode<synchronous>, transform_indices = @transform_5, window_bounds = array<i64: 1, 160>}, {transform_indices = @transform_6, window_bounds = array<i64: 32, 16, 16>}, {transform_indices = @transform_7, window_bounds = array<i64: 32, 16, 16>}, {transform_indices = @transform_8, window_bounds = array<i64: 16, 16, 32>}]} {
    %c0 = arith.constant 0 : index
    %c0_0 = arith.constant 0 : index
    %0 = vector.load %arg1[%c0, %c0_0] : memref<256x32xf32, #tpu.memory_space<vmem>>, vector<256x32xf32>
    %c0_1 = arith.constant 0 : index
    %c0_2 = arith.constant 0 : index
    %1 = vector.load %arg2[%c0_1, %c0_2] : memref<256x1xf32, #tpu.memory_space<vmem>>, vector<256x1xf32>
    %cst = arith.constant dense<0.000000e+00> : vector<256xf32>
    %2 = vector.multi_reduction <add>, %0, %cst [1] : vector<256x32xf32> to vector<256xf32>
    %3 = vector.shape_cast %2 : vector<256xf32> to vector<256x1xf32>
    %cst_3 = arith.constant 3.200000e+01 : f32
    %4 = vector.broadcast %cst_3 : f32 to vector<256x1xf32>
    %5 = arith.divf %3, %4 : vector<256x1xf32>
    %6 = vector.broadcast %5 : vector<256x1xf32> to vector<256x32xf32>
    %7 = arith.subf %0, %6 : vector<256x32xf32>
    %8 = arith.mulf %7, %7 : vector<256x32xf32>
    %cst_4 = arith.constant dense<0.000000e+00> : vector<256xf32>
    %9 = vector.multi_reduction <add>, %8, %cst_4 [1] : vector<256x32xf32> to vector<256xf32>
    %10 = vector.shape_cast %9 : vector<256xf32> to vector<256x1xf32>
    %cst_5 = arith.constant 3.200000e+01 : f32
    %11 = vector.broadcast %cst_5 : f32 to vector<256x1xf32>
    %12 = arith.divf %10, %11 : vector<256x1xf32>
    %13 = vector.broadcast %5 : vector<256x1xf32> to vector<256x32xf32>
    %14 = arith.subf %0, %13 : vector<256x32xf32>
    %cst_6 = arith.constant 9.99999974E-6 : f32
    %15 = vector.broadcast %cst_6 : f32 to vector<256x1xf32>
    %16 = arith.addf %12, %15 : vector<256x1xf32>
    %17 = math.rsqrt %16 : vector<256x1xf32>
    %18 = vector.broadcast %17 : vector<256x1xf32> to vector<256x32xf32>
    %19 = arith.mulf %14, %18 : vector<256x32xf32>
    %c0_7 = arith.constant 0 : index
    %c0_8 = arith.constant 0 : index
    %20 = vector.load %arg3[%c0_7, %c0_8] : memref<1x32xf32, #tpu.memory_space<vmem>>, vector<1x32xf32>
    %21 = vector.broadcast %20 : vector<1x32xf32> to vector<256x32xf32>
    %22 = arith.mulf %19, %21 : vector<256x32xf32>
    %c0_9 = arith.constant 0 : index
    %c0_10 = arith.constant 0 : index
    %23 = vector.load %arg4[%c0_9, %c0_10] : memref<1x32xf32, #tpu.memory_space<vmem>>, vector<1x32xf32>
    %24 = vector.broadcast %23 : vector<1x32xf32> to vector<256x32xf32>
    %25 = arith.addf %22, %24 : vector<256x32xf32>
    %26 = arith.truncf %25 : vector<256x32xf32> to vector<256x32xbf16>
    %c0_11 = arith.constant 0 : index
    %c0_12 = arith.constant 0 : index
    %27 = vector.load %arg5[%c0_11, %c0_12] : memref<32x160xbf16, #tpu.memory_space<vmem>>, vector<32x160xbf16>
    %cst_13 = arith.constant dense<0.000000e+00> : vector<256x160xf32>
    %28 = tpu.matmul %26, %27, %cst_13 {dimension_numbers = #tpu.dot_dimension_numbers<[1], [0], [0], [1], [0, 0, 1, 1], [], []>} : vector<256x32xbf16>, vector<32x160xbf16>, vector<256x160xf32> -> vector<256x160xf32>
    %c0_14 = arith.constant 0 : index
    %c0_15 = arith.constant 0 : index
    %29 = vector.load %arg6[%c0_14, %c0_15] : memref<1x160xf32, #tpu.memory_space<vmem>>, vector<1x160xf32>
    %30 = vector.broadcast %29 : vector<1x160xf32> to vector<256x160xf32>
    %31 = arith.addf %28, %30 : vector<256x160xf32>
    %32 = vector.extract_strided_slice %31 {offsets = [0, 0], sizes = [256, 32], strides = [1, 1]} : vector<256x160xf32> to vector<256x32xf32>
    %33 = vector.extract_strided_slice %31 {offsets = [0, 32], sizes = [256, 32], strides = [1, 1]} : vector<256x160xf32> to vector<256x32xf32>
    %34 = vector.extract_strided_slice %31 {offsets = [0, 64], sizes = [256, 32], strides = [1, 1]} : vector<256x160xf32> to vector<256x32xf32>
    %35 = vector.extract_strided_slice %31 {offsets = [0, 96], sizes = [256, 32], strides = [1, 1]} : vector<256x160xf32> to vector<256x32xf32>
    %36 = vector.extract_strided_slice %31 {offsets = [0, 128], sizes = [256, 32], strides = [1, 1]} : vector<256x160xf32> to vector<256x32xf32>
    %37 = vector.broadcast %1 : vector<256x1xf32> to vector<256x32xf32>
    %38 = arith.mulf %37, %32 : vector<256x32xf32>
    %39 = arith.negf %34 : vector<256x32xf32>
    %40 = math.exp %39 : vector<256x32xf32>
    %cst_16 = arith.constant 1.000000e+00 : f32
    %41 = vector.broadcast %cst_16 : f32 to vector<256x32xf32>
    %42 = arith.addf %41, %40 : vector<256x32xf32>
    %43 = arith.divf %41, %42 : vector<256x32xf32>
    %44 = arith.mulf %38, %43 : vector<256x32xf32>
    %45 = arith.truncf %44 : vector<256x32xf32> to vector<256x32xbf16>
    %46 = vector.broadcast %1 : vector<256x1xf32> to vector<256x32xf32>
    %47 = arith.mulf %46, %33 : vector<256x32xf32>
    %48 = arith.negf %35 : vector<256x32xf32>
    %49 = math.exp %48 : vector<256x32xf32>
    %cst_17 = arith.constant 1.000000e+00 : f32
    %50 = vector.broadcast %cst_17 : f32 to vector<256x32xf32>
    %51 = arith.addf %50, %49 : vector<256x32xf32>
    %52 = arith.divf %50, %51 : vector<256x32xf32>
    %53 = arith.mulf %47, %52 : vector<256x32xf32>
    %54 = arith.truncf %53 : vector<256x32xf32> to vector<256x32xbf16>
    %55 = arith.negf %36 : vector<256x32xf32>
    %56 = math.exp %55 : vector<256x32xf32>
    %cst_18 = arith.constant 1.000000e+00 : f32
    %57 = vector.broadcast %cst_18 : f32 to vector<256x32xf32>
    %58 = arith.addf %57, %56 : vector<256x32xf32>
    %59 = arith.divf %57, %58 : vector<256x32xf32>
    %60 = arith.truncf %59 : vector<256x32xf32> to vector<256x32xbf16>
    %61 = tpu.transpose %45, [1, 0] : vector<256x32xbf16> -> vector<32x256xbf16>
    %62 = vector.shape_cast %61 : vector<32x256xbf16> to vector<32x16x16xbf16>
    %c0_19 = arith.constant 0 : index
    %c0_20 = arith.constant 0 : index
    %c0_21 = arith.constant 0 : index
    %63 = vector.load %arg7[%c0_19, %c0_20, %c0_21] : memref<32x16x16xbf16, #tpu.memory_space<vmem>>, vector<32x16x16xbf16>
    tpu.vector_store %arg7[%c0_19, %c0_20, %c0_21], %62 {strides = array<i32>} : memref<32x16x16xbf16, #tpu.memory_space<vmem>>, vector<32x16x16xbf16>,
    %64 = tpu.transpose %54, [1, 0] : vector<256x32xbf16> -> vector<32x256xbf16>
    %65 = vector.shape_cast %64 : vector<32x256xbf16> to vector<32x16x16xbf16>
    %c0_22 = arith.constant 0 : index
    %c0_23 = arith.constant 0 : index
    %c0_24 = arith.constant 0 : index
    %66 = vector.load %arg8[%c0_22, %c0_23, %c0_24] : memref<32x16x16xbf16, #tpu.memory_space<vmem>>, vector<32x16x16xbf16>
    tpu.vector_store %arg8[%c0_22, %c0_23, %c0_24], %65 {strides = array<i32>} : memref<32x16x16xbf16, #tpu.memory_space<vmem>>, vector<32x16x16xbf16>,
    %67 = vector.shape_cast %60 : vector<256x32xbf16> to vector<16x16x32xbf16>
    %c0_25 = arith.constant 0 : index
    %c0_26 = arith.constant 0 : index
    %c0_27 = arith.constant 0 : index
    %68 = vector.load %arg9[%c0_25, %c0_26, %c0_27] : memref<16x16x32xbf16, #tpu.memory_space<vmem>>, vector<16x16x32xbf16>
    tpu.vector_store %arg9[%c0_25, %c0_26, %c0_27], %67 {strides = array<i32>} : memref<16x16x32xbf16, #tpu.memory_space<vmem>>, vector<16x16x32xbf16>,
    return
  }
  func.func @transform_0(%arg0: i32) -> (i32, i32) {
    %c0_i32 = arith.constant 0 : i32
    %c0_i32_0 = arith.constant 0 : i32
    return %arg0, %c0_i32 : i32, i32
  }
  func.func @transform_1(%arg0: i32) -> (i32, i32) {
    %c0_i32 = arith.constant 0 : i32
    %c0_i32_0 = arith.constant 0 : i32
    return %arg0, %c0_i32 : i32, i32
  }
  func.func @transform_2(%arg0: i32) -> (i32, i32) {
    %c0_i32 = arith.constant 0 : i32
    %c0_i32_0 = arith.constant 0 : i32
    %c0_i32_1 = arith.constant 0 : i32
    return %c0_i32, %c0_i32_0 : i32, i32
  }
  func.func @transform_3(%arg0: i32) -> (i32, i32) {
    %c0_i32 = arith.constant 0 : i32
    %c0_i32_0 = arith.constant 0 : i32
    %c0_i32_1 = arith.constant 0 : i32
    return %c0_i32, %c0_i32_0 : i32, i32
  }
  func.func @transform_4(%arg0: i32) -> (i32, i32) {
    %c0_i32 = arith.constant 0 : i32
    %c0_i32_0 = arith.constant 0 : i32
    %c0_i32_1 = arith.constant 0 : i32
    return %c0_i32, %c0_i32_0 : i32, i32
  }
  func.func @transform_5(%arg0: i32) -> (i32, i32) {
    %c0_i32 = arith.constant 0 : i32
    %c0_i32_0 = arith.constant 0 : i32
    %c0_i32_1 = arith.constant 0 : i32
    return %c0_i32, %c0_i32_0 : i32, i32
  }
  func.func @transform_6(%arg0: i32) -> (i32, i32, i32) {
    %c0_i32 = arith.constant 0 : i32
    %c0_i32_0 = arith.constant 0 : i32
    %c0_i32_1 = arith.constant 0 : i32
    return %c0_i32, %arg0, %c0_i32_0 : i32, i32, i32
  }
  func.func @transform_7(%arg0: i32) -> (i32, i32, i32) {
    %c0_i32 = arith.constant 0 : i32
    %c0_i32_0 = arith.constant 0 : i32
    %c0_i32_1 = arith.constant 0 : i32
    return %c0_i32, %arg0, %c0_i32_0 : i32, i32, i32
  }
  func.func @transform_8(%arg0: i32) -> (i32, i32, i32) {
    %c0_i32 = arith.constant 0 : i32
    %c0_i32_0 = arith.constant 0 : i32
    %c0_i32_1 = arith.constant 0 : i32
    return %arg0, %c0_i32, %c0_i32_0 : i32, i32, i32
  }
}

</mosaic_0001>

<llo_original>
// kernel: triangle_multiplication.2
$region0: #{triangle_multiplication.2}
  #allocation0 [shape = 'u32[]', space=smem, size = 0x4, offset = 0x4, fixed_abs, tag = 'smem constant byte address 0x4 - core index']
  #allocation1 [shape = 'u32[144,128]{1,0:T(1,128)}', space=vmem, size = 0x12000, scoped, tag = 'internal scratch']
  %s0 = inlined_call_operand.hbm [shape: f32[256,32], index: 0, kind: input, shape index: {}]
  %s1 = inlined_call_operand.hbm [shape: f32[256,1], index: 1, kind: input, shape index: {}]
  %s2 = inlined_call_operand.hbm [shape: f32[1,32], index: 2, kind: input, shape index: {}]
  %s3 = inlined_call_operand.hbm [shape: f32[1,32], index: 3, kind: input, shape index: {}]
  %s4 = inlined_call_operand.hbm [shape: bf16[32,160], index: 4, kind: input, shape index: {}]
  %s5 = inlined_call_operand.hbm [shape: f32[1,160], index: 5, kind: input, shape index: {}]
  %s6 = inlined_call_operand.hbm [shape: bf16[32,16,16], index: 6, kind: output, shape index: {0}]
  %s7 = inlined_call_operand.hbm [shape: bf16[32,16,16], index: 7, kind: output, shape index: {1}]
  %s8 = inlined_call_operand.hbm [shape: bf16[16,16,32], index: 8, kind: output, shape index: {2}]
  %9 = xla_tuple %s6, %s7, %s8
  %s10 = sld [smem:[#allocation0]]
  $region74: #{triangle_multiplication.2} parent=0
    _
  %s12 = ssub.s32 1, %s10
  %s13 = scalar_select 0, %s12, %s10
  $region1: #{triangle_multiplication.2} parent=0
    #allocation2 [shape = 'u8[131072]{0}', space=vmem, size = 0x20000, scoped, tag = 'input window, operand 0, single buffered']
    #allocation3 [shape = 's32[1]{0}', space=sflag, size = 0x4, scoped, tag = 'scoped memory for triangle_multiplication.2']
    #allocation4 [shape = 's32[1]{0}', space=sflag, size = 0x4, scoped, tag = 'scoped memory for triangle_multiplication.2']
    #allocation5 [shape = 'u8[131072]{0}', space=vmem, size = 0x20000, scoped, tag = 'input window, operand 1, single buffered']
    #allocation6 [shape = 's32[1]{0}', space=sflag, size = 0x4, scoped, tag = 'scoped memory for triangle_multiplication.2']
    #allocation7 [shape = 'u8[512]{0}', space=vmem, size = 0x400, scoped, tag = 'input window, operand 2, single buffered']
    #allocation8 [shape = 'u8[512]{0}', space=vmem, size = 0x400, scoped, tag = 'input window, operand 3, single buffered']
    #allocation9 [shape = 's32[1]{0}', space=sflag, size = 0x4, scoped, tag = 'scoped memory for triangle_multiplication.2']
    #allocation10 [shape = 'u8[16384]{0}', space=vmem, size = 0x4000, scoped, tag = 'input window, operand 4, single buffered']
    #allocation11 [shape = 'u8[1024]{0}', space=vmem, size = 0x400, scoped, tag = 'input window, operand 5, single buffered']
    #allocation12 [shape = 's32[1]{0}', space=sflag, size = 0x4, scoped, tag = 'scoped memory for triangle_multiplication.2']
    #allocation13 [shape = 'u8[131072]{0}', space=vmem, size = 0x20000, scoped, tag = 'output window, operand 0, single buffered']
    #allocation14 [shape = 'u8[131072]{0}', space=vmem, size = 0x20000, scoped, tag = 'output window, operand 1, single buffered']
    #allocation15 [shape = 's32[1]{0}', space=sflag, size = 0x4, scoped, tag = 'scoped memory for triangle_multiplication.2']
    #allocation16 [shape = 'u8[65536]{0}', space=vmem, size = 0x10000, scoped, tag = 'output window, operand 2, single buffered']
    %14 = vsyncpa [#allocation3], 0
    %15 = vsyncpa [#allocation6], 0
    %16 = vsyncpa [#allocation9], 0
    %17 = vsyncpa [#allocation12], 0
    %18 = vsyncpa [#allocation4], 0
    %19 = vsyncpa [#allocation15], 0
    // Predicated region
    $region2: #{triangle_multiplication.2} parent=1 // pred_check
      _
    $region3: #{triangle_multiplication.2} parent=1 // pred_check_branch
      %21 = sbr.rel (0) target = $region5
    $region4: #{triangle_multiplication.2} parent=1 // pred_region
      %s23 = ssub.s32 4096, 4096
      %24 = vsyncadd [#allocation3], %s23
      %s25 = sshll.u32 [#allocation2], 4
      %s26 = int_to_ptr.vmem [resolvable:$true] %s25
      %31 = dma.hbm_to_vmem [thread:$0]  %s0, 4096, %s26, [#allocation3], 128, 128, 8
    $region5: #{triangle_multiplication.2} parent=1 // pred_fallthru
      _
    // Predicated region
    $region6: #{triangle_multiplication.2} parent=1 // pred_check
      _
    $region7: #{triangle_multiplication.2} parent=1 // pred_check_branch
      %33 = sbr.rel (0) target = $region9
    $region8: #{triangle_multiplication.2} parent=1 // pred_region
      %s35 = ssub.s32 4096, 4096
      %36 = vsyncadd [#allocation6], %s35
      %s37 = sshll.u32 [#allocation5], 4
      %s38 = int_to_ptr.vmem [resolvable:$true] %s37
      %43 = dma.hbm_to_vmem [thread:$0]  %s1, 4096, %s38, [#allocation6], 128, 128, 8
    $region9: #{triangle_multiplication.2} parent=1 // pred_fallthru
      _
    // Predicated region
    $region10: #{triangle_multiplication.2} parent=1 // pred_check
      _
    $region11: #{triangle_multiplication.2} parent=1 // pred_check_branch
      %45 = sbr.rel (0) target = $region13
    $region12: #{triangle_multiplication.2} parent=1 // pred_region
      %s47 = ssub.s32 16, 16
      %48 = vsyncadd [#allocation6], %s47
      %s50 = sshll.u32 [#allocation7], 4
      %s51 = int_to_ptr.vmem [resolvable:$true] %s50
      %53 = dma.hbm_to_vmem [thread:$0]  %s2, 16, %s51, [#allocation6]
    $region13: #{triangle_multiplication.2} parent=1 // pred_fallthru
      _
    // Predicated region
    $region14: #{triangle_multiplication.2} parent=1 // pred_check
      _
    $region15: #{triangle_multiplication.2} parent=1 // pred_check_branch
      %55 = sbr.rel (0) target = $region17
    $region16: #{triangle_multiplication.2} parent=1 // pred_region
      %s57 = ssub.s32 16, 16
      %58 = vsyncadd [#allocation9], %s57
      %s60 = sshll.u32 [#allocation8], 4
      %s61 = int_to_ptr.vmem [resolvable:$true] %s60
      %63 = dma.hbm_to_vmem [thread:$0]  %s3, 16, %s61, [#allocation9]
    $region17: #{triangle_multiplication.2} parent=1 // pred_fallthru
      _
    // Predicated region
    $region18: #{triangle_multiplication.2} parent=1 // pred_check
      _
    $region19: #{triangle_multiplication.2} parent=1 // pred_check_branch
      %65 = sbr.rel (0) target = $region21
    $region20: #{triangle_multiplication.2} parent=1 // pred_region
      %s67 = ssub.s32 512, 512
      %68 = vsyncadd [#allocation9], %s67
      %s69 = sshll.u32 [#allocation10], 4
      %s70 = int_to_ptr.vmem [resolvable:$true] %s69
      %75 = dma.hbm_to_vmem [thread:$0]  %s4, 512, %s70, [#allocation9], 128, 128, 8
    $region21: #{triangle_multiplication.2} parent=1 // pred_fallthru
      _
    // Predicated region
    $region22: #{triangle_multiplication.2} parent=1 // pred_check
      _
    $region23: #{triangle_multiplication.2} parent=1 // pred_check_branch
      %77 = sbr.rel (0) target = $region25
    $region24: #{triangle_multiplication.2} parent=1 // pred_region
      %s79 = ssub.s32 32, 32
      %80 = vsyncadd [#allocation12], %s79
      %s82 = sshll.u32 [#allocation11], 4
      %s83 = int_to_ptr.vmem [resolvable:$true] %s82
      %85 = dma.hbm_to_vmem [thread:$0]  %s5, 32, %s83, [#allocation12]
    $region25: #{triangle_multiplication.2} parent=1 // pred_fallthru
      _
    // Predicated region
    $region26: #{triangle_multiplication.2} parent=1 // pred_check
      _
    $region27: #{triangle_multiplication.2} parent=1 // pred_check_branch
      %87 = sbr.rel (0) target = $region29
    $region28: #{triangle_multiplication.2} parent=1 // pred_region
      %88 = dma.done [#allocation3], 4096
    $region29: #{triangle_multiplication.2} parent=1 // pred_fallthru
      _
    // Predicated region
    $region30: #{triangle_multiplication.2} parent=1 // pred_check
      _
    $region31: #{triangle_multiplication.2} parent=1 // pred_check_branch
      %90 = sbr.rel (0) target = $region33
    $region32: #{triangle_multiplication.2} parent=1 // pred_region
      %91 = dma.done [#allocation6], 4096
    $region33: #{triangle_multiplication.2} parent=1 // pred_fallthru
      _
    // Predicated region
    $region34: #{triangle_multiplication.2} parent=1 // pred_check
      _
    $region35: #{triangle_multiplication.2} parent=1 // pred_check_branch
      %93 = sbr.rel (0) target = $region37
    $region36: #{triangle_multiplication.2} parent=1 // pred_region
      %94 = dma.done [#allocation6], 16
    $region37: #{triangle_multiplication.2} parent=1 // pred_fallthru
      _
    // Predicated region
    $region38: #{triangle_multiplication.2} parent=1 // pred_check
      _
    $region39: #{triangle_multiplication.2} parent=1 // pred_check_branch
      %96 = sbr.rel (0) target = $region41
    $region40: #{triangle_multiplication.2} parent=1 // pred_region
      %97 = dma.done [#allocation9], 16
    $region41: #{triangle_multiplication.2} parent=1 // pred_fallthru
      _
    // Predicated region
    $region42: #{triangle_multiplication.2} parent=1 // pred_check
      _
    $region43: #{triangle_multiplication.2} parent=1 // pred_check_branch
      %99 = sbr.rel (0) target = $region45
    $region44: #{triangle_multiplication.2} parent=1 // pred_region
      %100 = dma.done [#allocation9], 512
    $region45: #{triangle_multiplication.2} parent=1 // pred_fallthru
      _
    // Predicated region
    $region46: #{triangle_multiplication.2} parent=1 // pred_check
      _
    $region47: #{triangle_multiplication.2} parent=1 // pred_check_branch
      %102 = sbr.rel (0) target = $region49
    $region48: #{triangle_multiplication.2} parent=1 // pred_region
      %103 = dma.done [#allocation12], 32
    $region49: #{triangle_multiplication.2} parent=1 // pred_fallthru
      _
    %v105 = vld [vmem:[#allocation2] sm:$0xff]
    %v106 = vld [vmem:[#allocation2 + $0x8] sm:$0xff]
    %v107 = vld [vmem:[#allocation2 + $0x10] sm:$0xff]
    %v108 = vld [vmem:[#allocation2 + $0x18] sm:$0xff]
    %v109 = vld [vmem:[#allocation2 + $0x20] sm:$0xff]
    %v110 = vld [vmem:[#allocation2 + $0x28] sm:$0xff]
    %v111 = vld [vmem:[#allocation2 + $0x30] sm:$0xff]
    %v112 = vld [vmem:[#allocation2 + $0x38] sm:$0xff]
    %v113 = vld [vmem:[#allocation2 + $0x40] sm:$0xff]
    %v114 = vld [vmem:[#allocation2 + $0x48] sm:$0xff]
    %v115 = vld [vmem:[#allocation2 + $0x50] sm:$0xff]
    %v116 = vld [vmem:[#allocation2 + $0x58] sm:$0xff]
    %v117 = vld [vmem:[#allocation2 + $0x60] sm:$0xff]
    %v118 = vld [vmem:[#allocation2 + $0x68] sm:$0xff]
    %v119 = vld [vmem:[#allocation2 + $0x70] sm:$0xff]
    %v120 = vld [vmem:[#allocation2 + $0x78] sm:$0xff]
    %v121 = vld [vmem:[#allocation2 + $0x80] sm:$0xff]
    %v122 = vld [vmem:[#allocation2 + $0x88] sm:$0xff]
    %v123 = vld [vmem:[#allocation2 + $0x90] sm:$0xff]
    %v124 = vld [vmem:[#allocation2 + $0x98] sm:$0xff]
    %v125 = vld [vmem:[#allocation2 + $0xa0] sm:$0xff]
    %v126 = vld [vmem:[#allocation2 + $0xa8] sm:$0xff]
    %v127 = vld [vmem:[#allocation2 + $0xb0] sm:$0xff]
    %v128 = vld [vmem:[#allocation2 + $0xb8] sm:$0xff]
    %v129 = vld [vmem:[#allocation2 + $0xc0] sm:$0xff]
    %v130 = vld [vmem:[#allocation2 + $0xc8] sm:$0xff]
    %v131 = vld [vmem:[#allocation2 + $0xd0] sm:$0xff]
    %v132 = vld [vmem:[#allocation2 + $0xd8] sm:$0xff]
    %v133 = vld [vmem:[#allocation2 + $0xe0] sm:$0xff]
    %v134 = vld [vmem:[#allocation2 + $0xe8] sm:$0xff]
    %v135 = vld [vmem:[#allocation2 + $0xf0] sm:$0xff]
    %v136 = vld [vmem:[#allocation2 + $0xf8] sm:$0xff]
    %v137 = vld [vmem:[#allocation5] sm:$0xff]
    %v138 = vld [vmem:[#allocation5 + $0x8] sm:$0xff]
    %v139 = vld [vmem:[#allocation5 + $0x10] sm:$0xff]
    %v140 = vld [vmem:[#allocation5 + $0x18] sm:$0xff]
    %v141 = vld [vmem:[#allocation5 + $0x20] sm:$0xff]
    %v142 = vld [vmem:[#allocation5 + $0x28] sm:$0xff]
    %v143 = vld [vmem:[#allocation5 + $0x30] sm:$0xff]
    %v144 = vld [vmem:[#allocation5 + $0x38] sm:$0xff]
    %v145 = vld [vmem:[#allocation5 + $0x40] sm:$0xff]
    %v146 = vld [vmem:[#allocation5 + $0x48] sm:$0xff]
    %v147 = vld [vmem:[#allocation5 + $0x50] sm:$0xff]
    %v148 = vld [vmem:[#allocation5 + $0x58] sm:$0xff]
    %v149 = vld [vmem:[#allocation5 + $0x60] sm:$0xff]
    %v150 = vld [vmem:[#allocation5 + $0x68] sm:$0xff]
    %v151 = vld [vmem:[#allocation5 + $0x70] sm:$0xff]
    %v152 = vld [vmem:[#allocation5 + $0x78] sm:$0xff]
    %v153 = vld [vmem:[#allocation5 + $0x80] sm:$0xff]
    %v154 = vld [vmem:[#allocation5 + $0x88] sm:$0xff]
    %v155 = vld [vmem:[#allocation5 + $0x90] sm:$0xff]
    %v156 = vld [vmem:[#allocation5 + $0x98] sm:$0xff]
    %v157 = vld [vmem:[#allocation5 + $0xa0] sm:$0xff]
    %v158 = vld [vmem:[#allocation5 + $0xa8] sm:$0xff]
    %v159 = vld [vmem:[#allocation5 + $0xb0] sm:$0xff]
    %v160 = vld [vmem:[#allocation5 + $0xb8] sm:$0xff]
    %v161 = vld [vmem:[#allocation5 + $0xc0] sm:$0xff]
    %v162 = vld [vmem:[#allocation5 + $0xc8] sm:$0xff]
    %v163 = vld [vmem:[#allocation5 + $0xd0] sm:$0xff]
    %v164 = vld [vmem:[#allocation5 + $0xd8] sm:$0xff]
    %v165 = vld [vmem:[#allocation5 + $0xe0] sm:$0xff]
    %v166 = vld [vmem:[#allocation5 + $0xe8] sm:$0xff]
    %v167 = vld [vmem:[#allocation5 + $0xf0] sm:$0xff]
    %v168 = vld [vmem:[#allocation5 + $0xf8] sm:$0xff]
    %vm169 = vcmask 261120
    %v170 = vsel %vm169, %v105, 0.0
    %171 = vadd.xlane.f32.xlu0 %v170
    %v172 = vpop.xlane.xlu0 %171
    %v173 = vsel %vm169, %v106, 0.0
    %174 = vadd.xlane.f32.xlu0 %v173
    %v175 = vpop.xlane.xlu0 %174
    %v176 = vsel %vm169, %v107, 0.0
    %177 = vadd.xlane.f32.xlu0 %v176
    %v178 = vpop.xlane.xlu0 %177
    %v179 = vsel %vm169, %v108, 0.0
    %180 = vadd.xlane.f32.xlu0 %v179
    %v181 = vpop.xlane.xlu0 %180
    %v182 = vsel %vm169, %v109, 0.0
    %183 = vadd.xlane.f32.xlu0 %v182
    %v184 = vpop.xlane.xlu0 %183
    %v185 = vsel %vm169, %v110, 0.0
    %186 = vadd.xlane.f32.xlu0 %v185
    %v187 = vpop.xlane.xlu0 %186
    %v188 = vsel %vm169, %v111, 0.0
    %189 = vadd.xlane.f32.xlu0 %v188
    %v190 = vpop.xlane.xlu0 %189
    %v191 = vsel %vm169, %v112, 0.0
    %192 = vadd.xlane.f32.xlu0 %v191
    %v193 = vpop.xlane.xlu0 %192
    %v194 = vsel %vm169, %v113, 0.0
    %195 = vadd.xlane.f32.xlu0 %v194
    %v196 = vpop.xlane.xlu0 %195
    %v197 = vsel %vm169, %v114, 0.0
    %198 = vadd.xlane.f32.xlu0 %v197
    %v199 = vpop.xlane.xlu0 %198
    %v200 = vsel %vm169, %v115, 0.0
    %201 = vadd.xlane.f32.xlu0 %v200
    %v202 = vpop.xlane.xlu0 %201
    %v203 = vsel %vm169, %v116, 0.0
    %204 = vadd.xlane.f32.xlu0 %v203
    %v205 = vpop.xlane.xlu0 %204
    %v206 = vsel %vm169, %v117, 0.0
    %207 = vadd.xlane.f32.xlu0 %v206
    %v208 = vpop.xlane.xlu0 %207
    %v209 = vsel %vm169, %v118, 0.0
    %210 = vadd.xlane.f32.xlu0 %v209
    %v211 = vpop.xlane.xlu0 %210
    %v212 = vsel %vm169, %v119, 0.0
    %213 = vadd.xlane.f32.xlu0 %v212
    %v214 = vpop.xlane.xlu0 %213
    %v215 = vsel %vm169, %v120, 0.0
    %216 = vadd.xlane.f32.xlu0 %v215
    %v217 = vpop.xlane.xlu0 %216
    %v218 = vsel %vm169, %v121, 0.0
    %219 = vadd.xlane.f32.xlu0 %v218
    %v220 = vpop.xlane.xlu0 %219
    %v221 = vsel %vm169, %v122, 0.0
    %222 = vadd.xlane.f32.xlu0 %v221
    %v223 = vpop.xlane.xlu0 %222
    %v224 = vsel %vm169, %v123, 0.0
    %225 = vadd.xlane.f32.xlu0 %v224
    %v226 = vpop.xlane.xlu0 %225
    %v227 = vsel %vm169, %v124, 0.0
    %228 = vadd.xlane.f32.xlu0 %v227
    %v229 = vpop.xlane.xlu0 %228
    %v230 = vsel %vm169, %v125, 0.0
    %231 = vadd.xlane.f32.xlu0 %v230
    %v232 = vpop.xlane.xlu0 %231
    %v233 = vsel %vm169, %v126, 0.0
    %234 = vadd.xlane.f32.xlu0 %v233
    %v235 = vpop.xlane.xlu0 %234
    %v236 = vsel %vm169, %v127, 0.0
    %237 = vadd.xlane.f32.xlu0 %v236
    %v238 = vpop.xlane.xlu0 %237
    %v239 = vsel %vm169, %v128, 0.0
    %240 = vadd.xlane.f32.xlu0 %v239
    %v241 = vpop.xlane.xlu0 %240
    %v242 = vsel %vm169, %v129, 0.0
    %243 = vadd.xlane.f32.xlu0 %v242
    %v244 = vpop.xlane.xlu0 %243
    %v245 = vsel %vm169, %v130, 0.0
    %246 = vadd.xlane.f32.xlu0 %v245
    %v247 = vpop.xlane.xlu0 %246
    %v248 = vsel %vm169, %v131, 0.0
    %249 = vadd.xlane.f32.xlu0 %v248
    %v250 = vpop.xlane.xlu0 %249
    %v251 = vsel %vm169, %v132, 0.0
    %252 = vadd.xlane.f32.xlu0 %v251
    %v253 = vpop.xlane.xlu0 %252
    %v254 = vsel %vm169, %v133, 0.0
    %255 = vadd.xlane.f32.xlu0 %v254
    %v256 = vpop.xlane.xlu0 %255
    %v257 = vsel %vm169, %v134, 0.0
    %258 = vadd.xlane.f32.xlu0 %v257
    %v259 = vpop.xlane.xlu0 %258
    %v260 = vsel %vm169, %v135, 0.0
    %261 = vadd.xlane.f32.xlu0 %v260
    %v262 = vpop.xlane.xlu0 %261
    %v263 = vsel %vm169, %v136, 0.0
    %264 = vadd.xlane.f32.xlu0 %v263
    %v265 = vpop.xlane.xlu0 %264
    %v266 = vrcp.pop 32.0
    %v267 = vmul.f32 %v172, %v266
    %v268 = vmul.f32 %v175, %v266
    %v269 = vmul.f32 %v178, %v266
    %v270 = vmul.f32 %v181, %v266
    %v271 = vmul.f32 %v184, %v266
    %v272 = vmul.f32 %v187, %v266
    %v273 = vmul.f32 %v190, %v266
    %v274 = vmul.f32 %v193, %v266
    %v275 = vmul.f32 %v196, %v266
    %v276 = vmul.f32 %v199, %v266
    %v277 = vmul.f32 %v202, %v266
    %v278 = vmul.f32 %v205, %v266
    %v279 = vmul.f32 %v208, %v266
    %v280 = vmul.f32 %v211, %v266
    %v281 = vmul.f32 %v214, %v266
    %v282 = vmul.f32 %v217, %v266
    %v283 = vmul.f32 %v220, %v266
    %v284 = vmul.f32 %v223, %v266
    %v285 = vmul.f32 %v226, %v266
    %v286 = vmul.f32 %v229, %v266
    %v287 = vmul.f32 %v232, %v266
    %v288 = vmul.f32 %v235, %v266
    %v289 = vmul.f32 %v238, %v266
    %v290 = vmul.f32 %v241, %v266
    %v291 = vmul.f32 %v244, %v266
    %v292 = vmul.f32 %v247, %v266
    %v293 = vmul.f32 %v250, %v266
    %v294 = vmul.f32 %v253, %v266
    %v295 = vmul.f32 %v256, %v266
    %v296 = vmul.f32 %v259, %v266
    %v297 = vmul.f32 %v262, %v266
    %v298 = vmul.f32 %v265, %v266
    %v299 = vsub.f32 %v105, %v267
    %v300 = vsub.f32 %v106, %v268
    %v301 = vsub.f32 %v107, %v269
    %v302 = vsub.f32 %v108, %v270
    %v303 = vsub.f32 %v109, %v271
    %v304 = vsub.f32 %v110, %v272
    %v305 = vsub.f32 %v111, %v273
    %v306 = vsub.f32 %v112, %v274
    %v307 = vsub.f32 %v113, %v275
    %v308 = vsub.f32 %v114, %v276
    %v309 = vsub.f32 %v115, %v277
    %v310 = vsub.f32 %v116, %v278
    %v311 = vsub.f32 %v117, %v279
    %v312 = vsub.f32 %v118, %v280
    %v313 = vsub.f32 %v119, %v281
    %v314 = vsub.f32 %v120, %v282
    %v315 = vsub.f32 %v121, %v283
    %v316 = vsub.f32 %v122, %v284
    %v317 = vsub.f32 %v123, %v285
    %v318 = vsub.f32 %v124, %v286
    %v319 = vsub.f32 %v125, %v287
    %v320 = vsub.f32 %v126, %v288
    %v321 = vsub.f32 %v127, %v289
    %v322 = vsub.f32 %v128, %v290
    %v323 = vsub.f32 %v129, %v291
    %v324 = vsub.f32 %v130, %v292
    %v325 = vsub.f32 %v131, %v293
    %v326 = vsub.f32 %v132, %v294
    %v327 = vsub.f32 %v133, %v295
    %v328 = vsub.f32 %v134, %v296
    %v329 = vsub.f32 %v135, %v297
    %v330 = vsub.f32 %v136, %v298
    %v331 = vmul.f32 %v299, %v299
    %v332 = vmul.f32 %v300, %v300
    %v333 = vmul.f32 %v301, %v301
    %v334 = vmul.f32 %v302, %v302
    %v335 = vmul.f32 %v303, %v303
    %v336 = vmul.f32 %v304, %v304
    %v337 = vmul.f32 %v305, %v305
    %v338 = vmul.f32 %v306, %v306
    %v339 = vmul.f32 %v307, %v307
    %v340 = vmul.f32 %v308, %v308
    %v341 = vmul.f32 %v309, %v309
    %v342 = vmul.f32 %v310, %v310
    %v343 = vmul.f32 %v311, %v311
    %v344 = vmul.f32 %v312, %v312
    %v345 = vmul.f32 %v313, %v313
    %v346 = vmul.f32 %v314, %v314
    %v347 = vmul.f32 %v315, %v315
    %v348 = vmul.f32 %v316, %v316
    %v349 = vmul.f32 %v317, %v317
    %v350 = vmul.f32 %v318, %v318
    %v351 = vmul.f32 %v319, %v319
    %v352 = vmul.f32 %v320, %v320
    %v353 = vmul.f32 %v321, %v321
    %v354 = vmul.f32 %v322, %v322
    %v355 = vmul.f32 %v323, %v323
    %v356 = vmul.f32 %v324, %v324
    %v357 = vmul.f32 %v325, %v325
    %v358 = vmul.f32 %v326, %v326
    %v359 = vmul.f32 %v327, %v327
    %v360 = vmul.f32 %v328, %v328
    %v361 = vmul.f32 %v329, %v329
    %v362 = vmul.f32 %v330, %v330
    %v363 = vsel %vm169, %v331, 0.0
    %364 = vadd.xlane.f32.xlu0 %v363
    %v365 = vpop.xlane.xlu0 %364
    %v366 = vsel %vm169, %v332, 0.0
    %367 = vadd.xlane.f32.xlu0 %v366
    %v368 = vpop.xlane.xlu0 %367
    %v369 = vsel %vm169, %v333, 0.0
    %370 = vadd.xlane.f32.xlu0 %v369
    %v371 = vpop.xlane.xlu0 %370
    %v372 = vsel %vm169, %v334, 0.0
    %373 = vadd.xlane.f32.xlu0 %v372
    %v374 = vpop.xlane.xlu0 %373
    %v375 = vsel %vm169, %v335, 0.0
    %376 = vadd.xlane.f32.xlu0 %v375
    %v377 = vpop.xlane.xlu0 %376
    %v378 = vsel %vm169, %v336, 0.0
    %379 = vadd.xlane.f32.xlu0 %v378
    %v380 = vpop.xlane.xlu0 %379
    %v381 = vsel %vm169, %v337, 0.0
    %382 = vadd.xlane.f32.xlu0 %v381
    %v383 = vpop.xlane.xlu0 %382
    %v384 = vsel %vm169, %v338, 0.0
    %385 = vadd.xlane.f32.xlu0 %v384
    %v386 = vpop.xlane.xlu0 %385
    %v387 = vsel %vm169, %v339, 0.0
    %388 = vadd.xlane.f32.xlu0 %v387
    %v389 = vpop.xlane.xlu0 %388
    %v390 = vsel %vm169, %v340, 0.0
    %391 = vadd.xlane.f32.xlu0 %v390
    %v392 = vpop.xlane.xlu0 %391
    %v393 = vsel %vm169, %v341, 0.0
    %394 = vadd.xlane.f32.xlu0 %v393
    %v395 = vpop.xlane.xlu0 %394
    %v396 = vsel %vm169, %v342, 0.0
    %397 = vadd.xlane.f32.xlu0 %v396
    %v398 = vpop.xlane.xlu0 %397
    %v399 = vsel %vm169, %v343, 0.0
    %400 = vadd.xlane.f32.xlu0 %v399
    %v401 = vpop.xlane.xlu0 %400
    %v402 = vsel %vm169, %v344, 0.0
    %403 = vadd.xlane.f32.xlu0 %v402
    %v404 = vpop.xlane.xlu0 %403
    %v405 = vsel %vm169, %v345, 0.0
    %406 = vadd.xlane.f32.xlu0 %v405
    %v407 = vpop.xlane.xlu0 %406
    %v408 = vsel %vm169, %v346, 0.0
    %409 = vadd.xlane.f32.xlu0 %v408
    %v410 = vpop.xlane.xlu0 %409
    %v411 = vsel %vm169, %v347, 0.0
    %412 = vadd.xlane.f32.xlu0 %v411
    %v413 = vpop.xlane.xlu0 %412
    %v414 = vsel %vm169, %v348, 0.0
    %415 = vadd.xlane.f32.xlu0 %v414
    %v416 = vpop.xlane.xlu0 %415
    %v417 = vsel %vm169, %v349, 0.0
    %418 = vadd.xlane.f32.xlu0 %v417
    %v419 = vpop.xlane.xlu0 %418
    %v420 = vsel %vm169, %v350, 0.0
    %421 = vadd.xlane.f32.xlu0 %v420
    %v422 = vpop.xlane.xlu0 %421
    %v423 = vsel %vm169, %v351, 0.0
    %424 = vadd.xlane.f32.xlu0 %v423
    %v425 = vpop.xlane.xlu0 %424
    %v426 = vsel %vm169, %v352, 0.0
    %427 = vadd.xlane.f32.xlu0 %v426
    %v428 = vpop.xlane.xlu0 %427
    %v429 = vsel %vm169, %v353, 0.0
    %430 = vadd.xlane.f32.xlu0 %v429
    %v431 = vpop.xlane.xlu0 %430
    %v432 = vsel %vm169, %v354, 0.0
    %433 = vadd.xlane.f32.xlu0 %v432
    %v434 = vpop.xlane.xlu0 %433
    %v435 = vsel %vm169, %v355, 0.0
    %436 = vadd.xlane.f32.xlu0 %v435
    %v437 = vpop.xlane.xlu0 %436
    %v438 = vsel %vm169, %v356, 0.0
    %439 = vadd.xlane.f32.xlu0 %v438
    %v440 = vpop.xlane.xlu0 %439
    %v441 = vsel %vm169, %v357, 0.0
    %442 = vadd.xlane.f32.xlu0 %v441
    %v443 = vpop.xlane.xlu0 %442
    %v444 = vsel %vm169, %v358, 0.0
    %445 = vadd.xlane.f32.xlu0 %v444
    %v446 = vpop.xlane.xlu0 %445
    %v447 = vsel %vm169, %v359, 0.0
    %448 = vadd.xlane.f32.xlu0 %v447
    %v449 = vpop.xlane.xlu0 %448
    %v450 = vsel %vm169, %v360, 0.0
    %451 = vadd.xlane.f32.xlu0 %v450
    %v452 = vpop.xlane.xlu0 %451
    %v453 = vsel %vm169, %v361, 0.0
    %454 = vadd.xlane.f32.xlu0 %v453
    %v455 = vpop.xlane.xlu0 %454
    %v456 = vsel %vm169, %v362, 0.0
    %457 = vadd.xlane.f32.xlu0 %v456
    %v458 = vpop.xlane.xlu0 %457
    %v459 = vmul.f32 %v365, %v266
    %v460 = vmul.f32 %v368, %v266
    %v461 = vmul.f32 %v371, %v266
    %v462 = vmul.f32 %v374, %v266
    %v463 = vmul.f32 %v377, %v266
    %v464 = vmul.f32 %v380, %v266
    %v465 = vmul.f32 %v383, %v266
    %v466 = vmul.f32 %v386, %v266
    %v467 = vmul.f32 %v389, %v266
    %v468 = vmul.f32 %v392, %v266
    %v469 = vmul.f32 %v395, %v266
    %v470 = vmul.f32 %v398, %v266
    %v471 = vmul.f32 %v401, %v266
    %v472 = vmul.f32 %v404, %v266
    %v473 = vmul.f32 %v407, %v266
    %v474 = vmul.f32 %v410, %v266
    %v475 = vmul.f32 %v413, %v266
    %v476 = vmul.f32 %v416, %v266
    %v477 = vmul.f32 %v419, %v266
    %v478 = vmul.f32 %v422, %v266
    %v479 = vmul.f32 %v425, %v266
    %v480 = vmul.f32 %v428, %v266
    %v481 = vmul.f32 %v431, %v266
    %v482 = vmul.f32 %v434, %v266
    %v483 = vmul.f32 %v437, %v266
    %v484 = vmul.f32 %v440, %v266
    %v485 = vmul.f32 %v443, %v266
    %v486 = vmul.f32 %v446, %v266
    %v487 = vmul.f32 %v449, %v266
    %v488 = vmul.f32 %v452, %v266
    %v489 = vmul.f32 %v455, %v266
    %v490 = vmul.f32 %v458, %v266
    %v491 = vadd.f32 %v459, 1e-05
    %v492 = vadd.f32 %v460, 1e-05
    %v493 = vadd.f32 %v461, 1e-05
    %v494 = vadd.f32 %v462, 1e-05
    %v495 = vadd.f32 %v463, 1e-05
    %v496 = vadd.f32 %v464, 1e-05
    %v497 = vadd.f32 %v465, 1e-05
    %v498 = vadd.f32 %v466, 1e-05
    %v499 = vadd.f32 %v467, 1e-05
    %v500 = vadd.f32 %v468, 1e-05
    %v501 = vadd.f32 %v469, 1e-05
    %v502 = vadd.f32 %v470, 1e-05
    %v503 = vadd.f32 %v471, 1e-05
    %v504 = vadd.f32 %v472, 1e-05
    %v505 = vadd.f32 %v473, 1e-05
    %v506 = vadd.f32 %v474, 1e-05
    %v507 = vadd.f32 %v475, 1e-05
    %v508 = vadd.f32 %v476, 1e-05
    %v509 = vadd.f32 %v477, 1e-05
    %v510 = vadd.f32 %v478, 1e-05
    %v511 = vadd.f32 %v479, 1e-05
    %v512 = vadd.f32 %v480, 1e-05
    %v513 = vadd.f32 %v481, 1e-05
    %v514 = vadd.f32 %v482, 1e-05
    %v515 = vadd.f32 %v483, 1e-05
    %v516 = vadd.f32 %v484, 1e-05
    %v517 = vadd.f32 %v485, 1e-05
    %v518 = vadd.f32 %v486, 1e-05
    %v519 = vadd.f32 %v487, 1e-05
    %v520 = vadd.f32 %v488, 1e-05
    %v521 = vadd.f32 %v489, 1e-05
    %v522 = vadd.f32 %v490, 1e-05
    %v523 = vrsqrt.pop %v491
    %v524 = vrsqrt.pop %v492
    %v525 = vrsqrt.pop %v493
    %v526 = vrsqrt.pop %v494
    %v527 = vrsqrt.pop %v495
    %v528 = vrsqrt.pop %v496
    %v529 = vrsqrt.pop %v497
    %v530 = vrsqrt.pop %v498
    %v531 = vrsqrt.pop %v499
    %v532 = vrsqrt.pop %v500
    %v533 = vrsqrt.pop %v501
    %v534 = vrsqrt.pop %v502
    %v535 = vrsqrt.pop %v503
    %v536 = vrsqrt.pop %v504
    %v537 = vrsqrt.pop %v505
    %v538 = vrsqrt.pop %v506
    %v539 = vrsqrt.pop %v507
    %v540 = vrsqrt.pop %v508
    %v541 = vrsqrt.pop %v509
    %v542 = vrsqrt.pop %v510
    %v543 = vrsqrt.pop %v511
    %v544 = vrsqrt.pop %v512
    %v545 = vrsqrt.pop %v513
    %v546 = vrsqrt.pop %v514
    %v547 = vrsqrt.pop %v515
    %v548 = vrsqrt.pop %v516
    %v549 = vrsqrt.pop %v517
    %v550 = vrsqrt.pop %v518
    %v551 = vrsqrt.pop %v519
    %v552 = vrsqrt.pop %v520
    %v553 = vrsqrt.pop %v521
    %v554 = vrsqrt.pop %v522
    %v555 = vmul.f32 %v299, %v523
    %v556 = vmul.f32 %v300, %v524
    %v557 = vmul.f32 %v301, %v525
    %v558 = vmul.f32 %v302, %v526
    %v559 = vmul.f32 %v303, %v527
    %v560 = vmul.f32 %v304, %v528
    %v561 = vmul.f32 %v305, %v529
    %v562 = vmul.f32 %v306, %v530
    %v563 = vmul.f32 %v307, %v531
    %v564 = vmul.f32 %v308, %v532
    %v565 = vmul.f32 %v309, %v533
    %v566 = vmul.f32 %v310, %v534
    %v567 = vmul.f32 %v311, %v535
    %v568 = vmul.f32 %v312, %v536
    %v569 = vmul.f32 %v313, %v537
    %v570 = vmul.f32 %v314, %v538
    %v571 = vmul.f32 %v315, %v539
    %v572 = vmul.f32 %v316, %v540
    %v573 = vmul.f32 %v317, %v541
    %v574 = vmul.f32 %v318, %v542
    %v575 = vmul.f32 %v319, %v543
    %v576 = vmul.f32 %v320, %v544
    %v577 = vmul.f32 %v321, %v545
    %v578 = vmul.f32 %v322, %v546
    %v579 = vmul.f32 %v323, %v547
    %v580 = vmul.f32 %v324, %v548
    %v581 = vmul.f32 %v325, %v549
    %v582 = vmul.f32 %v326, %v550
    %v583 = vmul.f32 %v327, %v551
    %v584 = vmul.f32 %v328, %v552
    %v585 = vmul.f32 %v329, %v553
    %v586 = vmul.f32 %v330, %v554
    %v587 = vld [vmem:[#allocation7] sm:$0x1]
    %v589 = vlaneseq
    %v590 = vshrl.u32 %v589, 7
    %v591 = vsub.s32 0, %v590
    %v592 = vrot.slane %v587, %v591
    %v594 = vmul.f32 %v555, %v592
    %v595 = vmul.f32 %v556, %v592
    %v596 = vmul.f32 %v557, %v592
    %v597 = vmul.f32 %v558, %v592
    %v598 = vmul.f32 %v559, %v592
    %v599 = vmul.f32 %v560, %v592
    %v600 = vmul.f32 %v561, %v592
    %v601 = vmul.f32 %v562, %v592
    %v602 = vmul.f32 %v563, %v592
    %v603 = vmul.f32 %v564, %v592
    %v604 = vmul.f32 %v565, %v592
    %v605 = vmul.f32 %v566, %v592
    %v606 = vmul.f32 %v567, %v592
    %v607 = vmul.f32 %v568, %v592
    %v608 = vmul.f32 %v569, %v592
    %v609 = vmul.f32 %v570, %v592
    %v610 = vmul.f32 %v571, %v592
    %v611 = vmul.f32 %v572, %v592
    %v612 = vmul.f32 %v573, %v592
    %v613 = vmul.f32 %v574, %v592
    %v614 = vmul.f32 %v575, %v592
    %v615 = vmul.f32 %v576, %v592
    %v616 = vmul.f32 %v577, %v592
    %v617 = vmul.f32 %v578, %v592
    %v618 = vmul.f32 %v579, %v592
    %v619 = vmul.f32 %v580, %v592
    %v620 = vmul.f32 %v581, %v592
    %v621 = vmul.f32 %v582, %v592
    %v622 = vmul.f32 %v583, %v592
    %v623 = vmul.f32 %v584, %v592
    %v624 = vmul.f32 %v585, %v592
    %v625 = vmul.f32 %v586, %v592
    %v626 = vld [vmem:[#allocation8] sm:$0x1]
    %v628 = vlaneseq
    %v629 = vshrl.u32 %v628, 7
    %v630 = vsub.s32 0, %v629
    %v631 = vrot.slane %v626, %v630
    %v633 = vadd.f32 %v594, %v631
    %v634 = vadd.f32 %v595, %v631
    %v635 = vadd.f32 %v596, %v631
    %v636 = vadd.f32 %v597, %v631
    %v637 = vadd.f32 %v598, %v631
    %v638 = vadd.f32 %v599, %v631
    %v639 = vadd.f32 %v600, %v631
    %v640 = vadd.f32 %v601, %v631
    %v641 = vadd.f32 %v602, %v631
    %v642 = vadd.f32 %v603, %v631
    %v643 = vadd.f32 %v604, %v631
    %v644 = vadd.f32 %v605, %v631
    %v645 = vadd.f32 %v606, %v631
    %v646 = vadd.f32 %v607, %v631
    %v647 = vadd.f32 %v608, %v631
    %v648 = vadd.f32 %v609, %v631
    %v649 = vadd.f32 %v610, %v631
    %v650 = vadd.f32 %v611, %v631
    %v651 = vadd.f32 %v612, %v631
    %v652 = vadd.f32 %v613, %v631
    %v653 = vadd.f32 %v614, %v631
    %v654 = vadd.f32 %v615, %v631
    %v655 = vadd.f32 %v616, %v631
    %v656 = vadd.f32 %v617, %v631
    %v657 = vadd.f32 %v618, %v631
    %v658 = vadd.f32 %v619, %v631
    %v659 = vadd.f32 %v620, %v631
    %v660 = vadd.f32 %v621, %v631
    %v661 = vadd.f32 %v622, %v631
    %v662 = vadd.f32 %v623, %v631
    %v663 = vadd.f32 %v624, %v631
    %v664 = vadd.f32 %v625, %v631
    %v665 = vpack.c.bf16 %v634, %v633
    %v666 = vpack.c.bf16 %v636, %v635
    %v667 = vpack.c.bf16 %v638, %v637
    %v668 = vpack.c.bf16 %v640, %v639
    %v669 = vpack.c.bf16 %v642, %v641
    %v670 = vpack.c.bf16 %v644, %v643
    %v671 = vpack.c.bf16 %v646, %v645
    %v672 = vpack.c.bf16 %v648, %v647
    %v673 = vpack.c.bf16 %v650, %v649
    %v674 = vpack.c.bf16 %v652, %v651
    %v675 = vpack.c.bf16 %v654, %v653
    %v676 = vpack.c.bf16 %v656, %v655
    %v677 = vpack.c.bf16 %v658, %v657
    %v678 = vpack.c.bf16 %v660, %v659
    %v679 = vpack.c.bf16 %v662, %v661
    %v680 = vpack.c.bf16 %v664, %v663
    %v681 = vld [vmem:[#allocation10] sm:$0xff]
    %v682 = vld [vmem:[#allocation10 + $0x8] sm:$0xff]
    %v683 = vld [vmem:[#allocation10 + $0x10] sm:$0xff]
    %v684 = vld [vmem:[#allocation10 + $0x18] sm:$0xff]
    %v685 = vld [vmem:[#allocation11] sm:$0x3]
    %v687 = vlaneseq
    %v688 = vshrl.u32 %v687, 7
    %v689 = vsub.s32 0, %v688
    %v690 = vrot.slane %v685, %v689
    %v691 = vlaneseq
    %v692 = vshrl.u32 %v691, 7
    %v693 = vsub.s32 1, %v692
    %v694 = vrot.slane %v685, %v693
    %v701 = vunpack.c.l.b16 %v681
    %v702 = vunpack.c.h.b16 %v681
    %v703 = vunpack.c.l.b16 %v682
    %v704 = vunpack.c.h.b16 %v682
    %v705 = vunpack.c.l.b16 %v683
    %v706 = vunpack.c.h.b16 %v683
    %v707 = vunpack.c.l.b16 %v684
    %v708 = vunpack.c.h.b16 %v684
    %v709 = vpack.c.b16 %v703, %v701
    %v710 = vpack.c.b16 %v704, %v702
    %v711 = vpack.c.b16 %v707, %v705
    %v712 = vpack.c.b16 %v708, %v706
    %v718 = vsel %vm169, %v665, 0
    %v721 = vsel %vm169, %v666, 0
    %v724 = vsel %vm169, %v667, 0
    %v727 = vsel %vm169, %v668, 0
    %v730 = vsel %vm169, %v669, 0
    %v733 = vsel %vm169, %v670, 0
    %v736 = vsel %vm169, %v671, 0
    %v739 = vsel %vm169, %v672, 0
    %v742 = vsel %vm169, %v673, 0
    %v745 = vsel %vm169, %v674, 0
    %v748 = vsel %vm169, %v675, 0
    %v751 = vsel %vm169, %v676, 0
    %v754 = vsel %vm169, %v677, 0
    %v757 = vsel %vm169, %v678, 0
    %v760 = vsel %vm169, %v679, 0
    %v763 = vsel %vm169, %v680, 0
    %765 = vmatprep.subr.bf16.mxu0 %v710
    %766 = vmatpush1.bf16.msra.mxu0 %v709
    %767 = vmatprep.subr.bf16.mxu0 %v712
    %768 = vmatpush1.bf16.msra.mxu0 %v711
    %769 = vmatprep.subr.bf16.mxu0 0
    %770 = vmatpush1.bf16.msra.mxu0 0
    %771 = vmatprep.subr.bf16.mxu0 0
    %772 = vmatpush1.bf16.msra.mxu0 0
    %773 = vmatprep.subr.bf16.mxu0 0
    %774 = vmatpush1.bf16.msra.mxu0 0
    %775 = vmatprep.subr.bf16.mxu0 0
    %776 = vmatpush1.bf16.msra.mxu0 0
    %777 = vmatprep.subr.bf16.mxu0 0
    %778 = vmatpush1.bf16.msra.mxu0 0
    %779 = vmatprep.subr.bf16.mxu0 0
    %780 = vmatpush1.bf16.msra.mxu0 0
    %781 = vmatprep.subr.bf16.mxu0 0
    %782 = vmatpush1.bf16.msra.mxu0 0
    %783 = vmatprep.subr.bf16.mxu0 0
    %784 = vmatpush1.bf16.msra.mxu0 0
    %785 = vmatprep.subr.bf16.mxu0 0
    %786 = vmatpush1.bf16.msra.mxu0 0
    %787 = vmatprep.subr.bf16.mxu0 0
    %788 = vmatpush1.bf16.msra.mxu0 0
    %789 = vmatprep.subr.bf16.mxu0 0
    %790 = vmatpush1.bf16.msra.mxu0 0
    %791 = vmatprep.subr.bf16.mxu0 0
    %792 = vmatpush1.bf16.msra.mxu0 0
    %793 = vmatprep.subr.bf16.mxu0 0
    %794 = vmatpush1.bf16.msra.mxu0 0
    %795 = vmatprep.subr.bf16.mxu0 0
    %796 = vmatpush1.bf16.msra.mxu0 0
    %797 = vmatprep.mubr.bf16.mxu0 0
    %798 = vmatmul.mubr.bf16.gmra.mrb[0].mxu0 %v718
    %v799 = vpop.f32.mrb[0].mxu0
    %v800 = vadd.f32 %v690, %v799
    %v801 = vpop.f32.mrb[0].mxu0
    %v802 = vadd.f32 %v694, %v801
    %v803 = vpop.f32.mrb[0].mxu0
    %v804 = vadd.f32 %v690, %v803
    %v805 = vpop.f32.mrb[0].mxu0
    %v806 = vadd.f32 %v694, %v805
    %807 = vmatprep.mubr.bf16.mxu0 0
    %808 = vmatmul.mubr.bf16.gmra.mrb[0].mxu0 %v721
    %v809 = vpop.f32.mrb[0].mxu0
    %v810 = vadd.f32 %v690, %v809
    %v811 = vpop.f32.mrb[0].mxu0
    %v812 = vadd.f32 %v694, %v811
    %v813 = vpop.f32.mrb[0].mxu0
    %v814 = vadd.f32 %v690, %v813
    %v815 = vpop.f32.mrb[0].mxu0
    %v816 = vadd.f32 %v694, %v815
    %817 = vmatprep.mubr.bf16.mxu0 0
    %818 = vmatmul.mubr.bf16.gmra.mrb[0].mxu0 %v724
    %v819 = vpop.f32.mrb[0].mxu0
    %v820 = vadd.f32 %v690, %v819
    %v821 = vpop.f32.mrb[0].mxu0
    %v822 = vadd.f32 %v694, %v821
    %v823 = vpop.f32.mrb[0].mxu0
    %v824 = vadd.f32 %v690, %v823
    %v825 = vpop.f32.mrb[0].mxu0
    %v826 = vadd.f32 %v694, %v825
    %827 = vmatprep.mubr.bf16.mxu0 0
    %828 = vmatmul.mubr.bf16.gmra.mrb[0].mxu0 %v727
    %v829 = vpop.f32.mrb[0].mxu0
    %v830 = vadd.f32 %v690, %v829
    %v831 = vpop.f32.mrb[0].mxu0
    %v832 = vadd.f32 %v694, %v831
    %v833 = vpop.f32.mrb[0].mxu0
    %v834 = vadd.f32 %v690, %v833
    %v835 = vpop.f32.mrb[0].mxu0
    %v836 = vadd.f32 %v694, %v835
    %837 = vmatprep.mubr.bf16.mxu0 0
    %838 = vmatmul.mubr.bf16.gmra.mrb[0].mxu0 %v730
    %v839 = vpop.f32.mrb[0].mxu0
    %v840 = vadd.f32 %v690, %v839
    %v841 = vpop.f32.mrb[0].mxu0
    %v842 = vadd.f32 %v694, %v841
    %v843 = vpop.f32.mrb[0].mxu0
    %v844 = vadd.f32 %v690, %v843
    %v845 = vpop.f32.mrb[0].mxu0
    %v846 = vadd.f32 %v694, %v845
    %847 = vmatprep.mubr.bf16.mxu0 0
    %848 = vmatmul.mubr.bf16.gmra.mrb[0].mxu0 %v733
    %v849 = vpop.f32.mrb[0].mxu0
    %v850 = vadd.f32 %v690, %v849
    %v851 = vpop.f32.mrb[0].mxu0
    %v852 = vadd.f32 %v694, %v851
    %v853 = vpop.f32.mrb[0].mxu0
    %v854 = vadd.f32 %v690, %v853
    %v855 = vpop.f32.mrb[0].mxu0
    %v856 = vadd.f32 %v694, %v855
    %857 = vmatprep.mubr.bf16.mxu0 0
    %858 = vmatmul.mubr.bf16.gmra.mrb[0].mxu0 %v736
    %v859 = vpop.f32.mrb[0].mxu0
    %v860 = vadd.f32 %v690, %v859
    %v861 = vpop.f32.mrb[0].mxu0
    %v862 = vadd.f32 %v694, %v861
    %v863 = vpop.f32.mrb[0].mxu0
    %v864 = vadd.f32 %v690, %v863
    %v865 = vpop.f32.mrb[0].mxu0
    %v866 = vadd.f32 %v694, %v865
    %867 = vmatprep.mubr.bf16.mxu0 0
    %868 = vmatmul.mubr.bf16.gmra.mrb[0].mxu0 %v739
    %v869 = vpop.f32.mrb[0].mxu0
    %v870 = vadd.f32 %v690, %v869
    %v871 = vpop.f32.mrb[0].mxu0
    %v872 = vadd.f32 %v694, %v871
    %v873 = vpop.f32.mrb[0].mxu0
    %v874 = vadd.f32 %v690, %v873
    %v875 = vpop.f32.mrb[0].mxu0
    %v876 = vadd.f32 %v694, %v875
    %877 = vmatprep.mubr.bf16.mxu0 0
    %878 = vmatmul.mubr.bf16.gmra.mrb[0].mxu0 %v742
    %v879 = vpop.f32.mrb[0].mxu0
    %v880 = vadd.f32 %v690, %v879
    %v881 = vpop.f32.mrb[0].mxu0
    %v882 = vadd.f32 %v694, %v881
    %v883 = vpop.f32.mrb[0].mxu0
    %v884 = vadd.f32 %v690, %v883
    %v885 = vpop.f32.mrb[0].mxu0
    %v886 = vadd.f32 %v694, %v885
    %887 = vmatprep.mubr.bf16.mxu0 0
    %888 = vmatmul.mubr.bf16.gmra.mrb[0].mxu0 %v745
    %v889 = vpop.f32.mrb[0].mxu0
    %v890 = vadd.f32 %v690, %v889
    %v891 = vpop.f32.mrb[0].mxu0
    %v892 = vadd.f32 %v694, %v891
    %v893 = vpop.f32.mrb[0].mxu0
    %v894 = vadd.f32 %v690, %v893
    %v895 = vpop.f32.mrb[0].mxu0
    %v896 = vadd.f32 %v694, %v895
    %897 = vmatprep.mubr.bf16.mxu0 0
    %898 = vmatmul.mubr.bf16.gmra.mrb[0].mxu0 %v748
    %v899 = vpop.f32.mrb[0].mxu0
    %v900 = vadd.f32 %v690, %v899
    %v901 = vpop.f32.mrb[0].mxu0
    %v902 = vadd.f32 %v694, %v901
    %v903 = vpop.f32.mrb[0].mxu0
    %v904 = vadd.f32 %v690, %v903
    %v905 = vpop.f32.mrb[0].mxu0
    %v906 = vadd.f32 %v694, %v905
    %907 = vmatprep.mubr.bf16.mxu0 0
    %908 = vmatmul.mubr.bf16.gmra.mrb[0].mxu0 %v751
    %v909 = vpop.f32.mrb[0].mxu0
    %v910 = vadd.f32 %v690, %v909
    %v911 = vpop.f32.mrb[0].mxu0
    %v912 = vadd.f32 %v694, %v911
    %v913 = vpop.f32.mrb[0].mxu0
    %v914 = vadd.f32 %v690, %v913
    %v915 = vpop.f32.mrb[0].mxu0
    %v916 = vadd.f32 %v694, %v915
    %917 = vmatprep.mubr.bf16.mxu0 0
    %918 = vmatmul.mubr.bf16.gmra.mrb[0].mxu0 %v754
    %v919 = vpop.f32.mrb[0].mxu0
    %v920 = vadd.f32 %v690, %v919
    %v921 = vpop.f32.mrb[0].mxu0
    %v922 = vadd.f32 %v694, %v921
    %v923 = vpop.f32.mrb[0].mxu0
    %v924 = vadd.f32 %v690, %v923
    %v925 = vpop.f32.mrb[0].mxu0
    %v926 = vadd.f32 %v694, %v925
    %927 = vmatprep.mubr.bf16.mxu0 0
    %928 = vmatmul.mubr.bf16.gmra.mrb[0].mxu0 %v757
    %v929 = vpop.f32.mrb[0].mxu0
    %v930 = vadd.f32 %v690, %v929
    %v931 = vpop.f32.mrb[0].mxu0
    %v932 = vadd.f32 %v694, %v931
    %v933 = vpop.f32.mrb[0].mxu0
    %v934 = vadd.f32 %v690, %v933
    %v935 = vpop.f32.mrb[0].mxu0
    %v936 = vadd.f32 %v694, %v935
    %937 = vmatprep.mubr.bf16.mxu0 0
    %938 = vmatmul.mubr.bf16.gmra.mrb[0].mxu0 %v760
    %v939 = vpop.f32.mrb[0].mxu0
    %v940 = vadd.f32 %v690, %v939
    %v941 = vpop.f32.mrb[0].mxu0
    %v942 = vadd.f32 %v694, %v941
    %v943 = vpop.f32.mrb[0].mxu0
    %v944 = vadd.f32 %v690, %v943
    %v945 = vpop.f32.mrb[0].mxu0
    %v946 = vadd.f32 %v694, %v945
    %947 = vmatprep.mubr.bf16.mxu0 0
    %948 = vmatmul.mubr.bf16.gmra.mrb[0].mxu0 %v763
    %v949 = vpop.f32.mrb[0].mxu0
    %v950 = vadd.f32 %v690, %v949
    %v951 = vpop.f32.mrb[0].mxu0
    %v952 = vadd.f32 %v694, %v951
    %v953 = vpop.f32.mrb[0].mxu0
    %v954 = vadd.f32 %v690, %v953
    %v955 = vpop.f32.mrb[0].mxu0
    %v956 = vadd.f32 %v694, %v955
    %957 = vdwg.mxu0
    %959 = vset.pattern.permute.xlu0 0
    %960 = vperm.xlu0 %959, %v137
    %v961 = vpop.permute.xlu0 %960
    %964 = vset.pattern.permute.xlu0 0
    %965 = vperm.xlu0 %964, %v138
    %v966 = vpop.permute.xlu0 %965
    %969 = vset.pattern.permute.xlu0 0
    %970 = vperm.xlu0 %969, %v139
    %v971 = vpop.permute.xlu0 %970
    %974 = vset.pattern.permute.xlu0 0
    %975 = vperm.xlu0 %974, %v140
    %v976 = vpop.permute.xlu0 %975
    %979 = vset.pattern.permute.xlu0 0
    %980 = vperm.xlu0 %979, %v141
    %v981 = vpop.permute.xlu0 %980
    %984 = vset.pattern.permute.xlu0 0
    %985 = vperm.xlu0 %984, %v142
    %v986 = vpop.permute.xlu0 %985
    %989 = vset.pattern.permute.xlu0 0
    %990 = vperm.xlu0 %989, %v143
    %v991 = vpop.permute.xlu0 %990
    %994 = vset.pattern.permute.xlu0 0
    %995 = vperm.xlu0 %994, %v144
    %v996 = vpop.permute.xlu0 %995
    %999 = vset.pattern.permute.xlu0 0
    %1000 = vperm.xlu0 %999, %v145
    %v1001 = vpop.permute.xlu0 %1000
    %1004 = vset.pattern.permute.xlu0 0
    %1005 = vperm.xlu0 %1004, %v146
    %v1006 = vpop.permute.xlu0 %1005
    %1009 = vset.pattern.permute.xlu0 0
    %1010 = vperm.xlu0 %1009, %v147
    %v1011 = vpop.permute.xlu0 %1010
    %1014 = vset.pattern.permute.xlu0 0
    %1015 = vperm.xlu0 %1014, %v148
    %v1016 = vpop.permute.xlu0 %1015
    %1019 = vset.pattern.permute.xlu0 0
    %1020 = vperm.xlu0 %1019, %v149
    %v1021 = vpop.permute.xlu0 %1020
    %1024 = vset.pattern.permute.xlu0 0
    %1025 = vperm.xlu0 %1024, %v150
    %v1026 = vpop.permute.xlu0 %1025
    %1029 = vset.pattern.permute.xlu0 0
    %1030 = vperm.xlu0 %1029, %v151
    %v1031 = vpop.permute.xlu0 %1030
    %1034 = vset.pattern.permute.xlu0 0
    %1035 = vperm.xlu0 %1034, %v152
    %v1036 = vpop.permute.xlu0 %1035
    %1039 = vset.pattern.permute.xlu0 0
    %1040 = vperm.xlu0 %1039, %v153
    %v1041 = vpop.permute.xlu0 %1040
    %1044 = vset.pattern.permute.xlu0 0
    %1045 = vperm.xlu0 %1044, %v154
    %v1046 = vpop.permute.xlu0 %1045
    %1049 = vset.pattern.permute.xlu0 0
    %1050 = vperm.xlu0 %1049, %v155
    %v1051 = vpop.permute.xlu0 %1050
    %1054 = vset.pattern.permute.xlu0 0
    %1055 = vperm.xlu0 %1054, %v156
    %v1056 = vpop.permute.xlu0 %1055
    %1059 = vset.pattern.permute.xlu0 0
    %1060 = vperm.xlu0 %1059, %v157
    %v1061 = vpop.permute.xlu0 %1060
    %1064 = vset.pattern.permute.xlu0 0
    %1065 = vperm.xlu0 %1064, %v158
    %v1066 = vpop.permute.xlu0 %1065
    %1069 = vset.pattern.permute.xlu0 0
    %1070 = vperm.xlu0 %1069, %v159
    %v1071 = vpop.permute.xlu0 %1070
    %1074 = vset.pattern.permute.xlu0 0
    %1075 = vperm.xlu0 %1074, %v160
    %v1076 = vpop.permute.xlu0 %1075
    %1079 = vset.pattern.permute.xlu0 0
    %1080 = vperm.xlu0 %1079, %v161
    %v1081 = vpop.permute.xlu0 %1080
    %1084 = vset.pattern.permute.xlu0 0
    %1085 = vperm.xlu0 %1084, %v162
    %v1086 = vpop.permute.xlu0 %1085
    %1089 = vset.pattern.permute.xlu0 0
    %1090 = vperm.xlu0 %1089, %v163
    %v1091 = vpop.permute.xlu0 %1090
    %1094 = vset.pattern.permute.xlu0 0
    %1095 = vperm.xlu0 %1094, %v164
    %v1096 = vpop.permute.xlu0 %1095
    %1099 = vset.pattern.permute.xlu0 0
    %1100 = vperm.xlu0 %1099, %v165
    %v1101 = vpop.permute.xlu0 %1100
    %1104 = vset.pattern.permute.xlu0 0
    %1105 = vperm.xlu0 %1104, %v166
    %v1106 = vpop.permute.xlu0 %1105
    %1109 = vset.pattern.permute.xlu0 0
    %1110 = vperm.xlu0 %1109, %v167
    %v1111 = vpop.permute.xlu0 %1110
    %1114 = vset.pattern.permute.xlu0 0
    %1115 = vperm.xlu0 %1114, %v168
    %v1116 = vpop.permute.xlu0 %1115
    %v1118 = vmul.f32 %v961, %v800
    %v1119 = vmul.f32 %v966, %v804
    %v1120 = vmul.f32 %v971, %v810
    %v1121 = vmul.f32 %v976, %v814
    %v1122 = vmul.f32 %v981, %v820
    %v1123 = vmul.f32 %v986, %v824
    %v1124 = vmul.f32 %v991, %v830
    %v1125 = vmul.f32 %v996, %v834
    %v1126 = vmul.f32 %v1001, %v840
    %v1127 = vmul.f32 %v1006, %v844
    %v1128 = vmul.f32 %v1011, %v850
    %v1129 = vmul.f32 %v1016, %v854
    %v1130 = vmul.f32 %v1021, %v860
    %v1131 = vmul.f32 %v1026, %v864
    %v1132 = vmul.f32 %v1031, %v870
    %v1133 = vmul.f32 %v1036, %v874
    %v1134 = vmul.f32 %v1041, %v880
    %v1135 = vmul.f32 %v1046, %v884
    %v1136 = vmul.f32 %v1051, %v890
    %v1137 = vmul.f32 %v1056, %v894
    %v1138 = vmul.f32 %v1061, %v900
    %v1139 = vmul.f32 %v1066, %v904
    %v1140 = vmul.f32 %v1071, %v910
    %v1141 = vmul.f32 %v1076, %v914
    %v1142 = vmul.f32 %v1081, %v920
    %v1143 = vmul.f32 %v1086, %v924
    %v1144 = vmul.f32 %v1091, %v930
    %v1145 = vmul.f32 %v1096, %v934
    %v1146 = vmul.f32 %v1101, %v940
    %v1147 = vmul.f32 %v1106, %v944
    %v1148 = vmul.f32 %v1111, %v950
    %v1149 = vmul.f32 %v1116, %v954
    %v1150 = vxor.u32 %v800, 2147483648
    %v1151 = vxor.u32 %v804, 2147483648
    %v1152 = vxor.u32 %v810, 2147483648
    %v1153 = vxor.u32 %v814, 2147483648
    %v1154 = vxor.u32 %v820, 2147483648
    %v1155 = vxor.u32 %v824, 2147483648
    %v1156 = vxor.u32 %v830, 2147483648
    %v1157 = vxor.u32 %v834, 2147483648
    %v1158 = vxor.u32 %v840, 2147483648
    %v1159 = vxor.u32 %v844, 2147483648
    %v1160 = vxor.u32 %v850, 2147483648
    %v1161 = vxor.u32 %v854, 2147483648
    %v1162 = vxor.u32 %v860, 2147483648
    %v1163 = vxor.u32 %v864, 2147483648
    %v1164 = vxor.u32 %v870, 2147483648
    %v1165 = vxor.u32 %v874, 2147483648
    %v1166 = vxor.u32 %v880, 2147483648
    %v1167 = vxor.u32 %v884, 2147483648
    %v1168 = vxor.u32 %v890, 2147483648
    %v1169 = vxor.u32 %v894, 2147483648
    %v1170 = vxor.u32 %v900, 2147483648
    %v1171 = vxor.u32 %v904, 2147483648
    %v1172 = vxor.u32 %v910, 2147483648
    %v1173 = vxor.u32 %v914, 2147483648
    %v1174 = vxor.u32 %v920, 2147483648
    %v1175 = vxor.u32 %v924, 2147483648
    %v1176 = vxor.u32 %v930, 2147483648
    %v1177 = vxor.u32 %v934, 2147483648
    %v1178 = vxor.u32 %v940, 2147483648
    %v1179 = vxor.u32 %v944, 2147483648
    %v1180 = vxor.u32 %v950, 2147483648
    %v1181 = vxor.u32 %v954, 2147483648
    %v1182 = vmul.f32 %v1150, 1.442695
    %v1183 = vpow.pop %v1182
    %v1184 = vmul.f32 %v1151, 1.442695
    %v1185 = vpow.pop %v1184
    %v1186 = vmul.f32 %v1152, 1.442695
    %v1187 = vpow.pop %v1186
    %v1188 = vmul.f32 %v1153, 1.442695
    %v1189 = vpow.pop %v1188
    %v1190 = vmul.f32 %v1154, 1.442695
    %v1191 = vpow.pop %v1190
    %v1192 = vmul.f32 %v1155, 1.442695
    %v1193 = vpow.pop %v1192
    %v1194 = vmul.f32 %v1156, 1.442695
    %v1195 = vpow.pop %v1194
    %v1196 = vmul.f32 %v1157, 1.442695
    %v1197 = vpow.pop %v1196
    %v1198 = vmul.f32 %v1158, 1.442695
    %v1199 = vpow.pop %v1198
    %v1200 = vmul.f32 %v1159, 1.442695
    %v1201 = vpow.pop %v1200
    %v1202 = vmul.f32 %v1160, 1.442695
    %v1203 = vpow.pop %v1202
    %v1204 = vmul.f32 %v1161, 1.442695
    %v1205 = vpow.pop %v1204
    %v1206 = vmul.f32 %v1162, 1.442695
    %v1207 = vpow.pop %v1206
    %v1208 = vmul.f32 %v1163, 1.442695
    %v1209 = vpow.pop %v1208
    %v1210 = vmul.f32 %v1164, 1.442695
    %v1211 = vpow.pop %v1210
    %v1212 = vmul.f32 %v1165, 1.442695
    %v1213 = vpow.pop %v1212
    %v1214 = vmul.f32 %v1166, 1.442695
    %v1215 = vpow.pop %v1214
    %v1216 = vmul.f32 %v1167, 1.442695
    %v1217 = vpow.pop %v1216
    %v1218 = vmul.f32 %v1168, 1.442695
    %v1219 = vpow.pop %v1218
    %v1220 = vmul.f32 %v1169, 1.442695
    %v1221 = vpow.pop %v1220
    %v1222 = vmul.f32 %v1170, 1.442695
    %v1223 = vpow.pop %v1222
    %v1224 = vmul.f32 %v1171, 1.442695
    %v1225 = vpow.pop %v1224
    %v1226 = vmul.f32 %v1172, 1.442695
    %v1227 = vpow.pop %v1226
    %v1228 = vmul.f32 %v1173, 1.442695
    %v1229 = vpow.pop %v1228
    %v1230 = vmul.f32 %v1174, 1.442695
    %v1231 = vpow.pop %v1230
    %v1232 = vmul.f32 %v1175, 1.442695
    %v1233 = vpow.pop %v1232
    %v1234 = vmul.f32 %v1176, 1.442695
    %v1235 = vpow.pop %v1234
    %v1236 = vmul.f32 %v1177, 1.442695
    %v1237 = vpow.pop %v1236
    %v1238 = vmul.f32 %v1178, 1.442695
    %v1239 = vpow.pop %v1238
    %v1240 = vmul.f32 %v1179, 1.442695
    %v1241 = vpow.pop %v1240
    %v1242 = vmul.f32 %v1180, 1.442695
    %v1243 = vpow.pop %v1242
    %v1244 = vmul.f32 %v1181, 1.442695
    %v1245 = vpow.pop %v1244
    %v1246 = vadd.f32 %v1183, 1.0
    %v1247 = vadd.f32 %v1185, 1.0
    %v1248 = vadd.f32 %v1187, 1.0
    %v1249 = vadd.f32 %v1189, 1.0
    %v1250 = vadd.f32 %v1191, 1.0
    %v1251 = vadd.f32 %v1193, 1.0
    %v1252 = vadd.f32 %v1195, 1.0
    %v1253 = vadd.f32 %v1197, 1.0
    %v1254 = vadd.f32 %v1199, 1.0
    %v1255 = vadd.f32 %v1201, 1.0
    %v1256 = vadd.f32 %v1203, 1.0
    %v1257 = vadd.f32 %v1205, 1.0
    %v1258 = vadd.f32 %v1207, 1.0
    %v1259 = vadd.f32 %v1209, 1.0
    %v1260 = vadd.f32 %v1211, 1.0
    %v1261 = vadd.f32 %v1213, 1.0
    %v1262 = vadd.f32 %v1215, 1.0
    %v1263 = vadd.f32 %v1217, 1.0
    %v1264 = vadd.f32 %v1219, 1.0
    %v1265 = vadd.f32 %v1221, 1.0
    %v1266 = vadd.f32 %v1223, 1.0
    %v1267 = vadd.f32 %v1225, 1.0
    %v1268 = vadd.f32 %v1227, 1.0
    %v1269 = vadd.f32 %v1229, 1.0
    %v1270 = vadd.f32 %v1231, 1.0
    %v1271 = vadd.f32 %v1233, 1.0
    %v1272 = vadd.f32 %v1235, 1.0
    %v1273 = vadd.f32 %v1237, 1.0
    %v1274 = vadd.f32 %v1239, 1.0
    %v1275 = vadd.f32 %v1241, 1.0
    %v1276 = vadd.f32 %v1243, 1.0
    %v1277 = vadd.f32 %v1245, 1.0
    %v1278 = vrcp.pop %v1246
    %v1279 = vmul.f32 1.0, %v1278
    %v1280 = vrcp.pop %v1247
    %v1281 = vmul.f32 1.0, %v1280
    %v1282 = vrcp.pop %v1248
    %v1283 = vmul.f32 1.0, %v1282
    %v1284 = vrcp.pop %v1249
    %v1285 = vmul.f32 1.0, %v1284
    %v1286 = vrcp.pop %v1250
    %v1287 = vmul.f32 1.0, %v1286
    %v1288 = vrcp.pop %v1251
    %v1289 = vmul.f32 1.0, %v1288
    %v1290 = vrcp.pop %v1252
    %v1291 = vmul.f32 1.0, %v1290
    %v1292 = vrcp.pop %v1253
    %v1293 = vmul.f32 1.0, %v1292
    %v1294 = vrcp.pop %v1254
    %v1295 = vmul.f32 1.0, %v1294
    %v1296 = vrcp.pop %v1255
    %v1297 = vmul.f32 1.0, %v1296
    %v1298 = vrcp.pop %v1256
    %v1299 = vmul.f32 1.0, %v1298
    %v1300 = vrcp.pop %v1257
    %v1301 = vmul.f32 1.0, %v1300
    %v1302 = vrcp.pop %v1258
    %v1303 = vmul.f32 1.0, %v1302
    %v1304 = vrcp.pop %v1259
    %v1305 = vmul.f32 1.0, %v1304
    %v1306 = vrcp.pop %v1260
    %v1307 = vmul.f32 1.0, %v1306
    %v1308 = vrcp.pop %v1261
    %v1309 = vmul.f32 1.0, %v1308
    %v1310 = vrcp.pop %v1262
    %v1311 = vmul.f32 1.0, %v1310
    %v1312 = vrcp.pop %v1263
    %v1313 = vmul.f32 1.0, %v1312
    %v1314 = vrcp.pop %v1264
    %v1315 = vmul.f32 1.0, %v1314
    %v1316 = vrcp.pop %v1265
    %v1317 = vmul.f32 1.0, %v1316
    %v1318 = vrcp.pop %v1266
    %v1319 = vmul.f32 1.0, %v1318
    %v1320 = vrcp.pop %v1267
    %v1321 = vmul.f32 1.0, %v1320
    %v1322 = vrcp.pop %v1268
    %v1323 = vmul.f32 1.0, %v1322
    %v1324 = vrcp.pop %v1269
    %v1325 = vmul.f32 1.0, %v1324
    %v1326 = vrcp.pop %v1270
    %v1327 = vmul.f32 1.0, %v1326
    %v1328 = vrcp.pop %v1271
    %v1329 = vmul.f32 1.0, %v1328
    %v1330 = vrcp.pop %v1272
    %v1331 = vmul.f32 1.0, %v1330
    %v1332 = vrcp.pop %v1273
    %v1333 = vmul.f32 1.0, %v1332
    %v1334 = vrcp.pop %v1274
    %v1335 = vmul.f32 1.0, %v1334
    %v1336 = vrcp.pop %v1275
    %v1337 = vmul.f32 1.0, %v1336
    %v1338 = vrcp.pop %v1276
    %v1339 = vmul.f32 1.0, %v1338
    %v1340 = vrcp.pop %v1277
    %v1341 = vmul.f32 1.0, %v1340
    %1374 = vrot.lane.b32.xlu0 %v1279, 64
    %v1375 = vpop.permute.xlu0 %1374
    %1376 = vrot.lane.b32.xlu0 %v1281, 64
    %v1377 = vpop.permute.xlu0 %1376
    %1378 = vrot.lane.b32.xlu0 %v1283, 64
    %v1379 = vpop.permute.xlu0 %1378
    %1380 = vrot.lane.b32.xlu0 %v1285, 64
    %v1381 = vpop.permute.xlu0 %1380
    %1382 = vrot.lane.b32.xlu0 %v1287, 64
    %v1383 = vpop.permute.xlu0 %1382
    %1384 = vrot.lane.b32.xlu0 %v1289, 64
    %v1385 = vpop.permute.xlu0 %1384
    %1386 = vrot.lane.b32.xlu0 %v1291, 64
    %v1387 = vpop.permute.xlu0 %1386
    %1388 = vrot.lane.b32.xlu0 %v1293, 64
    %v1389 = vpop.permute.xlu0 %1388
    %1390 = vrot.lane.b32.xlu0 %v1295, 64
    %v1391 = vpop.permute.xlu0 %1390
    %1392 = vrot.lane.b32.xlu0 %v1297, 64
    %v1393 = vpop.permute.xlu0 %1392
    %1394 = vrot.lane.b32.xlu0 %v1299, 64
    %v1395 = vpop.permute.xlu0 %1394
    %1396 = vrot.lane.b32.xlu0 %v1301, 64
    %v1397 = vpop.permute.xlu0 %1396
    %1398 = vrot.lane.b32.xlu0 %v1303, 64
    %v1399 = vpop.permute.xlu0 %1398
    %1400 = vrot.lane.b32.xlu0 %v1305, 64
    %v1401 = vpop.permute.xlu0 %1400
    %1402 = vrot.lane.b32.xlu0 %v1307, 64
    %v1403 = vpop.permute.xlu0 %1402
    %1404 = vrot.lane.b32.xlu0 %v1309, 64
    %v1405 = vpop.permute.xlu0 %1404
    %1406 = vrot.lane.b32.xlu0 %v1311, 64
    %v1407 = vpop.permute.xlu0 %1406
    %1408 = vrot.lane.b32.xlu0 %v1313, 64
    %v1409 = vpop.permute.xlu0 %1408
    %1410 = vrot.lane.b32.xlu0 %v1315, 64
    %v1411 = vpop.permute.xlu0 %1410
    %1412 = vrot.lane.b32.xlu0 %v1317, 64
    %v1413 = vpop.permute.xlu0 %1412
    %1414 = vrot.lane.b32.xlu0 %v1319, 64
    %v1415 = vpop.permute.xlu0 %1414
    %1416 = vrot.lane.b32.xlu0 %v1321, 64
    %v1417 = vpop.permute.xlu0 %1416
    %1418 = vrot.lane.b32.xlu0 %v1323, 64
    %v1419 = vpop.permute.xlu0 %1418
    %1420 = vrot.lane.b32.xlu0 %v1325, 64
    %v1421 = vpop.permute.xlu0 %1420
    %1422 = vrot.lane.b32.xlu0 %v1327, 64
    %v1423 = vpop.permute.xlu0 %1422
    %1424 = vrot.lane.b32.xlu0 %v1329, 64
    %v1425 = vpop.permute.xlu0 %1424
    %1426 = vrot.lane.b32.xlu0 %v1331, 64
    %v1427 = vpop.permute.xlu0 %1426
    %1428 = vrot.lane.b32.xlu0 %v1333, 64
    %v1429 = vpop.permute.xlu0 %1428
    %1430 = vrot.lane.b32.xlu0 %v1335, 64
    %v1431 = vpop.permute.xlu0 %1430
    %1432 = vrot.lane.b32.xlu0 %v1337, 64
    %v1433 = vpop.permute.xlu0 %1432
    %1434 = vrot.lane.b32.xlu0 %v1339, 64
    %v1435 = vpop.permute.xlu0 %1434
    %1436 = vrot.lane.b32.xlu0 %v1341, 64
    %v1437 = vpop.permute.xlu0 %1436
    %v1470 = vmul.f32 %v1118, %v1375
    %v1471 = vmul.f32 %v1119, %v1377
    %v1472 = vmul.f32 %v1120, %v1379
    %v1473 = vmul.f32 %v1121, %v1381
    %v1474 = vmul.f32 %v1122, %v1383
    %v1475 = vmul.f32 %v1123, %v1385
    %v1476 = vmul.f32 %v1124, %v1387
    %v1477 = vmul.f32 %v1125, %v1389
    %v1478 = vmul.f32 %v1126, %v1391
    %v1479 = vmul.f32 %v1127, %v1393
    %v1480 = vmul.f32 %v1128, %v1395
    %v1481 = vmul.f32 %v1129, %v1397
    %v1482 = vmul.f32 %v1130, %v1399
    %v1483 = vmul.f32 %v1131, %v1401
    %v1484 = vmul.f32 %v1132, %v1403
    %v1485 = vmul.f32 %v1133, %v1405
    %v1486 = vmul.f32 %v1134, %v1407
    %v1487 = vmul.f32 %v1135, %v1409
    %v1488 = vmul.f32 %v1136, %v1411
    %v1489 = vmul.f32 %v1137, %v1413
    %v1490 = vmul.f32 %v1138, %v1415
    %v1491 = vmul.f32 %v1139, %v1417
    %v1492 = vmul.f32 %v1140, %v1419
    %v1493 = vmul.f32 %v1141, %v1421
    %v1494 = vmul.f32 %v1142, %v1423
    %v1495 = vmul.f32 %v1143, %v1425
    %v1496 = vmul.f32 %v1144, %v1427
    %v1497 = vmul.f32 %v1145, %v1429
    %v1498 = vmul.f32 %v1146, %v1431
    %v1499 = vmul.f32 %v1147, %v1433
    %v1500 = vmul.f32 %v1148, %v1435
    %v1501 = vmul.f32 %v1149, %v1437
    %v1502 = vpack.c.bf16 %v1471, %v1470
    %v1503 = vpack.c.bf16 %v1473, %v1472
    %v1504 = vpack.c.bf16 %v1475, %v1474
    %v1505 = vpack.c.bf16 %v1477, %v1476
    %v1506 = vpack.c.bf16 %v1479, %v1478
    %v1507 = vpack.c.bf16 %v1481, %v1480
    %v1508 = vpack.c.bf16 %v1483, %v1482
    %v1509 = vpack.c.bf16 %v1485, %v1484
    %v1510 = vpack.c.bf16 %v1487, %v1486
    %v1511 = vpack.c.bf16 %v1489, %v1488
    %v1512 = vpack.c.bf16 %v1491, %v1490
    %v1513 = vpack.c.bf16 %v1493, %v1492
    %v1514 = vpack.c.bf16 %v1495, %v1494
    %v1515 = vpack.c.bf16 %v1497, %v1496
    %v1516 = vpack.c.bf16 %v1499, %v1498
    %v1517 = vpack.c.bf16 %v1501, %v1500
    %v1518 = vxor.u32 %v802, 2147483648
    %v1519 = vxor.u32 %v806, 2147483648
    %v1520 = vxor.u32 %v812, 2147483648
    %v1521 = vxor.u32 %v816, 2147483648
    %v1522 = vxor.u32 %v822, 2147483648
    %v1523 = vxor.u32 %v826, 2147483648
    %v1524 = vxor.u32 %v832, 2147483648
    %v1525 = vxor.u32 %v836, 2147483648
    %v1526 = vxor.u32 %v842, 2147483648
    %v1527 = vxor.u32 %v846, 2147483648
    %v1528 = vxor.u32 %v852, 2147483648
    %v1529 = vxor.u32 %v856, 2147483648
    %v1530 = vxor.u32 %v862, 2147483648
    %v1531 = vxor.u32 %v866, 2147483648
    %v1532 = vxor.u32 %v872, 2147483648
    %v1533 = vxor.u32 %v876, 2147483648
    %v1534 = vxor.u32 %v882, 2147483648
    %v1535 = vxor.u32 %v886, 2147483648
    %v1536 = vxor.u32 %v892, 2147483648
    %v1537 = vxor.u32 %v896, 2147483648
    %v1538 = vxor.u32 %v902, 2147483648
    %v1539 = vxor.u32 %v906, 2147483648
    %v1540 = vxor.u32 %v912, 2147483648
    %v1541 = vxor.u32 %v916, 2147483648
    %v1542 = vxor.u32 %v922, 2147483648
    %v1543 = vxor.u32 %v926, 2147483648
    %v1544 = vxor.u32 %v932, 2147483648
    %v1545 = vxor.u32 %v936, 2147483648
    %v1546 = vxor.u32 %v942, 2147483648
    %v1547 = vxor.u32 %v946, 2147483648
    %v1548 = vxor.u32 %v952, 2147483648
    %v1549 = vxor.u32 %v956, 2147483648
    %v1550 = vmul.f32 %v1518, 1.442695
    %v1551 = vpow.pop %v1550
    %v1552 = vmul.f32 %v1519, 1.442695
    %v1553 = vpow.pop %v1552
    %v1554 = vmul.f32 %v1520, 1.442695
    %v1555 = vpow.pop %v1554
    %v1556 = vmul.f32 %v1521, 1.442695
    %v1557 = vpow.pop %v1556
    %v1558 = vmul.f32 %v1522, 1.442695
    %v1559 = vpow.pop %v1558
    %v1560 = vmul.f32 %v1523, 1.442695
    %v1561 = vpow.pop %v1560
    %v1562 = vmul.f32 %v1524, 1.442695
    %v1563 = vpow.pop %v1562
    %v1564 = vmul.f32 %v1525, 1.442695
    %v1565 = vpow.pop %v1564
    %v1566 = vmul.f32 %v1526, 1.442695
    %v1567 = vpow.pop %v1566
    %v1568 = vmul.f32 %v1527, 1.442695
    %v1569 = vpow.pop %v1568
    %v1570 = vmul.f32 %v1528, 1.442695
    %v1571 = vpow.pop %v1570
    %v1572 = vmul.f32 %v1529, 1.442695
    %v1573 = vpow.pop %v1572
    %v1574 = vmul.f32 %v1530, 1.442695
    %v1575 = vpow.pop %v1574
    %v1576 = vmul.f32 %v1531, 1.442695
    %v1577 = vpow.pop %v1576
    %v1578 = vmul.f32 %v1532, 1.442695
    %v1579 = vpow.pop %v1578
    %v1580 = vmul.f32 %v1533, 1.442695
    %v1581 = vpow.pop %v1580
    %v1582 = vmul.f32 %v1534, 1.442695
    %v1583 = vpow.pop %v1582
    %v1584 = vmul.f32 %v1535, 1.442695
    %v1585 = vpow.pop %v1584
    %v1586 = vmul.f32 %v1536, 1.442695
    %v1587 = vpow.pop %v1586
    %v1588 = vmul.f32 %v1537, 1.442695
    %v1589 = vpow.pop %v1588
    %v1590 = vmul.f32 %v1538, 1.442695
    %v1591 = vpow.pop %v1590
    %v1592 = vmul.f32 %v1539, 1.442695
    %v1593 = vpow.pop %v1592
    %v1594 = vmul.f32 %v1540, 1.442695
    %v1595 = vpow.pop %v1594
    %v1596 = vmul.f32 %v1541, 1.442695
    %v1597 = vpow.pop %v1596
    %v1598 = vmul.f32 %v1542, 1.442695
    %v1599 = vpow.pop %v1598
    %v1600 = vmul.f32 %v1543, 1.442695
    %v1601 = vpow.pop %v1600
    %v1602 = vmul.f32 %v1544, 1.442695
    %v1603 = vpow.pop %v1602
    %v1604 = vmul.f32 %v1545, 1.442695
    %v1605 = vpow.pop %v1604
    %v1606 = vmul.f32 %v1546, 1.442695
    %v1607 = vpow.pop %v1606
    %v1608 = vmul.f32 %v1547, 1.442695
    %v1609 = vpow.pop %v1608
    %v1610 = vmul.f32 %v1548, 1.442695
    %v1611 = vpow.pop %v1610
    %v1612 = vmul.f32 %v1549, 1.442695
    %v1613 = vpow.pop %v1612
    %v1614 = vadd.f32 %v1551, 1.0
    %v1615 = vadd.f32 %v1553, 1.0
    %v1616 = vadd.f32 %v1555, 1.0
    %v1617 = vadd.f32 %v1557, 1.0
    %v1618 = vadd.f32 %v1559, 1.0
    %v1619 = vadd.f32 %v1561, 1.0
    %v1620 = vadd.f32 %v1563, 1.0
    %v1621 = vadd.f32 %v1565, 1.0
    %v1622 = vadd.f32 %v1567, 1.0
    %v1623 = vadd.f32 %v1569, 1.0
    %v1624 = vadd.f32 %v1571, 1.0
    %v1625 = vadd.f32 %v1573, 1.0
    %v1626 = vadd.f32 %v1575, 1.0
    %v1627 = vadd.f32 %v1577, 1.0
    %v1628 = vadd.f32 %v1579, 1.0
    %v1629 = vadd.f32 %v1581, 1.0
    %v1630 = vadd.f32 %v1583, 1.0
    %v1631 = vadd.f32 %v1585, 1.0
    %v1632 = vadd.f32 %v1587, 1.0
    %v1633 = vadd.f32 %v1589, 1.0
    %v1634 = vadd.f32 %v1591, 1.0
    %v1635 = vadd.f32 %v1593, 1.0
    %v1636 = vadd.f32 %v1595, 1.0
    %v1637 = vadd.f32 %v1597, 1.0
    %v1638 = vadd.f32 %v1599, 1.0
    %v1639 = vadd.f32 %v1601, 1.0
    %v1640 = vadd.f32 %v1603, 1.0
    %v1641 = vadd.f32 %v1605, 1.0
    %v1642 = vadd.f32 %v1607, 1.0
    %v1643 = vadd.f32 %v1609, 1.0
    %v1644 = vadd.f32 %v1611, 1.0
    %v1645 = vadd.f32 %v1613, 1.0
    %v1646 = vrcp.pop %v1614
    %v1647 = vmul.f32 1.0, %v1646
    %v1648 = vrcp.pop %v1615
    %v1649 = vmul.f32 1.0, %v1648
    %v1650 = vrcp.pop %v1616
    %v1651 = vmul.f32 1.0, %v1650
    %v1652 = vrcp.pop %v1617
    %v1653 = vmul.f32 1.0, %v1652
    %v1654 = vrcp.pop %v1618
    %v1655 = vmul.f32 1.0, %v1654
    %v1656 = vrcp.pop %v1619
    %v1657 = vmul.f32 1.0, %v1656
    %v1658 = vrcp.pop %v1620
    %v1659 = vmul.f32 1.0, %v1658
    %v1660 = vrcp.pop %v1621
    %v1661 = vmul.f32 1.0, %v1660
    %v1662 = vrcp.pop %v1622
    %v1663 = vmul.f32 1.0, %v1662
    %v1664 = vrcp.pop %v1623
    %v1665 = vmul.f32 1.0, %v1664
    %v1666 = vrcp.pop %v1624
    %v1667 = vmul.f32 1.0, %v1666
    %v1668 = vrcp.pop %v1625
    %v1669 = vmul.f32 1.0, %v1668
    %v1670 = vrcp.pop %v1626
    %v1671 = vmul.f32 1.0, %v1670
    %v1672 = vrcp.pop %v1627
    %v1673 = vmul.f32 1.0, %v1672
    %v1674 = vrcp.pop %v1628
    %v1675 = vmul.f32 1.0, %v1674
    %v1676 = vrcp.pop %v1629
    %v1677 = vmul.f32 1.0, %v1676
    %v1678 = vrcp.pop %v1630
    %v1679 = vmul.f32 1.0, %v1678
    %v1680 = vrcp.pop %v1631
    %v1681 = vmul.f32 1.0, %v1680
    %v1682 = vrcp.pop %v1632
    %v1683 = vmul.f32 1.0, %v1682
    %v1684 = vrcp.pop %v1633
    %v1685 = vmul.f32 1.0, %v1684
    %v1686 = vrcp.pop %v1634
    %v1687 = vmul.f32 1.0, %v1686
    %v1688 = vrcp.pop %v1635
    %v1689 = vmul.f32 1.0, %v1688
    %v1690 = vrcp.pop %v1636
    %v1691 = vmul.f32 1.0, %v1690
    %v1692 = vrcp.pop %v1637
    %v1693 = vmul.f32 1.0, %v1692
    %v1694 = vrcp.pop %v1638
    %v1695 = vmul.f32 1.0, %v1694
    %v1696 = vrcp.pop %v1639
    %v1697 = vmul.f32 1.0, %v1696
    %v1698 = vrcp.pop %v1640
    %v1699 = vmul.f32 1.0, %v1698
    %v1700 = vrcp.pop %v1641
    %v1701 = vmul.f32 1.0, %v1700
    %v1702 = vrcp.pop %v1642
    %v1703 = vmul.f32 1.0, %v1702
    %v1704 = vrcp.pop %v1643
    %v1705 = vmul.f32 1.0, %v1704
    %v1706 = vrcp.pop %v1644
    %v1707 = vmul.f32 1.0, %v1706
    %v1708 = vrcp.pop %v1645
    %v1709 = vmul.f32 1.0, %v1708
    %v1710 = vpack.c.bf16 %v1649, %v1647
    %v1711 = vpack.c.bf16 %v1653, %v1651
    %v1712 = vpack.c.bf16 %v1657, %v1655
    %v1713 = vpack.c.bf16 %v1661, %v1659
    %v1714 = vpack.c.bf16 %v1665, %v1663
    %v1715 = vpack.c.bf16 %v1669, %v1667
    %v1716 = vpack.c.bf16 %v1673, %v1671
    %v1717 = vpack.c.bf16 %v1677, %v1675
    %v1718 = vpack.c.bf16 %v1681, %v1679
    %v1719 = vpack.c.bf16 %v1685, %v1683
    %v1720 = vpack.c.bf16 %v1689, %v1687
    %v1721 = vpack.c.bf16 %v1693, %v1691
    %v1722 = vpack.c.bf16 %v1697, %v1695
    %v1723 = vpack.c.bf16 %v1701, %v1699
    %v1724 = vpack.c.bf16 %v1705, %v1703
    %v1725 = vpack.c.bf16 %v1709, %v1707
    %1726 = vxpose.xlu0.c.b16.start [1/8] %v1502, 128
    %1727 = vxpose.xlu0.c.b16.cont [2/8] %v1503, 128
    %1728 = vxpose.xlu0.c.b16.cont [3/8] %v1504, 128
    %1729 = vxpose.xlu0.c.b16.cont [4/8] %v1505, 128
    %1730 = vxpose.xlu0.c.b16.cont [5/8] %v1506, 128
    %1731 = vxpose.xlu0.c.b16.cont [6/8] %v1507, 128
    %1732 = vxpose.xlu0.c.b16.cont [7/8] %v1508, 128
    %1733 = vxpose.xlu0.c.b16.end [8/8] %v1509, 128
    %v1734 = vpop.trf.xlu0
    %v1735 = vpop.trf.xlu0
    %v1736 = vpop.trf.xlu0
    %v1737 = vpop.trf.xlu0
    %v1738 = vpop.trf.xlu0
    %v1739 = vpop.trf.xlu0
    %v1740 = vpop.trf.xlu0
    %v1741 = vpop.trf.xlu0
    %1742 = vxpose.xlu0.c.b16.start [1/8] %v1510, 128
    %1743 = vxpose.xlu0.c.b16.cont [2/8] %v1511, 128
    %1744 = vxpose.xlu0.c.b16.cont [3/8] %v1512, 128
    %1745 = vxpose.xlu0.c.b16.cont [4/8] %v1513, 128
    %1746 = vxpose.xlu0.c.b16.cont [5/8] %v1514, 128
    %1747 = vxpose.xlu0.c.b16.cont [6/8] %v1515, 128
    %1748 = vxpose.xlu0.c.b16.cont [7/8] %v1516, 128
    %1749 = vxpose.xlu0.c.b16.end [8/8] %v1517, 128
    %v1750 = vpop.trf.xlu0
    %v1751 = vpop.trf.xlu0
    %v1752 = vpop.trf.xlu0
    %v1753 = vpop.trf.xlu0
    %v1754 = vpop.trf.xlu0
    %v1755 = vpop.trf.xlu0
    %v1756 = vpop.trf.xlu0
    %v1757 = vpop.trf.xlu0
    %1760 = vrot.lane.b32.xlu0 %v1734, 112
    %v1761 = vpop.permute.xlu0 %1760
    %1762 = vrot.lane.b32.xlu0 %v1735, 112
    %v1763 = vpop.permute.xlu0 %1762
    %1766 = vrot.lane.b32.xlu0 %v1734, 96
    %v1767 = vpop.permute.xlu0 %1766
    %1768 = vrot.lane.b32.xlu0 %v1735, 96
    %v1769 = vpop.permute.xlu0 %1768
    %1772 = vrot.lane.b32.xlu0 %v1734, 80
    %v1773 = vpop.permute.xlu0 %1772
    %1774 = vrot.lane.b32.xlu0 %v1735, 80
    %v1775 = vpop.permute.xlu0 %1774
    %1778 = vrot.lane.b32.xlu0 %v1734, 64
    %v1779 = vpop.permute.xlu0 %1778
    %1780 = vrot.lane.b32.xlu0 %v1735, 64
    %v1781 = vpop.permute.xlu0 %1780
    %1784 = vrot.lane.b32.xlu0 %v1734, 48
    %v1785 = vpop.permute.xlu0 %1784
    %1786 = vrot.lane.b32.xlu0 %v1735, 48
    %v1787 = vpop.permute.xlu0 %1786
    %1790 = vrot.lane.b32.xlu0 %v1734, 32
    %v1791 = vpop.permute.xlu0 %1790
    %1792 = vrot.lane.b32.xlu0 %v1735, 32
    %v1793 = vpop.permute.xlu0 %1792
    %1796 = vrot.lane.b32.xlu0 %v1734, 16
    %v1797 = vpop.permute.xlu0 %1796
    %1798 = vrot.lane.b32.xlu0 %v1735, 16
    %v1799 = vpop.permute.xlu0 %1798
    %1804 = vrot.lane.b32.xlu0 %v1750, 112
    %v1805 = vpop.permute.xlu0 %1804
    %1806 = vrot.lane.b32.xlu0 %v1751, 112
    %v1807 = vpop.permute.xlu0 %1806
    %1810 = vrot.lane.b32.xlu0 %v1750, 96
    %v1811 = vpop.permute.xlu0 %1810
    %1812 = vrot.lane.b32.xlu0 %v1751, 96
    %v1813 = vpop.permute.xlu0 %1812
    %1816 = vrot.lane.b32.xlu0 %v1750, 80
    %v1817 = vpop.permute.xlu0 %1816
    %1818 = vrot.lane.b32.xlu0 %v1751, 80
    %v1819 = vpop.permute.xlu0 %1818
    %1822 = vrot.lane.b32.xlu0 %v1750, 64
    %v1823 = vpop.permute.xlu0 %1822
    %1824 = vrot.lane.b32.xlu0 %v1751, 64
    %v1825 = vpop.permute.xlu0 %1824
    %1828 = vrot.lane.b32.xlu0 %v1750, 48
    %v1829 = vpop.permute.xlu0 %1828
    %1830 = vrot.lane.b32.xlu0 %v1751, 48
    %v1831 = vpop.permute.xlu0 %1830
    %1834 = vrot.lane.b32.xlu0 %v1750, 32
    %v1835 = vpop.permute.xlu0 %1834
    %1836 = vrot.lane.b32.xlu0 %v1751, 32
    %v1837 = vpop.permute.xlu0 %1836
    %1840 = vrot.lane.b32.xlu0 %v1750, 16
    %v1841 = vpop.permute.xlu0 %1840
    %1842 = vrot.lane.b32.xlu0 %v1751, 16
    %v1843 = vpop.permute.xlu0 %1842
    %v1846 = vcombine.low %v1734, %v1779
    %v1847 = vcombine.high %v1734, %v1779
    %v1849 = vunpack.c.l.s4 1983009808
    %v1850 = vunpack.c.0.s8 %v1849
    %v1851 = vlaneseq
    %v1852 = vshrl.u32 %v1851, 7
    %v1853 = vsub.s32 %v1850, %v1852
    %v1854 = vrot.slane %v1846, %v1853
    %v1856 = vunpack.c.l.s4 1983009808
    %v1857 = vunpack.c.0.s8 %v1856
    %v1858 = vlaneseq
    %v1859 = vshrl.u32 %v1858, 7
    %v1860 = vsub.s32 %v1857, %v1859
    %v1861 = vrot.slane %v1847, %v1860
    %v1862 = vcombine.low %v1767, %v1791
    %v1863 = vcombine.high %v1767, %v1791
    %v1865 = vunpack.c.l.s4 1983009808
    %v1866 = vunpack.c.0.s8 %v1865
    %v1867 = vlaneseq
    %v1868 = vshrl.u32 %v1867, 7
    %v1869 = vsub.s32 %v1866, %v1868
    %v1870 = vrot.slane %v1862, %v1869
    %v1872 = vunpack.c.l.s4 1983009808
    %v1873 = vunpack.c.0.s8 %v1872
    %v1874 = vlaneseq
    %v1875 = vshrl.u32 %v1874, 7
    %v1876 = vsub.s32 %v1873, %v1875
    %v1877 = vrot.slane %v1863, %v1876
    %v1878 = vcombine.low %v1750, %v1823
    %v1879 = vcombine.high %v1750, %v1823
    %v1881 = vunpack.c.l.s4 1983009808
    %v1882 = vunpack.c.0.s8 %v1881
    %v1883 = vlaneseq
    %v1884 = vshrl.u32 %v1883, 7
    %v1885 = vsub.s32 %v1882, %v1884
    %v1886 = vrot.slane %v1878, %v1885
    %v1888 = vunpack.c.l.s4 1983009808
    %v1889 = vunpack.c.0.s8 %v1888
    %v1890 = vlaneseq
    %v1891 = vshrl.u32 %v1890, 7
    %v1892 = vsub.s32 %v1889, %v1891
    %v1893 = vrot.slane %v1879, %v1892
    %v1894 = vcombine.low %v1811, %v1835
    %v1895 = vcombine.high %v1811, %v1835
    %v1897 = vunpack.c.l.s4 1983009808
    %v1898 = vunpack.c.0.s8 %v1897
    %v1899 = vlaneseq
    %v1900 = vshrl.u32 %v1899, 7
    %v1901 = vsub.s32 %v1898, %v1900
    %v1902 = vrot.slane %v1894, %v1901
    %v1904 = vunpack.c.l.s4 1983009808
    %v1905 = vunpack.c.0.s8 %v1904
    %v1906 = vlaneseq
    %v1907 = vshrl.u32 %v1906, 7
    %v1908 = vsub.s32 %v1905, %v1907
    %v1909 = vrot.slane %v1895, %v1908
    %v1910 = vcombine.low %v1854, %v1870
    %v1911 = vcombine.high %v1854, %v1870
    %v1913 = vunpack.c.l.s4 1934713408
    %v1914 = vunpack.c.0.s8 %v1913
    %v1915 = vlaneseq
    %v1916 = vshrl.u32 %v1915, 7
    %v1917 = vsub.s32 %v1914, %v1916
    %v1918 = vrot.slane %v1910, %v1917
    %v1920 = vunpack.c.l.s4 1934713408
    %v1921 = vunpack.c.0.s8 %v1920
    %v1922 = vlaneseq
    %v1923 = vshrl.u32 %v1922, 7
    %v1924 = vsub.s32 %v1921, %v1923
    %v1925 = vrot.slane %v1911, %v1924
    %v1926 = vcombine.low %v1861, %v1877
    %v1927 = vcombine.high %v1861, %v1877
    %v1929 = vunpack.c.l.s4 1934713408
    %v1930 = vunpack.c.0.s8 %v1929
    %v1931 = vlaneseq
    %v1932 = vshrl.u32 %v1931, 7
    %v1933 = vsub.s32 %v1930, %v1932
    %v1934 = vrot.slane %v1926, %v1933
    %v1936 = vunpack.c.l.s4 1934713408
    %v1937 = vunpack.c.0.s8 %v1936
    %v1938 = vlaneseq
    %v1939 = vshrl.u32 %v1938, 7
    %v1940 = vsub.s32 %v1937, %v1939
    %v1941 = vrot.slane %v1927, %v1940
    %v1942 = vcombine.low %v1886, %v1902
    %v1943 = vcombine.high %v1886, %v1902
    %v1945 = vunpack.c.l.s4 1934713408
    %v1946 = vunpack.c.0.s8 %v1945
    %v1947 = vlaneseq
    %v1948 = vshrl.u32 %v1947, 7
    %v1949 = vsub.s32 %v1946, %v1948
    %v1950 = vrot.slane %v1942, %v1949
    %v1952 = vunpack.c.l.s4 1934713408
    %v1953 = vunpack.c.0.s8 %v1952
    %v1954 = vlaneseq
    %v1955 = vshrl.u32 %v1954, 7
    %v1956 = vsub.s32 %v1953, %v1955
    %v1957 = vrot.slane %v1943, %v1956
    %v1958 = vcombine.low %v1893, %v1909
    %v1959 = vcombine.high %v1893, %v1909
    %v1961 = vunpack.c.l.s4 1934713408
    %v1962 = vunpack.c.0.s8 %v1961
    %v1963 = vlaneseq
    %v1964 = vshrl.u32 %v1963, 7
    %v1965 = vsub.s32 %v1962, %v1964
    %v1966 = vrot.slane %v1958, %v1965
    %v1968 = vunpack.c.l.s4 1934713408
    %v1969 = vunpack.c.0.s8 %v1968
    %v1970 = vlaneseq
    %v1971 = vshrl.u32 %v1970, 7
    %v1972 = vsub.s32 %v1969, %v1971
    %v1973 = vrot.slane %v1959, %v1972
    %v1974 = vcombine.low %v1918, %v1950
    %v1975 = vcombine.high %v1918, %v1950
    %v1976 = vcombine.low %v1925, %v1957
    %v1977 = vcombine.high %v1925, %v1957
    %v1978 = vcombine.low %v1934, %v1966
    %v1979 = vcombine.high %v1934, %v1966
    %v1980 = vcombine.low %v1941, %v1973
    %v1981 = vcombine.high %v1941, %v1973
    %v1982 = vcombine.low %v1761, %v1785
    %v1983 = vcombine.high %v1761, %v1785
    %v1985 = vunpack.c.l.s4 1983009808
    %v1986 = vunpack.c.0.s8 %v1985
    %v1987 = vlaneseq
    %v1988 = vshrl.u32 %v1987, 7
    %v1989 = vsub.s32 %v1986, %v1988
    %v1990 = vrot.slane %v1982, %v1989
    %v1992 = vunpack.c.l.s4 1983009808
    %v1993 = vunpack.c.0.s8 %v1992
    %v1994 = vlaneseq
    %v1995 = vshrl.u32 %v1994, 7
    %v1996 = vsub.s32 %v1993, %v1995
    %v1997 = vrot.slane %v1983, %v1996
    %v1998 = vcombine.low %v1773, %v1797
    %v1999 = vcombine.high %v1773, %v1797
    %v2001 = vunpack.c.l.s4 1983009808
    %v2002 = vunpack.c.0.s8 %v2001
    %v2003 = vlaneseq
    %v2004 = vshrl.u32 %v2003, 7
    %v2005 = vsub.s32 %v2002, %v2004
    %v2006 = vrot.slane %v1998, %v2005
    %v2008 = vunpack.c.l.s4 1983009808
    %v2009 = vunpack.c.0.s8 %v2008
    %v2010 = vlaneseq
    %v2011 = vshrl.u32 %v2010, 7
    %v2012 = vsub.s32 %v2009, %v2011
    %v2013 = vrot.slane %v1999, %v2012
    %v2014 = vcombine.low %v1805, %v1829
    %v2015 = vcombine.high %v1805, %v1829
    %v2017 = vunpack.c.l.s4 1983009808
    %v2018 = vunpack.c.0.s8 %v2017
    %v2019 = vlaneseq
    %v2020 = vshrl.u32 %v2019, 7
    %v2021 = vsub.s32 %v2018, %v2020
    %v2022 = vrot.slane %v2014, %v2021
    %v2024 = vunpack.c.l.s4 1983009808
    %v2025 = vunpack.c.0.s8 %v2024
    %v2026 = vlaneseq
    %v2027 = vshrl.u32 %v2026, 7
    %v2028 = vsub.s32 %v2025, %v2027
    %v2029 = vrot.slane %v2015, %v2028
    %v2030 = vcombine.low %v1817, %v1841
    %v2031 = vcombine.high %v1817, %v1841
    %v2033 = vunpack.c.l.s4 1983009808
    %v2034 = vunpack.c.0.s8 %v2033
    %v2035 = vlaneseq
    %v2036 = vshrl.u32 %v2035, 7
    %v2037 = vsub.s32 %v2034, %v2036
    %v2038 = vrot.slane %v2030, %v2037
    %v2040 = vunpack.c.l.s4 1983009808
    %v2041 = vunpack.c.0.s8 %v2040
    %v2042 = vlaneseq
    %v2043 = vshrl.u32 %v2042, 7
    %v2044 = vsub.s32 %v2041, %v2043
    %v2045 = vrot.slane %v2031, %v2044
    %v2046 = vcombine.low %v1990, %v2006
    %v2047 = vcombine.high %v1990, %v2006
    %v2049 = vunpack.c.l.s4 1934713408
    %v2050 = vunpack.c.0.s8 %v2049
    %v2051 = vlaneseq
    %v2052 = vshrl.u32 %v2051, 7
    %v2053 = vsub.s32 %v2050, %v2052
    %v2054 = vrot.slane %v2046, %v2053
    %v2056 = vunpack.c.l.s4 1934713408
    %v2057 = vunpack.c.0.s8 %v2056
    %v2058 = vlaneseq
    %v2059 = vshrl.u32 %v2058, 7
    %v2060 = vsub.s32 %v2057, %v2059
    %v2061 = vrot.slane %v2047, %v2060
    %v2062 = vcombine.low %v1997, %v2013
    %v2063 = vcombine.high %v1997, %v2013
    %v2065 = vunpack.c.l.s4 1934713408
    %v2066 = vunpack.c.0.s8 %v2065
    %v2067 = vlaneseq
    %v2068 = vshrl.u32 %v2067, 7
    %v2069 = vsub.s32 %v2066, %v2068
    %v2070 = vrot.slane %v2062, %v2069
    %v2072 = vunpack.c.l.s4 1934713408
    %v2073 = vunpack.c.0.s8 %v2072
    %v2074 = vlaneseq
    %v2075 = vshrl.u32 %v2074, 7
    %v2076 = vsub.s32 %v2073, %v2075
    %v2077 = vrot.slane %v2063, %v2076
    %v2078 = vcombine.low %v2022, %v2038
    %v2079 = vcombine.high %v2022, %v2038
    %v2081 = vunpack.c.l.s4 1934713408
    %v2082 = vunpack.c.0.s8 %v2081
    %v2083 = vlaneseq
    %v2084 = vshrl.u32 %v2083, 7
    %v2085 = vsub.s32 %v2082, %v2084
    %v2086 = vrot.slane %v2078, %v2085
    %v2088 = vunpack.c.l.s4 1934713408
    %v2089 = vunpack.c.0.s8 %v2088
    %v2090 = vlaneseq
    %v2091 = vshrl.u32 %v2090, 7
    %v2092 = vsub.s32 %v2089, %v2091
    %v2093 = vrot.slane %v2079, %v2092
    %v2094 = vcombine.low %v2029, %v2045
    %v2095 = vcombine.high %v2029, %v2045
    %v2097 = vunpack.c.l.s4 1934713408
    %v2098 = vunpack.c.0.s8 %v2097
    %v2099 = vlaneseq
    %v2100 = vshrl.u32 %v2099, 7
    %v2101 = vsub.s32 %v2098, %v2100
    %v2102 = vrot.slane %v2094, %v2101
    %v2104 = vunpack.c.l.s4 1934713408
    %v2105 = vunpack.c.0.s8 %v2104
    %v2106 = vlaneseq
    %v2107 = vshrl.u32 %v2106, 7
    %v2108 = vsub.s32 %v2105, %v2107
    %v2109 = vrot.slane %v2095, %v2108
    %v2110 = vcombine.low %v2054, %v2086
    %v2111 = vcombine.high %v2054, %v2086
    %v2112 = vcombine.low %v2061, %v2093
    %v2113 = vcombine.high %v2061, %v2093
    %v2114 = vcombine.low %v2070, %v2102
    %v2115 = vcombine.high %v2070, %v2102
    %v2116 = vcombine.low %v2077, %v2109
    %v2117 = vcombine.high %v2077, %v2109
    %v2118 = vcombine.low %v1735, %v1781
    %v2119 = vcombine.high %v1735, %v1781
    %v2121 = vunpack.c.l.s4 1983009808
    %v2122 = vunpack.c.0.s8 %v2121
    %v2123 = vlaneseq
    %v2124 = vshrl.u32 %v2123, 7
    %v2125 = vsub.s32 %v2122, %v2124
    %v2126 = vrot.slane %v2118, %v2125
    %v2128 = vunpack.c.l.s4 1983009808
    %v2129 = vunpack.c.0.s8 %v2128
    %v2130 = vlaneseq
    %v2131 = vshrl.u32 %v2130, 7
    %v2132 = vsub.s32 %v2129, %v2131
    %v2133 = vrot.slane %v2119, %v2132
    %v2134 = vcombine.low %v1769, %v1793
    %v2135 = vcombine.high %v1769, %v1793
    %v2137 = vunpack.c.l.s4 1983009808
    %v2138 = vunpack.c.0.s8 %v2137
    %v2139 = vlaneseq
    %v2140 = vshrl.u32 %v2139, 7
    %v2141 = vsub.s32 %v2138, %v2140
    %v2142 = vrot.slane %v2134, %v2141
    %v2144 = vunpack.c.l.s4 1983009808
    %v2145 = vunpack.c.0.s8 %v2144
    %v2146 = vlaneseq
    %v2147 = vshrl.u32 %v2146, 7
    %v2148 = vsub.s32 %v2145, %v2147
    %v2149 = vrot.slane %v2135, %v2148
    %v2150 = vcombine.low %v1751, %v1825
    %v2151 = vcombine.high %v1751, %v1825
    %v2153 = vunpack.c.l.s4 1983009808
    %v2154 = vunpack.c.0.s8 %v2153
    %v2155 = vlaneseq
    %v2156 = vshrl.u32 %v2155, 7
    %v2157 = vsub.s32 %v2154, %v2156
    %v2158 = vrot.slane %v2150, %v2157
    %v2160 = vunpack.c.l.s4 1983009808
    %v2161 = vunpack.c.0.s8 %v2160
    %v2162 = vlaneseq
    %v2163 = vshrl.u32 %v2162, 7
    %v2164 = vsub.s32 %v2161, %v2163
    %v2165 = vrot.slane %v2151, %v2164
    %v2166 = vcombine.low %v1813, %v1837
    %v2167 = vcombine.high %v1813, %v1837
    %v2169 = vunpack.c.l.s4 1983009808
    %v2170 = vunpack.c.0.s8 %v2169
    %v2171 = vlaneseq
    %v2172 = vshrl.u32 %v2171, 7
    %v2173 = vsub.s32 %v2170, %v2172
    %v2174 = vrot.slane %v2166, %v2173
    %v2176 = vunpack.c.l.s4 1983009808
    %v2177 = vunpack.c.0.s8 %v2176
    %v2178 = vlaneseq
    %v2179 = vshrl.u32 %v2178, 7
    %v2180 = vsub.s32 %v2177, %v2179
    %v2181 = vrot.slane %v2167, %v2180
    %v2182 = vcombine.low %v2126, %v2142
    %v2183 = vcombine.high %v2126, %v2142
    %v2185 = vunpack.c.l.s4 1934713408
    %v2186 = vunpack.c.0.s8 %v2185
    %v2187 = vlaneseq
    %v2188 = vshrl.u32 %v2187, 7
    %v2189 = vsub.s32 %v2186, %v2188
    %v2190 = vrot.slane %v2182, %v2189
    %v2192 = vunpack.c.l.s4 1934713408
    %v2193 = vunpack.c.0.s8 %v2192
    %v2194 = vlaneseq
    %v2195 = vshrl.u32 %v2194, 7
    %v2196 = vsub.s32 %v2193, %v2195
    %v2197 = vrot.slane %v2183, %v2196
    %v2198 = vcombine.low %v2133, %v2149
    %v2199 = vcombine.high %v2133, %v2149
    %v2201 = vunpack.c.l.s4 1934713408
    %v2202 = vunpack.c.0.s8 %v2201
    %v2203 = vlaneseq
    %v2204 = vshrl.u32 %v2203, 7
    %v2205 = vsub.s32 %v2202, %v2204
    %v2206 = vrot.slane %v2198, %v2205
    %v2208 = vunpack.c.l.s4 1934713408
    %v2209 = vunpack.c.0.s8 %v2208
    %v2210 = vlaneseq
    %v2211 = vshrl.u32 %v2210, 7
    %v2212 = vsub.s32 %v2209, %v2211
    %v2213 = vrot.slane %v2199, %v2212
    %v2214 = vcombine.low %v2158, %v2174
    %v2215 = vcombine.high %v2158, %v2174
    %v2217 = vunpack.c.l.s4 1934713408
    %v2218 = vunpack.c.0.s8 %v2217
    %v2219 = vlaneseq
    %v2220 = vshrl.u32 %v2219, 7
    %v2221 = vsub.s32 %v2218, %v2220
    %v2222 = vrot.slane %v2214, %v2221
    %v2224 = vunpack.c.l.s4 1934713408
    %v2225 = vunpack.c.0.s8 %v2224
    %v2226 = vlaneseq
    %v2227 = vshrl.u32 %v2226, 7
    %v2228 = vsub.s32 %v2225, %v2227
    %v2229 = vrot.slane %v2215, %v2228
    %v2230 = vcombine.low %v2165, %v2181
    %v2231 = vcombine.high %v2165, %v2181
    %v2233 = vunpack.c.l.s4 1934713408
    %v2234 = vunpack.c.0.s8 %v2233
    %v2235 = vlaneseq
    %v2236 = vshrl.u32 %v2235, 7
    %v2237 = vsub.s32 %v2234, %v2236
    %v2238 = vrot.slane %v2230, %v2237
    %v2240 = vunpack.c.l.s4 1934713408
    %v2241 = vunpack.c.0.s8 %v2240
    %v2242 = vlaneseq
    %v2243 = vshrl.u32 %v2242, 7
    %v2244 = vsub.s32 %v2241, %v2243
    %v2245 = vrot.slane %v2231, %v2244
    %v2246 = vcombine.low %v2190, %v2222
    %v2247 = vcombine.high %v2190, %v2222
    %v2248 = vcombine.low %v2197, %v2229
    %v2249 = vcombine.high %v2197, %v2229
    %v2250 = vcombine.low %v2206, %v2238
    %v2251 = vcombine.high %v2206, %v2238
    %v2252 = vcombine.low %v2213, %v2245
    %v2253 = vcombine.high %v2213, %v2245
    %v2254 = vcombine.low %v1763, %v1787
    %v2255 = vcombine.high %v1763, %v1787
    %v2257 = vunpack.c.l.s4 1983009808
    %v2258 = vunpack.c.0.s8 %v2257
    %v2259 = vlaneseq
    %v2260 = vshrl.u32 %v2259, 7
    %v2261 = vsub.s32 %v2258, %v2260
    %v2262 = vrot.slane %v2254, %v2261
    %v2264 = vunpack.c.l.s4 1983009808
    %v2265 = vunpack.c.0.s8 %v2264
    %v2266 = vlaneseq
    %v2267 = vshrl.u32 %v2266, 7
    %v2268 = vsub.s32 %v2265, %v2267
    %v2269 = vrot.slane %v2255, %v2268
    %v2270 = vcombine.low %v1775, %v1799
    %v2271 = vcombine.high %v1775, %v1799
    %v2273 = vunpack.c.l.s4 1983009808
    %v2274 = vunpack.c.0.s8 %v2273
    %v2275 = vlaneseq
    %v2276 = vshrl.u32 %v2275, 7
    %v2277 = vsub.s32 %v2274, %v2276
    %v2278 = vrot.slane %v2270, %v2277
    %v2280 = vunpack.c.l.s4 1983009808
    %v2281 = vunpack.c.0.s8 %v2280
    %v2282 = vlaneseq
    %v2283 = vshrl.u32 %v2282, 7
    %v2284 = vsub.s32 %v2281, %v2283
    %v2285 = vrot.slane %v2271, %v2284
    %v2286 = vcombine.low %v1807, %v1831
    %v2287 = vcombine.high %v1807, %v1831
    %v2289 = vunpack.c.l.s4 1983009808
    %v2290 = vunpack.c.0.s8 %v2289
    %v2291 = vlaneseq
    %v2292 = vshrl.u32 %v2291, 7
    %v2293 = vsub.s32 %v2290, %v2292
    %v2294 = vrot.slane %v2286, %v2293
    %v2296 = vunpack.c.l.s4 1983009808
    %v2297 = vunpack.c.0.s8 %v2296
    %v2298 = vlaneseq
    %v2299 = vshrl.u32 %v2298, 7
    %v2300 = vsub.s32 %v2297, %v2299
    %v2301 = vrot.slane %v2287, %v2300
    %v2302 = vcombine.low %v1819, %v1843
    %v2303 = vcombine.high %v1819, %v1843
    %v2305 = vunpack.c.l.s4 1983009808
    %v2306 = vunpack.c.0.s8 %v2305
    %v2307 = vlaneseq
    %v2308 = vshrl.u32 %v2307, 7
    %v2309 = vsub.s32 %v2306, %v2308
    %v2310 = vrot.slane %v2302, %v2309
    %v2312 = vunpack.c.l.s4 1983009808
    %v2313 = vunpack.c.0.s8 %v2312
    %v2314 = vlaneseq
    %v2315 = vshrl.u32 %v2314, 7
    %v2316 = vsub.s32 %v2313, %v2315
    %v2317 = vrot.slane %v2303, %v2316
    %v2318 = vcombine.low %v2262, %v2278
    %v2319 = vcombine.high %v2262, %v2278
    %v2321 = vunpack.c.l.s4 1934713408
    %v2322 = vunpack.c.0.s8 %v2321
    %v2323 = vlaneseq
    %v2324 = vshrl.u32 %v2323, 7
    %v2325 = vsub.s32 %v2322, %v2324
    %v2326 = vrot.slane %v2318, %v2325
    %v2328 = vunpack.c.l.s4 1934713408
    %v2329 = vunpack.c.0.s8 %v2328
    %v2330 = vlaneseq
    %v2331 = vshrl.u32 %v2330, 7
    %v2332 = vsub.s32 %v2329, %v2331
    %v2333 = vrot.slane %v2319, %v2332
    %v2334 = vcombine.low %v2269, %v2285
    %v2335 = vcombine.high %v2269, %v2285
    %v2337 = vunpack.c.l.s4 1934713408
    %v2338 = vunpack.c.0.s8 %v2337
    %v2339 = vlaneseq
    %v2340 = vshrl.u32 %v2339, 7
    %v2341 = vsub.s32 %v2338, %v2340
    %v2342 = vrot.slane %v2334, %v2341
    %v2344 = vunpack.c.l.s4 1934713408
    %v2345 = vunpack.c.0.s8 %v2344
    %v2346 = vlaneseq
    %v2347 = vshrl.u32 %v2346, 7
    %v2348 = vsub.s32 %v2345, %v2347
    %v2349 = vrot.slane %v2335, %v2348
    %v2350 = vcombine.low %v2294, %v2310
    %v2351 = vcombine.high %v2294, %v2310
    %v2353 = vunpack.c.l.s4 1934713408
    %v2354 = vunpack.c.0.s8 %v2353
    %v2355 = vlaneseq
    %v2356 = vshrl.u32 %v2355, 7
    %v2357 = vsub.s32 %v2354, %v2356
    %v2358 = vrot.slane %v2350, %v2357
    %v2360 = vunpack.c.l.s4 1934713408
    %v2361 = vunpack.c.0.s8 %v2360
    %v2362 = vlaneseq
    %v2363 = vshrl.u32 %v2362, 7
    %v2364 = vsub.s32 %v2361, %v2363
    %v2365 = vrot.slane %v2351, %v2364
    %v2366 = vcombine.low %v2301, %v2317
    %v2367 = vcombine.high %v2301, %v2317
    %v2369 = vunpack.c.l.s4 1934713408
    %v2370 = vunpack.c.0.s8 %v2369
    %v2371 = vlaneseq
    %v2372 = vshrl.u32 %v2371, 7
    %v2373 = vsub.s32 %v2370, %v2372
    %v2374 = vrot.slane %v2366, %v2373
    %v2376 = vunpack.c.l.s4 1934713408
    %v2377 = vunpack.c.0.s8 %v2376
    %v2378 = vlaneseq
    %v2379 = vshrl.u32 %v2378, 7
    %v2380 = vsub.s32 %v2377, %v2379
    %v2381 = vrot.slane %v2367, %v2380
    %v2382 = vcombine.low %v2326, %v2358
    %v2383 = vcombine.high %v2326, %v2358
    %v2384 = vcombine.low %v2333, %v2365
    %v2385 = vcombine.high %v2333, %v2365
    %v2386 = vcombine.low %v2342, %v2374
    %v2387 = vcombine.high %v2342, %v2374
    %v2388 = vcombine.low %v2349, %v2381
    %v2389 = vcombine.high %v2349, %v2381
    %v2392 = vpack.i.b16 %v2110, %v1974
    %v2393 = vshrl.u32 %v1974, 16
    %v2394 = vshrl.u32 %v2110, 16
    %v2395 = vpack.i.b16 %v2394, %v2393
    %v2398 = vpack.i.b16 %v2111, %v1975
    %v2399 = vshrl.u32 %v1975, 16
    %v2400 = vshrl.u32 %v2111, 16
    %v2401 = vpack.i.b16 %v2400, %v2399
    %v2404 = vpack.i.b16 %v2112, %v1976
    %v2405 = vshrl.u32 %v1976, 16
    %v2406 = vshrl.u32 %v2112, 16
    %v2407 = vpack.i.b16 %v2406, %v2405
    %v2410 = vpack.i.b16 %v2113, %v1977
    %v2411 = vshrl.u32 %v1977, 16
    %v2412 = vshrl.u32 %v2113, 16
    %v2413 = vpack.i.b16 %v2412, %v2411
    %v2416 = vpack.i.b16 %v2114, %v1978
    %v2417 = vshrl.u32 %v1978, 16
    %v2418 = vshrl.u32 %v2114, 16
    %v2419 = vpack.i.b16 %v2418, %v2417
    %v2422 = vpack.i.b16 %v2115, %v1979
    %v2423 = vshrl.u32 %v1979, 16
    %v2424 = vshrl.u32 %v2115, 16
    %v2425 = vpack.i.b16 %v2424, %v2423
    %v2428 = vpack.i.b16 %v2116, %v1980
    %v2429 = vshrl.u32 %v1980, 16
    %v2430 = vshrl.u32 %v2116, 16
    %v2431 = vpack.i.b16 %v2430, %v2429
    %v2434 = vpack.i.b16 %v2117, %v1981
    %v2435 = vshrl.u32 %v1981, 16
    %v2436 = vshrl.u32 %v2117, 16
    %v2437 = vpack.i.b16 %v2436, %v2435
    %v2440 = vpack.i.b16 %v2382, %v2246
    %v2441 = vshrl.u32 %v2246, 16
    %v2442 = vshrl.u32 %v2382, 16
    %v2443 = vpack.i.b16 %v2442, %v2441
    %v2446 = vpack.i.b16 %v2383, %v2247
    %v2447 = vshrl.u32 %v2247, 16
    %v2448 = vshrl.u32 %v2383, 16
    %v2449 = vpack.i.b16 %v2448, %v2447
    %v2452 = vpack.i.b16 %v2384, %v2248
    %v2453 = vshrl.u32 %v2248, 16
    %v2454 = vshrl.u32 %v2384, 16
    %v2455 = vpack.i.b16 %v2454, %v2453
    %v2458 = vpack.i.b16 %v2385, %v2249
    %v2459 = vshrl.u32 %v2249, 16
    %v2460 = vshrl.u32 %v2385, 16
    %v2461 = vpack.i.b16 %v2460, %v2459
    %v2464 = vpack.i.b16 %v2386, %v2250
    %v2465 = vshrl.u32 %v2250, 16
    %v2466 = vshrl.u32 %v2386, 16
    %v2467 = vpack.i.b16 %v2466, %v2465
    %v2470 = vpack.i.b16 %v2387, %v2251
    %v2471 = vshrl.u32 %v2251, 16
    %v2472 = vshrl.u32 %v2387, 16
    %v2473 = vpack.i.b16 %v2472, %v2471
    %v2476 = vpack.i.b16 %v2388, %v2252
    %v2477 = vshrl.u32 %v2252, 16
    %v2478 = vshrl.u32 %v2388, 16
    %v2479 = vpack.i.b16 %v2478, %v2477
    %v2482 = vpack.i.b16 %v2389, %v2253
    %v2483 = vshrl.u32 %v2253, 16
    %v2484 = vshrl.u32 %v2389, 16
    %v2485 = vpack.i.b16 %v2484, %v2483
    %v2486 = vunpack.c.l.b16 %v2392
    %v2487 = vunpack.c.h.b16 %v2392
    %v2488 = vunpack.c.l.b16 %v2395
    %v2489 = vunpack.c.h.b16 %v2395
    %v2490 = vunpack.c.l.b16 %v2398
    %v2491 = vunpack.c.h.b16 %v2398
    %v2492 = vunpack.c.l.b16 %v2401
    %v2493 = vunpack.c.h.b16 %v2401
    %v2494 = vunpack.c.l.b16 %v2404
    %v2495 = vunpack.c.h.b16 %v2404
    %v2496 = vunpack.c.l.b16 %v2407
    %v2497 = vunpack.c.h.b16 %v2407
    %v2498 = vunpack.c.l.b16 %v2410
    %v2499 = vunpack.c.h.b16 %v2410
    %v2500 = vunpack.c.l.b16 %v2413
    %v2501 = vunpack.c.h.b16 %v2413
    %v2502 = vunpack.c.l.b16 %v2416
    %v2503 = vunpack.c.h.b16 %v2416
    %v2504 = vunpack.c.l.b16 %v2419
    %v2505 = vunpack.c.h.b16 %v2419
    %v2506 = vunpack.c.l.b16 %v2422
    %v2507 = vunpack.c.h.b16 %v2422
    %v2508 = vunpack.c.l.b16 %v2425
    %v2509 = vunpack.c.h.b16 %v2425
    %v2510 = vunpack.c.l.b16 %v2428
    %v2511 = vunpack.c.h.b16 %v2428
    %v2512 = vunpack.c.l.b16 %v2431
    %v2513 = vunpack.c.h.b16 %v2431
    %v2514 = vunpack.c.l.b16 %v2434
    %v2515 = vunpack.c.h.b16 %v2434
    %v2516 = vunpack.c.l.b16 %v2437
    %v2517 = vunpack.c.h.b16 %v2437
    %v2518 = vunpack.c.l.b16 %v2440
    %v2519 = vunpack.c.h.b16 %v2440
    %v2520 = vunpack.c.l.b16 %v2443
    %v2521 = vunpack.c.h.b16 %v2443
    %v2522 = vunpack.c.l.b16 %v2446
    %v2523 = vunpack.c.h.b16 %v2446
    %v2524 = vunpack.c.l.b16 %v2449
    %v2525 = vunpack.c.h.b16 %v2449
    %v2526 = vunpack.c.l.b16 %v2452
    %v2527 = vunpack.c.h.b16 %v2452
    %v2528 = vunpack.c.l.b16 %v2455
    %v2529 = vunpack.c.h.b16 %v2455
    %v2530 = vunpack.c.l.b16 %v2458
    %v2531 = vunpack.c.h.b16 %v2458
    %v2532 = vunpack.c.l.b16 %v2461
    %v2533 = vunpack.c.h.b16 %v2461
    %v2534 = vunpack.c.l.b16 %v2464
    %v2535 = vunpack.c.h.b16 %v2464
    %v2536 = vunpack.c.l.b16 %v2467
    %v2537 = vunpack.c.h.b16 %v2467
    %v2538 = vunpack.c.l.b16 %v2470
    %v2539 = vunpack.c.h.b16 %v2470
    %v2540 = vunpack.c.l.b16 %v2473
    %v2541 = vunpack.c.h.b16 %v2473
    %v2542 = vunpack.c.l.b16 %v2476
    %v2543 = vunpack.c.h.b16 %v2476
    %v2544 = vunpack.c.l.b16 %v2479
    %v2545 = vunpack.c.h.b16 %v2479
    %v2546 = vunpack.c.l.b16 %v2482
    %v2547 = vunpack.c.h.b16 %v2482
    %v2548 = vunpack.c.l.b16 %v2485
    %v2549 = vunpack.c.h.b16 %v2485
    %v2550 = vpack.c.b16 %v2486, %v2486
    %v2551 = vpack.c.b16 %v2487, %v2487
    %v2552 = vpack.c.b16 %v2488, %v2488
    %v2553 = vpack.c.b16 %v2489, %v2489
    %v2554 = vpack.c.b16 %v2490, %v2490
    %v2555 = vpack.c.b16 %v2491, %v2491
    %v2556 = vpack.c.b16 %v2492, %v2492
    %v2557 = vpack.c.b16 %v2493, %v2493
    %v2558 = vpack.c.b16 %v2494, %v2494
    %v2559 = vpack.c.b16 %v2495, %v2495
    %v2560 = vpack.c.b16 %v2496, %v2496
    %v2561 = vpack.c.b16 %v2497, %v2497
    %v2562 = vpack.c.b16 %v2498, %v2498
    %v2563 = vpack.c.b16 %v2499, %v2499
    %v2564 = vpack.c.b16 %v2500, %v2500
    %v2565 = vpack.c.b16 %v2501, %v2501
    %v2566 = vpack.c.b16 %v2502, %v2502
    %v2567 = vpack.c.b16 %v2503, %v2503
    %v2568 = vpack.c.b16 %v2504, %v2504
    %v2569 = vpack.c.b16 %v2505, %v2505
    %v2570 = vpack.c.b16 %v2506, %v2506
    %v2571 = vpack.c.b16 %v2507, %v2507
    %v2572 = vpack.c.b16 %v2508, %v2508
    %v2573 = vpack.c.b16 %v2509, %v2509
    %v2574 = vpack.c.b16 %v2510, %v2510
    %v2575 = vpack.c.b16 %v2511, %v2511
    %v2576 = vpack.c.b16 %v2512, %v2512
    %v2577 = vpack.c.b16 %v2513, %v2513
    %v2578 = vpack.c.b16 %v2514, %v2514
    %v2579 = vpack.c.b16 %v2515, %v2515
    %v2580 = vpack.c.b16 %v2516, %v2516
    %v2581 = vpack.c.b16 %v2517, %v2517
    %v2582 = vpack.c.b16 %v2518, %v2518
    %v2583 = vpack.c.b16 %v2519, %v2519
    %v2584 = vpack.c.b16 %v2520, %v2520
    %v2585 = vpack.c.b16 %v2521, %v2521
    %v2586 = vpack.c.b16 %v2522, %v2522
    %v2587 = vpack.c.b16 %v2523, %v2523
    %v2588 = vpack.c.b16 %v2524, %v2524
    %v2589 = vpack.c.b16 %v2525, %v2525
    %v2590 = vpack.c.b16 %v2526, %v2526
    %v2591 = vpack.c.b16 %v2527, %v2527
    %v2592 = vpack.c.b16 %v2528, %v2528
    %v2593 = vpack.c.b16 %v2529, %v2529
    %v2594 = vpack.c.b16 %v2530, %v2530
    %v2595 = vpack.c.b16 %v2531, %v2531
    %v2596 = vpack.c.b16 %v2532, %v2532
    %v2597 = vpack.c.b16 %v2533, %v2533
    %v2598 = vpack.c.b16 %v2534, %v2534
    %v2599 = vpack.c.b16 %v2535, %v2535
    %v2600 = vpack.c.b16 %v2536, %v2536
    %v2601 = vpack.c.b16 %v2537, %v2537
    %v2602 = vpack.c.b16 %v2538, %v2538
    %v2603 = vpack.c.b16 %v2539, %v2539
    %v2604 = vpack.c.b16 %v2540, %v2540
    %v2605 = vpack.c.b16 %v2541, %v2541
    %v2606 = vpack.c.b16 %v2542, %v2542
    %v2607 = vpack.c.b16 %v2543, %v2543
    %v2608 = vpack.c.b16 %v2544, %v2544
    %v2609 = vpack.c.b16 %v2545, %v2545
    %v2610 = vpack.c.b16 %v2546, %v2546
    %v2611 = vpack.c.b16 %v2547, %v2547
    %v2612 = vpack.c.b16 %v2548, %v2548
    %v2613 = vpack.c.b16 %v2549, %v2549
    %vm2678 = vcmask 125952
    %2679 = vst.msk [vmem:[#allocation13] sm:$0xf] %vm2678, %v2550
    %2680 = vst.msk [vmem:[#allocation13 + $0x4] sm:$0xf] %vm2678, %v2551
    %2681 = vst.msk [vmem:[#allocation13 + $0x8] sm:$0xf] %vm2678, %v2552
    %2682 = vst.msk [vmem:[#allocation13 + $0xc] sm:$0xf] %vm2678, %v2553
    %2683 = vst.msk [vmem:[#allocation13 + $0x10] sm:$0xf] %vm2678, %v2554
    %2684 = vst.msk [vmem:[#allocation13 + $0x14] sm:$0xf] %vm2678, %v2555
    %2685 = vst.msk [vmem:[#allocation13 + $0x18] sm:$0xf] %vm2678, %v2556
    %2686 = vst.msk [vmem:[#allocation13 + $0x1c] sm:$0xf] %vm2678, %v2557
    %2687 = vst.msk [vmem:[#allocation13 + $0x20] sm:$0xf] %vm2678, %v2558
    %2688 = vst.msk [vmem:[#allocation13 + $0x24] sm:$0xf] %vm2678, %v2559
    %2689 = vst.msk [vmem:[#allocation13 + $0x28] sm:$0xf] %vm2678, %v2560
    %2690 = vst.msk [vmem:[#allocation13 + $0x2c] sm:$0xf] %vm2678, %v2561
    %2691 = vst.msk [vmem:[#allocation13 + $0x30] sm:$0xf] %vm2678, %v2562
    %2692 = vst.msk [vmem:[#allocation13 + $0x34] sm:$0xf] %vm2678, %v2563
    %2693 = vst.msk [vmem:[#allocation13 + $0x38] sm:$0xf] %vm2678, %v2564
    %2694 = vst.msk [vmem:[#allocation13 + $0x3c] sm:$0xf] %vm2678, %v2565
    %2695 = vst.msk [vmem:[#allocation13 + $0x40] sm:$0xf] %vm2678, %v2566
    %2696 = vst.msk [vmem:[#allocation13 + $0x44] sm:$0xf] %vm2678, %v2567
    %2697 = vst.msk [vmem:[#allocation13 + $0x48] sm:$0xf] %vm2678, %v2568
    %2698 = vst.msk [vmem:[#allocation13 + $0x4c] sm:$0xf] %vm2678, %v2569
    %2699 = vst.msk [vmem:[#allocation13 + $0x50] sm:$0xf] %vm2678, %v2570
    %2700 = vst.msk [vmem:[#allocation13 + $0x54] sm:$0xf] %vm2678, %v2571
    %2701 = vst.msk [vmem:[#allocation13 + $0x58] sm:$0xf] %vm2678, %v2572
    %2702 = vst.msk [vmem:[#allocation13 + $0x5c] sm:$0xf] %vm2678, %v2573
    %2703 = vst.msk [vmem:[#allocation13 + $0x60] sm:$0xf] %vm2678, %v2574
    %2704 = vst.msk [vmem:[#allocation13 + $0x64] sm:$0xf] %vm2678, %v2575
    %2705 = vst.msk [vmem:[#allocation13 + $0x68] sm:$0xf] %vm2678, %v2576
    %2706 = vst.msk [vmem:[#allocation13 + $0x6c] sm:$0xf] %vm2678, %v2577
    %2707 = vst.msk [vmem:[#allocation13 + $0x70] sm:$0xf] %vm2678, %v2578
    %2708 = vst.msk [vmem:[#allocation13 + $0x74] sm:$0xf] %vm2678, %v2579
    %2709 = vst.msk [vmem:[#allocation13 + $0x78] sm:$0xf] %vm2678, %v2580
    %2710 = vst.msk [vmem:[#allocation13 + $0x7c] sm:$0xf] %vm2678, %v2581
    %2711 = vst.msk [vmem:[#allocation13 + $0x80] sm:$0xf] %vm2678, %v2582
    %2712 = vst.msk [vmem:[#allocation13 + $0x84] sm:$0xf] %vm2678, %v2583
    %2713 = vst.msk [vmem:[#allocation13 + $0x88] sm:$0xf] %vm2678, %v2584
    %2714 = vst.msk [vmem:[#allocation13 + $0x8c] sm:$0xf] %vm2678, %v2585
    %2715 = vst.msk [vmem:[#allocation13 + $0x90] sm:$0xf] %vm2678, %v2586
    %2716 = vst.msk [vmem:[#allocation13 + $0x94] sm:$0xf] %vm2678, %v2587
    %2717 = vst.msk [vmem:[#allocation13 + $0x98] sm:$0xf] %vm2678, %v2588
    %2718 = vst.msk [vmem:[#allocation13 + $0x9c] sm:$0xf] %vm2678, %v2589
    %2719 = vst.msk [vmem:[#allocation13 + $0xa0] sm:$0xf] %vm2678, %v2590
    %2720 = vst.msk [vmem:[#allocation13 + $0xa4] sm:$0xf] %vm2678, %v2591
    %2721 = vst.msk [vmem:[#allocation13 + $0xa8] sm:$0xf] %vm2678, %v2592
    %2722 = vst.msk [vmem:[#allocation13 + $0xac] sm:$0xf] %vm2678, %v2593
    %2723 = vst.msk [vmem:[#allocation13 + $0xb0] sm:$0xf] %vm2678, %v2594
    %2724 = vst.msk [vmem:[#allocation13 + $0xb4] sm:$0xf] %vm2678, %v2595
    %2725 = vst.msk [vmem:[#allocation13 + $0xb8] sm:$0xf] %vm2678, %v2596
    %2726 = vst.msk [vmem:[#allocation13 + $0xbc] sm:$0xf] %vm2678, %v2597
    %2727 = vst.msk [vmem:[#allocation13 + $0xc0] sm:$0xf] %vm2678, %v2598
    %2728 = vst.msk [vmem:[#allocation13 + $0xc4] sm:$0xf] %vm2678, %v2599
    %2729 = vst.msk [vmem:[#allocation13 + $0xc8] sm:$0xf] %vm2678, %v2600
    %2730 = vst.msk [vmem:[#allocation13 + $0xcc] sm:$0xf] %vm2678, %v2601
    %2731 = vst.msk [vmem:[#allocation13 + $0xd0] sm:$0xf] %vm2678, %v2602
    %2732 = vst.msk [vmem:[#allocation13 + $0xd4] sm:$0xf] %vm2678, %v2603
    %2733 = vst.msk [vmem:[#allocation13 + $0xd8] sm:$0xf] %vm2678, %v2604
    %2734 = vst.msk [vmem:[#allocation13 + $0xdc] sm:$0xf] %vm2678, %v2605
    %2735 = vst.msk [vmem:[#allocation13 + $0xe0] sm:$0xf] %vm2678, %v2606
    %2736 = vst.msk [vmem:[#allocation13 + $0xe4] sm:$0xf] %vm2678, %v2607
    %2737 = vst.msk [vmem:[#allocation13 + $0xe8] sm:$0xf] %vm2678, %v2608
    %2738 = vst.msk [vmem:[#allocation13 + $0xec] sm:$0xf] %vm2678, %v2609
    %2739 = vst.msk [vmem:[#allocation13 + $0xf0] sm:$0xf] %vm2678, %v2610
    %2740 = vst.msk [vmem:[#allocation13 + $0xf4] sm:$0xf] %vm2678, %v2611
    %2741 = vst.msk [vmem:[#allocation13 + $0xf8] sm:$0xf] %vm2678, %v2612
    %2742 = vst.msk [vmem:[#allocation13 + $0xfc] sm:$0xf] %vm2678, %v2613
    %2759 = vrot.lane.b32.xlu0 %v1502, 96
    %v2760 = vpop.permute.xlu0 %2759
    %2761 = vrot.lane.b32.xlu0 %v1503, 96
    %v2762 = vpop.permute.xlu0 %2761
    %2763 = vrot.lane.b32.xlu0 %v1504, 96
    %v2764 = vpop.permute.xlu0 %2763
    %2765 = vrot.lane.b32.xlu0 %v1505, 96
    %v2766 = vpop.permute.xlu0 %2765
    %2767 = vrot.lane.b32.xlu0 %v1506, 96
    %v2768 = vpop.permute.xlu0 %2767
    %2769 = vrot.lane.b32.xlu0 %v1507, 96
    %v2770 = vpop.permute.xlu0 %2769
    %2771 = vrot.lane.b32.xlu0 %v1508, 96
    %v2772 = vpop.permute.xlu0 %2771
    %2773 = vrot.lane.b32.xlu0 %v1509, 96
    %v2774 = vpop.permute.xlu0 %2773
    %2775 = vrot.lane.b32.xlu0 %v1510, 96
    %v2776 = vpop.permute.xlu0 %2775
    %2777 = vrot.lane.b32.xlu0 %v1511, 96
    %v2778 = vpop.permute.xlu0 %2777
    %2779 = vrot.lane.b32.xlu0 %v1512, 96
    %v2780 = vpop.permute.xlu0 %2779
    %2781 = vrot.lane.b32.xlu0 %v1513, 96
    %v2782 = vpop.permute.xlu0 %2781
    %2783 = vrot.lane.b32.xlu0 %v1514, 96
    %v2784 = vpop.permute.xlu0 %2783
    %2785 = vrot.lane.b32.xlu0 %v1515, 96
    %v2786 = vpop.permute.xlu0 %2785
    %2787 = vrot.lane.b32.xlu0 %v1516, 96
    %v2788 = vpop.permute.xlu0 %2787
    %2789 = vrot.lane.b32.xlu0 %v1517, 96
    %v2790 = vpop.permute.xlu0 %2789
    %2807 = vxpose.xlu0.c.b16.start [1/8] %v2760, 128
    %2808 = vxpose.xlu0.c.b16.cont [2/8] %v2762, 128
    %2809 = vxpose.xlu0.c.b16.cont [3/8] %v2764, 128
    %2810 = vxpose.xlu0.c.b16.cont [4/8] %v2766, 128
    %2811 = vxpose.xlu0.c.b16.cont [5/8] %v2768, 128
    %2812 = vxpose.xlu0.c.b16.cont [6/8] %v2770, 128
    %2813 = vxpose.xlu0.c.b16.cont [7/8] %v2772, 128
    %2814 = vxpose.xlu0.c.b16.end [8/8] %v2774, 128
    %v2815 = vpop.trf.xlu0
    %v2816 = vpop.trf.xlu0
    %v2817 = vpop.trf.xlu0
    %v2818 = vpop.trf.xlu0
    %v2819 = vpop.trf.xlu0
    %v2820 = vpop.trf.xlu0
    %v2821 = vpop.trf.xlu0
    %v2822 = vpop.trf.xlu0
    %2823 = vxpose.xlu0.c.b16.start [1/8] %v2776, 128
    %2824 = vxpose.xlu0.c.b16.cont [2/8] %v2778, 128
    %2825 = vxpose.xlu0.c.b16.cont [3/8] %v2780, 128
    %2826 = vxpose.xlu0.c.b16.cont [4/8] %v2782, 128
    %2827 = vxpose.xlu0.c.b16.cont [5/8] %v2784, 128
    %2828 = vxpose.xlu0.c.b16.cont [6/8] %v2786, 128
    %2829 = vxpose.xlu0.c.b16.cont [7/8] %v2788, 128
    %2830 = vxpose.xlu0.c.b16.end [8/8] %v2790, 128
    %v2831 = vpop.trf.xlu0
    %v2832 = vpop.trf.xlu0
    %v2833 = vpop.trf.xlu0
    %v2834 = vpop.trf.xlu0
    %v2835 = vpop.trf.xlu0
    %v2836 = vpop.trf.xlu0
    %v2837 = vpop.trf.xlu0
    %v2838 = vpop.trf.xlu0
    %2841 = vrot.lane.b32.xlu0 %v2815, 112
    %v2842 = vpop.permute.xlu0 %2841
    %2843 = vrot.lane.b32.xlu0 %v2816, 112
    %v2844 = vpop.permute.xlu0 %2843
    %2847 = vrot.lane.b32.xlu0 %v2815, 96
    %v2848 = vpop.permute.xlu0 %2847
    %2849 = vrot.lane.b32.xlu0 %v2816, 96
    %v2850 = vpop.permute.xlu0 %2849
    %2853 = vrot.lane.b32.xlu0 %v2815, 80
    %v2854 = vpop.permute.xlu0 %2853
    %2855 = vrot.lane.b32.xlu0 %v2816, 80
    %v2856 = vpop.permute.xlu0 %2855
    %2859 = vrot.lane.b32.xlu0 %v2815, 64
    %v2860 = vpop.permute.xlu0 %2859
    %2861 = vrot.lane.b32.xlu0 %v2816, 64
    %v2862 = vpop.permute.xlu0 %2861
    %2865 = vrot.lane.b32.xlu0 %v2815, 48
    %v2866 = vpop.permute.xlu0 %2865
    %2867 = vrot.lane.b32.xlu0 %v2816, 48
    %v2868 = vpop.permute.xlu0 %2867
    %2871 = vrot.lane.b32.xlu0 %v2815, 32
    %v2872 = vpop.permute.xlu0 %2871
    %2873 = vrot.lane.b32.xlu0 %v2816, 32
    %v2874 = vpop.permute.xlu0 %2873
    %2877 = vrot.lane.b32.xlu0 %v2815, 16
    %v2878 = vpop.permute.xlu0 %2877
    %2879 = vrot.lane.b32.xlu0 %v2816, 16
    %v2880 = vpop.permute.xlu0 %2879
    %2885 = vrot.lane.b32.xlu0 %v2831, 112
    %v2886 = vpop.permute.xlu0 %2885
    %2887 = vrot.lane.b32.xlu0 %v2832, 112
    %v2888 = vpop.permute.xlu0 %2887
    %2891 = vrot.lane.b32.xlu0 %v2831, 96
    %v2892 = vpop.permute.xlu0 %2891
    %2893 = vrot.lane.b32.xlu0 %v2832, 96
    %v2894 = vpop.permute.xlu0 %2893
    %2897 = vrot.lane.b32.xlu0 %v2831, 80
    %v2898 = vpop.permute.xlu0 %2897
    %2899 = vrot.lane.b32.xlu0 %v2832, 80
    %v2900 = vpop.permute.xlu0 %2899
    %2903 = vrot.lane.b32.xlu0 %v2831, 64
    %v2904 = vpop.permute.xlu0 %2903
    %2905 = vrot.lane.b32.xlu0 %v2832, 64
    %v2906 = vpop.permute.xlu0 %2905
    %2909 = vrot.lane.b32.xlu0 %v2831, 48
    %v2910 = vpop.permute.xlu0 %2909
    %2911 = vrot.lane.b32.xlu0 %v2832, 48
    %v2912 = vpop.permute.xlu0 %2911
    %2915 = vrot.lane.b32.xlu0 %v2831, 32
    %v2916 = vpop.permute.xlu0 %2915
    %2917 = vrot.lane.b32.xlu0 %v2832, 32
    %v2918 = vpop.permute.xlu0 %2917
    %2921 = vrot.lane.b32.xlu0 %v2831, 16
    %v2922 = vpop.permute.xlu0 %2921
    %2923 = vrot.lane.b32.xlu0 %v2832, 16
    %v2924 = vpop.permute.xlu0 %2923
    %v2927 = vcombine.low %v2815, %v2860
    %v2928 = vcombine.high %v2815, %v2860
    %v2930 = vunpack.c.l.s4 1983009808
    %v2931 = vunpack.c.0.s8 %v2930
    %v2932 = vlaneseq
    %v2933 = vshrl.u32 %v2932, 7
    %v2934 = vsub.s32 %v2931, %v2933
    %v2935 = vrot.slane %v2927, %v2934
    %v2937 = vunpack.c.l.s4 1983009808
    %v2938 = vunpack.c.0.s8 %v2937
    %v2939 = vlaneseq
    %v2940 = vshrl.u32 %v2939, 7
    %v2941 = vsub.s32 %v2938, %v2940
    %v2942 = vrot.slane %v2928, %v2941
    %v2943 = vcombine.low %v2848, %v2872
    %v2944 = vcombine.high %v2848, %v2872
    %v2946 = vunpack.c.l.s4 1983009808
    %v2947 = vunpack.c.0.s8 %v2946
    %v2948 = vlaneseq
    %v2949 = vshrl.u32 %v2948, 7
    %v2950 = vsub.s32 %v2947, %v2949
    %v2951 = vrot.slane %v2943, %v2950
    %v2953 = vunpack.c.l.s4 1983009808
    %v2954 = vunpack.c.0.s8 %v2953
    %v2955 = vlaneseq
    %v2956 = vshrl.u32 %v2955, 7
    %v2957 = vsub.s32 %v2954, %v2956
    %v2958 = vrot.slane %v2944, %v2957
    %v2959 = vcombine.low %v2831, %v2904
    %v2960 = vcombine.high %v2831, %v2904
    %v2962 = vunpack.c.l.s4 1983009808
    %v2963 = vunpack.c.0.s8 %v2962
    %v2964 = vlaneseq
    %v2965 = vshrl.u32 %v2964, 7
    %v2966 = vsub.s32 %v2963, %v2965
    %v2967 = vrot.slane %v2959, %v2966
    %v2969 = vunpack.c.l.s4 1983009808
    %v2970 = vunpack.c.0.s8 %v2969
    %v2971 = vlaneseq
    %v2972 = vshrl.u32 %v2971, 7
    %v2973 = vsub.s32 %v2970, %v2972
    %v2974 = vrot.slane %v2960, %v2973
    %v2975 = vcombine.low %v2892, %v2916
    %v2976 = vcombine.high %v2892, %v2916
    %v2978 = vunpack.c.l.s4 1983009808
    %v2979 = vunpack.c.0.s8 %v2978
    %v2980 = vlaneseq
    %v2981 = vshrl.u32 %v2980, 7
    %v2982 = vsub.s32 %v2979, %v2981
    %v2983 = vrot.slane %v2975, %v2982
    %v2985 = vunpack.c.l.s4 1983009808
    %v2986 = vunpack.c.0.s8 %v2985
    %v2987 = vlaneseq
    %v2988 = vshrl.u32 %v2987, 7
    %v2989 = vsub.s32 %v2986, %v2988
    %v2990 = vrot.slane %v2976, %v2989
    %v2991 = vcombine.low %v2935, %v2951
    %v2992 = vcombine.high %v2935, %v2951
    %v2994 = vunpack.c.l.s4 1934713408
    %v2995 = vunpack.c.0.s8 %v2994
    %v2996 = vlaneseq
    %v2997 = vshrl.u32 %v2996, 7
    %v2998 = vsub.s32 %v2995, %v2997
    %v2999 = vrot.slane %v2991, %v2998
    %v3001 = vunpack.c.l.s4 1934713408
    %v3002 = vunpack.c.0.s8 %v3001
    %v3003 = vlaneseq
    %v3004 = vshrl.u32 %v3003, 7
    %v3005 = vsub.s32 %v3002, %v3004
    %v3006 = vrot.slane %v2992, %v3005
    %v3007 = vcombine.low %v2942, %v2958
    %v3008 = vcombine.high %v2942, %v2958
    %v3010 = vunpack.c.l.s4 1934713408
    %v3011 = vunpack.c.0.s8 %v3010
    %v3012 = vlaneseq
    %v3013 = vshrl.u32 %v3012, 7
    %v3014 = vsub.s32 %v3011, %v3013
    %v3015 = vrot.slane %v3007, %v3014
    %v3017 = vunpack.c.l.s4 1934713408
    %v3018 = vunpack.c.0.s8 %v3017
    %v3019 = vlaneseq
    %v3020 = vshrl.u32 %v3019, 7
    %v3021 = vsub.s32 %v3018, %v3020
    %v3022 = vrot.slane %v3008, %v3021
    %v3023 = vcombine.low %v2967, %v2983
    %v3024 = vcombine.high %v2967, %v2983
    %v3026 = vunpack.c.l.s4 1934713408
    %v3027 = vunpack.c.0.s8 %v3026
    %v3028 = vlaneseq
    %v3029 = vshrl.u32 %v3028, 7
    %v3030 = vsub.s32 %v3027, %v3029
    %v3031 = vrot.slane %v3023, %v3030
    %v3033 = vunpack.c.l.s4 1934713408
    %v3034 = vunpack.c.0.s8 %v3033
    %v3035 = vlaneseq
    %v3036 = vshrl.u32 %v3035, 7
    %v3037 = vsub.s32 %v3034, %v3036
    %v3038 = vrot.slane %v3024, %v3037
    %v3039 = vcombine.low %v2974, %v2990
    %v3040 = vcombine.high %v2974, %v2990
    %v3042 = vunpack.c.l.s4 1934713408
    %v3043 = vunpack.c.0.s8 %v3042
    %v3044 = vlaneseq
    %v3045 = vshrl.u32 %v3044, 7
    %v3046 = vsub.s32 %v3043, %v3045
    %v3047 = vrot.slane %v3039, %v3046
    %v3049 = vunpack.c.l.s4 1934713408
    %v3050 = vunpack.c.0.s8 %v3049
    %v3051 = vlaneseq
    %v3052 = vshrl.u32 %v3051, 7
    %v3053 = vsub.s32 %v3050, %v3052
    %v3054 = vrot.slane %v3040, %v3053
    %v3055 = vcombine.low %v2999, %v3031
    %v3056 = vcombine.high %v2999, %v3031
    %v3057 = vcombine.low %v3006, %v3038
    %v3058 = vcombine.high %v3006, %v3038
    %v3059 = vcombine.low %v3015, %v3047
    %v3060 = vcombine.high %v3015, %v3047
    %v3061 = vcombine.low %v3022, %v3054
    %v3062 = vcombine.high %v3022, %v3054
    %v3063 = vcombine.low %v2842, %v2866
    %v3064 = vcombine.high %v2842, %v2866
    %v3066 = vunpack.c.l.s4 1983009808
    %v3067 = vunpack.c.0.s8 %v3066
    %v3068 = vlaneseq
    %v3069 = vshrl.u32 %v3068, 7
    %v3070 = vsub.s32 %v3067, %v3069
    %v3071 = vrot.slane %v3063, %v3070
    %v3073 = vunpack.c.l.s4 1983009808
    %v3074 = vunpack.c.0.s8 %v3073
    %v3075 = vlaneseq
    %v3076 = vshrl.u32 %v3075, 7
    %v3077 = vsub.s32 %v3074, %v3076
    %v3078 = vrot.slane %v3064, %v3077
    %v3079 = vcombine.low %v2854, %v2878
    %v3080 = vcombine.high %v2854, %v2878
    %v3082 = vunpack.c.l.s4 1983009808
    %v3083 = vunpack.c.0.s8 %v3082
    %v3084 = vlaneseq
    %v3085 = vshrl.u32 %v3084, 7
    %v3086 = vsub.s32 %v3083, %v3085
    %v3087 = vrot.slane %v3079, %v3086
    %v3089 = vunpack.c.l.s4 1983009808
    %v3090 = vunpack.c.0.s8 %v3089
    %v3091 = vlaneseq
    %v3092 = vshrl.u32 %v3091, 7
    %v3093 = vsub.s32 %v3090, %v3092
    %v3094 = vrot.slane %v3080, %v3093
    %v3095 = vcombine.low %v2886, %v2910
    %v3096 = vcombine.high %v2886, %v2910
    %v3098 = vunpack.c.l.s4 1983009808
    %v3099 = vunpack.c.0.s8 %v3098
    %v3100 = vlaneseq
    %v3101 = vshrl.u32 %v3100, 7
    %v3102 = vsub.s32 %v3099, %v3101
    %v3103 = vrot.slane %v3095, %v3102
    %v3105 = vunpack.c.l.s4 1983009808
    %v3106 = vunpack.c.0.s8 %v3105
    %v3107 = vlaneseq
    %v3108 = vshrl.u32 %v3107, 7
    %v3109 = vsub.s32 %v3106, %v3108
    %v3110 = vrot.slane %v3096, %v3109
    %v3111 = vcombine.low %v2898, %v2922
    %v3112 = vcombine.high %v2898, %v2922
    %v3114 = vunpack.c.l.s4 1983009808
    %v3115 = vunpack.c.0.s8 %v3114
    %v3116 = vlaneseq
    %v3117 = vshrl.u32 %v3116, 7
    %v3118 = vsub.s32 %v3115, %v3117
    %v3119 = vrot.slane %v3111, %v3118
    %v3121 = vunpack.c.l.s4 1983009808
    %v3122 = vunpack.c.0.s8 %v3121
    %v3123 = vlaneseq
    %v3124 = vshrl.u32 %v3123, 7
    %v3125 = vsub.s32 %v3122, %v3124
    %v3126 = vrot.slane %v3112, %v3125
    %v3127 = vcombine.low %v3071, %v3087
    %v3128 = vcombine.high %v3071, %v3087
    %v3130 = vunpack.c.l.s4 1934713408
    %v3131 = vunpack.c.0.s8 %v3130
    %v3132 = vlaneseq
    %v3133 = vshrl.u32 %v3132, 7
    %v3134 = vsub.s32 %v3131, %v3133
    %v3135 = vrot.slane %v3127, %v3134
    %v3137 = vunpack.c.l.s4 1934713408
    %v3138 = vunpack.c.0.s8 %v3137
    %v3139 = vlaneseq
    %v3140 = vshrl.u32 %v3139, 7
    %v3141 = vsub.s32 %v3138, %v3140
    %v3142 = vrot.slane %v3128, %v3141
    %v3143 = vcombine.low %v3078, %v3094
    %v3144 = vcombine.high %v3078, %v3094
    %v3146 = vunpack.c.l.s4 1934713408
    %v3147 = vunpack.c.0.s8 %v3146
    %v3148 = vlaneseq
    %v3149 = vshrl.u32 %v3148, 7
    %v3150 = vsub.s32 %v3147, %v3149
    %v3151 = vrot.slane %v3143, %v3150
    %v3153 = vunpack.c.l.s4 1934713408
    %v3154 = vunpack.c.0.s8 %v3153
    %v3155 = vlaneseq
    %v3156 = vshrl.u32 %v3155, 7
    %v3157 = vsub.s32 %v3154, %v3156
    %v3158 = vrot.slane %v3144, %v3157
    %v3159 = vcombine.low %v3103, %v3119
    %v3160 = vcombine.high %v3103, %v3119
    %v3162 = vunpack.c.l.s4 1934713408
    %v3163 = vunpack.c.0.s8 %v3162
    %v3164 = vlaneseq
    %v3165 = vshrl.u32 %v3164, 7
    %v3166 = vsub.s32 %v3163, %v3165
    %v3167 = vrot.slane %v3159, %v3166
    %v3169 = vunpack.c.l.s4 1934713408
    %v3170 = vunpack.c.0.s8 %v3169
    %v3171 = vlaneseq
    %v3172 = vshrl.u32 %v3171, 7
    %v3173 = vsub.s32 %v3170, %v3172
    %v3174 = vrot.slane %v3160, %v3173
    %v3175 = vcombine.low %v3110, %v3126
    %v3176 = vcombine.high %v3110, %v3126
    %v3178 = vunpack.c.l.s4 1934713408
    %v3179 = vunpack.c.0.s8 %v3178
    %v3180 = vlaneseq
    %v3181 = vshrl.u32 %v3180, 7
    %v3182 = vsub.s32 %v3179, %v3181
    %v3183 = vrot.slane %v3175, %v3182
    %v3185 = vunpack.c.l.s4 1934713408
    %v3186 = vunpack.c.0.s8 %v3185
    %v3187 = vlaneseq
    %v3188 = vshrl.u32 %v3187, 7
    %v3189 = vsub.s32 %v3186, %v3188
    %v3190 = vrot.slane %v3176, %v3189
    %v3191 = vcombine.low %v3135, %v3167
    %v3192 = vcombine.high %v3135, %v3167
    %v3193 = vcombine.low %v3142, %v3174
    %v3194 = vcombine.high %v3142, %v3174
    %v3195 = vcombine.low %v3151, %v3183
    %v3196 = vcombine.high %v3151, %v3183
    %v3197 = vcombine.low %v3158, %v3190
    %v3198 = vcombine.high %v3158, %v3190
    %v3199 = vcombine.low %v2816, %v2862
    %v3200 = vcombine.high %v2816, %v2862
    %v3202 = vunpack.c.l.s4 1983009808
    %v3203 = vunpack.c.0.s8 %v3202
    %v3204 = vlaneseq
    %v3205 = vshrl.u32 %v3204, 7
    %v3206 = vsub.s32 %v3203, %v3205
    %v3207 = vrot.slane %v3199, %v3206
    %v3209 = vunpack.c.l.s4 1983009808
    %v3210 = vunpack.c.0.s8 %v3209
    %v3211 = vlaneseq
    %v3212 = vshrl.u32 %v3211, 7
    %v3213 = vsub.s32 %v3210, %v3212
    %v3214 = vrot.slane %v3200, %v3213
    %v3215 = vcombine.low %v2850, %v2874
    %v3216 = vcombine.high %v2850, %v2874
    %v3218 = vunpack.c.l.s4 1983009808
    %v3219 = vunpack.c.0.s8 %v3218
    %v3220 = vlaneseq
    %v3221 = vshrl.u32 %v3220, 7
    %v3222 = vsub.s32 %v3219, %v3221
    %v3223 = vrot.slane %v3215, %v3222
    %v3225 = vunpack.c.l.s4 1983009808
    %v3226 = vunpack.c.0.s8 %v3225
    %v3227 = vlaneseq
    %v3228 = vshrl.u32 %v3227, 7
    %v3229 = vsub.s32 %v3226, %v3228
    %v3230 = vrot.slane %v3216, %v3229
    %v3231 = vcombine.low %v2832, %v2906
    %v3232 = vcombine.high %v2832, %v2906
    %v3234 = vunpack.c.l.s4 1983009808
    %v3235 = vunpack.c.0.s8 %v3234
    %v3236 = vlaneseq
    %v3237 = vshrl.u32 %v3236, 7
    %v3238 = vsub.s32 %v3235, %v3237
    %v3239 = vrot.slane %v3231, %v3238
    %v3241 = vunpack.c.l.s4 1983009808
    %v3242 = vunpack.c.0.s8 %v3241
    %v3243 = vlaneseq
    %v3244 = vshrl.u32 %v3243, 7
    %v3245 = vsub.s32 %v3242, %v3244
    %v3246 = vrot.slane %v3232, %v3245
    %v3247 = vcombine.low %v2894, %v2918
    %v3248 = vcombine.high %v2894, %v2918
    %v3250 = vunpack.c.l.s4 1983009808
    %v3251 = vunpack.c.0.s8 %v3250
    %v3252 = vlaneseq
    %v3253 = vshrl.u32 %v3252, 7
    %v3254 = vsub.s32 %v3251, %v3253
    %v3255 = vrot.slane %v3247, %v3254
    %v3257 = vunpack.c.l.s4 1983009808
    %v3258 = vunpack.c.0.s8 %v3257
    %v3259 = vlaneseq
    %v3260 = vshrl.u32 %v3259, 7
    %v3261 = vsub.s32 %v3258, %v3260
    %v3262 = vrot.slane %v3248, %v3261
    %v3263 = vcombine.low %v3207, %v3223
    %v3264 = vcombine.high %v3207, %v3223
    %v3266 = vunpack.c.l.s4 1934713408
    %v3267 = vunpack.c.0.s8 %v3266
    %v3268 = vlaneseq
    %v3269 = vshrl.u32 %v3268, 7
    %v3270 = vsub.s32 %v3267, %v3269
    %v3271 = vrot.slane %v3263, %v3270
    %v3273 = vunpack.c.l.s4 1934713408
    %v3274 = vunpack.c.0.s8 %v3273
    %v3275 = vlaneseq
    %v3276 = vshrl.u32 %v3275, 7
    %v3277 = vsub.s32 %v3274, %v3276
    %v3278 = vrot.slane %v3264, %v3277
    %v3279 = vcombine.low %v3214, %v3230
    %v3280 = vcombine.high %v3214, %v3230
    %v3282 = vunpack.c.l.s4 1934713408
    %v3283 = vunpack.c.0.s8 %v3282
    %v3284 = vlaneseq
    %v3285 = vshrl.u32 %v3284, 7
    %v3286 = vsub.s32 %v3283, %v3285
    %v3287 = vrot.slane %v3279, %v3286
    %v3289 = vunpack.c.l.s4 1934713408
    %v3290 = vunpack.c.0.s8 %v3289
    %v3291 = vlaneseq
    %v3292 = vshrl.u32 %v3291, 7
    %v3293 = vsub.s32 %v3290, %v3292
    %v3294 = vrot.slane %v3280, %v3293
    %v3295 = vcombine.low %v3239, %v3255
    %v3296 = vcombine.high %v3239, %v3255
    %v3298 = vunpack.c.l.s4 1934713408
    %v3299 = vunpack.c.0.s8 %v3298
    %v3300 = vlaneseq
    %v3301 = vshrl.u32 %v3300, 7
    %v3302 = vsub.s32 %v3299, %v3301
    %v3303 = vrot.slane %v3295, %v3302
    %v3305 = vunpack.c.l.s4 1934713408
    %v3306 = vunpack.c.0.s8 %v3305
    %v3307 = vlaneseq
    %v3308 = vshrl.u32 %v3307, 7
    %v3309 = vsub.s32 %v3306, %v3308
    %v3310 = vrot.slane %v3296, %v3309
    %v3311 = vcombine.low %v3246, %v3262
    %v3312 = vcombine.high %v3246, %v3262
    %v3314 = vunpack.c.l.s4 1934713408
    %v3315 = vunpack.c.0.s8 %v3314
    %v3316 = vlaneseq
    %v3317 = vshrl.u32 %v3316, 7
    %v3318 = vsub.s32 %v3315, %v3317
    %v3319 = vrot.slane %v3311, %v3318
    %v3321 = vunpack.c.l.s4 1934713408
    %v3322 = vunpack.c.0.s8 %v3321
    %v3323 = vlaneseq
    %v3324 = vshrl.u32 %v3323, 7
    %v3325 = vsub.s32 %v3322, %v3324
    %v3326 = vrot.slane %v3312, %v3325
    %v3327 = vcombine.low %v3271, %v3303
    %v3328 = vcombine.high %v3271, %v3303
    %v3329 = vcombine.low %v3278, %v3310
    %v3330 = vcombine.high %v3278, %v3310
    %v3331 = vcombine.low %v3287, %v3319
    %v3332 = vcombine.high %v3287, %v3319
    %v3333 = vcombine.low %v3294, %v3326
    %v3334 = vcombine.high %v3294, %v3326
    %v3335 = vcombine.low %v2844, %v2868
    %v3336 = vcombine.high %v2844, %v2868
    %v3338 = vunpack.c.l.s4 1983009808
    %v3339 = vunpack.c.0.s8 %v3338
    %v3340 = vlaneseq
    %v3341 = vshrl.u32 %v3340, 7
    %v3342 = vsub.s32 %v3339, %v3341
    %v3343 = vrot.slane %v3335, %v3342
    %v3345 = vunpack.c.l.s4 1983009808
    %v3346 = vunpack.c.0.s8 %v3345
    %v3347 = vlaneseq
    %v3348 = vshrl.u32 %v3347, 7
    %v3349 = vsub.s32 %v3346, %v3348
    %v3350 = vrot.slane %v3336, %v3349
    %v3351 = vcombine.low %v2856, %v2880
    %v3352 = vcombine.high %v2856, %v2880
    %v3354 = vunpack.c.l.s4 1983009808
    %v3355 = vunpack.c.0.s8 %v3354
    %v3356 = vlaneseq
    %v3357 = vshrl.u32 %v3356, 7
    %v3358 = vsub.s32 %v3355, %v3357
    %v3359 = vrot.slane %v3351, %v3358
    %v3361 = vunpack.c.l.s4 1983009808
    %v3362 = vunpack.c.0.s8 %v3361
    %v3363 = vlaneseq
    %v3364 = vshrl.u32 %v3363, 7
    %v3365 = vsub.s32 %v3362, %v3364
    %v3366 = vrot.slane %v3352, %v3365
    %v3367 = vcombine.low %v2888, %v2912
    %v3368 = vcombine.high %v2888, %v2912
    %v3370 = vunpack.c.l.s4 1983009808
    %v3371 = vunpack.c.0.s8 %v3370
    %v3372 = vlaneseq
    %v3373 = vshrl.u32 %v3372, 7
    %v3374 = vsub.s32 %v3371, %v3373
    %v3375 = vrot.slane %v3367, %v3374
    %v3377 = vunpack.c.l.s4 1983009808
    %v3378 = vunpack.c.0.s8 %v3377
    %v3379 = vlaneseq
    %v3380 = vshrl.u32 %v3379, 7
    %v3381 = vsub.s32 %v3378, %v3380
    %v3382 = vrot.slane %v3368, %v3381
    %v3383 = vcombine.low %v2900, %v2924
    %v3384 = vcombine.high %v2900, %v2924
    %v3386 = vunpack.c.l.s4 1983009808
    %v3387 = vunpack.c.0.s8 %v3386
    %v3388 = vlaneseq
    %v3389 = vshrl.u32 %v3388, 7
    %v3390 = vsub.s32 %v3387, %v3389
    %v3391 = vrot.slane %v3383, %v3390
    %v3393 = vunpack.c.l.s4 1983009808
    %v3394 = vunpack.c.0.s8 %v3393
    %v3395 = vlaneseq
    %v3396 = vshrl.u32 %v3395, 7
    %v3397 = vsub.s32 %v3394, %v3396
    %v3398 = vrot.slane %v3384, %v3397
    %v3399 = vcombine.low %v3343, %v3359
    %v3400 = vcombine.high %v3343, %v3359
    %v3402 = vunpack.c.l.s4 1934713408
    %v3403 = vunpack.c.0.s8 %v3402
    %v3404 = vlaneseq
    %v3405 = vshrl.u32 %v3404, 7
    %v3406 = vsub.s32 %v3403, %v3405
    %v3407 = vrot.slane %v3399, %v3406
    %v3409 = vunpack.c.l.s4 1934713408
    %v3410 = vunpack.c.0.s8 %v3409
    %v3411 = vlaneseq
    %v3412 = vshrl.u32 %v3411, 7
    %v3413 = vsub.s32 %v3410, %v3412
    %v3414 = vrot.slane %v3400, %v3413
    %v3415 = vcombine.low %v3350, %v3366
    %v3416 = vcombine.high %v3350, %v3366
    %v3418 = vunpack.c.l.s4 1934713408
    %v3419 = vunpack.c.0.s8 %v3418
    %v3420 = vlaneseq
    %v3421 = vshrl.u32 %v3420, 7
    %v3422 = vsub.s32 %v3419, %v3421
    %v3423 = vrot.slane %v3415, %v3422
    %v3425 = vunpack.c.l.s4 1934713408
    %v3426 = vunpack.c.0.s8 %v3425
    %v3427 = vlaneseq
    %v3428 = vshrl.u32 %v3427, 7
    %v3429 = vsub.s32 %v3426, %v3428
    %v3430 = vrot.slane %v3416, %v3429
    %v3431 = vcombine.low %v3375, %v3391
    %v3432 = vcombine.high %v3375, %v3391
    %v3434 = vunpack.c.l.s4 1934713408
    %v3435 = vunpack.c.0.s8 %v3434
    %v3436 = vlaneseq
    %v3437 = vshrl.u32 %v3436, 7
    %v3438 = vsub.s32 %v3435, %v3437
    %v3439 = vrot.slane %v3431, %v3438
    %v3441 = vunpack.c.l.s4 1934713408
    %v3442 = vunpack.c.0.s8 %v3441
    %v3443 = vlaneseq
    %v3444 = vshrl.u32 %v3443, 7
    %v3445 = vsub.s32 %v3442, %v3444
    %v3446 = vrot.slane %v3432, %v3445
    %v3447 = vcombine.low %v3382, %v3398
    %v3448 = vcombine.high %v3382, %v3398
    %v3450 = vunpack.c.l.s4 1934713408
    %v3451 = vunpack.c.0.s8 %v3450
    %v3452 = vlaneseq
    %v3453 = vshrl.u32 %v3452, 7
    %v3454 = vsub.s32 %v3451, %v3453
    %v3455 = vrot.slane %v3447, %v3454
    %v3457 = vunpack.c.l.s4 1934713408
    %v3458 = vunpack.c.0.s8 %v3457
    %v3459 = vlaneseq
    %v3460 = vshrl.u32 %v3459, 7
    %v3461 = vsub.s32 %v3458, %v3460
    %v3462 = vrot.slane %v3448, %v3461
    %v3463 = vcombine.low %v3407, %v3439
    %v3464 = vcombine.high %v3407, %v3439
    %v3465 = vcombine.low %v3414, %v3446
    %v3466 = vcombine.high %v3414, %v3446
    %v3467 = vcombine.low %v3423, %v3455
    %v3468 = vcombine.high %v3423, %v3455
    %v3469 = vcombine.low %v3430, %v3462
    %v3470 = vcombine.high %v3430, %v3462
    %v3473 = vpack.i.b16 %v3191, %v3055
    %v3474 = vshrl.u32 %v3055, 16
    %v3475 = vshrl.u32 %v3191, 16
    %v3476 = vpack.i.b16 %v3475, %v3474
    %v3479 = vpack.i.b16 %v3192, %v3056
    %v3480 = vshrl.u32 %v3056, 16
    %v3481 = vshrl.u32 %v3192, 16
    %v3482 = vpack.i.b16 %v3481, %v3480
    %v3485 = vpack.i.b16 %v3193, %v3057
    %v3486 = vshrl.u32 %v3057, 16
    %v3487 = vshrl.u32 %v3193, 16
    %v3488 = vpack.i.b16 %v3487, %v3486
    %v3491 = vpack.i.b16 %v3194, %v3058
    %v3492 = vshrl.u32 %v3058, 16
    %v3493 = vshrl.u32 %v3194, 16
    %v3494 = vpack.i.b16 %v3493, %v3492
    %v3497 = vpack.i.b16 %v3195, %v3059
    %v3498 = vshrl.u32 %v3059, 16
    %v3499 = vshrl.u32 %v3195, 16
    %v3500 = vpack.i.b16 %v3499, %v3498
    %v3503 = vpack.i.b16 %v3196, %v3060
    %v3504 = vshrl.u32 %v3060, 16
    %v3505 = vshrl.u32 %v3196, 16
    %v3506 = vpack.i.b16 %v3505, %v3504
    %v3509 = vpack.i.b16 %v3197, %v3061
    %v3510 = vshrl.u32 %v3061, 16
    %v3511 = vshrl.u32 %v3197, 16
    %v3512 = vpack.i.b16 %v3511, %v3510
    %v3515 = vpack.i.b16 %v3198, %v3062
    %v3516 = vshrl.u32 %v3062, 16
    %v3517 = vshrl.u32 %v3198, 16
    %v3518 = vpack.i.b16 %v3517, %v3516
    %v3521 = vpack.i.b16 %v3463, %v3327
    %v3522 = vshrl.u32 %v3327, 16
    %v3523 = vshrl.u32 %v3463, 16
    %v3524 = vpack.i.b16 %v3523, %v3522
    %v3527 = vpack.i.b16 %v3464, %v3328
    %v3528 = vshrl.u32 %v3328, 16
    %v3529 = vshrl.u32 %v3464, 16
    %v3530 = vpack.i.b16 %v3529, %v3528
    %v3533 = vpack.i.b16 %v3465, %v3329
    %v3534 = vshrl.u32 %v3329, 16
    %v3535 = vshrl.u32 %v3465, 16
    %v3536 = vpack.i.b16 %v3535, %v3534
    %v3539 = vpack.i.b16 %v3466, %v3330
    %v3540 = vshrl.u32 %v3330, 16
    %v3541 = vshrl.u32 %v3466, 16
    %v3542 = vpack.i.b16 %v3541, %v3540
    %v3545 = vpack.i.b16 %v3467, %v3331
    %v3546 = vshrl.u32 %v3331, 16
    %v3547 = vshrl.u32 %v3467, 16
    %v3548 = vpack.i.b16 %v3547, %v3546
    %v3551 = vpack.i.b16 %v3468, %v3332
    %v3552 = vshrl.u32 %v3332, 16
    %v3553 = vshrl.u32 %v3468, 16
    %v3554 = vpack.i.b16 %v3553, %v3552
    %v3557 = vpack.i.b16 %v3469, %v3333
    %v3558 = vshrl.u32 %v3333, 16
    %v3559 = vshrl.u32 %v3469, 16
    %v3560 = vpack.i.b16 %v3559, %v3558
    %v3563 = vpack.i.b16 %v3470, %v3334
    %v3564 = vshrl.u32 %v3334, 16
    %v3565 = vshrl.u32 %v3470, 16
    %v3566 = vpack.i.b16 %v3565, %v3564
    %v3567 = vunpack.c.l.b16 %v3473
    %v3568 = vunpack.c.h.b16 %v3473
    %v3569 = vunpack.c.l.b16 %v3476
    %v3570 = vunpack.c.h.b16 %v3476
    %v3571 = vunpack.c.l.b16 %v3479
    %v3572 = vunpack.c.h.b16 %v3479
    %v3573 = vunpack.c.l.b16 %v3482
    %v3574 = vunpack.c.h.b16 %v3482
    %v3575 = vunpack.c.l.b16 %v3485
    %v3576 = vunpack.c.h.b16 %v3485
    %v3577 = vunpack.c.l.b16 %v3488
    %v3578 = vunpack.c.h.b16 %v3488
    %v3579 = vunpack.c.l.b16 %v3491
    %v3580 = vunpack.c.h.b16 %v3491
    %v3581 = vunpack.c.l.b16 %v3494
    %v3582 = vunpack.c.h.b16 %v3494
    %v3583 = vunpack.c.l.b16 %v3497
    %v3584 = vunpack.c.h.b16 %v3497
    %v3585 = vunpack.c.l.b16 %v3500
    %v3586 = vunpack.c.h.b16 %v3500
    %v3587 = vunpack.c.l.b16 %v3503
    %v3588 = vunpack.c.h.b16 %v3503
    %v3589 = vunpack.c.l.b16 %v3506
    %v3590 = vunpack.c.h.b16 %v3506
    %v3591 = vunpack.c.l.b16 %v3509
    %v3592 = vunpack.c.h.b16 %v3509
    %v3593 = vunpack.c.l.b16 %v3512
    %v3594 = vunpack.c.h.b16 %v3512
    %v3595 = vunpack.c.l.b16 %v3515
    %v3596 = vunpack.c.h.b16 %v3515
    %v3597 = vunpack.c.l.b16 %v3518
    %v3598 = vunpack.c.h.b16 %v3518
    %v3599 = vunpack.c.l.b16 %v3521
    %v3600 = vunpack.c.h.b16 %v3521
    %v3601 = vunpack.c.l.b16 %v3524
    %v3602 = vunpack.c.h.b16 %v3524
    %v3603 = vunpack.c.l.b16 %v3527
    %v3604 = vunpack.c.h.b16 %v3527
    %v3605 = vunpack.c.l.b16 %v3530
    %v3606 = vunpack.c.h.b16 %v3530
    %v3607 = vunpack.c.l.b16 %v3533
    %v3608 = vunpack.c.h.b16 %v3533
    %v3609 = vunpack.c.l.b16 %v3536
    %v3610 = vunpack.c.h.b16 %v3536
    %v3611 = vunpack.c.l.b16 %v3539
    %v3612 = vunpack.c.h.b16 %v3539
    %v3613 = vunpack.c.l.b16 %v3542
    %v3614 = vunpack.c.h.b16 %v3542
    %v3615 = vunpack.c.l.b16 %v3545
    %v3616 = vunpack.c.h.b16 %v3545
    %v3617 = vunpack.c.l.b16 %v3548
    %v3618 = vunpack.c.h.b16 %v3548
    %v3619 = vunpack.c.l.b16 %v3551
    %v3620 = vunpack.c.h.b16 %v3551
    %v3621 = vunpack.c.l.b16 %v3554
    %v3622 = vunpack.c.h.b16 %v3554
    %v3623 = vunpack.c.l.b16 %v3557
    %v3624 = vunpack.c.h.b16 %v3557
    %v3625 = vunpack.c.l.b16 %v3560
    %v3626 = vunpack.c.h.b16 %v3560
    %v3627 = vunpack.c.l.b16 %v3563
    %v3628 = vunpack.c.h.b16 %v3563
    %v3629 = vunpack.c.l.b16 %v3566
    %v3630 = vunpack.c.h.b16 %v3566
    %v3631 = vpack.c.b16 %v3567, %v3567
    %v3632 = vpack.c.b16 %v3568, %v3568
    %v3633 = vpack.c.b16 %v3569, %v3569
    %v3634 = vpack.c.b16 %v3570, %v3570
    %v3635 = vpack.c.b16 %v3571, %v3571
    %v3636 = vpack.c.b16 %v3572, %v3572
    %v3637 = vpack.c.b16 %v3573, %v3573
    %v3638 = vpack.c.b16 %v3574, %v3574
    %v3639 = vpack.c.b16 %v3575, %v3575
    %v3640 = vpack.c.b16 %v3576, %v3576
    %v3641 = vpack.c.b16 %v3577, %v3577
    %v3642 = vpack.c.b16 %v3578, %v3578
    %v3643 = vpack.c.b16 %v3579, %v3579
    %v3644 = vpack.c.b16 %v3580, %v3580
    %v3645 = vpack.c.b16 %v3581, %v3581
    %v3646 = vpack.c.b16 %v3582, %v3582
    %v3647 = vpack.c.b16 %v3583, %v3583
    %v3648 = vpack.c.b16 %v3584, %v3584
    %v3649 = vpack.c.b16 %v3585, %v3585
    %v3650 = vpack.c.b16 %v3586, %v3586
    %v3651 = vpack.c.b16 %v3587, %v3587
    %v3652 = vpack.c.b16 %v3588, %v3588
    %v3653 = vpack.c.b16 %v3589, %v3589
    %v3654 = vpack.c.b16 %v3590, %v3590
    %v3655 = vpack.c.b16 %v3591, %v3591
    %v3656 = vpack.c.b16 %v3592, %v3592
    %v3657 = vpack.c.b16 %v3593, %v3593
    %v3658 = vpack.c.b16 %v3594, %v3594
    %v3659 = vpack.c.b16 %v3595, %v3595
    %v3660 = vpack.c.b16 %v3596, %v3596
    %v3661 = vpack.c.b16 %v3597, %v3597
    %v3662 = vpack.c.b16 %v3598, %v3598
    %v3663 = vpack.c.b16 %v3599, %v3599
    %v3664 = vpack.c.b16 %v3600, %v3600
    %v3665 = vpack.c.b16 %v3601, %v3601
    %v3666 = vpack.c.b16 %v3602, %v3602
    %v3667 = vpack.c.b16 %v3603, %v3603
    %v3668 = vpack.c.b16 %v3604, %v3604
    %v3669 = vpack.c.b16 %v3605, %v3605
    %v3670 = vpack.c.b16 %v3606, %v3606
    %v3671 = vpack.c.b16 %v3607, %v3607
    %v3672 = vpack.c.b16 %v3608, %v3608
    %v3673 = vpack.c.b16 %v3609, %v3609
    %v3674 = vpack.c.b16 %v3610, %v3610
    %v3675 = vpack.c.b16 %v3611, %v3611
    %v3676 = vpack.c.b16 %v3612, %v3612
    %v3677 = vpack.c.b16 %v3613, %v3613
    %v3678 = vpack.c.b16 %v3614, %v3614
    %v3679 = vpack.c.b16 %v3615, %v3615
    %v3680 = vpack.c.b16 %v3616, %v3616
    %v3681 = vpack.c.b16 %v3617, %v3617
    %v3682 = vpack.c.b16 %v3618, %v3618
    %v3683 = vpack.c.b16 %v3619, %v3619
    %v3684 = vpack.c.b16 %v3620, %v3620
    %v3685 = vpack.c.b16 %v3621, %v3621
    %v3686 = vpack.c.b16 %v3622, %v3622
    %v3687 = vpack.c.b16 %v3623, %v3623
    %v3688 = vpack.c.b16 %v3624, %v3624
    %v3689 = vpack.c.b16 %v3625, %v3625
    %v3690 = vpack.c.b16 %v3626, %v3626
    %v3691 = vpack.c.b16 %v3627, %v3627
    %v3692 = vpack.c.b16 %v3628, %v3628
    %v3693 = vpack.c.b16 %v3629, %v3629
    %v3694 = vpack.c.b16 %v3630, %v3630
    %3759 = vst.msk [vmem:[#allocation14] sm:$0xf] %vm2678, %v3631
    %3760 = vst.msk [vmem:[#allocation14 + $0x4] sm:$0xf] %vm2678, %v3632
    %3761 = vst.msk [vmem:[#allocation14 + $0x8] sm:$0xf] %vm2678, %v3633
    %3762 = vst.msk [vmem:[#allocation14 + $0xc] sm:$0xf] %vm2678, %v3634
    %3763 = vst.msk [vmem:[#allocation14 + $0x10] sm:$0xf] %vm2678, %v3635
    %3764 = vst.msk [vmem:[#allocation14 + $0x14] sm:$0xf] %vm2678, %v3636
    %3765 = vst.msk [vmem:[#allocation14 + $0x18] sm:$0xf] %vm2678, %v3637
    %3766 = vst.msk [vmem:[#allocation14 + $0x1c] sm:$0xf] %vm2678, %v3638
    %3767 = vst.msk [vmem:[#allocation14 + $0x20] sm:$0xf] %vm2678, %v3639
    %3768 = vst.msk [vmem:[#allocation14 + $0x24] sm:$0xf] %vm2678, %v3640
    %3769 = vst.msk [vmem:[#allocation14 + $0x28] sm:$0xf] %vm2678, %v3641
    %3770 = vst.msk [vmem:[#allocation14 + $0x2c] sm:$0xf] %vm2678, %v3642
    %3771 = vst.msk [vmem:[#allocation14 + $0x30] sm:$0xf] %vm2678, %v3643
    %3772 = vst.msk [vmem:[#allocation14 + $0x34] sm:$0xf] %vm2678, %v3644
    %3773 = vst.msk [vmem:[#allocation14 + $0x38] sm:$0xf] %vm2678, %v3645
    %3774 = vst.msk [vmem:[#allocation14 + $0x3c] sm:$0xf] %vm2678, %v3646
    %3775 = vst.msk [vmem:[#allocation14 + $0x40] sm:$0xf] %vm2678, %v3647
    %3776 = vst.msk [vmem:[#allocation14 + $0x44] sm:$0xf] %vm2678, %v3648
    %3777 = vst.msk [vmem:[#allocation14 + $0x48] sm:$0xf] %vm2678, %v3649
    %3778 = vst.msk [vmem:[#allocation14 + $0x4c] sm:$0xf] %vm2678, %v3650
    %3779 = vst.msk [vmem:[#allocation14 + $0x50] sm:$0xf] %vm2678, %v3651
    %3780 = vst.msk [vmem:[#allocation14 + $0x54] sm:$0xf] %vm2678, %v3652
    %3781 = vst.msk [vmem:[#allocation14 + $0x58] sm:$0xf] %vm2678, %v3653
    %3782 = vst.msk [vmem:[#allocation14 + $0x5c] sm:$0xf] %vm2678, %v3654
    %3783 = vst.msk [vmem:[#allocation14 + $0x60] sm:$0xf] %vm2678, %v3655
    %3784 = vst.msk [vmem:[#allocation14 + $0x64] sm:$0xf] %vm2678, %v3656
    %3785 = vst.msk [vmem:[#allocation14 + $0x68] sm:$0xf] %vm2678, %v3657
    %3786 = vst.msk [vmem:[#allocation14 + $0x6c] sm:$0xf] %vm2678, %v3658
    %3787 = vst.msk [vmem:[#allocation14 + $0x70] sm:$0xf] %vm2678, %v3659
    %3788 = vst.msk [vmem:[#allocation14 + $0x74] sm:$0xf] %vm2678, %v3660
    %3789 = vst.msk [vmem:[#allocation14 + $0x78] sm:$0xf] %vm2678, %v3661
    %3790 = vst.msk [vmem:[#allocation14 + $0x7c] sm:$0xf] %vm2678, %v3662
    %3791 = vst.msk [vmem:[#allocation14 + $0x80] sm:$0xf] %vm2678, %v3663
    %3792 = vst.msk [vmem:[#allocation14 + $0x84] sm:$0xf] %vm2678, %v3664
    %3793 = vst.msk [vmem:[#allocation14 + $0x88] sm:$0xf] %vm2678, %v3665
    %3794 = vst.msk [vmem:[#allocation14 + $0x8c] sm:$0xf] %vm2678, %v3666
    %3795 = vst.msk [vmem:[#allocation14 + $0x90] sm:$0xf] %vm2678, %v3667
    %3796 = vst.msk [vmem:[#allocation14 + $0x94] sm:$0xf] %vm2678, %v3668
    %3797 = vst.msk [vmem:[#allocation14 + $0x98] sm:$0xf] %vm2678, %v3669
    %3798 = vst.msk [vmem:[#allocation14 + $0x9c] sm:$0xf] %vm2678, %v3670
    %3799 = vst.msk [vmem:[#allocation14 + $0xa0] sm:$0xf] %vm2678, %v3671
    %3800 = vst.msk [vmem:[#allocation14 + $0xa4] sm:$0xf] %vm2678, %v3672
    %3801 = vst.msk [vmem:[#allocation14 + $0xa8] sm:$0xf] %vm2678, %v3673
    %3802 = vst.msk [vmem:[#allocation14 + $0xac] sm:$0xf] %vm2678, %v3674
    %3803 = vst.msk [vmem:[#allocation14 + $0xb0] sm:$0xf] %vm2678, %v3675
    %3804 = vst.msk [vmem:[#allocation14 + $0xb4] sm:$0xf] %vm2678, %v3676
    %3805 = vst.msk [vmem:[#allocation14 + $0xb8] sm:$0xf] %vm2678, %v3677
    %3806 = vst.msk [vmem:[#allocation14 + $0xbc] sm:$0xf] %vm2678, %v3678
    %3807 = vst.msk [vmem:[#allocation14 + $0xc0] sm:$0xf] %vm2678, %v3679
    %3808 = vst.msk [vmem:[#allocation14 + $0xc4] sm:$0xf] %vm2678, %v3680
    %3809 = vst.msk [vmem:[#allocation14 + $0xc8] sm:$0xf] %vm2678, %v3681
    %3810 = vst.msk [vmem:[#allocation14 + $0xcc] sm:$0xf] %vm2678, %v3682
    %3811 = vst.msk [vmem:[#allocation14 + $0xd0] sm:$0xf] %vm2678, %v3683
    %3812 = vst.msk [vmem:[#allocation14 + $0xd4] sm:$0xf] %vm2678, %v3684
    %3813 = vst.msk [vmem:[#allocation14 + $0xd8] sm:$0xf] %vm2678, %v3685
    %3814 = vst.msk [vmem:[#allocation14 + $0xdc] sm:$0xf] %vm2678, %v3686
    %3815 = vst.msk [vmem:[#allocation14 + $0xe0] sm:$0xf] %vm2678, %v3687
    %3816 = vst.msk [vmem:[#allocation14 + $0xe4] sm:$0xf] %vm2678, %v3688
    %3817 = vst.msk [vmem:[#allocation14 + $0xe8] sm:$0xf] %vm2678, %v3689
    %3818 = vst.msk [vmem:[#allocation14 + $0xec] sm:$0xf] %vm2678, %v3690
    %3819 = vst.msk [vmem:[#allocation14 + $0xf0] sm:$0xf] %vm2678, %v3691
    %3820 = vst.msk [vmem:[#allocation14 + $0xf4] sm:$0xf] %vm2678, %v3692
    %3821 = vst.msk [vmem:[#allocation14 + $0xf8] sm:$0xf] %vm2678, %v3693
    %3822 = vst.msk [vmem:[#allocation14 + $0xfc] sm:$0xf] %vm2678, %v3694
    %v3839 = vunpack.c.l.b16 %v1710
    %v3840 = vunpack.c.h.b16 %v1710
    %v3841 = vunpack.c.l.b16 %v1711
    %v3842 = vunpack.c.h.b16 %v1711
    %v3843 = vunpack.c.l.b16 %v1712
    %v3844 = vunpack.c.h.b16 %v1712
    %v3845 = vunpack.c.l.b16 %v1713
    %v3846 = vunpack.c.h.b16 %v1713
    %v3847 = vunpack.c.l.b16 %v1714
    %v3848 = vunpack.c.h.b16 %v1714
    %v3849 = vunpack.c.l.b16 %v1715
    %v3850 = vunpack.c.h.b16 %v1715
    %v3851 = vunpack.c.l.b16 %v1716
    %v3852 = vunpack.c.h.b16 %v1716
    %v3853 = vunpack.c.l.b16 %v1717
    %v3854 = vunpack.c.h.b16 %v1717
    %v3855 = vunpack.c.l.b16 %v1718
    %v3856 = vunpack.c.h.b16 %v1718
    %v3857 = vunpack.c.l.b16 %v1719
    %v3858 = vunpack.c.h.b16 %v1719
    %v3859 = vunpack.c.l.b16 %v1720
    %v3860 = vunpack.c.h.b16 %v1720
    %v3861 = vunpack.c.l.b16 %v1721
    %v3862 = vunpack.c.h.b16 %v1721
    %v3863 = vunpack.c.l.b16 %v1722
    %v3864 = vunpack.c.h.b16 %v1722
    %v3865 = vunpack.c.l.b16 %v1723
    %v3866 = vunpack.c.h.b16 %v1723
    %v3867 = vunpack.c.l.b16 %v1724
    %v3868 = vunpack.c.h.b16 %v1724
    %v3869 = vunpack.c.l.b16 %v1725
    %v3870 = vunpack.c.h.b16 %v1725
    %v3871 = vpack.c.b16 %v3839, %v3839
    %v3872 = vpack.c.b16 %v3840, %v3840
    %v3873 = vpack.c.b16 %v3841, %v3841
    %v3874 = vpack.c.b16 %v3842, %v3842
    %v3875 = vpack.c.b16 %v3843, %v3843
    %v3876 = vpack.c.b16 %v3844, %v3844
    %v3877 = vpack.c.b16 %v3845, %v3845
    %v3878 = vpack.c.b16 %v3846, %v3846
    %v3879 = vpack.c.b16 %v3847, %v3847
    %v3880 = vpack.c.b16 %v3848, %v3848
    %v3881 = vpack.c.b16 %v3849, %v3849
    %v3882 = vpack.c.b16 %v3850, %v3850
    %v3883 = vpack.c.b16 %v3851, %v3851
    %v3884 = vpack.c.b16 %v3852, %v3852
    %v3885 = vpack.c.b16 %v3853, %v3853
    %v3886 = vpack.c.b16 %v3854, %v3854
    %v3887 = vpack.c.b16 %v3855, %v3855
    %v3888 = vpack.c.b16 %v3856, %v3856
    %v3889 = vpack.c.b16 %v3857, %v3857
    %v3890 = vpack.c.b16 %v3858, %v3858
    %v3891 = vpack.c.b16 %v3859, %v3859
    %v3892 = vpack.c.b16 %v3860, %v3860
    %v3893 = vpack.c.b16 %v3861, %v3861
    %v3894 = vpack.c.b16 %v3862, %v3862
    %v3895 = vpack.c.b16 %v3863, %v3863
    %v3896 = vpack.c.b16 %v3864, %v3864
    %v3897 = vpack.c.b16 %v3865, %v3865
    %v3898 = vpack.c.b16 %v3866, %v3866
    %v3899 = vpack.c.b16 %v3867, %v3867
    %v3900 = vpack.c.b16 %v3868, %v3868
    %v3901 = vpack.c.b16 %v3869, %v3869
    %v3902 = vpack.c.b16 %v3870, %v3870
    %vm3935 = vcmask 257024
    %3936 = vst.msk [vmem:[#allocation16] sm:$0xf] %vm3935, %v3871
    %3937 = vst.msk [vmem:[#allocation16 + $0x4] sm:$0xf] %vm3935, %v3872
    %3938 = vst.msk [vmem:[#allocation16 + $0x8] sm:$0xf] %vm3935, %v3873
    %3939 = vst.msk [vmem:[#allocation16 + $0xc] sm:$0xf] %vm3935, %v3874
    %3940 = vst.msk [vmem:[#allocation16 + $0x10] sm:$0xf] %vm3935, %v3875
    %3941 = vst.msk [vmem:[#allocation16 + $0x14] sm:$0xf] %vm3935, %v3876
    %3942 = vst.msk [vmem:[#allocation16 + $0x18] sm:$0xf] %vm3935, %v3877
    %3943 = vst.msk [vmem:[#allocation16 + $0x1c] sm:$0xf] %vm3935, %v3878
    %3944 = vst.msk [vmem:[#allocation16 + $0x20] sm:$0xf] %vm3935, %v3879
    %3945 = vst.msk [vmem:[#allocation16 + $0x24] sm:$0xf] %vm3935, %v3880
    %3946 = vst.msk [vmem:[#allocation16 + $0x28] sm:$0xf] %vm3935, %v3881
    %3947 = vst.msk [vmem:[#allocation16 + $0x2c] sm:$0xf] %vm3935, %v3882
    %3948 = vst.msk [vmem:[#allocation16 + $0x30] sm:$0xf] %vm3935, %v3883
    %3949 = vst.msk [vmem:[#allocation16 + $0x34] sm:$0xf] %vm3935, %v3884
    %3950 = vst.msk [vmem:[#allocation16 + $0x38] sm:$0xf] %vm3935, %v3885
    %3951 = vst.msk [vmem:[#allocation16 + $0x3c] sm:$0xf] %vm3935, %v3886
    %3952 = vst.msk [vmem:[#allocation16 + $0x40] sm:$0xf] %vm3935, %v3887
    %3953 = vst.msk [vmem:[#allocation16 + $0x44] sm:$0xf] %vm3935, %v3888
    %3954 = vst.msk [vmem:[#allocation16 + $0x48] sm:$0xf] %vm3935, %v3889
    %3955 = vst.msk [vmem:[#allocation16 + $0x4c] sm:$0xf] %vm3935, %v3890
    %3956 = vst.msk [vmem:[#allocation16 + $0x50] sm:$0xf] %vm3935, %v3891
    %3957 = vst.msk [vmem:[#allocation16 + $0x54] sm:$0xf] %vm3935, %v3892
    %3958 = vst.msk [vmem:[#allocation16 + $0x58] sm:$0xf] %vm3935, %v3893
    %3959 = vst.msk [vmem:[#allocation16 + $0x5c] sm:$0xf] %vm3935, %v3894
    %3960 = vst.msk [vmem:[#allocation16 + $0x60] sm:$0xf] %vm3935, %v3895
    %3961 = vst.msk [vmem:[#allocation16 + $0x64] sm:$0xf] %vm3935, %v3896
    %3962 = vst.msk [vmem:[#allocation16 + $0x68] sm:$0xf] %vm3935, %v3897
    %3963 = vst.msk [vmem:[#allocation16 + $0x6c] sm:$0xf] %vm3935, %v3898
    %3964 = vst.msk [vmem:[#allocation16 + $0x70] sm:$0xf] %vm3935, %v3899
    %3965 = vst.msk [vmem:[#allocation16 + $0x74] sm:$0xf] %vm3935, %v3900
    %3966 = vst.msk [vmem:[#allocation16 + $0x78] sm:$0xf] %vm3935, %v3901
    %3967 = vst.msk [vmem:[#allocation16 + $0x7c] sm:$0xf] %vm3935, %v3902
    // Predicated region
    $region50: #{triangle_multiplication.2} parent=1 // pred_check
      _
    $region51: #{triangle_multiplication.2} parent=1 // pred_check_branch
      %3969 = sbr.rel (0) target = $region53
    $region52: #{triangle_multiplication.2} parent=1 // pred_region
      %s3971 = ssub.s32 4096, 4096
      %3972 = vsyncadd [#allocation4], %s3971
      %s3973 = sshll.u32 [#allocation13], 4
      %s3974 = int_to_ptr.vmem [resolvable:$true] %s3973
      %3979 = dma.vmem_to_hbm [thread:$0]  %s3974, 4096, %s6, [#allocation4], 64, 64, 4
    $region53: #{triangle_multiplication.2} parent=1 // pred_fallthru
      _
    // Predicated region
    $region54: #{triangle_multiplication.2} parent=1 // pred_check
      _
    $region55: #{triangle_multiplication.2} parent=1 // pred_check_branch
      %3981 = sbr.rel (0) target = $region57
    $region56: #{triangle_multiplication.2} parent=1 // pred_region
      %s3983 = ssub.s32 4096, 4096
      %3984 = vsyncadd [#allocation15], %s3983
      %s3985 = sshll.u32 [#allocation14], 4
      %s3986 = int_to_ptr.vmem [resolvable:$true] %s3985
      %3991 = dma.vmem_to_hbm [thread:$0]  %s3986, 4096, %s7, [#allocation15], 64, 64, 4
    $region57: #{triangle_multiplication.2} parent=1 // pred_fallthru
      _
    // Predicated region
    $region58: #{triangle_multiplication.2} parent=1 // pred_check
      _
    $region59: #{triangle_multiplication.2} parent=1 // pred_check_branch
      %3993 = sbr.rel (0) target = $region61
    $region60: #{triangle_multiplication.2} parent=1 // pred_region
      %s3995 = ssub.s32 2048, 2048
      %3996 = vsyncadd [#allocation15], %s3995
      %s3997 = sshll.u32 [#allocation16], 4
      %s3998 = int_to_ptr.vmem [resolvable:$true] %s3997
      %4003 = dma.vmem_to_hbm [thread:$0]  %s3998, 2048, %s8, [#allocation15], 64, 64, 4
    $region61: #{triangle_multiplication.2} parent=1 // pred_fallthru
      _
    // Predicated region
    $region62: #{triangle_multiplication.2} parent=1 // pred_check
      _
    $region63: #{triangle_multiplication.2} parent=1 // pred_check_branch
      %4005 = sbr.rel (0) target = $region65
    $region64: #{triangle_multiplication.2} parent=1 // pred_region
      %4006 = dma.done [#allocation4], 4096
    $region65: #{triangle_multiplication.2} parent=1 // pred_fallthru
      _
    // Predicated region
    $region66: #{triangle_multiplication.2} parent=1 // pred_check
      _
    $region67: #{triangle_multiplication.2} parent=1 // pred_check_branch
      %4008 = sbr.rel (0) target = $region69
    $region68: #{triangle_multiplication.2} parent=1 // pred_region
      %4009 = dma.done [#allocation15], 4096
    $region69: #{triangle_multiplication.2} parent=1 // pred_fallthru
      _
    // Predicated region
    $region70: #{triangle_multiplication.2} parent=1 // pred_check
      _
    $region71: #{triangle_multiplication.2} parent=1 // pred_check_branch
      %4011 = sbr.rel (0) target = $region73
    $region72: #{triangle_multiplication.2} parent=1 // pred_region
      %4012 = dma.done [#allocation15], 2048
    $region73: #{triangle_multiplication.2} parent=1 // pred_fallthru
      _
    %4013 = vsyncpa [#allocation3], 1
    %4014 = vsyncpa [#allocation6], 1
    %4015 = vsyncpa [#allocation9], 1
    %4016 = vsyncpa [#allocation12], 1
    %4017 = vsyncpa [#allocation4], 1
    %4018 = vsyncpa [#allocation15], 1

// kernel: triangle_multiplication.3
$region0: #{triangle_multiplication.3}
  #allocation0 [shape = 'u32[]', space=smem, size = 0x4, offset = 0x4, fixed_abs, tag = 'smem constant byte address 0x4 - core index']
  #allocation1 [shape = 'u32[144,128]{1,0:T(1,128)}', space=vmem, size = 0x12000, scoped, tag = 'internal scratch']
  %s0 = inlined_call_operand.hbm [shape: bf16[32,16,16], index: 0, kind: input, shape index: {}]
  %s1 = inlined_call_operand.hbm [shape: bf16[32,16,16], index: 1, kind: input, shape index: {}]
  %s2 = inlined_call_operand.hbm [shape: bf16[16,16,32], index: 2, kind: input, shape index: {}]
  %s3 = inlined_call_operand.hbm [shape: f32[32,1], index: 3, kind: input, shape index: {}]
  %s4 = inlined_call_operand.hbm [shape: f32[32,1], index: 4, kind: input, shape index: {}]
  %s5 = inlined_call_operand.hbm [shape: bf16[32,32], index: 5, kind: input, shape index: {}]
  %s6 = inlined_call_operand.hbm [shape: f32[1,32], index: 6, kind: input, shape index: {}]
  %s7 = inlined_call_operand.hbm [shape: f32[16,16,32], index: 7, kind: output, shape index: {}]
  %s8 = sld [smem:[#allocation0]]
  $region66: #{triangle_multiplication.3} parent=0
    _
  %s10 = ssub.s32 1, %s8
  %s11 = scalar_select 0, %s10, %s8
  $region1: #{triangle_multiplication.3} parent=0
    #allocation2 [shape = 'u8[131072]{0}', space=vmem, size = 0x20000, scoped, tag = 'input window, operand 0, single buffered']
    #allocation3 [shape = 's32[1]{0}', space=sflag, size = 0x4, scoped, tag = 'scoped memory for triangle_multiplication.3']
    #allocation4 [shape = 's32[1]{0}', space=sflag, size = 0x4, scoped, tag = 'scoped memory for triangle_multiplication.3']
    #allocation5 [shape = 'u8[131072]{0}', space=vmem, size = 0x20000, scoped, tag = 'input window, operand 1, single buffered']
    #allocation6 [shape = 's32[1]{0}', space=sflag, size = 0x4, scoped, tag = 'scoped memory for triangle_multiplication.3']
    #allocation7 [shape = 'u8[65536]{0}', space=vmem, size = 0x10000, scoped, tag = 'input window, operand 2, single buffered']
    #allocation8 [shape = 'u8[16384]{0}', space=vmem, size = 0x4000, scoped, tag = 'input window, operand 3, single buffered']
    #allocation9 [shape = 's32[1]{0}', space=sflag, size = 0x4, scoped, tag = 'scoped memory for triangle_multiplication.3']
    #allocation10 [shape = 'u8[16384]{0}', space=vmem, size = 0x4000, scoped, tag = 'input window, operand 4, single buffered']
    #allocation11 [shape = 'u8[8192]{0}', space=vmem, size = 0x2000, scoped, tag = 'input window, operand 5, single buffered']
    #allocation12 [shape = 's32[1]{0}', space=sflag, size = 0x4, scoped, tag = 'scoped memory for triangle_multiplication.3']
    #allocation13 [shape = 'u8[512]{0}', space=vmem, size = 0x400, scoped, tag = 'input window, operand 6, single buffered']
    #allocation14 [shape = 'u8[131072]{0}', space=vmem, size = 0x20000, scoped, tag = 'output window, operand 0, single buffered']
    %12 = vsyncpa [#allocation3], 0
    %13 = vsyncpa [#allocation6], 0
    %14 = vsyncpa [#allocation9], 0
    %15 = vsyncpa [#allocation12], 0
    %16 = vsyncpa [#allocation4], 0
    // Predicated region
    $region2: #{triangle_multiplication.3} parent=1 // pred_check
      _
    $region3: #{triangle_multiplication.3} parent=1 // pred_check_branch
      %18 = sbr.rel (0) target = $region5
    $region4: #{triangle_multiplication.3} parent=1 // pred_region
      %s20 = ssub.s32 4096, 4096
      %21 = vsyncadd [#allocation3], %s20
      %s22 = sshll.u32 [#allocation2], 4
      %s23 = int_to_ptr.vmem [resolvable:$true] %s22
      %28 = dma.hbm_to_vmem [thread:$0]  %s0, 4096, %s23, [#allocation3], 64, 64, 4
    $region5: #{triangle_multiplication.3} parent=1 // pred_fallthru
      _
    // Predicated region
    $region6: #{triangle_multiplication.3} parent=1 // pred_check
      _
    $region7: #{triangle_multiplication.3} parent=1 // pred_check_branch
      %30 = sbr.rel (0) target = $region9
    $region8: #{triangle_multiplication.3} parent=1 // pred_region
      %s32 = ssub.s32 4096, 4096
      %33 = vsyncadd [#allocation6], %s32
      %s34 = sshll.u32 [#allocation5], 4
      %s35 = int_to_ptr.vmem [resolvable:$true] %s34
      %40 = dma.hbm_to_vmem [thread:$0]  %s1, 4096, %s35, [#allocation6], 64, 64, 4
    $region9: #{triangle_multiplication.3} parent=1 // pred_fallthru
      _
    // Predicated region
    $region10: #{triangle_multiplication.3} parent=1 // pred_check
      _
    $region11: #{triangle_multiplication.3} parent=1 // pred_check_branch
      %42 = sbr.rel (0) target = $region13
    $region12: #{triangle_multiplication.3} parent=1 // pred_region
      %s44 = ssub.s32 2048, 2048
      %45 = vsyncadd [#allocation6], %s44
      %s46 = sshll.u32 [#allocation7], 4
      %s47 = int_to_ptr.vmem [resolvable:$true] %s46
      %52 = dma.hbm_to_vmem [thread:$0]  %s2, 2048, %s47, [#allocation6], 64, 64, 4
    $region13: #{triangle_multiplication.3} parent=1 // pred_fallthru
      _
    // Predicated region
    $region14: #{triangle_multiplication.3} parent=1 // pred_check
      _
    $region15: #{triangle_multiplication.3} parent=1 // pred_check_branch
      %54 = sbr.rel (0) target = $region17
    $region16: #{triangle_multiplication.3} parent=1 // pred_region
      %s56 = ssub.s32 512, 512
      %57 = vsyncadd [#allocation9], %s56
      %s58 = sshll.u32 [#allocation8], 4
      %s59 = int_to_ptr.vmem [resolvable:$true] %s58
      %64 = dma.hbm_to_vmem [thread:$0]  %s3, 512, %s59, [#allocation9], 128, 128, 8
    $region17: #{triangle_multiplication.3} parent=1 // pred_fallthru
      _
    // Predicated region
    $region18: #{triangle_multiplication.3} parent=1 // pred_check
      _
    $region19: #{triangle_multiplication.3} parent=1 // pred_check_branch
      %66 = sbr.rel (0) target = $region21
    $region20: #{triangle_multiplication.3} parent=1 // pred_region
      %s68 = ssub.s32 512, 512
      %69 = vsyncadd [#allocation9], %s68
      %s70 = sshll.u32 [#allocation10], 4
      %s71 = int_to_ptr.vmem [resolvable:$true] %s70
      %76 = dma.hbm_to_vmem [thread:$0]  %s4, 512, %s71, [#allocation9], 128, 128, 8
    $region21: #{triangle_multiplication.3} parent=1 // pred_fallthru
      _
    // Predicated region
    $region22: #{triangle_multiplication.3} parent=1 // pred_check
      _
    $region23: #{triangle_multiplication.3} parent=1 // pred_check_branch
      %78 = sbr.rel (0) target = $region25
    $region24: #{triangle_multiplication.3} parent=1 // pred_region
      %s80 = ssub.s32 256, 256
      %81 = vsyncadd [#allocation12], %s80
      %s82 = sshll.u32 [#allocation11], 4
      %s83 = int_to_ptr.vmem [resolvable:$true] %s82
      %88 = dma.hbm_to_vmem [thread:$0]  %s5, 256, %s83, [#allocation12], 64, 64, 4
    $region25: #{triangle_multiplication.3} parent=1 // pred_fallthru
      _
    // Predicated region
    $region26: #{triangle_multiplication.3} parent=1 // pred_check
      _
    $region27: #{triangle_multiplication.3} parent=1 // pred_check_branch
      %90 = sbr.rel (0) target = $region29
    $region28: #{triangle_multiplication.3} parent=1 // pred_region
      %s92 = ssub.s32 16, 16
      %93 = vsyncadd [#allocation12], %s92
      %s95 = sshll.u32 [#allocation13], 4
      %s96 = int_to_ptr.vmem [resolvable:$true] %s95
      %98 = dma.hbm_to_vmem [thread:$0]  %s6, 16, %s96, [#allocation12]
    $region29: #{triangle_multiplication.3} parent=1 // pred_fallthru
      _
    // Predicated region
    $region30: #{triangle_multiplication.3} parent=1 // pred_check
      _
    $region31: #{triangle_multiplication.3} parent=1 // pred_check_branch
      %100 = sbr.rel (0) target = $region33
    $region32: #{triangle_multiplication.3} parent=1 // pred_region
      %101 = dma.done [#allocation3], 4096
    $region33: #{triangle_multiplication.3} parent=1 // pred_fallthru
      _
    // Predicated region
    $region34: #{triangle_multiplication.3} parent=1 // pred_check
      _
    $region35: #{triangle_multiplication.3} parent=1 // pred_check_branch
      %103 = sbr.rel (0) target = $region37
    $region36: #{triangle_multiplication.3} parent=1 // pred_region
      %104 = dma.done [#allocation6], 4096
    $region37: #{triangle_multiplication.3} parent=1 // pred_fallthru
      _
    // Predicated region
    $region38: #{triangle_multiplication.3} parent=1 // pred_check
      _
    $region39: #{triangle_multiplication.3} parent=1 // pred_check_branch
      %106 = sbr.rel (0) target = $region41
    $region40: #{triangle_multiplication.3} parent=1 // pred_region
      %107 = dma.done [#allocation6], 2048
    $region41: #{triangle_multiplication.3} parent=1 // pred_fallthru
      _
    // Predicated region
    $region42: #{triangle_multiplication.3} parent=1 // pred_check
      _
    $region43: #{triangle_multiplication.3} parent=1 // pred_check_branch
      %109 = sbr.rel (0) target = $region45
    $region44: #{triangle_multiplication.3} parent=1 // pred_region
      %110 = dma.done [#allocation9], 512
    $region45: #{triangle_multiplication.3} parent=1 // pred_fallthru
      _
    // Predicated region
    $region46: #{triangle_multiplication.3} parent=1 // pred_check
      _
    $region47: #{triangle_multiplication.3} parent=1 // pred_check_branch
      %112 = sbr.rel (0) target = $region49
    $region48: #{triangle_multiplication.3} parent=1 // pred_region
      %113 = dma.done [#allocation9], 512
    $region49: #{triangle_multiplication.3} parent=1 // pred_fallthru
      _
    // Predicated region
    $region50: #{triangle_multiplication.3} parent=1 // pred_check
      _
    $region51: #{triangle_multiplication.3} parent=1 // pred_check_branch
      %115 = sbr.rel (0) target = $region53
    $region52: #{triangle_multiplication.3} parent=1 // pred_region
      %116 = dma.done [#allocation12], 256
    $region53: #{triangle_multiplication.3} parent=1 // pred_fallthru
      _
    // Predicated region
    $region54: #{triangle_multiplication.3} parent=1 // pred_check
      _
    $region55: #{triangle_multiplication.3} parent=1 // pred_check_branch
      %118 = sbr.rel (0) target = $region57
    $region56: #{triangle_multiplication.3} parent=1 // pred_region
      %119 = dma.done [#allocation12], 16
    $region57: #{triangle_multiplication.3} parent=1 // pred_fallthru
      _
    %v121 = vld [vmem:[#allocation2] sm:$0xf]
    %v122 = vld [vmem:[#allocation2 + $0x4] sm:$0xf]
    %v123 = vld [vmem:[#allocation2 + $0x8] sm:$0xf]
    %v124 = vld [vmem:[#allocation2 + $0xc] sm:$0xf]
    %v125 = vld [vmem:[#allocation2 + $0x10] sm:$0xf]
    %v126 = vld [vmem:[#allocation2 + $0x14] sm:$0xf]
    %v127 = vld [vmem:[#allocation2 + $0x18] sm:$0xf]
    %v128 = vld [vmem:[#allocation2 + $0x1c] sm:$0xf]
    %v129 = vld [vmem:[#allocation2 + $0x20] sm:$0xf]
    %v130 = vld [vmem:[#allocation2 + $0x24] sm:$0xf]
    %v131 = vld [vmem:[#allocation2 + $0x28] sm:$0xf]
    %v132 = vld [vmem:[#allocation2 + $0x2c] sm:$0xf]
    %v133 = vld [vmem:[#allocation2 + $0x30] sm:$0xf]
    %v134 = vld [vmem:[#allocation2 + $0x34] sm:$0xf]
    %v135 = vld [vmem:[#allocation2 + $0x38] sm:$0xf]
    %v136 = vld [vmem:[#allocation2 + $0x3c] sm:$0xf]
    %v137 = vld [vmem:[#allocation2 + $0x40] sm:$0xf]
    %v138 = vld [vmem:[#allocation2 + $0x44] sm:$0xf]
    %v139 = vld [vmem:[#allocation2 + $0x48] sm:$0xf]
    %v140 = vld [vmem:[#allocation2 + $0x4c] sm:$0xf]
    %v141 = vld [vmem:[#allocation2 + $0x50] sm:$0xf]
    %v142 = vld [vmem:[#allocation2 + $0x54] sm:$0xf]
    %v143 = vld [vmem:[#allocation2 + $0x58] sm:$0xf]
    %v144 = vld [vmem:[#allocation2 + $0x5c] sm:$0xf]
    %v145 = vld [vmem:[#allocation2 + $0x60] sm:$0xf]
    %v146 = vld [vmem:[#allocation2 + $0x64] sm:$0xf]
    %v147 = vld [vmem:[#allocation2 + $0x68] sm:$0xf]
    %v148 = vld [vmem:[#allocation2 + $0x6c] sm:$0xf]
    %v149 = vld [vmem:[#allocation2 + $0x70] sm:$0xf]
    %v150 = vld [vmem:[#allocation2 + $0x74] sm:$0xf]
    %v151 = vld [vmem:[#allocation2 + $0x78] sm:$0xf]
    %v152 = vld [vmem:[#allocation2 + $0x7c] sm:$0xf]
    %v153 = vld [vmem:[#allocation2 + $0x80] sm:$0xf]
    %v154 = vld [vmem:[#allocation2 + $0x84] sm:$0xf]
    %v155 = vld [vmem:[#allocation2 + $0x88] sm:$0xf]
    %v156 = vld [vmem:[#allocation2 + $0x8c] sm:$0xf]
    %v157 = vld [vmem:[#allocation2 + $0x90] sm:$0xf]
    %v158 = vld [vmem:[#allocation2 + $0x94] sm:$0xf]
    %v159 = vld [vmem:[#allocation2 + $0x98] sm:$0xf]
    %v160 = vld [vmem:[#allocation2 + $0x9c] sm:$0xf]
    %v161 = vld [vmem:[#allocation2 + $0xa0] sm:$0xf]
    %v162 = vld [vmem:[#allocation2 + $0xa4] sm:$0xf]
    %v163 = vld [vmem:[#allocation2 + $0xa8] sm:$0xf]
    %v164 = vld [vmem:[#allocation2 + $0xac] sm:$0xf]
    %v165 = vld [vmem:[#allocation2 + $0xb0] sm:$0xf]
    %v166 = vld [vmem:[#allocation2 + $0xb4] sm:$0xf]
    %v167 = vld [vmem:[#allocation2 + $0xb8] sm:$0xf]
    %v168 = vld [vmem:[#allocation2 + $0xbc] sm:$0xf]
    %v169 = vld [vmem:[#allocation2 + $0xc0] sm:$0xf]
    %v170 = vld [vmem:[#allocation2 + $0xc4] sm:$0xf]
    %v171 = vld [vmem:[#allocation2 + $0xc8] sm:$0xf]
    %v172 = vld [vmem:[#allocation2 + $0xcc] sm:$0xf]
    %v173 = vld [vmem:[#allocation2 + $0xd0] sm:$0xf]
    %v174 = vld [vmem:[#allocation2 + $0xd4] sm:$0xf]
    %v175 = vld [vmem:[#allocation2 + $0xd8] sm:$0xf]
    %v176 = vld [vmem:[#allocation2 + $0xdc] sm:$0xf]
    %v177 = vld [vmem:[#allocation2 + $0xe0] sm:$0xf]
    %v178 = vld [vmem:[#allocation2 + $0xe4] sm:$0xf]
    %v179 = vld [vmem:[#allocation2 + $0xe8] sm:$0xf]
    %v180 = vld [vmem:[#allocation2 + $0xec] sm:$0xf]
    %v181 = vld [vmem:[#allocation2 + $0xf0] sm:$0xf]
    %v182 = vld [vmem:[#allocation2 + $0xf4] sm:$0xf]
    %v183 = vld [vmem:[#allocation2 + $0xf8] sm:$0xf]
    %v184 = vld [vmem:[#allocation2 + $0xfc] sm:$0xf]
    %v185 = vld [vmem:[#allocation5] sm:$0xf]
    %v186 = vld [vmem:[#allocation5 + $0x4] sm:$0xf]
    %v187 = vld [vmem:[#allocation5 + $0x8] sm:$0xf]
    %v188 = vld [vmem:[#allocation5 + $0xc] sm:$0xf]
    %v189 = vld [vmem:[#allocation5 + $0x10] sm:$0xf]
    %v190 = vld [vmem:[#allocation5 + $0x14] sm:$0xf]
    %v191 = vld [vmem:[#allocation5 + $0x18] sm:$0xf]
    %v192 = vld [vmem:[#allocation5 + $0x1c] sm:$0xf]
    %v193 = vld [vmem:[#allocation5 + $0x20] sm:$0xf]
    %v194 = vld [vmem:[#allocation5 + $0x24] sm:$0xf]
    %v195 = vld [vmem:[#allocation5 + $0x28] sm:$0xf]
    %v196 = vld [vmem:[#allocation5 + $0x2c] sm:$0xf]
    %v197 = vld [vmem:[#allocation5 + $0x30] sm:$0xf]
    %v198 = vld [vmem:[#allocation5 + $0x34] sm:$0xf]
    %v199 = vld [vmem:[#allocation5 + $0x38] sm:$0xf]
    %v200 = vld [vmem:[#allocation5 + $0x3c] sm:$0xf]
    %v201 = vld [vmem:[#allocation5 + $0x40] sm:$0xf]
    %v202 = vld [vmem:[#allocation5 + $0x44] sm:$0xf]
    %v203 = vld [vmem:[#allocation5 + $0x48] sm:$0xf]
    %v204 = vld [vmem:[#allocation5 + $0x4c] sm:$0xf]
    %v205 = vld [vmem:[#allocation5 + $0x50] sm:$0xf]
    %v206 = vld [vmem:[#allocation5 + $0x54] sm:$0xf]
    %v207 = vld [vmem:[#allocation5 + $0x58] sm:$0xf]
    %v208 = vld [vmem:[#allocation5 + $0x5c] sm:$0xf]
    %v209 = vld [vmem:[#allocation5 + $0x60] sm:$0xf]
    %v210 = vld [vmem:[#allocation5 + $0x64] sm:$0xf]
    %v211 = vld [vmem:[#allocation5 + $0x68] sm:$0xf]
    %v212 = vld [vmem:[#allocation5 + $0x6c] sm:$0xf]
    %v213 = vld [vmem:[#allocation5 + $0x70] sm:$0xf]
    %v214 = vld [vmem:[#allocation5 + $0x74] sm:$0xf]
    %v215 = vld [vmem:[#allocation5 + $0x78] sm:$0xf]
    %v216 = vld [vmem:[#allocation5 + $0x7c] sm:$0xf]
    %v217 = vld [vmem:[#allocation5 + $0x80] sm:$0xf]
    %v218 = vld [vmem:[#allocation5 + $0x84] sm:$0xf]
    %v219 = vld [vmem:[#allocation5 + $0x88] sm:$0xf]
    %v220 = vld [vmem:[#allocation5 + $0x8c] sm:$0xf]
    %v221 = vld [vmem:[#allocation5 + $0x90] sm:$0xf]
    %v222 = vld [vmem:[#allocation5 + $0x94] sm:$0xf]
    %v223 = vld [vmem:[#allocation5 + $0x98] sm:$0xf]
    %v224 = vld [vmem:[#allocation5 + $0x9c] sm:$0xf]
    %v225 = vld [vmem:[#allocation5 + $0xa0] sm:$0xf]
    %v226 = vld [vmem:[#allocation5 + $0xa4] sm:$0xf]
    %v227 = vld [vmem:[#allocation5 + $0xa8] sm:$0xf]
    %v228 = vld [vmem:[#allocation5 + $0xac] sm:$0xf]
    %v229 = vld [vmem:[#allocation5 + $0xb0] sm:$0xf]
    %v230 = vld [vmem:[#allocation5 + $0xb4] sm:$0xf]
    %v231 = vld [vmem:[#allocation5 + $0xb8] sm:$0xf]
    %v232 = vld [vmem:[#allocation5 + $0xbc] sm:$0xf]
    %v233 = vld [vmem:[#allocation5 + $0xc0] sm:$0xf]
    %v234 = vld [vmem:[#allocation5 + $0xc4] sm:$0xf]
    %v235 = vld [vmem:[#allocation5 + $0xc8] sm:$0xf]
    %v236 = vld [vmem:[#allocation5 + $0xcc] sm:$0xf]
    %v237 = vld [vmem:[#allocation5 + $0xd0] sm:$0xf]
    %v238 = vld [vmem:[#allocation5 + $0xd4] sm:$0xf]
    %v239 = vld [vmem:[#allocation5 + $0xd8] sm:$0xf]
    %v240 = vld [vmem:[#allocation5 + $0xdc] sm:$0xf]
    %v241 = vld [vmem:[#allocation5 + $0xe0] sm:$0xf]
    %v242 = vld [vmem:[#allocation5 + $0xe4] sm:$0xf]
    %v243 = vld [vmem:[#allocation5 + $0xe8] sm:$0xf]
    %v244 = vld [vmem:[#allocation5 + $0xec] sm:$0xf]
    %v245 = vld [vmem:[#allocation5 + $0xf0] sm:$0xf]
    %v246 = vld [vmem:[#allocation5 + $0xf4] sm:$0xf]
    %v247 = vld [vmem:[#allocation5 + $0xf8] sm:$0xf]
    %v248 = vld [vmem:[#allocation5 + $0xfc] sm:$0xf]
    %v251 = vunpack.c.l.b16 %v121
    %v252 = vunpack.c.l.b16 %v122
    %v253 = vpack.c.b16 %v252, %v251
    %v256 = vunpack.c.l.b16 %v185
    %v257 = vunpack.c.l.b16 %v186
    %v258 = vpack.c.b16 %v257, %v256
    %vm259 = vcmask 130048
    %v261 = vsel %vm259, %v253, 0
    %v264 = vsel %vm259, %v258, 0
    %266 = vmatprep.subr.bf16.mxu0 0
    %267 = vmatpush1.bf16.xpose.msra.mxu0 %v264
    %268 = vmatprep.subr.bf16.mxu0 0
    %269 = vmatpush1.bf16.xpose.msra.mxu0 0
    %270 = vmatprep.subr.bf16.mxu0 0
    %271 = vmatpush1.bf16.xpose.msra.mxu0 0
    %272 = vmatprep.subr.bf16.mxu0 0
    %273 = vmatpush1.bf16.xpose.msra.mxu0 0
    %274 = vmatprep.subr.bf16.mxu0 0
    %275 = vmatpush1.bf16.xpose.msra.mxu0 0
    %276 = vmatprep.subr.bf16.mxu0 0
    %277 = vmatpush1.bf16.xpose.msra.mxu0 0
    %278 = vmatprep.subr.bf16.mxu0 0
    %279 = vmatpush1.bf16.xpose.msra.mxu0 0
    %280 = vmatprep.subr.bf16.mxu0 0
    %281 = vmatpush1.bf16.xpose.msra.mxu0 0
    %282 = vmatprep.subr.bf16.mxu0 0
    %283 = vmatpush1.bf16.xpose.msra.mxu0 0
    %284 = vmatprep.subr.bf16.mxu0 0
    %285 = vmatpush1.bf16.xpose.msra.mxu0 0
    %286 = vmatprep.subr.bf16.mxu0 0
    %287 = vmatpush1.bf16.xpose.msra.mxu0 0
    %288 = vmatprep.subr.bf16.mxu0 0
    %289 = vmatpush1.bf16.xpose.msra.mxu0 0
    %290 = vmatprep.subr.bf16.mxu0 0
    %291 = vmatpush1.bf16.xpose.msra.mxu0 0
    %292 = vmatprep.subr.bf16.mxu0 0
    %293 = vmatpush1.bf16.xpose.msra.mxu0 0
    %294 = vmatprep.subr.bf16.mxu0 0
    %295 = vmatpush1.bf16.xpose.msra.mxu0 0
    %296 = vmatprep.subr.bf16.mxu0 0
    %297 = vmatpush1.bf16.xpose.msra.mxu0 0
    %298 = vmatprep.mubr.bf16.mxu0 0
    %299 = vmatmul.mubr.bf16.gmra.mrb[0].mxu0 %v261
    %v300 = vpop.f32.mrb[0].mxu0
    %v301 = vadd.f32 0.0, %v300
    %v302 = vpop.f32.mrb[0].mxu0
    %v303 = vpop.f32.mrb[0].mxu0
    %v304 = vadd.f32 0.0, %v303
    %v305 = vpop.f32.mrb[0].mxu0
    %306 = vdwg.mxu0
    %v309 = vunpack.c.l.b16 %v123
    %v310 = vunpack.c.l.b16 %v124
    %v311 = vpack.c.b16 %v310, %v309
    %v314 = vunpack.c.l.b16 %v187
    %v315 = vunpack.c.l.b16 %v188
    %v316 = vpack.c.b16 %v315, %v314
    %v318 = vsel %vm259, %v311, 0
    %v321 = vsel %vm259, %v316, 0
    %323 = vmatprep.subr.bf16.mxu0 0
    %324 = vmatpush1.bf16.xpose.msra.mxu0 %v321
    %325 = vmatprep.subr.bf16.mxu0 0
    %326 = vmatpush1.bf16.xpose.msra.mxu0 0
    %327 = vmatprep.subr.bf16.mxu0 0
    %328 = vmatpush1.bf16.xpose.msra.mxu0 0
    %329 = vmatprep.subr.bf16.mxu0 0
    %330 = vmatpush1.bf16.xpose.msra.mxu0 0
    %331 = vmatprep.subr.bf16.mxu0 0
    %332 = vmatpush1.bf16.xpose.msra.mxu0 0
    %333 = vmatprep.subr.bf16.mxu0 0
    %334 = vmatpush1.bf16.xpose.msra.mxu0 0
    %335 = vmatprep.subr.bf16.mxu0 0
    %336 = vmatpush1.bf16.xpose.msra.mxu0 0
    %337 = vmatprep.subr.bf16.mxu0 0
    %338 = vmatpush1.bf16.xpose.msra.mxu0 0
    %339 = vmatprep.subr.bf16.mxu0 0
    %340 = vmatpush1.bf16.xpose.msra.mxu0 0
    %341 = vmatprep.subr.bf16.mxu0 0
    %342 = vmatpush1.bf16.xpose.msra.mxu0 0
    %343 = vmatprep.subr.bf16.mxu0 0
    %344 = vmatpush1.bf16.xpose.msra.mxu0 0
    %345 = vmatprep.subr.bf16.mxu0 0
    %346 = vmatpush1.bf16.xpose.msra.mxu0 0
    %347 = vmatprep.subr.bf16.mxu0 0
    %348 = vmatpush1.bf16.xpose.msra.mxu0 0
    %349 = vmatprep.subr.bf16.mxu0 0
    %350 = vmatpush1.bf16.xpose.msra.mxu0 0
    %351 = vmatprep.subr.bf16.mxu0 0
    %352 = vmatpush1.bf16.xpose.msra.mxu0 0
    %353 = vmatprep.subr.bf16.mxu0 0
    %354 = vmatpush1.bf16.xpose.msra.mxu0 0
    %355 = vmatprep.mubr.bf16.mxu0 0
    %356 = vmatmul.mubr.bf16.gmra.mrb[0].mxu0 %v318
    %v357 = vpop.f32.mrb[0].mxu0
    %v358 = vadd.f32 0.0, %v357
    %v359 = vpop.f32.mrb[0].mxu0
    %v360 = vpop.f32.mrb[0].mxu0
    %v361 = vadd.f32 0.0, %v360
    %v362 = vpop.f32.mrb[0].mxu0
    %363 = vdwg.mxu0
    %v366 = vunpack.c.l.b16 %v125
    %v367 = vunpack.c.l.b16 %v126
    %v368 = vpack.c.b16 %v367, %v366
    %v371 = vunpack.c.l.b16 %v189
    %v372 = vunpack.c.l.b16 %v190
    %v373 = vpack.c.b16 %v372, %v371
    %v375 = vsel %vm259, %v368, 0
    %v378 = vsel %vm259, %v373, 0
    %380 = vmatprep.subr.bf16.mxu0 0
    %381 = vmatpush1.bf16.xpose.msra.mxu0 %v378
    %382 = vmatprep.subr.bf16.mxu0 0
    %383 = vmatpush1.bf16.xpose.msra.mxu0 0
    %384 = vmatprep.subr.bf16.mxu0 0
    %385 = vmatpush1.bf16.xpose.msra.mxu0 0
    %386 = vmatprep.subr.bf16.mxu0 0
    %387 = vmatpush1.bf16.xpose.msra.mxu0 0
    %388 = vmatprep.subr.bf16.mxu0 0
    %389 = vmatpush1.bf16.xpose.msra.mxu0 0
    %390 = vmatprep.subr.bf16.mxu0 0
    %391 = vmatpush1.bf16.xpose.msra.mxu0 0
    %392 = vmatprep.subr.bf16.mxu0 0
    %393 = vmatpush1.bf16.xpose.msra.mxu0 0
    %394 = vmatprep.subr.bf16.mxu0 0
    %395 = vmatpush1.bf16.xpose.msra.mxu0 0
    %396 = vmatprep.subr.bf16.mxu0 0
    %397 = vmatpush1.bf16.xpose.msra.mxu0 0
    %398 = vmatprep.subr.bf16.mxu0 0
    %399 = vmatpush1.bf16.xpose.msra.mxu0 0
    %400 = vmatprep.subr.bf16.mxu0 0
    %401 = vmatpush1.bf16.xpose.msra.mxu0 0
    %402 = vmatprep.subr.bf16.mxu0 0
    %403 = vmatpush1.bf16.xpose.msra.mxu0 0
    %404 = vmatprep.subr.bf16.mxu0 0
    %405 = vmatpush1.bf16.xpose.msra.mxu0 0
    %406 = vmatprep.subr.bf16.mxu0 0
    %407 = vmatpush1.bf16.xpose.msra.mxu0 0
    %408 = vmatprep.subr.bf16.mxu0 0
    %409 = vmatpush1.bf16.xpose.msra.mxu0 0
    %410 = vmatprep.subr.bf16.mxu0 0
    %411 = vmatpush1.bf16.xpose.msra.mxu0 0
    %412 = vmatprep.mubr.bf16.mxu0 0
    %413 = vmatmul.mubr.bf16.gmra.mrb[0].mxu0 %v375
    %v414 = vpop.f32.mrb[0].mxu0
    %v415 = vadd.f32 0.0, %v414
    %v416 = vpop.f32.mrb[0].mxu0
    %v417 = vpop.f32.mrb[0].mxu0
    %v418 = vadd.f32 0.0, %v417
    %v419 = vpop.f32.mrb[0].mxu0
    %420 = vdwg.mxu0
    %v423 = vunpack.c.l.b16 %v127
    %v424 = vunpack.c.l.b16 %v128
    %v425 = vpack.c.b16 %v424, %v423
    %v428 = vunpack.c.l.b16 %v191
    %v429 = vunpack.c.l.b16 %v192
    %v430 = vpack.c.b16 %v429, %v428
    %v432 = vsel %vm259, %v425, 0
    %v435 = vsel %vm259, %v430, 0
    %437 = vmatprep.subr.bf16.mxu0 0
    %438 = vmatpush1.bf16.xpose.msra.mxu0 %v435
    %439 = vmatprep.subr.bf16.mxu0 0
    %440 = vmatpush1.bf16.xpose.msra.mxu0 0
    %441 = vmatprep.subr.bf16.mxu0 0
    %442 = vmatpush1.bf16.xpose.msra.mxu0 0
    %443 = vmatprep.subr.bf16.mxu0 0
    %444 = vmatpush1.bf16.xpose.msra.mxu0 0
    %445 = vmatprep.subr.bf16.mxu0 0
    %446 = vmatpush1.bf16.xpose.msra.mxu0 0
    %447 = vmatprep.subr.bf16.mxu0 0
    %448 = vmatpush1.bf16.xpose.msra.mxu0 0
    %449 = vmatprep.subr.bf16.mxu0 0
    %450 = vmatpush1.bf16.xpose.msra.mxu0 0
    %451 = vmatprep.subr.bf16.mxu0 0
    %452 = vmatpush1.bf16.xpose.msra.mxu0 0
    %453 = vmatprep.subr.bf16.mxu0 0
    %454 = vmatpush1.bf16.xpose.msra.mxu0 0
    %455 = vmatprep.subr.bf16.mxu0 0
    %456 = vmatpush1.bf16.xpose.msra.mxu0 0
    %457 = vmatprep.subr.bf16.mxu0 0
    %458 = vmatpush1.bf16.xpose.msra.mxu0 0
    %459 = vmatprep.subr.bf16.mxu0 0
    %460 = vmatpush1.bf16.xpose.msra.mxu0 0
    %461 = vmatprep.subr.bf16.mxu0 0
    %462 = vmatpush1.bf16.xpose.msra.mxu0 0
    %463 = vmatprep.subr.bf16.mxu0 0
    %464 = vmatpush1.bf16.xpose.msra.mxu0 0
    %465 = vmatprep.subr.bf16.mxu0 0
    %466 = vmatpush1.bf16.xpose.msra.mxu0 0
    %467 = vmatprep.subr.bf16.mxu0 0
    %468 = vmatpush1.bf16.xpose.msra.mxu0 0
    %469 = vmatprep.mubr.bf16.mxu0 0
    %470 = vmatmul.mubr.bf16.gmra.mrb[0].mxu0 %v432
    %v471 = vpop.f32.mrb[0].mxu0
    %v472 = vadd.f32 0.0, %v471
    %v473 = vpop.f32.mrb[0].mxu0
    %v474 = vpop.f32.mrb[0].mxu0
    %v475 = vadd.f32 0.0, %v474
    %v476 = vpop.f32.mrb[0].mxu0
    %477 = vdwg.mxu0
    %v480 = vunpack.c.l.b16 %v129
    %v481 = vunpack.c.l.b16 %v130
    %v482 = vpack.c.b16 %v481, %v480
    %v485 = vunpack.c.l.b16 %v193
    %v486 = vunpack.c.l.b16 %v194
    %v487 = vpack.c.b16 %v486, %v485
    %v489 = vsel %vm259, %v482, 0
    %v492 = vsel %vm259, %v487, 0
    %494 = vmatprep.subr.bf16.mxu0 0
    %495 = vmatpush1.bf16.xpose.msra.mxu0 %v492
    %496 = vmatprep.subr.bf16.mxu0 0
    %497 = vmatpush1.bf16.xpose.msra.mxu0 0
    %498 = vmatprep.subr.bf16.mxu0 0
    %499 = vmatpush1.bf16.xpose.msra.mxu0 0
    %500 = vmatprep.subr.bf16.mxu0 0
    %501 = vmatpush1.bf16.xpose.msra.mxu0 0
    %502 = vmatprep.subr.bf16.mxu0 0
    %503 = vmatpush1.bf16.xpose.msra.mxu0 0
    %504 = vmatprep.subr.bf16.mxu0 0
    %505 = vmatpush1.bf16.xpose.msra.mxu0 0
    %506 = vmatprep.subr.bf16.mxu0 0
    %507 = vmatpush1.bf16.xpose.msra.mxu0 0
    %508 = vmatprep.subr.bf16.mxu0 0
    %509 = vmatpush1.bf16.xpose.msra.mxu0 0
    %510 = vmatprep.subr.bf16.mxu0 0
    %511 = vmatpush1.bf16.xpose.msra.mxu0 0
    %512 = vmatprep.subr.bf16.mxu0 0
    %513 = vmatpush1.bf16.xpose.msra.mxu0 0
    %514 = vmatprep.subr.bf16.mxu0 0
    %515 = vmatpush1.bf16.xpose.msra.mxu0 0
    %516 = vmatprep.subr.bf16.mxu0 0
    %517 = vmatpush1.bf16.xpose.msra.mxu0 0
    %518 = vmatprep.subr.bf16.mxu0 0
    %519 = vmatpush1.bf16.xpose.msra.mxu0 0
    %520 = vmatprep.subr.bf16.mxu0 0
    %521 = vmatpush1.bf16.xpose.msra.mxu0 0
    %522 = vmatprep.subr.bf16.mxu0 0
    %523 = vmatpush1.bf16.xpose.msra.mxu0 0
    %524 = vmatprep.subr.bf16.mxu0 0
    %525 = vmatpush1.bf16.xpose.msra.mxu0 0
    %526 = vmatprep.mubr.bf16.mxu0 0
    %527 = vmatmul.mubr.bf16.gmra.mrb[0].mxu0 %v489
    %v528 = vpop.f32.mrb[0].mxu0
    %v529 = vadd.f32 0.0, %v528
    %v530 = vpop.f32.mrb[0].mxu0
    %v531 = vpop.f32.mrb[0].mxu0
    %v532 = vadd.f32 0.0, %v531
    %v533 = vpop.f32.mrb[0].mxu0
    %534 = vdwg.mxu0
    %v537 = vunpack.c.l.b16 %v131
    %v538 = vunpack.c.l.b16 %v132
    %v539 = vpack.c.b16 %v538, %v537
    %v542 = vunpack.c.l.b16 %v195
    %v543 = vunpack.c.l.b16 %v196
    %v544 = vpack.c.b16 %v543, %v542
    %v546 = vsel %vm259, %v539, 0
    %v549 = vsel %vm259, %v544, 0
    %551 = vmatprep.subr.bf16.mxu0 0
    %552 = vmatpush1.bf16.xpose.msra.mxu0 %v549
    %553 = vmatprep.subr.bf16.mxu0 0
    %554 = vmatpush1.bf16.xpose.msra.mxu0 0
    %555 = vmatprep.subr.bf16.mxu0 0
    %556 = vmatpush1.bf16.xpose.msra.mxu0 0
    %557 = vmatprep.subr.bf16.mxu0 0
    %558 = vmatpush1.bf16.xpose.msra.mxu0 0
    %559 = vmatprep.subr.bf16.mxu0 0
    %560 = vmatpush1.bf16.xpose.msra.mxu0 0
    %561 = vmatprep.subr.bf16.mxu0 0
    %562 = vmatpush1.bf16.xpose.msra.mxu0 0
    %563 = vmatprep.subr.bf16.mxu0 0
    %564 = vmatpush1.bf16.xpose.msra.mxu0 0
    %565 = vmatprep.subr.bf16.mxu0 0
    %566 = vmatpush1.bf16.xpose.msra.mxu0 0
    %567 = vmatprep.subr.bf16.mxu0 0
    %568 = vmatpush1.bf16.xpose.msra.mxu0 0
    %569 = vmatprep.subr.bf16.mxu0 0
    %570 = vmatpush1.bf16.xpose.msra.mxu0 0
    %571 = vmatprep.subr.bf16.mxu0 0
    %572 = vmatpush1.bf16.xpose.msra.mxu0 0
    %573 = vmatprep.subr.bf16.mxu0 0
    %574 = vmatpush1.bf16.xpose.msra.mxu0 0
    %575 = vmatprep.subr.bf16.mxu0 0
    %576 = vmatpush1.bf16.xpose.msra.mxu0 0
    %577 = vmatprep.subr.bf16.mxu0 0
    %578 = vmatpush1.bf16.xpose.msra.mxu0 0
    %579 = vmatprep.subr.bf16.mxu0 0
    %580 = vmatpush1.bf16.xpose.msra.mxu0 0
    %581 = vmatprep.subr.bf16.mxu0 0
    %582 = vmatpush1.bf16.xpose.msra.mxu0 0
    %583 = vmatprep.mubr.bf16.mxu0 0
    %584 = vmatmul.mubr.bf16.gmra.mrb[0].mxu0 %v546
    %v585 = vpop.f32.mrb[0].mxu0
    %v586 = vadd.f32 0.0, %v585
    %v587 = vpop.f32.mrb[0].mxu0
    %v588 = vpop.f32.mrb[0].mxu0
    %v589 = vadd.f32 0.0, %v588
    %v590 = vpop.f32.mrb[0].mxu0
    %591 = vdwg.mxu0
    %v594 = vunpack.c.l.b16 %v133
    %v595 = vunpack.c.l.b16 %v134
    %v596 = vpack.c.b16 %v595, %v594
    %v599 = vunpack.c.l.b16 %v197
    %v600 = vunpack.c.l.b16 %v198
    %v601 = vpack.c.b16 %v600, %v599
    %v603 = vsel %vm259, %v596, 0
    %v606 = vsel %vm259, %v601, 0
    %608 = vmatprep.subr.bf16.mxu0 0
    %609 = vmatpush1.bf16.xpose.msra.mxu0 %v606
    %610 = vmatprep.subr.bf16.mxu0 0
    %611 = vmatpush1.bf16.xpose.msra.mxu0 0
    %612 = vmatprep.subr.bf16.mxu0 0
    %613 = vmatpush1.bf16.xpose.msra.mxu0 0
    %614 = vmatprep.subr.bf16.mxu0 0
    %615 = vmatpush1.bf16.xpose.msra.mxu0 0
    %616 = vmatprep.subr.bf16.mxu0 0
    %617 = vmatpush1.bf16.xpose.msra.mxu0 0
    %618 = vmatprep.subr.bf16.mxu0 0
    %619 = vmatpush1.bf16.xpose.msra.mxu0 0
    %620 = vmatprep.subr.bf16.mxu0 0
    %621 = vmatpush1.bf16.xpose.msra.mxu0 0
    %622 = vmatprep.subr.bf16.mxu0 0
    %623 = vmatpush1.bf16.xpose.msra.mxu0 0
    %624 = vmatprep.subr.bf16.mxu0 0
    %625 = vmatpush1.bf16.xpose.msra.mxu0 0
    %626 = vmatprep.subr.bf16.mxu0 0
    %627 = vmatpush1.bf16.xpose.msra.mxu0 0
    %628 = vmatprep.subr.bf16.mxu0 0
    %629 = vmatpush1.bf16.xpose.msra.mxu0 0
    %630 = vmatprep.subr.bf16.mxu0 0
    %631 = vmatpush1.bf16.xpose.msra.mxu0 0
    %632 = vmatprep.subr.bf16.mxu0 0
    %633 = vmatpush1.bf16.xpose.msra.mxu0 0
    %634 = vmatprep.subr.bf16.mxu0 0
    %635 = vmatpush1.bf16.xpose.msra.mxu0 0
    %636 = vmatprep.subr.bf16.mxu0 0
    %637 = vmatpush1.bf16.xpose.msra.mxu0 0
    %638 = vmatprep.subr.bf16.mxu0 0
    %639 = vmatpush1.bf16.xpose.msra.mxu0 0
    %640 = vmatprep.mubr.bf16.mxu0 0
    %641 = vmatmul.mubr.bf16.gmra.mrb[0].mxu0 %v603
    %v642 = vpop.f32.mrb[0].mxu0
    %v643 = vadd.f32 0.0, %v642
    %v644 = vpop.f32.mrb[0].mxu0
    %v645 = vpop.f32.mrb[0].mxu0
    %v646 = vadd.f32 0.0, %v645
    %v647 = vpop.f32.mrb[0].mxu0
    %648 = vdwg.mxu0
    %v651 = vunpack.c.l.b16 %v135
    %v652 = vunpack.c.l.b16 %v136
    %v653 = vpack.c.b16 %v652, %v651
    %v656 = vunpack.c.l.b16 %v199
    %v657 = vunpack.c.l.b16 %v200
    %v658 = vpack.c.b16 %v657, %v656
    %v660 = vsel %vm259, %v653, 0
    %v663 = vsel %vm259, %v658, 0
    %665 = vmatprep.subr.bf16.mxu0 0
    %666 = vmatpush1.bf16.xpose.msra.mxu0 %v663
    %667 = vmatprep.subr.bf16.mxu0 0
    %668 = vmatpush1.bf16.xpose.msra.mxu0 0
    %669 = vmatprep.subr.bf16.mxu0 0
    %670 = vmatpush1.bf16.xpose.msra.mxu0 0
    %671 = vmatprep.subr.bf16.mxu0 0
    %672 = vmatpush1.bf16.xpose.msra.mxu0 0
    %673 = vmatprep.subr.bf16.mxu0 0
    %674 = vmatpush1.bf16.xpose.msra.mxu0 0
    %675 = vmatprep.subr.bf16.mxu0 0
    %676 = vmatpush1.bf16.xpose.msra.mxu0 0
    %677 = vmatprep.subr.bf16.mxu0 0
    %678 = vmatpush1.bf16.xpose.msra.mxu0 0
    %679 = vmatprep.subr.bf16.mxu0 0
    %680 = vmatpush1.bf16.xpose.msra.mxu0 0
    %681 = vmatprep.subr.bf16.mxu0 0
    %682 = vmatpush1.bf16.xpose.msra.mxu0 0
    %683 = vmatprep.subr.bf16.mxu0 0
    %684 = vmatpush1.bf16.xpose.msra.mxu0 0
    %685 = vmatprep.subr.bf16.mxu0 0
    %686 = vmatpush1.bf16.xpose.msra.mxu0 0
    %687 = vmatprep.subr.bf16.mxu0 0
    %688 = vmatpush1.bf16.xpose.msra.mxu0 0
    %689 = vmatprep.subr.bf16.mxu0 0
    %690 = vmatpush1.bf16.xpose.msra.mxu0 0
    %691 = vmatprep.subr.bf16.mxu0 0
    %692 = vmatpush1.bf16.xpose.msra.mxu0 0
    %693 = vmatprep.subr.bf16.mxu0 0
    %694 = vmatpush1.bf16.xpose.msra.mxu0 0
    %695 = vmatprep.subr.bf16.mxu0 0
    %696 = vmatpush1.bf16.xpose.msra.mxu0 0
    %697 = vmatprep.mubr.bf16.mxu0 0
    %698 = vmatmul.mubr.bf16.gmra.mrb[0].mxu0 %v660
    %v699 = vpop.f32.mrb[0].mxu0
    %v700 = vadd.f32 0.0, %v699
    %v701 = vpop.f32.mrb[0].mxu0
    %v702 = vpop.f32.mrb[0].mxu0
    %v703 = vadd.f32 0.0, %v702
    %v704 = vpop.f32.mrb[0].mxu0
    %705 = vdwg.mxu0
    %v708 = vunpack.c.l.b16 %v137
    %v709 = vunpack.c.l.b16 %v138
    %v710 = vpack.c.b16 %v709, %v708
    %v713 = vunpack.c.l.b16 %v201
    %v714 = vunpack.c.l.b16 %v202
    %v715 = vpack.c.b16 %v714, %v713
    %v717 = vsel %vm259, %v710, 0
    %v720 = vsel %vm259, %v715, 0
    %722 = vmatprep.subr.bf16.mxu0 0
    %723 = vmatpush1.bf16.xpose.msra.mxu0 %v720
    %724 = vmatprep.subr.bf16.mxu0 0
    %725 = vmatpush1.bf16.xpose.msra.mxu0 0
    %726 = vmatprep.subr.bf16.mxu0 0
    %727 = vmatpush1.bf16.xpose.msra.mxu0 0
    %728 = vmatprep.subr.bf16.mxu0 0
    %729 = vmatpush1.bf16.xpose.msra.mxu0 0
    %730 = vmatprep.subr.bf16.mxu0 0
    %731 = vmatpush1.bf16.xpose.msra.mxu0 0
    %732 = vmatprep.subr.bf16.mxu0 0
    %733 = vmatpush1.bf16.xpose.msra.mxu0 0
    %734 = vmatprep.subr.bf16.mxu0 0
    %735 = vmatpush1.bf16.xpose.msra.mxu0 0
    %736 = vmatprep.subr.bf16.mxu0 0
    %737 = vmatpush1.bf16.xpose.msra.mxu0 0
    %738 = vmatprep.subr.bf16.mxu0 0
    %739 = vmatpush1.bf16.xpose.msra.mxu0 0
    %740 = vmatprep.subr.bf16.mxu0 0
    %741 = vmatpush1.bf16.xpose.msra.mxu0 0
    %742 = vmatprep.subr.bf16.mxu0 0
    %743 = vmatpush1.bf16.xpose.msra.mxu0 0
    %744 = vmatprep.subr.bf16.mxu0 0
    %745 = vmatpush1.bf16.xpose.msra.mxu0 0
    %746 = vmatprep.subr.bf16.mxu0 0
    %747 = vmatpush1.bf16.xpose.msra.mxu0 0
    %748 = vmatprep.subr.bf16.mxu0 0
    %749 = vmatpush1.bf16.xpose.msra.mxu0 0
    %750 = vmatprep.subr.bf16.mxu0 0
    %751 = vmatpush1.bf16.xpose.msra.mxu0 0
    %752 = vmatprep.subr.bf16.mxu0 0
    %753 = vmatpush1.bf16.xpose.msra.mxu0 0
    %754 = vmatprep.mubr.bf16.mxu0 0
    %755 = vmatmul.mubr.bf16.gmra.mrb[0].mxu0 %v717
    %v756 = vpop.f32.mrb[0].mxu0
    %v757 = vadd.f32 0.0, %v756
    %v758 = vpop.f32.mrb[0].mxu0
    %v759 = vpop.f32.mrb[0].mxu0
    %v760 = vadd.f32 0.0, %v759
    %v761 = vpop.f32.mrb[0].mxu0
    %762 = vdwg.mxu0
    %v765 = vunpack.c.l.b16 %v139
    %v766 = vunpack.c.l.b16 %v140
    %v767 = vpack.c.b16 %v766, %v765
    %v770 = vunpack.c.l.b16 %v203
    %v771 = vunpack.c.l.b16 %v204
    %v772 = vpack.c.b16 %v771, %v770
    %v774 = vsel %vm259, %v767, 0
    %v777 = vsel %vm259, %v772, 0
    %779 = vmatprep.subr.bf16.mxu0 0
    %780 = vmatpush1.bf16.xpose.msra.mxu0 %v777
    %781 = vmatprep.subr.bf16.mxu0 0
    %782 = vmatpush1.bf16.xpose.msra.mxu0 0
    %783 = vmatprep.subr.bf16.mxu0 0
    %784 = vmatpush1.bf16.xpose.msra.mxu0 0
    %785 = vmatprep.subr.bf16.mxu0 0
    %786 = vmatpush1.bf16.xpose.msra.mxu0 0
    %787 = vmatprep.subr.bf16.mxu0 0
    %788 = vmatpush1.bf16.xpose.msra.mxu0 0
    %789 = vmatprep.subr.bf16.mxu0 0
    %790 = vmatpush1.bf16.xpose.msra.mxu0 0
    %791 = vmatprep.subr.bf16.mxu0 0
    %792 = vmatpush1.bf16.xpose.msra.mxu0 0
    %793 = vmatprep.subr.bf16.mxu0 0
    %794 = vmatpush1.bf16.xpose.msra.mxu0 0
    %795 = vmatprep.subr.bf16.mxu0 0
    %796 = vmatpush1.bf16.xpose.msra.mxu0 0
    %797 = vmatprep.subr.bf16.mxu0 0
    %798 = vmatpush1.bf16.xpose.msra.mxu0 0
    %799 = vmatprep.subr.bf16.mxu0 0
    %800 = vmatpush1.bf16.xpose.msra.mxu0 0
    %801 = vmatprep.subr.bf16.mxu0 0
    %802 = vmatpush1.bf16.xpose.msra.mxu0 0
    %803 = vmatprep.subr.bf16.mxu0 0
    %804 = vmatpush1.bf16.xpose.msra.mxu0 0
    %805 = vmatprep.subr.bf16.mxu0 0
    %806 = vmatpush1.bf16.xpose.msra.mxu0 0
    %807 = vmatprep.subr.bf16.mxu0 0
    %808 = vmatpush1.bf16.xpose.msra.mxu0 0
    %809 = vmatprep.subr.bf16.mxu0 0
    %810 = vmatpush1.bf16.xpose.msra.mxu0 0
    %811 = vmatprep.mubr.bf16.mxu0 0
    %812 = vmatmul.mubr.bf16.gmra.mrb[0].mxu0 %v774
    %v813 = vpop.f32.mrb[0].mxu0
    %v814 = vadd.f32 0.0, %v813
    %v815 = vpop.f32.mrb[0].mxu0
    %v816 = vpop.f32.mrb[0].mxu0
    %v817 = vadd.f32 0.0, %v816
    %v818 = vpop.f32.mrb[0].mxu0
    %819 = vdwg.mxu0
    %v822 = vunpack.c.l.b16 %v141
    %v823 = vunpack.c.l.b16 %v142
    %v824 = vpack.c.b16 %v823, %v822
    %v827 = vunpack.c.l.b16 %v205
    %v828 = vunpack.c.l.b16 %v206
    %v829 = vpack.c.b16 %v828, %v827
    %v831 = vsel %vm259, %v824, 0
    %v834 = vsel %vm259, %v829, 0
    %836 = vmatprep.subr.bf16.mxu0 0
    %837 = vmatpush1.bf16.xpose.msra.mxu0 %v834
    %838 = vmatprep.subr.bf16.mxu0 0
    %839 = vmatpush1.bf16.xpose.msra.mxu0 0
    %840 = vmatprep.subr.bf16.mxu0 0
    %841 = vmatpush1.bf16.xpose.msra.mxu0 0
    %842 = vmatprep.subr.bf16.mxu0 0
    %843 = vmatpush1.bf16.xpose.msra.mxu0 0
    %844 = vmatprep.subr.bf16.mxu0 0
    %845 = vmatpush1.bf16.xpose.msra.mxu0 0
    %846 = vmatprep.subr.bf16.mxu0 0
    %847 = vmatpush1.bf16.xpose.msra.mxu0 0
    %848 = vmatprep.subr.bf16.mxu0 0
    %849 = vmatpush1.bf16.xpose.msra.mxu0 0
    %850 = vmatprep.subr.bf16.mxu0 0
    %851 = vmatpush1.bf16.xpose.msra.mxu0 0
    %852 = vmatprep.subr.bf16.mxu0 0
    %853 = vmatpush1.bf16.xpose.msra.mxu0 0
    %854 = vmatprep.subr.bf16.mxu0 0
    %855 = vmatpush1.bf16.xpose.msra.mxu0 0
    %856 = vmatprep.subr.bf16.mxu0 0
    %857 = vmatpush1.bf16.xpose.msra.mxu0 0
    %858 = vmatprep.subr.bf16.mxu0 0
    %859 = vmatpush1.bf16.xpose.msra.mxu0 0
    %860 = vmatprep.subr.bf16.mxu0 0
    %861 = vmatpush1.bf16.xpose.msra.mxu0 0
    %862 = vmatprep.subr.bf16.mxu0 0
    %863 = vmatpush1.bf16.xpose.msra.mxu0 0
    %864 = vmatprep.subr.bf16.mxu0 0
    %865 = vmatpush1.bf16.xpose.msra.mxu0 0
    %866 = vmatprep.subr.bf16.mxu0 0
    %867 = vmatpush1.bf16.xpose.msra.mxu0 0
    %868 = vmatprep.mubr.bf16.mxu0 0
    %869 = vmatmul.mubr.bf16.gmra.mrb[0].mxu0 %v831
    %v870 = vpop.f32.mrb[0].mxu0
    %v871 = vadd.f32 0.0, %v870
    %v872 = vpop.f32.mrb[0].mxu0
    %v873 = vpop.f32.mrb[0].mxu0
    %v874 = vadd.f32 0.0, %v873
    %v875 = vpop.f32.mrb[0].mxu0
    %876 = vdwg.mxu0
    %v879 = vunpack.c.l.b16 %v143
    %v880 = vunpack.c.l.b16 %v144
    %v881 = vpack.c.b16 %v880, %v879
    %v884 = vunpack.c.l.b16 %v207
    %v885 = vunpack.c.l.b16 %v208
    %v886 = vpack.c.b16 %v885, %v884
    %v888 = vsel %vm259, %v881, 0
    %v891 = vsel %vm259, %v886, 0
    %893 = vmatprep.subr.bf16.mxu0 0
    %894 = vmatpush1.bf16.xpose.msra.mxu0 %v891
    %895 = vmatprep.subr.bf16.mxu0 0
    %896 = vmatpush1.bf16.xpose.msra.mxu0 0
    %897 = vmatprep.subr.bf16.mxu0 0
    %898 = vmatpush1.bf16.xpose.msra.mxu0 0
    %899 = vmatprep.subr.bf16.mxu0 0
    %900 = vmatpush1.bf16.xpose.msra.mxu0 0
    %901 = vmatprep.subr.bf16.mxu0 0
    %902 = vmatpush1.bf16.xpose.msra.mxu0 0
    %903 = vmatprep.subr.bf16.mxu0 0
    %904 = vmatpush1.bf16.xpose.msra.mxu0 0
    %905 = vmatprep.subr.bf16.mxu0 0
    %906 = vmatpush1.bf16.xpose.msra.mxu0 0
    %907 = vmatprep.subr.bf16.mxu0 0
    %908 = vmatpush1.bf16.xpose.msra.mxu0 0
    %909 = vmatprep.subr.bf16.mxu0 0
    %910 = vmatpush1.bf16.xpose.msra.mxu0 0
    %911 = vmatprep.subr.bf16.mxu0 0
    %912 = vmatpush1.bf16.xpose.msra.mxu0 0
    %913 = vmatprep.subr.bf16.mxu0 0
    %914 = vmatpush1.bf16.xpose.msra.mxu0 0
    %915 = vmatprep.subr.bf16.mxu0 0
    %916 = vmatpush1.bf16.xpose.msra.mxu0 0
    %917 = vmatprep.subr.bf16.mxu0 0
    %918 = vmatpush1.bf16.xpose.msra.mxu0 0
    %919 = vmatprep.subr.bf16.mxu0 0
    %920 = vmatpush1.bf16.xpose.msra.mxu0 0
    %921 = vmatprep.subr.bf16.mxu0 0
    %922 = vmatpush1.bf16.xpose.msra.mxu0 0
    %923 = vmatprep.subr.bf16.mxu0 0
    %924 = vmatpush1.bf16.xpose.msra.mxu0 0
    %925 = vmatprep.mubr.bf16.mxu0 0
    %926 = vmatmul.mubr.bf16.gmra.mrb[0].mxu0 %v888
    %v927 = vpop.f32.mrb[0].mxu0
    %v928 = vadd.f32 0.0, %v927
    %v929 = vpop.f32.mrb[0].mxu0
    %v930 = vpop.f32.mrb[0].mxu0
    %v931 = vadd.f32 0.0, %v930
    %v932 = vpop.f32.mrb[0].mxu0
    %933 = vdwg.mxu0
    %v936 = vunpack.c.l.b16 %v145
    %v937 = vunpack.c.l.b16 %v146
    %v938 = vpack.c.b16 %v937, %v936
    %v941 = vunpack.c.l.b16 %v209
    %v942 = vunpack.c.l.b16 %v210
    %v943 = vpack.c.b16 %v942, %v941
    %v945 = vsel %vm259, %v938, 0
    %v948 = vsel %vm259, %v943, 0
    %950 = vmatprep.subr.bf16.mxu0 0
    %951 = vmatpush1.bf16.xpose.msra.mxu0 %v948
    %952 = vmatprep.subr.bf16.mxu0 0
    %953 = vmatpush1.bf16.xpose.msra.mxu0 0
    %954 = vmatprep.subr.bf16.mxu0 0
    %955 = vmatpush1.bf16.xpose.msra.mxu0 0
    %956 = vmatprep.subr.bf16.mxu0 0
    %957 = vmatpush1.bf16.xpose.msra.mxu0 0
    %958 = vmatprep.subr.bf16.mxu0 0
    %959 = vmatpush1.bf16.xpose.msra.mxu0 0
    %960 = vmatprep.subr.bf16.mxu0 0
    %961 = vmatpush1.bf16.xpose.msra.mxu0 0
    %962 = vmatprep.subr.bf16.mxu0 0
    %963 = vmatpush1.bf16.xpose.msra.mxu0 0
    %964 = vmatprep.subr.bf16.mxu0 0
    %965 = vmatpush1.bf16.xpose.msra.mxu0 0
    %966 = vmatprep.subr.bf16.mxu0 0
    %967 = vmatpush1.bf16.xpose.msra.mxu0 0
    %968 = vmatprep.subr.bf16.mxu0 0
    %969 = vmatpush1.bf16.xpose.msra.mxu0 0
    %970 = vmatprep.subr.bf16.mxu0 0
    %971 = vmatpush1.bf16.xpose.msra.mxu0 0
    %972 = vmatprep.subr.bf16.mxu0 0
    %973 = vmatpush1.bf16.xpose.msra.mxu0 0
    %974 = vmatprep.subr.bf16.mxu0 0
    %975 = vmatpush1.bf16.xpose.msra.mxu0 0
    %976 = vmatprep.subr.bf16.mxu0 0
    %977 = vmatpush1.bf16.xpose.msra.mxu0 0
    %978 = vmatprep.subr.bf16.mxu0 0
    %979 = vmatpush1.bf16.xpose.msra.mxu0 0
    %980 = vmatprep.subr.bf16.mxu0 0
    %981 = vmatpush1.bf16.xpose.msra.mxu0 0
    %982 = vmatprep.mubr.bf16.mxu0 0
    %983 = vmatmul.mubr.bf16.gmra.mrb[0].mxu0 %v945
    %v984 = vpop.f32.mrb[0].mxu0
    %v985 = vadd.f32 0.0, %v984
    %v986 = vpop.f32.mrb[0].mxu0
    %v987 = vpop.f32.mrb[0].mxu0
    %v988 = vadd.f32 0.0, %v987
    %v989 = vpop.f32.mrb[0].mxu0
    %990 = vdwg.mxu0
    %v993 = vunpack.c.l.b16 %v147
    %v994 = vunpack.c.l.b16 %v148
    %v995 = vpack.c.b16 %v994, %v993
    %v998 = vunpack.c.l.b16 %v211
    %v999 = vunpack.c.l.b16 %v212
    %v1000 = vpack.c.b16 %v999, %v998
    %v1002 = vsel %vm259, %v995, 0
    %v1005 = vsel %vm259, %v1000, 0
    %1007 = vmatprep.subr.bf16.mxu0 0
    %1008 = vmatpush1.bf16.xpose.msra.mxu0 %v1005
    %1009 = vmatprep.subr.bf16.mxu0 0
    %1010 = vmatpush1.bf16.xpose.msra.mxu0 0
    %1011 = vmatprep.subr.bf16.mxu0 0
    %1012 = vmatpush1.bf16.xpose.msra.mxu0 0
    %1013 = vmatprep.subr.bf16.mxu0 0
    %1014 = vmatpush1.bf16.xpose.msra.mxu0 0
    %1015 = vmatprep.subr.bf16.mxu0 0
    %1016 = vmatpush1.bf16.xpose.msra.mxu0 0
    %1017 = vmatprep.subr.bf16.mxu0 0
    %1018 = vmatpush1.bf16.xpose.msra.mxu0 0
    %1019 = vmatprep.subr.bf16.mxu0 0
    %1020 = vmatpush1.bf16.xpose.msra.mxu0 0
    %1021 = vmatprep.subr.bf16.mxu0 0
    %1022 = vmatpush1.bf16.xpose.msra.mxu0 0
    %1023 = vmatprep.subr.bf16.mxu0 0
    %1024 = vmatpush1.bf16.xpose.msra.mxu0 0
    %1025 = vmatprep.subr.bf16.mxu0 0
    %1026 = vmatpush1.bf16.xpose.msra.mxu0 0
    %1027 = vmatprep.subr.bf16.mxu0 0
    %1028 = vmatpush1.bf16.xpose.msra.mxu0 0
    %1029 = vmatprep.subr.bf16.mxu0 0
    %1030 = vmatpush1.bf16.xpose.msra.mxu0 0
    %1031 = vmatprep.subr.bf16.mxu0 0
    %1032 = vmatpush1.bf16.xpose.msra.mxu0 0
    %1033 = vmatprep.subr.bf16.mxu0 0
    %1034 = vmatpush1.bf16.xpose.msra.mxu0 0
    %1035 = vmatprep.subr.bf16.mxu0 0
    %1036 = vmatpush1.bf16.xpose.msra.mxu0 0
    %1037 = vmatprep.subr.bf16.mxu0 0
    %1038 = vmatpush1.bf16.xpose.msra.mxu0 0
    %1039 = vmatprep.mubr.bf16.mxu0 0
    %1040 = vmatmul.mubr.bf16.gmra.mrb[0].mxu0 %v1002
    %v1041 = vpop.f32.mrb[0].mxu0
    %v1042 = vadd.f32 0.0, %v1041
    %v1043 = vpop.f32.mrb[0].mxu0
    %v1044 = vpop.f32.mrb[0].mxu0
    %v1045 = vadd.f32 0.0, %v1044
    %v1046 = vpop.f32.mrb[0].mxu0
    %1047 = vdwg.mxu0
    %v1050 = vunpack.c.l.b16 %v149
    %v1051 = vunpack.c.l.b16 %v150
    %v1052 = vpack.c.b16 %v1051, %v1050
    %v1055 = vunpack.c.l.b16 %v213
    %v1056 = vunpack.c.l.b16 %v214
    %v1057 = vpack.c.b16 %v1056, %v1055
    %v1059 = vsel %vm259, %v1052, 0
    %v1062 = vsel %vm259, %v1057, 0
    %1064 = vmatprep.subr.bf16.mxu0 0
    %1065 = vmatpush1.bf16.xpose.msra.mxu0 %v1062
    %1066 = vmatprep.subr.bf16.mxu0 0
    %1067 = vmatpush1.bf16.xpose.msra.mxu0 0
    %1068 = vmatprep.subr.bf16.mxu0 0
    %1069 = vmatpush1.bf16.xpose.msra.mxu0 0
    %1070 = vmatprep.subr.bf16.mxu0 0
    %1071 = vmatpush1.bf16.xpose.msra.mxu0 0
    %1072 = vmatprep.subr.bf16.mxu0 0
    %1073 = vmatpush1.bf16.xpose.msra.mxu0 0
    %1074 = vmatprep.subr.bf16.mxu0 0
    %1075 = vmatpush1.bf16.xpose.msra.mxu0 0
    %1076 = vmatprep.subr.bf16.mxu0 0
    %1077 = vmatpush1.bf16.xpose.msra.mxu0 0
    %1078 = vmatprep.subr.bf16.mxu0 0
    %1079 = vmatpush1.bf16.xpose.msra.mxu0 0
    %1080 = vmatprep.subr.bf16.mxu0 0
    %1081 = vmatpush1.bf16.xpose.msra.mxu0 0
    %1082 = vmatprep.subr.bf16.mxu0 0
    %1083 = vmatpush1.bf16.xpose.msra.mxu0 0
    %1084 = vmatprep.subr.bf16.mxu0 0
    %1085 = vmatpush1.bf16.xpose.msra.mxu0 0
    %1086 = vmatprep.subr.bf16.mxu0 0
    %1087 = vmatpush1.bf16.xpose.msra.mxu0 0
    %1088 = vmatprep.subr.bf16.mxu0 0
    %1089 = vmatpush1.bf16.xpose.msra.mxu0 0
    %1090 = vmatprep.subr.bf16.mxu0 0
    %1091 = vmatpush1.bf16.xpose.msra.mxu0 0
    %1092 = vmatprep.subr.bf16.mxu0 0
    %1093 = vmatpush1.bf16.xpose.msra.mxu0 0
    %1094 = vmatprep.subr.bf16.mxu0 0
    %1095 = vmatpush1.bf16.xpose.msra.mxu0 0
    %1096 = vmatprep.mubr.bf16.mxu0 0
    %1097 = vmatmul.mubr.bf16.gmra.mrb[0].mxu0 %v1059
    %v1098 = vpop.f32.mrb[0].mxu0
    %v1099 = vadd.f32 0.0, %v1098
    %v1100 = vpop.f32.mrb[0].mxu0
    %v1101 = vpop.f32.mrb[0].mxu0
    %v1102 = vadd.f32 0.0, %v1101
    %v1103 = vpop.f32.mrb[0].mxu0
    %1104 = vdwg.mxu0
    %v1107 = vunpack.c.l.b16 %v151
    %v1108 = vunpack.c.l.b16 %v152
    %v1109 = vpack.c.b16 %v1108, %v1107
    %v1112 = vunpack.c.l.b16 %v215
    %v1113 = vunpack.c.l.b16 %v216
    %v1114 = vpack.c.b16 %v1113, %v1112
    %v1116 = vsel %vm259, %v1109, 0
    %v1119 = vsel %vm259, %v1114, 0
    %1121 = vmatprep.subr.bf16.mxu0 0
    %1122 = vmatpush1.bf16.xpose.msra.mxu0 %v1119
    %1123 = vmatprep.subr.bf16.mxu0 0
    %1124 = vmatpush1.bf16.xpose.msra.mxu0 0
    %1125 = vmatprep.subr.bf16.mxu0 0
    %1126 = vmatpush1.bf16.xpose.msra.mxu0 0
    %1127 = vmatprep.subr.bf16.mxu0 0
    %1128 = vmatpush1.bf16.xpose.msra.mxu0 0
    %1129 = vmatprep.subr.bf16.mxu0 0
    %1130 = vmatpush1.bf16.xpose.msra.mxu0 0
    %1131 = vmatprep.subr.bf16.mxu0 0
    %1132 = vmatpush1.bf16.xpose.msra.mxu0 0
    %1133 = vmatprep.subr.bf16.mxu0 0
    %1134 = vmatpush1.bf16.xpose.msra.mxu0 0
    %1135 = vmatprep.subr.bf16.mxu0 0
    %1136 = vmatpush1.bf16.xpose.msra.mxu0 0
    %1137 = vmatprep.subr.bf16.mxu0 0
    %1138 = vmatpush1.bf16.xpose.msra.mxu0 0
    %1139 = vmatprep.subr.bf16.mxu0 0
    %1140 = vmatpush1.bf16.xpose.msra.mxu0 0
    %1141 = vmatprep.subr.bf16.mxu0 0
    %1142 = vmatpush1.bf16.xpose.msra.mxu0 0
    %1143 = vmatprep.subr.bf16.mxu0 0
    %1144 = vmatpush1.bf16.xpose.msra.mxu0 0
    %1145 = vmatprep.subr.bf16.mxu0 0
    %1146 = vmatpush1.bf16.xpose.msra.mxu0 0
    %1147 = vmatprep.subr.bf16.mxu0 0
    %1148 = vmatpush1.bf16.xpose.msra.mxu0 0
    %1149 = vmatprep.subr.bf16.mxu0 0
    %1150 = vmatpush1.bf16.xpose.msra.mxu0 0
    %1151 = vmatprep.subr.bf16.mxu0 0
    %1152 = vmatpush1.bf16.xpose.msra.mxu0 0
    %1153 = vmatprep.mubr.bf16.mxu0 0
    %1154 = vmatmul.mubr.bf16.gmra.mrb[0].mxu0 %v1116
    %v1155 = vpop.f32.mrb[0].mxu0
    %v1156 = vadd.f32 0.0, %v1155
    %v1157 = vpop.f32.mrb[0].mxu0
    %v1158 = vpop.f32.mrb[0].mxu0
    %v1159 = vadd.f32 0.0, %v1158
    %v1160 = vpop.f32.mrb[0].mxu0
    %1161 = vdwg.mxu0
    %v1164 = vunpack.c.l.b16 %v153
    %v1165 = vunpack.c.l.b16 %v154
    %v1166 = vpack.c.b16 %v1165, %v1164
    %v1169 = vunpack.c.l.b16 %v217
    %v1170 = vunpack.c.l.b16 %v218
    %v1171 = vpack.c.b16 %v1170, %v1169
    %v1173 = vsel %vm259, %v1166, 0
    %v1176 = vsel %vm259, %v1171, 0
    %1178 = vmatprep.subr.bf16.mxu0 0
    %1179 = vmatpush1.bf16.xpose.msra.mxu0 %v1176
    %1180 = vmatprep.subr.bf16.mxu0 0
    %1181 = vmatpush1.bf16.xpose.msra.mxu0 0
    %1182 = vmatprep.subr.bf16.mxu0 0
    %1183 = vmatpush1.bf16.xpose.msra.mxu0 0
    %1184 = vmatprep.subr.bf16.mxu0 0
    %1185 = vmatpush1.bf16.xpose.msra.mxu0 0
    %1186 = vmatprep.subr.bf16.mxu0 0
    %1187 = vmatpush1.bf16.xpose.msra.mxu0 0
    %1188 = vmatprep.subr.bf16.mxu0 0
    %1189 = vmatpush1.bf16.xpose.msra.mxu0 0
    %1190 = vmatprep.subr.bf16.mxu0 0
    %1191 = vmatpush1.bf16.xpose.msra.mxu0 0
    %1192 = vmatprep.subr.bf16.mxu0 0
    %1193 = vmatpush1.bf16.xpose.msra.mxu0 0
    %1194 = vmatprep.subr.bf16.mxu0 0
    %1195 = vmatpush1.bf16.xpose.msra.mxu0 0
    %1196 = vmatprep.subr.bf16.mxu0 0
    %1197 = vmatpush1.bf16.xpose.msra.mxu0 0
    %1198 = vmatprep.subr.bf16.mxu0 0
    %1199 = vmatpush1.bf16.xpose.msra.mxu0 0
    %1200 = vmatprep.subr.bf16.mxu0 0
    %1201 = vmatpush1.bf16.xpose.msra.mxu0 0
    %1202 = vmatprep.subr.bf16.mxu0 0
    %1203 = vmatpush1.bf16.xpose.msra.mxu0 0
    %1204 = vmatprep.subr.bf16.mxu0 0
    %1205 = vmatpush1.bf16.xpose.msra.mxu0 0
    %1206 = vmatprep.subr.bf16.mxu0 0
    %1207 = vmatpush1.bf16.xpose.msra.mxu0 0
    %1208 = vmatprep.subr.bf16.mxu0 0
    %1209 = vmatpush1.bf16.xpose.msra.mxu0 0
    %1210 = vmatprep.mubr.bf16.mxu0 0
    %1211 = vmatmul.mubr.bf16.gmra.mrb[0].mxu0 %v1173
    %v1212 = vpop.f32.mrb[0].mxu0
    %v1213 = vadd.f32 0.0, %v1212
    %v1214 = vpop.f32.mrb[0].mxu0
    %v1215 = vpop.f32.mrb[0].mxu0
    %v1216 = vadd.f32 0.0, %v1215
    %v1217 = vpop.f32.mrb[0].mxu0
    %1218 = vdwg.mxu0
    %v1221 = vunpack.c.l.b16 %v155
    %v1222 = vunpack.c.l.b16 %v156
    %v1223 = vpack.c.b16 %v1222, %v1221
    %v1226 = vunpack.c.l.b16 %v219
    %v1227 = vunpack.c.l.b16 %v220
    %v1228 = vpack.c.b16 %v1227, %v1226
    %v1230 = vsel %vm259, %v1223, 0
    %v1233 = vsel %vm259, %v1228, 0
    %1235 = vmatprep.subr.bf16.mxu0 0
    %1236 = vmatpush1.bf16.xpose.msra.mxu0 %v1233
    %1237 = vmatprep.subr.bf16.mxu0 0
    %1238 = vmatpush1.bf16.xpose.msra.mxu0 0
    %1239 = vmatprep.subr.bf16.mxu0 0
    %1240 = vmatpush1.bf16.xpose.msra.mxu0 0
    %1241 = vmatprep.subr.bf16.mxu0 0
    %1242 = vmatpush1.bf16.xpose.msra.mxu0 0
    %1243 = vmatprep.subr.bf16.mxu0 0
    %1244 = vmatpush1.bf16.xpose.msra.mxu0 0
    %1245 = vmatprep.subr.bf16.mxu0 0
    %1246 = vmatpush1.bf16.xpose.msra.mxu0 0
    %1247 = vmatprep.subr.bf16.mxu0 0
    %1248 = vmatpush1.bf16.xpose.msra.mxu0 0
    %1249 = vmatprep.subr.bf16.mxu0 0
    %1250 = vmatpush1.bf16.xpose.msra.mxu0 0
    %1251 = vmatprep.subr.bf16.mxu0 0
    %1252 = vmatpush1.bf16.xpose.msra.mxu0 0
    %1253 = vmatprep.subr.bf16.mxu0 0
    %1254 = vmatpush1.bf16.xpose.msra.mxu0 0
    %1255 = vmatprep.subr.bf16.mxu0 0
    %1256 = vmatpush1.bf16.xpose.msra.mxu0 0
    %1257 = vmatprep.subr.bf16.mxu0 0
    %1258 = vmatpush1.bf16.xpose.msra.mxu0 0
    %1259 = vmatprep.subr.bf16.mxu0 0
    %1260 = vmatpush1.bf16.xpose.msra.mxu0 0
    %1261 = vmatprep.subr.bf16.mxu0 0
    %1262 = vmatpush1.bf16.xpose.msra.mxu0 0
    %1263 = vmatprep.subr.bf16.mxu0 0
    %1264 = vmatpush1.bf16.xpose.msra.mxu0 0
    %1265 = vmatprep.subr.bf16.mxu0 0
    %1266 = vmatpush1.bf16.xpose.msra.mxu0 0
    %1267 = vmatprep.mubr.bf16.mxu0 0
    %1268 = vmatmul.mubr.bf16.gmra.mrb[0].mxu0 %v1230
    %v1269 = vpop.f32.mrb[0].mxu0
    %v1270 = vadd.f32 0.0, %v1269
    %v1271 = vpop.f32.mrb[0].mxu0
    %v1272 = vpop.f32.mrb[0].mxu0
    %v1273 = vadd.f32 0.0, %v1272
    %v1274 = vpop.f32.mrb[0].mxu0
    %1275 = vdwg.mxu0
    %v1278 = vunpack.c.l.b16 %v157
    %v1279 = vunpack.c.l.b16 %v158
    %v1280 = vpack.c.b16 %v1279, %v1278
    %v1283 = vunpack.c.l.b16 %v221
    %v1284 = vunpack.c.l.b16 %v222
    %v1285 = vpack.c.b16 %v1284, %v1283
    %v1287 = vsel %vm259, %v1280, 0
    %v1290 = vsel %vm259, %v1285, 0
    %1292 = vmatprep.subr.bf16.mxu0 0
    %1293 = vmatpush1.bf16.xpose.msra.mxu0 %v1290
    %1294 = vmatprep.subr.bf16.mxu0 0
    %1295 = vmatpush1.bf16.xpose.msra.mxu0 0
    %1296 = vmatprep.subr.bf16.mxu0 0
    %1297 = vmatpush1.bf16.xpose.msra.mxu0 0
    %1298 = vmatprep.subr.bf16.mxu0 0
    %1299 = vmatpush1.bf16.xpose.msra.mxu0 0
    %1300 = vmatprep.subr.bf16.mxu0 0
    %1301 = vmatpush1.bf16.xpose.msra.mxu0 0
    %1302 = vmatprep.subr.bf16.mxu0 0
    %1303 = vmatpush1.bf16.xpose.msra.mxu0 0
    %1304 = vmatprep.subr.bf16.mxu0 0
    %1305 = vmatpush1.bf16.xpose.msra.mxu0 0
    %1306 = vmatprep.subr.bf16.mxu0 0
    %1307 = vmatpush1.bf16.xpose.msra.mxu0 0
    %1308 = vmatprep.subr.bf16.mxu0 0
    %1309 = vmatpush1.bf16.xpose.msra.mxu0 0
    %1310 = vmatprep.subr.bf16.mxu0 0
    %1311 = vmatpush1.bf16.xpose.msra.mxu0 0
    %1312 = vmatprep.subr.bf16.mxu0 0
    %1313 = vmatpush1.bf16.xpose.msra.mxu0 0
    %1314 = vmatprep.subr.bf16.mxu0 0
    %1315 = vmatpush1.bf16.xpose.msra.mxu0 0
    %1316 = vmatprep.subr.bf16.mxu0 0
    %1317 = vmatpush1.bf16.xpose.msra.mxu0 0
    %1318 = vmatprep.subr.bf16.mxu0 0
    %1319 = vmatpush1.bf16.xpose.msra.mxu0 0
    %1320 = vmatprep.subr.bf16.mxu0 0
    %1321 = vmatpush1.bf16.xpose.msra.mxu0 0
    %1322 = vmatprep.subr.bf16.mxu0 0
    %1323 = vmatpush1.bf16.xpose.msra.mxu0 0
    %1324 = vmatprep.mubr.bf16.mxu0 0
    %1325 = vmatmul.mubr.bf16.gmra.mrb[0].mxu0 %v1287
    %v1326 = vpop.f32.mrb[0].mxu0
    %v1327 = vadd.f32 0.0, %v1326
    %v1328 = vpop.f32.mrb[0].mxu0
    %v1329 = vpop.f32.mrb[0].mxu0
    %v1330 = vadd.f32 0.0, %v1329
    %v1331 = vpop.f32.mrb[0].mxu0
    %1332 = vdwg.mxu0
    %v1335 = vunpack.c.l.b16 %v159
    %v1336 = vunpack.c.l.b16 %v160
    %v1337 = vpack.c.b16 %v1336, %v1335
    %v1340 = vunpack.c.l.b16 %v223
    %v1341 = vunpack.c.l.b16 %v224
    %v1342 = vpack.c.b16 %v1341, %v1340
    %v1344 = vsel %vm259, %v1337, 0
    %v1347 = vsel %vm259, %v1342, 0
    %1349 = vmatprep.subr.bf16.mxu0 0
    %1350 = vmatpush1.bf16.xpose.msra.mxu0 %v1347
    %1351 = vmatprep.subr.bf16.mxu0 0
    %1352 = vmatpush1.bf16.xpose.msra.mxu0 0
    %1353 = vmatprep.subr.bf16.mxu0 0
    %1354 = vmatpush1.bf16.xpose.msra.mxu0 0
    %1355 = vmatprep.subr.bf16.mxu0 0
    %1356 = vmatpush1.bf16.xpose.msra.mxu0 0
    %1357 = vmatprep.subr.bf16.mxu0 0
    %1358 = vmatpush1.bf16.xpose.msra.mxu0 0
    %1359 = vmatprep.subr.bf16.mxu0 0
    %1360 = vmatpush1.bf16.xpose.msra.mxu0 0
    %1361 = vmatprep.subr.bf16.mxu0 0
    %1362 = vmatpush1.bf16.xpose.msra.mxu0 0
    %1363 = vmatprep.subr.bf16.mxu0 0
    %1364 = vmatpush1.bf16.xpose.msra.mxu0 0
    %1365 = vmatprep.subr.bf16.mxu0 0
    %1366 = vmatpush1.bf16.xpose.msra.mxu0 0
    %1367 = vmatprep.subr.bf16.mxu0 0
    %1368 = vmatpush1.bf16.xpose.msra.mxu0 0
    %1369 = vmatprep.subr.bf16.mxu0 0
    %1370 = vmatpush1.bf16.xpose.msra.mxu0 0
    %1371 = vmatprep.subr.bf16.mxu0 0
    %1372 = vmatpush1.bf16.xpose.msra.mxu0 0
    %1373 = vmatprep.subr.bf16.mxu0 0
    %1374 = vmatpush1.bf16.xpose.msra.mxu0 0
    %1375 = vmatprep.subr.bf16.mxu0 0
    %1376 = vmatpush1.bf16.xpose.msra.mxu0 0
    %1377 = vmatprep.subr.bf16.mxu0 0
    %1378 = vmatpush1.bf16.xpose.msra.mxu0 0
    %1379 = vmatprep.subr.bf16.mxu0 0
    %1380 = vmatpush1.bf16.xpose.msra.mxu0 0
    %1381 = vmatprep.mubr.bf16.mxu0 0
    %1382 = vmatmul.mubr.bf16.gmra.mrb[0].mxu0 %v1344
    %v1383 = vpop.f32.mrb[0].mxu0
    %v1384 = vadd.f32 0.0, %v1383
    %v1385 = vpop.f32.mrb[0].mxu0
    %v1386 = vpop.f32.mrb[0].mxu0
    %v1387 = vadd.f32 0.0, %v1386
    %v1388 = vpop.f32.mrb[0].mxu0
    %1389 = vdwg.mxu0
    %v1392 = vunpack.c.l.b16 %v161
    %v1393 = vunpack.c.l.b16 %v162
    %v1394 = vpack.c.b16 %v1393, %v1392
    %v1397 = vunpack.c.l.b16 %v225
    %v1398 = vunpack.c.l.b16 %v226
    %v1399 = vpack.c.b16 %v1398, %v1397
    %v1401 = vsel %vm259, %v1394, 0
    %v1404 = vsel %vm259, %v1399, 0
    %1406 = vmatprep.subr.bf16.mxu0 0
    %1407 = vmatpush1.bf16.xpose.msra.mxu0 %v1404
    %1408 = vmatprep.subr.bf16.mxu0 0
    %1409 = vmatpush1.bf16.xpose.msra.mxu0 0
    %1410 = vmatprep.subr.bf16.mxu0 0
    %1411 = vmatpush1.bf16.xpose.msra.mxu0 0
    %1412 = vmatprep.subr.bf16.mxu0 0
    %1413 = vmatpush1.bf16.xpose.msra.mxu0 0
    %1414 = vmatprep.subr.bf16.mxu0 0
    %1415 = vmatpush1.bf16.xpose.msra.mxu0 0
    %1416 = vmatprep.subr.bf16.mxu0 0
    %1417 = vmatpush1.bf16.xpose.msra.mxu0 0
    %1418 = vmatprep.subr.bf16.mxu0 0
    %1419 = vmatpush1.bf16.xpose.msra.mxu0 0
    %1420 = vmatprep.subr.bf16.mxu0 0
    %1421 = vmatpush1.bf16.xpose.msra.mxu0 0
    %1422 = vmatprep.subr.bf16.mxu0 0
    %1423 = vmatpush1.bf16.xpose.msra.mxu0 0
    %1424 = vmatprep.subr.bf16.mxu0 0
    %1425 = vmatpush1.bf16.xpose.msra.mxu0 0
    %1426 = vmatprep.subr.bf16.mxu0 0
    %1427 = vmatpush1.bf16.xpose.msra.mxu0 0
    %1428 = vmatprep.subr.bf16.mxu0 0
    %1429 = vmatpush1.bf16.xpose.msra.mxu0 0
    %1430 = vmatprep.subr.bf16.mxu0 0
    %1431 = vmatpush1.bf16.xpose.msra.mxu0 0
    %1432 = vmatprep.subr.bf16.mxu0 0
    %1433 = vmatpush1.bf16.xpose.msra.mxu0 0
    %1434 = vmatprep.subr.bf16.mxu0 0
    %1435 = vmatpush1.bf16.xpose.msra.mxu0 0
    %1436 = vmatprep.subr.bf16.mxu0 0
    %1437 = vmatpush1.bf16.xpose.msra.mxu0 0
    %1438 = vmatprep.mubr.bf16.mxu0 0
    %1439 = vmatmul.mubr.bf16.gmra.mrb[0].mxu0 %v1401
    %v1440 = vpop.f32.mrb[0].mxu0
    %v1441 = vadd.f32 0.0, %v1440
    %v1442 = vpop.f32.mrb[0].mxu0
    %v1443 = vpop.f32.mrb[0].mxu0
    %v1444 = vadd.f32 0.0, %v1443
    %v1445 = vpop.f32.mrb[0].mxu0
    %1446 = vdwg.mxu0
    %v1449 = vunpack.c.l.b16 %v163
    %v1450 = vunpack.c.l.b16 %v164
    %v1451 = vpack.c.b16 %v1450, %v1449
    %v1454 = vunpack.c.l.b16 %v227
    %v1455 = vunpack.c.l.b16 %v228
    %v1456 = vpack.c.b16 %v1455, %v1454
    %v1458 = vsel %vm259, %v1451, 0
    %v1461 = vsel %vm259, %v1456, 0
    %1463 = vmatprep.subr.bf16.mxu0 0
    %1464 = vmatpush1.bf16.xpose.msra.mxu0 %v1461
    %1465 = vmatprep.subr.bf16.mxu0 0
    %1466 = vmatpush1.bf16.xpose.msra.mxu0 0
    %1467 = vmatprep.subr.bf16.mxu0 0
    %1468 = vmatpush1.bf16.xpose.msra.mxu0 0
    %1469 = vmatprep.subr.bf16.mxu0 0
    %1470 = vmatpush1.bf16.xpose.msra.mxu0 0
    %1471 = vmatprep.subr.bf16.mxu0 0
    %1472 = vmatpush1.bf16.xpose.msra.mxu0 0
    %1473 = vmatprep.subr.bf16.mxu0 0
    %1474 = vmatpush1.bf16.xpose.msra.mxu0 0
    %1475 = vmatprep.subr.bf16.mxu0 0
    %1476 = vmatpush1.bf16.xpose.msra.mxu0 0
    %1477 = vmatprep.subr.bf16.mxu0 0
    %1478 = vmatpush1.bf16.xpose.msra.mxu0 0
    %1479 = vmatprep.subr.bf16.mxu0 0
    %1480 = vmatpush1.bf16.xpose.msra.mxu0 0
    %1481 = vmatprep.subr.bf16.mxu0 0
    %1482 = vmatpush1.bf16.xpose.msra.mxu0 0
    %1483 = vmatprep.subr.bf16.mxu0 0
    %1484 = vmatpush1.bf16.xpose.msra.mxu0 0
    %1485 = vmatprep.subr.bf16.mxu0 0
    %1486 = vmatpush1.bf16.xpose.msra.mxu0 0
    %1487 = vmatprep.subr.bf16.mxu0 0
    %1488 = vmatpush1.bf16.xpose.msra.mxu0 0
    %1489 = vmatprep.subr.bf16.mxu0 0
    %1490 = vmatpush1.bf16.xpose.msra.mxu0 0
    %1491 = vmatprep.subr.bf16.mxu0 0
    %1492 = vmatpush1.bf16.xpose.msra.mxu0 0
    %1493 = vmatprep.subr.bf16.mxu0 0
    %1494 = vmatpush1.bf16.xpose.msra.mxu0 0
    %1495 = vmatprep.mubr.bf16.mxu0 0
    %1496 = vmatmul.mubr.bf16.gmra.mrb[0].mxu0 %v1458
    %v1497 = vpop.f32.mrb[0].mxu0
    %v1498 = vadd.f32 0.0, %v1497
    %v1499 = vpop.f32.mrb[0].mxu0
    %v1500 = vpop.f32.mrb[0].mxu0
    %v1501 = vadd.f32 0.0, %v1500
    %v1502 = vpop.f32.mrb[0].mxu0
    %1503 = vdwg.mxu0
    %v1506 = vunpack.c.l.b16 %v165
    %v1507 = vunpack.c.l.b16 %v166
    %v1508 = vpack.c.b16 %v1507, %v1506
    %v1511 = vunpack.c.l.b16 %v229
    %v1512 = vunpack.c.l.b16 %v230
    %v1513 = vpack.c.b16 %v1512, %v1511
    %v1515 = vsel %vm259, %v1508, 0
    %v1518 = vsel %vm259, %v1513, 0
    %1520 = vmatprep.subr.bf16.mxu0 0
    %1521 = vmatpush1.bf16.xpose.msra.mxu0 %v1518
    %1522 = vmatprep.subr.bf16.mxu0 0
    %1523 = vmatpush1.bf16.xpose.msra.mxu0 0
    %1524 = vmatprep.subr.bf16.mxu0 0
    %1525 = vmatpush1.bf16.xpose.msra.mxu0 0
    %1526 = vmatprep.subr.bf16.mxu0 0
    %1527 = vmatpush1.bf16.xpose.msra.mxu0 0
    %1528 = vmatprep.subr.bf16.mxu0 0
    %1529 = vmatpush1.bf16.xpose.msra.mxu0 0
    %1530 = vmatprep.subr.bf16.mxu0 0
    %1531 = vmatpush1.bf16.xpose.msra.mxu0 0
    %1532 = vmatprep.subr.bf16.mxu0 0
    %1533 = vmatpush1.bf16.xpose.msra.mxu0 0
    %1534 = vmatprep.subr.bf16.mxu0 0
    %1535 = vmatpush1.bf16.xpose.msra.mxu0 0
    %1536 = vmatprep.subr.bf16.mxu0 0
    %1537 = vmatpush1.bf16.xpose.msra.mxu0 0
    %1538 = vmatprep.subr.bf16.mxu0 0
    %1539 = vmatpush1.bf16.xpose.msra.mxu0 0
    %1540 = vmatprep.subr.bf16.mxu0 0
    %1541 = vmatpush1.bf16.xpose.msra.mxu0 0
    %1542 = vmatprep.subr.bf16.mxu0 0
    %1543 = vmatpush1.bf16.xpose.msra.mxu0 0
    %1544 = vmatprep.subr.bf16.mxu0 0
    %1545 = vmatpush1.bf16.xpose.msra.mxu0 0
    %1546 = vmatprep.subr.bf16.mxu0 0
    %1547 = vmatpush1.bf16.xpose.msra.mxu0 0
    %1548 = vmatprep.subr.bf16.mxu0 0
    %1549 = vmatpush1.bf16.xpose.msra.mxu0 0
    %1550 = vmatprep.subr.bf16.mxu0 0
    %1551 = vmatpush1.bf16.xpose.msra.mxu0 0
    %1552 = vmatprep.mubr.bf16.mxu0 0
    %1553 = vmatmul.mubr.bf16.gmra.mrb[0].mxu0 %v1515
    %v1554 = vpop.f32.mrb[0].mxu0
    %v1555 = vadd.f32 0.0, %v1554
    %v1556 = vpop.f32.mrb[0].mxu0
    %v1557 = vpop.f32.mrb[0].mxu0
    %v1558 = vadd.f32 0.0, %v1557
    %v1559 = vpop.f32.mrb[0].mxu0
    %1560 = vdwg.mxu0
    %v1563 = vunpack.c.l.b16 %v167
    %v1564 = vunpack.c.l.b16 %v168
    %v1565 = vpack.c.b16 %v1564, %v1563
    %v1568 = vunpack.c.l.b16 %v231
    %v1569 = vunpack.c.l.b16 %v232
    %v1570 = vpack.c.b16 %v1569, %v1568
    %v1572 = vsel %vm259, %v1565, 0
    %v1575 = vsel %vm259, %v1570, 0
    %1577 = vmatprep.subr.bf16.mxu0 0
    %1578 = vmatpush1.bf16.xpose.msra.mxu0 %v1575
    %1579 = vmatprep.subr.bf16.mxu0 0
    %1580 = vmatpush1.bf16.xpose.msra.mxu0 0
    %1581 = vmatprep.subr.bf16.mxu0 0
    %1582 = vmatpush1.bf16.xpose.msra.mxu0 0
    %1583 = vmatprep.subr.bf16.mxu0 0
    %1584 = vmatpush1.bf16.xpose.msra.mxu0 0
    %1585 = vmatprep.subr.bf16.mxu0 0
    %1586 = vmatpush1.bf16.xpose.msra.mxu0 0
    %1587 = vmatprep.subr.bf16.mxu0 0
    %1588 = vmatpush1.bf16.xpose.msra.mxu0 0
    %1589 = vmatprep.subr.bf16.mxu0 0
    %1590 = vmatpush1.bf16.xpose.msra.mxu0 0
    %1591 = vmatprep.subr.bf16.mxu0 0
    %1592 = vmatpush1.bf16.xpose.msra.mxu0 0
    %1593 = vmatprep.subr.bf16.mxu0 0
    %1594 = vmatpush1.bf16.xpose.msra.mxu0 0
    %1595 = vmatprep.subr.bf16.mxu0 0
    %1596 = vmatpush1.bf16.xpose.msra.mxu0 0
    %1597 = vmatprep.subr.bf16.mxu0 0
    %1598 = vmatpush1.bf16.xpose.msra.mxu0 0
    %1599 = vmatprep.subr.bf16.mxu0 0
    %1600 = vmatpush1.bf16.xpose.msra.mxu0 0
    %1601 = vmatprep.subr.bf16.mxu0 0
    %1602 = vmatpush1.bf16.xpose.msra.mxu0 0
    %1603 = vmatprep.subr.bf16.mxu0 0
    %1604 = vmatpush1.bf16.xpose.msra.mxu0 0
    %1605 = vmatprep.subr.bf16.mxu0 0
    %1606 = vmatpush1.bf16.xpose.msra.mxu0 0
    %1607 = vmatprep.subr.bf16.mxu0 0
    %1608 = vmatpush1.bf16.xpose.msra.mxu0 0
    %1609 = vmatprep.mubr.bf16.mxu0 0
    %1610 = vmatmul.mubr.bf16.gmra.mrb[0].mxu0 %v1572
    %v1611 = vpop.f32.mrb[0].mxu0
    %v1612 = vadd.f32 0.0, %v1611
    %v1613 = vpop.f32.mrb[0].mxu0
    %v1614 = vpop.f32.mrb[0].mxu0
    %v1615 = vadd.f32 0.0, %v1614
    %v1616 = vpop.f32.mrb[0].mxu0
    %1617 = vdwg.mxu0
    %v1620 = vunpack.c.l.b16 %v169
    %v1621 = vunpack.c.l.b16 %v170
    %v1622 = vpack.c.b16 %v1621, %v1620
    %v1625 = vunpack.c.l.b16 %v233
    %v1626 = vunpack.c.l.b16 %v234
    %v1627 = vpack.c.b16 %v1626, %v1625
    %v1629 = vsel %vm259, %v1622, 0
    %v1632 = vsel %vm259, %v1627, 0
    %1634 = vmatprep.subr.bf16.mxu0 0
    %1635 = vmatpush1.bf16.xpose.msra.mxu0 %v1632
    %1636 = vmatprep.subr.bf16.mxu0 0
    %1637 = vmatpush1.bf16.xpose.msra.mxu0 0
    %1638 = vmatprep.subr.bf16.mxu0 0
    %1639 = vmatpush1.bf16.xpose.msra.mxu0 0
    %1640 = vmatprep.subr.bf16.mxu0 0
    %1641 = vmatpush1.bf16.xpose.msra.mxu0 0
    %1642 = vmatprep.subr.bf16.mxu0 0
    %1643 = vmatpush1.bf16.xpose.msra.mxu0 0
    %1644 = vmatprep.subr.bf16.mxu0 0
    %1645 = vmatpush1.bf16.xpose.msra.mxu0 0
    %1646 = vmatprep.subr.bf16.mxu0 0
    %1647 = vmatpush1.bf16.xpose.msra.mxu0 0
    %1648 = vmatprep.subr.bf16.mxu0 0
    %1649 = vmatpush1.bf16.xpose.msra.mxu0 0
    %1650 = vmatprep.subr.bf16.mxu0 0
    %1651 = vmatpush1.bf16.xpose.msra.mxu0 0
    %1652 = vmatprep.subr.bf16.mxu0 0
    %1653 = vmatpush1.bf16.xpose.msra.mxu0 0
    %1654 = vmatprep.subr.bf16.mxu0 0
    %1655 = vmatpush1.bf16.xpose.msra.mxu0 0
    %1656 = vmatprep.subr.bf16.mxu0 0
    %1657 = vmatpush1.bf16.xpose.msra.mxu0 0
    %1658 = vmatprep.subr.bf16.mxu0 0
    %1659 = vmatpush1.bf16.xpose.msra.mxu0 0
    %1660 = vmatprep.subr.bf16.mxu0 0
    %1661 = vmatpush1.bf16.xpose.msra.mxu0 0
    %1662 = vmatprep.subr.bf16.mxu0 0
    %1663 = vmatpush1.bf16.xpose.msra.mxu0 0
    %1664 = vmatprep.subr.bf16.mxu0 0
    %1665 = vmatpush1.bf16.xpose.msra.mxu0 0
    %1666 = vmatprep.mubr.bf16.mxu0 0
    %1667 = vmatmul.mubr.bf16.gmra.mrb[0].mxu0 %v1629
    %v1668 = vpop.f32.mrb[0].mxu0
    %v1669 = vadd.f32 0.0, %v1668
    %v1670 = vpop.f32.mrb[0].mxu0
    %v1671 = vpop.f32.mrb[0].mxu0
    %v1672 = vadd.f32 0.0, %v1671
    %v1673 = vpop.f32.mrb[0].mxu0
    %1674 = vdwg.mxu0
    %v1677 = vunpack.c.l.b16 %v171
    %v1678 = vunpack.c.l.b16 %v172
    %v1679 = vpack.c.b16 %v1678, %v1677
    %v1682 = vunpack.c.l.b16 %v235
    %v1683 = vunpack.c.l.b16 %v236
    %v1684 = vpack.c.b16 %v1683, %v1682
    %v1686 = vsel %vm259, %v1679, 0
    %v1689 = vsel %vm259, %v1684, 0
    %1691 = vmatprep.subr.bf16.mxu0 0
    %1692 = vmatpush1.bf16.xpose.msra.mxu0 %v1689
    %1693 = vmatprep.subr.bf16.mxu0 0
    %1694 = vmatpush1.bf16.xpose.msra.mxu0 0
    %1695 = vmatprep.subr.bf16.mxu0 0
    %1696 = vmatpush1.bf16.xpose.msra.mxu0 0
    %1697 = vmatprep.subr.bf16.mxu0 0
    %1698 = vmatpush1.bf16.xpose.msra.mxu0 0
    %1699 = vmatprep.subr.bf16.mxu0 0
    %1700 = vmatpush1.bf16.xpose.msra.mxu0 0
    %1701 = vmatprep.subr.bf16.mxu0 0
    %1702 = vmatpush1.bf16.xpose.msra.mxu0 0
    %1703 = vmatprep.subr.bf16.mxu0 0
    %1704 = vmatpush1.bf16.xpose.msra.mxu0 0
    %1705 = vmatprep.subr.bf16.mxu0 0
    %1706 = vmatpush1.bf16.xpose.msra.mxu0 0
    %1707 = vmatprep.subr.bf16.mxu0 0
    %1708 = vmatpush1.bf16.xpose.msra.mxu0 0
    %1709 = vmatprep.subr.bf16.mxu0 0
    %1710 = vmatpush1.bf16.xpose.msra.mxu0 0
    %1711 = vmatprep.subr.bf16.mxu0 0
    %1712 = vmatpush1.bf16.xpose.msra.mxu0 0
    %1713 = vmatprep.subr.bf16.mxu0 0
    %1714 = vmatpush1.bf16.xpose.msra.mxu0 0
    %1715 = vmatprep.subr.bf16.mxu0 0
    %1716 = vmatpush1.bf16.xpose.msra.mxu0 0
    %1717 = vmatprep.subr.bf16.mxu0 0
    %1718 = vmatpush1.bf16.xpose.msra.mxu0 0
    %1719 = vmatprep.subr.bf16.mxu0 0
    %1720 = vmatpush1.bf16.xpose.msra.mxu0 0
    %1721 = vmatprep.subr.bf16.mxu0 0
    %1722 = vmatpush1.bf16.xpose.msra.mxu0 0
    %1723 = vmatprep.mubr.bf16.mxu0 0
    %1724 = vmatmul.mubr.bf16.gmra.mrb[0].mxu0 %v1686
    %v1725 = vpop.f32.mrb[0].mxu0
    %v1726 = vadd.f32 0.0, %v1725
    %v1727 = vpop.f32.mrb[0].mxu0
    %v1728 = vpop.f32.mrb[0].mxu0
    %v1729 = vadd.f32 0.0, %v1728
    %v1730 = vpop.f32.mrb[0].mxu0
    %1731 = vdwg.mxu0
    %v1734 = vunpack.c.l.b16 %v173
    %v1735 = vunpack.c.l.b16 %v174
    %v1736 = vpack.c.b16 %v1735, %v1734
    %v1739 = vunpack.c.l.b16 %v237
    %v1740 = vunpack.c.l.b16 %v238
    %v1741 = vpack.c.b16 %v1740, %v1739
    %v1743 = vsel %vm259, %v1736, 0
    %v1746 = vsel %vm259, %v1741, 0
    %1748 = vmatprep.subr.bf16.mxu0 0
    %1749 = vmatpush1.bf16.xpose.msra.mxu0 %v1746
    %1750 = vmatprep.subr.bf16.mxu0 0
    %1751 = vmatpush1.bf16.xpose.msra.mxu0 0
    %1752 = vmatprep.subr.bf16.mxu0 0
    %1753 = vmatpush1.bf16.xpose.msra.mxu0 0
    %1754 = vmatprep.subr.bf16.mxu0 0
    %1755 = vmatpush1.bf16.xpose.msra.mxu0 0
    %1756 = vmatprep.subr.bf16.mxu0 0
    %1757 = vmatpush1.bf16.xpose.msra.mxu0 0
    %1758 = vmatprep.subr.bf16.mxu0 0
    %1759 = vmatpush1.bf16.xpose.msra.mxu0 0
    %1760 = vmatprep.subr.bf16.mxu0 0
    %1761 = vmatpush1.bf16.xpose.msra.mxu0 0
    %1762 = vmatprep.subr.bf16.mxu0 0
    %1763 = vmatpush1.bf16.xpose.msra.mxu0 0
    %1764 = vmatprep.subr.bf16.mxu0 0
    %1765 = vmatpush1.bf16.xpose.msra.mxu0 0
    %1766 = vmatprep.subr.bf16.mxu0 0
    %1767 = vmatpush1.bf16.xpose.msra.mxu0 0
    %1768 = vmatprep.subr.bf16.mxu0 0
    %1769 = vmatpush1.bf16.xpose.msra.mxu0 0
    %1770 = vmatprep.subr.bf16.mxu0 0
    %1771 = vmatpush1.bf16.xpose.msra.mxu0 0
    %1772 = vmatprep.subr.bf16.mxu0 0
    %1773 = vmatpush1.bf16.xpose.msra.mxu0 0
    %1774 = vmatprep.subr.bf16.mxu0 0
    %1775 = vmatpush1.bf16.xpose.msra.mxu0 0
    %1776 = vmatprep.subr.bf16.mxu0 0
    %1777 = vmatpush1.bf16.xpose.msra.mxu0 0
    %1778 = vmatprep.subr.bf16.mxu0 0
    %1779 = vmatpush1.bf16.xpose.msra.mxu0 0
    %1780 = vmatprep.mubr.bf16.mxu0 0
    %1781 = vmatmul.mubr.bf16.gmra.mrb[0].mxu0 %v1743
    %v1782 = vpop.f32.mrb[0].mxu0
    %v1783 = vadd.f32 0.0, %v1782
    %v1784 = vpop.f32.mrb[0].mxu0
    %v1785 = vpop.f32.mrb[0].mxu0
    %v1786 = vadd.f32 0.0, %v1785
    %v1787 = vpop.f32.mrb[0].mxu0
    %1788 = vdwg.mxu0
    %v1791 = vunpack.c.l.b16 %v175
    %v1792 = vunpack.c.l.b16 %v176
    %v1793 = vpack.c.b16 %v1792, %v1791
    %v1796 = vunpack.c.l.b16 %v239
    %v1797 = vunpack.c.l.b16 %v240
    %v1798 = vpack.c.b16 %v1797, %v1796
    %v1800 = vsel %vm259, %v1793, 0
    %v1803 = vsel %vm259, %v1798, 0
    %1805 = vmatprep.subr.bf16.mxu0 0
    %1806 = vmatpush1.bf16.xpose.msra.mxu0 %v1803
    %1807 = vmatprep.subr.bf16.mxu0 0
    %1808 = vmatpush1.bf16.xpose.msra.mxu0 0
    %1809 = vmatprep.subr.bf16.mxu0 0
    %1810 = vmatpush1.bf16.xpose.msra.mxu0 0
    %1811 = vmatprep.subr.bf16.mxu0 0
    %1812 = vmatpush1.bf16.xpose.msra.mxu0 0
    %1813 = vmatprep.subr.bf16.mxu0 0
    %1814 = vmatpush1.bf16.xpose.msra.mxu0 0
    %1815 = vmatprep.subr.bf16.mxu0 0
    %1816 = vmatpush1.bf16.xpose.msra.mxu0 0
    %1817 = vmatprep.subr.bf16.mxu0 0
    %1818 = vmatpush1.bf16.xpose.msra.mxu0 0
    %1819 = vmatprep.subr.bf16.mxu0 0
    %1820 = vmatpush1.bf16.xpose.msra.mxu0 0
    %1821 = vmatprep.subr.bf16.mxu0 0
    %1822 = vmatpush1.bf16.xpose.msra.mxu0 0
    %1823 = vmatprep.subr.bf16.mxu0 0
    %1824 = vmatpush1.bf16.xpose.msra.mxu0 0
    %1825 = vmatprep.subr.bf16.mxu0 0
    %1826 = vmatpush1.bf16.xpose.msra.mxu0 0
    %1827 = vmatprep.subr.bf16.mxu0 0
    %1828 = vmatpush1.bf16.xpose.msra.mxu0 0
    %1829 = vmatprep.subr.bf16.mxu0 0
    %1830 = vmatpush1.bf16.xpose.msra.mxu0 0
    %1831 = vmatprep.subr.bf16.mxu0 0
    %1832 = vmatpush1.bf16.xpose.msra.mxu0 0
    %1833 = vmatprep.subr.bf16.mxu0 0
    %1834 = vmatpush1.bf16.xpose.msra.mxu0 0
    %1835 = vmatprep.subr.bf16.mxu0 0
    %1836 = vmatpush1.bf16.xpose.msra.mxu0 0
    %1837 = vmatprep.mubr.bf16.mxu0 0
    %1838 = vmatmul.mubr.bf16.gmra.mrb[0].mxu0 %v1800
    %v1839 = vpop.f32.mrb[0].mxu0
    %v1840 = vadd.f32 0.0, %v1839
    %v1841 = vpop.f32.mrb[0].mxu0
    %v1842 = vpop.f32.mrb[0].mxu0
    %v1843 = vadd.f32 0.0, %v1842
    %v1844 = vpop.f32.mrb[0].mxu0
    %1845 = vdwg.mxu0
    %v1848 = vunpack.c.l.b16 %v177
    %v1849 = vunpack.c.l.b16 %v178
    %v1850 = vpack.c.b16 %v1849, %v1848
    %v1853 = vunpack.c.l.b16 %v241
    %v1854 = vunpack.c.l.b16 %v242
    %v1855 = vpack.c.b16 %v1854, %v1853
    %v1857 = vsel %vm259, %v1850, 0
    %v1860 = vsel %vm259, %v1855, 0
    %1862 = vmatprep.subr.bf16.mxu0 0
    %1863 = vmatpush1.bf16.xpose.msra.mxu0 %v1860
    %1864 = vmatprep.subr.bf16.mxu0 0
    %1865 = vmatpush1.bf16.xpose.msra.mxu0 0
    %1866 = vmatprep.subr.bf16.mxu0 0
    %1867 = vmatpush1.bf16.xpose.msra.mxu0 0
    %1868 = vmatprep.subr.bf16.mxu0 0
    %1869 = vmatpush1.bf16.xpose.msra.mxu0 0
    %1870 = vmatprep.subr.bf16.mxu0 0
    %1871 = vmatpush1.bf16.xpose.msra.mxu0 0
    %1872 = vmatprep.subr.bf16.mxu0 0
    %1873 = vmatpush1.bf16.xpose.msra.mxu0 0
    %1874 = vmatprep.subr.bf16.mxu0 0
    %1875 = vmatpush1.bf16.xpose.msra.mxu0 0
    %1876 = vmatprep.subr.bf16.mxu0 0
    %1877 = vmatpush1.bf16.xpose.msra.mxu0 0
    %1878 = vmatprep.subr.bf16.mxu0 0
    %1879 = vmatpush1.bf16.xpose.msra.mxu0 0
    %1880 = vmatprep.subr.bf16.mxu0 0
    %1881 = vmatpush1.bf16.xpose.msra.mxu0 0
    %1882 = vmatprep.subr.bf16.mxu0 0
    %1883 = vmatpush1.bf16.xpose.msra.mxu0 0
    %1884 = vmatprep.subr.bf16.mxu0 0
    %1885 = vmatpush1.bf16.xpose.msra.mxu0 0
    %1886 = vmatprep.subr.bf16.mxu0 0
    %1887 = vmatpush1.bf16.xpose.msra.mxu0 0
    %1888 = vmatprep.subr.bf16.mxu0 0
    %1889 = vmatpush1.bf16.xpose.msra.mxu0 0
    %1890 = vmatprep.subr.bf16.mxu0 0
    %1891 = vmatpush1.bf16.xpose.msra.mxu0 0
    %1892 = vmatprep.subr.bf16.mxu0 0
    %1893 = vmatpush1.bf16.xpose.msra.mxu0 0
    %1894 = vmatprep.mubr.bf16.mxu0 0
    %1895 = vmatmul.mubr.bf16.gmra.mrb[0].mxu0 %v1857
    %v1896 = vpop.f32.mrb[0].mxu0
    %v1897 = vadd.f32 0.0, %v1896
    %v1898 = vpop.f32.mrb[0].mxu0
    %v1899 = vpop.f32.mrb[0].mxu0
    %v1900 = vadd.f32 0.0, %v1899
    %v1901 = vpop.f32.mrb[0].mxu0
    %1902 = vdwg.mxu0
    %v1905 = vunpack.c.l.b16 %v179
    %v1906 = vunpack.c.l.b16 %v180
    %v1907 = vpack.c.b16 %v1906, %v1905
    %v1910 = vunpack.c.l.b16 %v243
    %v1911 = vunpack.c.l.b16 %v244
    %v1912 = vpack.c.b16 %v1911, %v1910
    %v1914 = vsel %vm259, %v1907, 0
    %v1917 = vsel %vm259, %v1912, 0
    %1919 = vmatprep.subr.bf16.mxu0 0
    %1920 = vmatpush1.bf16.xpose.msra.mxu0 %v1917
    %1921 = vmatprep.subr.bf16.mxu0 0
    %1922 = vmatpush1.bf16.xpose.msra.mxu0 0
    %1923 = vmatprep.subr.bf16.mxu0 0
    %1924 = vmatpush1.bf16.xpose.msra.mxu0 0
    %1925 = vmatprep.subr.bf16.mxu0 0
    %1926 = vmatpush1.bf16.xpose.msra.mxu0 0
    %1927 = vmatprep.subr.bf16.mxu0 0
    %1928 = vmatpush1.bf16.xpose.msra.mxu0 0
    %1929 = vmatprep.subr.bf16.mxu0 0
    %1930 = vmatpush1.bf16.xpose.msra.mxu0 0
    %1931 = vmatprep.subr.bf16.mxu0 0
    %1932 = vmatpush1.bf16.xpose.msra.mxu0 0
    %1933 = vmatprep.subr.bf16.mxu0 0
    %1934 = vmatpush1.bf16.xpose.msra.mxu0 0
    %1935 = vmatprep.subr.bf16.mxu0 0
    %1936 = vmatpush1.bf16.xpose.msra.mxu0 0
    %1937 = vmatprep.subr.bf16.mxu0 0
    %1938 = vmatpush1.bf16.xpose.msra.mxu0 0
    %1939 = vmatprep.subr.bf16.mxu0 0
    %1940 = vmatpush1.bf16.xpose.msra.mxu0 0
    %1941 = vmatprep.subr.bf16.mxu0 0
    %1942 = vmatpush1.bf16.xpose.msra.mxu0 0
    %1943 = vmatprep.subr.bf16.mxu0 0
    %1944 = vmatpush1.bf16.xpose.msra.mxu0 0
    %1945 = vmatprep.subr.bf16.mxu0 0
    %1946 = vmatpush1.bf16.xpose.msra.mxu0 0
    %1947 = vmatprep.subr.bf16.mxu0 0
    %1948 = vmatpush1.bf16.xpose.msra.mxu0 0
    %1949 = vmatprep.subr.bf16.mxu0 0
    %1950 = vmatpush1.bf16.xpose.msra.mxu0 0
    %1951 = vmatprep.mubr.bf16.mxu0 0
    %1952 = vmatmul.mubr.bf16.gmra.mrb[0].mxu0 %v1914
    %v1953 = vpop.f32.mrb[0].mxu0
    %v1954 = vadd.f32 0.0, %v1953
    %v1955 = vpop.f32.mrb[0].mxu0
    %v1956 = vpop.f32.mrb[0].mxu0
    %v1957 = vadd.f32 0.0, %v1956
    %v1958 = vpop.f32.mrb[0].mxu0
    %1959 = vdwg.mxu0
    %v1962 = vunpack.c.l.b16 %v181
    %v1963 = vunpack.c.l.b16 %v182
    %v1964 = vpack.c.b16 %v1963, %v1962
    %v1967 = vunpack.c.l.b16 %v245
    %v1968 = vunpack.c.l.b16 %v246
    %v1969 = vpack.c.b16 %v1968, %v1967
    %v1971 = vsel %vm259, %v1964, 0
    %v1974 = vsel %vm259, %v1969, 0
    %1976 = vmatprep.subr.bf16.mxu0 0
    %1977 = vmatpush1.bf16.xpose.msra.mxu0 %v1974
    %1978 = vmatprep.subr.bf16.mxu0 0
    %1979 = vmatpush1.bf16.xpose.msra.mxu0 0
    %1980 = vmatprep.subr.bf16.mxu0 0
    %1981 = vmatpush1.bf16.xpose.msra.mxu0 0
    %1982 = vmatprep.subr.bf16.mxu0 0
    %1983 = vmatpush1.bf16.xpose.msra.mxu0 0
    %1984 = vmatprep.subr.bf16.mxu0 0
    %1985 = vmatpush1.bf16.xpose.msra.mxu0 0
    %1986 = vmatprep.subr.bf16.mxu0 0
    %1987 = vmatpush1.bf16.xpose.msra.mxu0 0
    %1988 = vmatprep.subr.bf16.mxu0 0
    %1989 = vmatpush1.bf16.xpose.msra.mxu0 0
    %1990 = vmatprep.subr.bf16.mxu0 0
    %1991 = vmatpush1.bf16.xpose.msra.mxu0 0
    %1992 = vmatprep.subr.bf16.mxu0 0
    %1993 = vmatpush1.bf16.xpose.msra.mxu0 0
    %1994 = vmatprep.subr.bf16.mxu0 0
    %1995 = vmatpush1.bf16.xpose.msra.mxu0 0
    %1996 = vmatprep.subr.bf16.mxu0 0
    %1997 = vmatpush1.bf16.xpose.msra.mxu0 0
    %1998 = vmatprep.subr.bf16.mxu0 0
    %1999 = vmatpush1.bf16.xpose.msra.mxu0 0
    %2000 = vmatprep.subr.bf16.mxu0 0
    %2001 = vmatpush1.bf16.xpose.msra.mxu0 0
    %2002 = vmatprep.subr.bf16.mxu0 0
    %2003 = vmatpush1.bf16.xpose.msra.mxu0 0
    %2004 = vmatprep.subr.bf16.mxu0 0
    %2005 = vmatpush1.bf16.xpose.msra.mxu0 0
    %2006 = vmatprep.subr.bf16.mxu0 0
    %2007 = vmatpush1.bf16.xpose.msra.mxu0 0
    %2008 = vmatprep.mubr.bf16.mxu0 0
    %2009 = vmatmul.mubr.bf16.gmra.mrb[0].mxu0 %v1971
    %v2010 = vpop.f32.mrb[0].mxu0
    %v2011 = vadd.f32 0.0, %v2010
    %v2012 = vpop.f32.mrb[0].mxu0
    %v2013 = vpop.f32.mrb[0].mxu0
    %v2014 = vadd.f32 0.0, %v2013
    %v2015 = vpop.f32.mrb[0].mxu0
    %2016 = vdwg.mxu0
    %v2019 = vunpack.c.l.b16 %v183
    %v2020 = vunpack.c.l.b16 %v184
    %v2021 = vpack.c.b16 %v2020, %v2019
    %v2024 = vunpack.c.l.b16 %v247
    %v2025 = vunpack.c.l.b16 %v248
    %v2026 = vpack.c.b16 %v2025, %v2024
    %v2028 = vsel %vm259, %v2021, 0
    %v2031 = vsel %vm259, %v2026, 0
    %2033 = vmatprep.subr.bf16.mxu0 0
    %2034 = vmatpush1.bf16.xpose.msra.mxu0 %v2031
    %2035 = vmatprep.subr.bf16.mxu0 0
    %2036 = vmatpush1.bf16.xpose.msra.mxu0 0
    %2037 = vmatprep.subr.bf16.mxu0 0
    %2038 = vmatpush1.bf16.xpose.msra.mxu0 0
    %2039 = vmatprep.subr.bf16.mxu0 0
    %2040 = vmatpush1.bf16.xpose.msra.mxu0 0
    %2041 = vmatprep.subr.bf16.mxu0 0
    %2042 = vmatpush1.bf16.xpose.msra.mxu0 0
    %2043 = vmatprep.subr.bf16.mxu0 0
    %2044 = vmatpush1.bf16.xpose.msra.mxu0 0
    %2045 = vmatprep.subr.bf16.mxu0 0
    %2046 = vmatpush1.bf16.xpose.msra.mxu0 0
    %2047 = vmatprep.subr.bf16.mxu0 0
    %2048 = vmatpush1.bf16.xpose.msra.mxu0 0
    %2049 = vmatprep.subr.bf16.mxu0 0
    %2050 = vmatpush1.bf16.xpose.msra.mxu0 0
    %2051 = vmatprep.subr.bf16.mxu0 0
    %2052 = vmatpush1.bf16.xpose.msra.mxu0 0
    %2053 = vmatprep.subr.bf16.mxu0 0
    %2054 = vmatpush1.bf16.xpose.msra.mxu0 0
    %2055 = vmatprep.subr.bf16.mxu0 0
    %2056 = vmatpush1.bf16.xpose.msra.mxu0 0
    %2057 = vmatprep.subr.bf16.mxu0 0
    %2058 = vmatpush1.bf16.xpose.msra.mxu0 0
    %2059 = vmatprep.subr.bf16.mxu0 0
    %2060 = vmatpush1.bf16.xpose.msra.mxu0 0
    %2061 = vmatprep.subr.bf16.mxu0 0
    %2062 = vmatpush1.bf16.xpose.msra.mxu0 0
    %2063 = vmatprep.subr.bf16.mxu0 0
    %2064 = vmatpush1.bf16.xpose.msra.mxu0 0
    %2065 = vmatprep.mubr.bf16.mxu0 0
    %2066 = vmatmul.mubr.bf16.gmra.mrb[0].mxu0 %v2028
    %v2067 = vpop.f32.mrb[0].mxu0
    %v2068 = vadd.f32 0.0, %v2067
    %v2069 = vpop.f32.mrb[0].mxu0
    %v2070 = vpop.f32.mrb[0].mxu0
    %v2071 = vadd.f32 0.0, %v2070
    %v2072 = vpop.f32.mrb[0].mxu0
    %2073 = vdwg.mxu0
    %v2074 = vcombine.low %v301, %v415
    %v2075 = vcombine.high %v301, %v415
    %v2077 = vunpack.c.l.s4 1983009808
    %v2078 = vunpack.c.0.s8 %v2077
    %v2079 = vlaneseq
    %v2080 = vshrl.u32 %v2079, 7
    %v2081 = vsub.s32 %v2078, %v2080
    %v2082 = vrot.slane %v2074, %v2081
    %v2084 = vunpack.c.l.s4 1983009808
    %v2085 = vunpack.c.0.s8 %v2084
    %v2086 = vlaneseq
    %v2087 = vshrl.u32 %v2086, 7
    %v2088 = vsub.s32 %v2085, %v2087
    %v2089 = vrot.slane %v2075, %v2088
    %v2090 = vcombine.low %v358, %v472
    %v2091 = vcombine.high %v358, %v472
    %v2093 = vunpack.c.l.s4 1983009808
    %v2094 = vunpack.c.0.s8 %v2093
    %v2095 = vlaneseq
    %v2096 = vshrl.u32 %v2095, 7
    %v2097 = vsub.s32 %v2094, %v2096
    %v2098 = vrot.slane %v2090, %v2097
    %v2100 = vunpack.c.l.s4 1983009808
    %v2101 = vunpack.c.0.s8 %v2100
    %v2102 = vlaneseq
    %v2103 = vshrl.u32 %v2102, 7
    %v2104 = vsub.s32 %v2101, %v2103
    %v2105 = vrot.slane %v2091, %v2104
    %v2106 = vcombine.low %v529, %v643
    %v2107 = vcombine.high %v529, %v643
    %v2109 = vunpack.c.l.s4 1983009808
    %v2110 = vunpack.c.0.s8 %v2109
    %v2111 = vlaneseq
    %v2112 = vshrl.u32 %v2111, 7
    %v2113 = vsub.s32 %v2110, %v2112
    %v2114 = vrot.slane %v2106, %v2113
    %v2116 = vunpack.c.l.s4 1983009808
    %v2117 = vunpack.c.0.s8 %v2116
    %v2118 = vlaneseq
    %v2119 = vshrl.u32 %v2118, 7
    %v2120 = vsub.s32 %v2117, %v2119
    %v2121 = vrot.slane %v2107, %v2120
    %v2122 = vcombine.low %v586, %v700
    %v2123 = vcombine.high %v586, %v700
    %v2125 = vunpack.c.l.s4 1983009808
    %v2126 = vunpack.c.0.s8 %v2125
    %v2127 = vlaneseq
    %v2128 = vshrl.u32 %v2127, 7
    %v2129 = vsub.s32 %v2126, %v2128
    %v2130 = vrot.slane %v2122, %v2129
    %v2132 = vunpack.c.l.s4 1983009808
    %v2133 = vunpack.c.0.s8 %v2132
    %v2134 = vlaneseq
    %v2135 = vshrl.u32 %v2134, 7
    %v2136 = vsub.s32 %v2133, %v2135
    %v2137 = vrot.slane %v2123, %v2136
    %v2138 = vcombine.low %v2082, %v2098
    %v2139 = vcombine.high %v2082, %v2098
    %v2141 = vunpack.c.l.s4 1934713408
    %v2142 = vunpack.c.0.s8 %v2141
    %v2143 = vlaneseq
    %v2144 = vshrl.u32 %v2143, 7
    %v2145 = vsub.s32 %v2142, %v2144
    %v2146 = vrot.slane %v2138, %v2145
    %v2148 = vunpack.c.l.s4 1934713408
    %v2149 = vunpack.c.0.s8 %v2148
    %v2150 = vlaneseq
    %v2151 = vshrl.u32 %v2150, 7
    %v2152 = vsub.s32 %v2149, %v2151
    %v2153 = vrot.slane %v2139, %v2152
    %v2154 = vcombine.low %v2089, %v2105
    %v2155 = vcombine.high %v2089, %v2105
    %v2157 = vunpack.c.l.s4 1934713408
    %v2158 = vunpack.c.0.s8 %v2157
    %v2159 = vlaneseq
    %v2160 = vshrl.u32 %v2159, 7
    %v2161 = vsub.s32 %v2158, %v2160
    %v2162 = vrot.slane %v2154, %v2161
    %v2164 = vunpack.c.l.s4 1934713408
    %v2165 = vunpack.c.0.s8 %v2164
    %v2166 = vlaneseq
    %v2167 = vshrl.u32 %v2166, 7
    %v2168 = vsub.s32 %v2165, %v2167
    %v2169 = vrot.slane %v2155, %v2168
    %v2170 = vcombine.low %v2114, %v2130
    %v2171 = vcombine.high %v2114, %v2130
    %v2173 = vunpack.c.l.s4 1934713408
    %v2174 = vunpack.c.0.s8 %v2173
    %v2175 = vlaneseq
    %v2176 = vshrl.u32 %v2175, 7
    %v2177 = vsub.s32 %v2174, %v2176
    %v2178 = vrot.slane %v2170, %v2177
    %v2180 = vunpack.c.l.s4 1934713408
    %v2181 = vunpack.c.0.s8 %v2180
    %v2182 = vlaneseq
    %v2183 = vshrl.u32 %v2182, 7
    %v2184 = vsub.s32 %v2181, %v2183
    %v2185 = vrot.slane %v2171, %v2184
    %v2186 = vcombine.low %v2121, %v2137
    %v2187 = vcombine.high %v2121, %v2137
    %v2189 = vunpack.c.l.s4 1934713408
    %v2190 = vunpack.c.0.s8 %v2189
    %v2191 = vlaneseq
    %v2192 = vshrl.u32 %v2191, 7
    %v2193 = vsub.s32 %v2190, %v2192
    %v2194 = vrot.slane %v2186, %v2193
    %v2196 = vunpack.c.l.s4 1934713408
    %v2197 = vunpack.c.0.s8 %v2196
    %v2198 = vlaneseq
    %v2199 = vshrl.u32 %v2198, 7
    %v2200 = vsub.s32 %v2197, %v2199
    %v2201 = vrot.slane %v2187, %v2200
    %v2202 = vcombine.low %v2146, %v2178
    %v2203 = vcombine.high %v2146, %v2178
    %v2204 = vcombine.low %v2153, %v2185
    %v2205 = vcombine.high %v2153, %v2185
    %v2206 = vcombine.low %v2162, %v2194
    %v2207 = vcombine.high %v2162, %v2194
    %v2208 = vcombine.low %v2169, %v2201
    %v2209 = vcombine.high %v2169, %v2201
    %v2210 = vcombine.low %v757, %v871
    %v2211 = vcombine.high %v757, %v871
    %v2213 = vunpack.c.l.s4 1983009808
    %v2214 = vunpack.c.0.s8 %v2213
    %v2215 = vlaneseq
    %v2216 = vshrl.u32 %v2215, 7
    %v2217 = vsub.s32 %v2214, %v2216
    %v2218 = vrot.slane %v2210, %v2217
    %v2220 = vunpack.c.l.s4 1983009808
    %v2221 = vunpack.c.0.s8 %v2220
    %v2222 = vlaneseq
    %v2223 = vshrl.u32 %v2222, 7
    %v2224 = vsub.s32 %v2221, %v2223
    %v2225 = vrot.slane %v2211, %v2224
    %v2226 = vcombine.low %v814, %v928
    %v2227 = vcombine.high %v814, %v928
    %v2229 = vunpack.c.l.s4 1983009808
    %v2230 = vunpack.c.0.s8 %v2229
    %v2231 = vlaneseq
    %v2232 = vshrl.u32 %v2231, 7
    %v2233 = vsub.s32 %v2230, %v2232
    %v2234 = vrot.slane %v2226, %v2233
    %v2236 = vunpack.c.l.s4 1983009808
    %v2237 = vunpack.c.0.s8 %v2236
    %v2238 = vlaneseq
    %v2239 = vshrl.u32 %v2238, 7
    %v2240 = vsub.s32 %v2237, %v2239
    %v2241 = vrot.slane %v2227, %v2240
    %v2242 = vcombine.low %v985, %v1099
    %v2243 = vcombine.high %v985, %v1099
    %v2245 = vunpack.c.l.s4 1983009808
    %v2246 = vunpack.c.0.s8 %v2245
    %v2247 = vlaneseq
    %v2248 = vshrl.u32 %v2247, 7
    %v2249 = vsub.s32 %v2246, %v2248
    %v2250 = vrot.slane %v2242, %v2249
    %v2252 = vunpack.c.l.s4 1983009808
    %v2253 = vunpack.c.0.s8 %v2252
    %v2254 = vlaneseq
    %v2255 = vshrl.u32 %v2254, 7
    %v2256 = vsub.s32 %v2253, %v2255
    %v2257 = vrot.slane %v2243, %v2256
    %v2258 = vcombine.low %v1042, %v1156
    %v2259 = vcombine.high %v1042, %v1156
    %v2261 = vunpack.c.l.s4 1983009808
    %v2262 = vunpack.c.0.s8 %v2261
    %v2263 = vlaneseq
    %v2264 = vshrl.u32 %v2263, 7
    %v2265 = vsub.s32 %v2262, %v2264
    %v2266 = vrot.slane %v2258, %v2265
    %v2268 = vunpack.c.l.s4 1983009808
    %v2269 = vunpack.c.0.s8 %v2268
    %v2270 = vlaneseq
    %v2271 = vshrl.u32 %v2270, 7
    %v2272 = vsub.s32 %v2269, %v2271
    %v2273 = vrot.slane %v2259, %v2272
    %v2274 = vcombine.low %v2218, %v2234
    %v2275 = vcombine.high %v2218, %v2234
    %v2277 = vunpack.c.l.s4 1934713408
    %v2278 = vunpack.c.0.s8 %v2277
    %v2279 = vlaneseq
    %v2280 = vshrl.u32 %v2279, 7
    %v2281 = vsub.s32 %v2278, %v2280
    %v2282 = vrot.slane %v2274, %v2281
    %v2284 = vunpack.c.l.s4 1934713408
    %v2285 = vunpack.c.0.s8 %v2284
    %v2286 = vlaneseq
    %v2287 = vshrl.u32 %v2286, 7
    %v2288 = vsub.s32 %v2285, %v2287
    %v2289 = vrot.slane %v2275, %v2288
    %v2290 = vcombine.low %v2225, %v2241
    %v2291 = vcombine.high %v2225, %v2241
    %v2293 = vunpack.c.l.s4 1934713408
    %v2294 = vunpack.c.0.s8 %v2293
    %v2295 = vlaneseq
    %v2296 = vshrl.u32 %v2295, 7
    %v2297 = vsub.s32 %v2294, %v2296
    %v2298 = vrot.slane %v2290, %v2297
    %v2300 = vunpack.c.l.s4 1934713408
    %v2301 = vunpack.c.0.s8 %v2300
    %v2302 = vlaneseq
    %v2303 = vshrl.u32 %v2302, 7
    %v2304 = vsub.s32 %v2301, %v2303
    %v2305 = vrot.slane %v2291, %v2304
    %v2306 = vcombine.low %v2250, %v2266
    %v2307 = vcombine.high %v2250, %v2266
    %v2309 = vunpack.c.l.s4 1934713408
    %v2310 = vunpack.c.0.s8 %v2309
    %v2311 = vlaneseq
    %v2312 = vshrl.u32 %v2311, 7
    %v2313 = vsub.s32 %v2310, %v2312
    %v2314 = vrot.slane %v2306, %v2313
    %v2316 = vunpack.c.l.s4 1934713408
    %v2317 = vunpack.c.0.s8 %v2316
    %v2318 = vlaneseq
    %v2319 = vshrl.u32 %v2318, 7
    %v2320 = vsub.s32 %v2317, %v2319
    %v2321 = vrot.slane %v2307, %v2320
    %v2322 = vcombine.low %v2257, %v2273
    %v2323 = vcombine.high %v2257, %v2273
    %v2325 = vunpack.c.l.s4 1934713408
    %v2326 = vunpack.c.0.s8 %v2325
    %v2327 = vlaneseq
    %v2328 = vshrl.u32 %v2327, 7
    %v2329 = vsub.s32 %v2326, %v2328
    %v2330 = vrot.slane %v2322, %v2329
    %v2332 = vunpack.c.l.s4 1934713408
    %v2333 = vunpack.c.0.s8 %v2332
    %v2334 = vlaneseq
    %v2335 = vshrl.u32 %v2334, 7
    %v2336 = vsub.s32 %v2333, %v2335
    %v2337 = vrot.slane %v2323, %v2336
    %v2338 = vcombine.low %v2282, %v2314
    %v2339 = vcombine.high %v2282, %v2314
    %v2340 = vcombine.low %v2289, %v2321
    %v2341 = vcombine.high %v2289, %v2321
    %v2342 = vcombine.low %v2298, %v2330
    %v2343 = vcombine.high %v2298, %v2330
    %v2344 = vcombine.low %v2305, %v2337
    %v2345 = vcombine.high %v2305, %v2337
    %v2346 = vcombine.low %v1213, %v1327
    %v2347 = vcombine.high %v1213, %v1327
    %v2349 = vunpack.c.l.s4 1983009808
    %v2350 = vunpack.c.0.s8 %v2349
    %v2351 = vlaneseq
    %v2352 = vshrl.u32 %v2351, 7
    %v2353 = vsub.s32 %v2350, %v2352
    %v2354 = vrot.slane %v2346, %v2353
    %v2356 = vunpack.c.l.s4 1983009808
    %v2357 = vunpack.c.0.s8 %v2356
    %v2358 = vlaneseq
    %v2359 = vshrl.u32 %v2358, 7
    %v2360 = vsub.s32 %v2357, %v2359
    %v2361 = vrot.slane %v2347, %v2360
    %v2362 = vcombine.low %v1270, %v1384
    %v2363 = vcombine.high %v1270, %v1384
    %v2365 = vunpack.c.l.s4 1983009808
    %v2366 = vunpack.c.0.s8 %v2365
    %v2367 = vlaneseq
    %v2368 = vshrl.u32 %v2367, 7
    %v2369 = vsub.s32 %v2366, %v2368
    %v2370 = vrot.slane %v2362, %v2369
    %v2372 = vunpack.c.l.s4 1983009808
    %v2373 = vunpack.c.0.s8 %v2372
    %v2374 = vlaneseq
    %v2375 = vshrl.u32 %v2374, 7
    %v2376 = vsub.s32 %v2373, %v2375
    %v2377 = vrot.slane %v2363, %v2376
    %v2378 = vcombine.low %v1441, %v1555
    %v2379 = vcombine.high %v1441, %v1555
    %v2381 = vunpack.c.l.s4 1983009808
    %v2382 = vunpack.c.0.s8 %v2381
    %v2383 = vlaneseq
    %v2384 = vshrl.u32 %v2383, 7
    %v2385 = vsub.s32 %v2382, %v2384
    %v2386 = vrot.slane %v2378, %v2385
    %v2388 = vunpack.c.l.s4 1983009808
    %v2389 = vunpack.c.0.s8 %v2388
    %v2390 = vlaneseq
    %v2391 = vshrl.u32 %v2390, 7
    %v2392 = vsub.s32 %v2389, %v2391
    %v2393 = vrot.slane %v2379, %v2392
    %v2394 = vcombine.low %v1498, %v1612
    %v2395 = vcombine.high %v1498, %v1612
    %v2397 = vunpack.c.l.s4 1983009808
    %v2398 = vunpack.c.0.s8 %v2397
    %v2399 = vlaneseq
    %v2400 = vshrl.u32 %v2399, 7
    %v2401 = vsub.s32 %v2398, %v2400
    %v2402 = vrot.slane %v2394, %v2401
    %v2404 = vunpack.c.l.s4 1983009808
    %v2405 = vunpack.c.0.s8 %v2404
    %v2406 = vlaneseq
    %v2407 = vshrl.u32 %v2406, 7
    %v2408 = vsub.s32 %v2405, %v2407
    %v2409 = vrot.slane %v2395, %v2408
    %v2410 = vcombine.low %v2354, %v2370
    %v2411 = vcombine.high %v2354, %v2370
    %v2413 = vunpack.c.l.s4 1934713408
    %v2414 = vunpack.c.0.s8 %v2413
    %v2415 = vlaneseq
    %v2416 = vshrl.u32 %v2415, 7
    %v2417 = vsub.s32 %v2414, %v2416
    %v2418 = vrot.slane %v2410, %v2417
    %v2420 = vunpack.c.l.s4 1934713408
    %v2421 = vunpack.c.0.s8 %v2420
    %v2422 = vlaneseq
    %v2423 = vshrl.u32 %v2422, 7
    %v2424 = vsub.s32 %v2421, %v2423
    %v2425 = vrot.slane %v2411, %v2424
    %v2426 = vcombine.low %v2361, %v2377
    %v2427 = vcombine.high %v2361, %v2377
    %v2429 = vunpack.c.l.s4 1934713408
    %v2430 = vunpack.c.0.s8 %v2429
    %v2431 = vlaneseq
    %v2432 = vshrl.u32 %v2431, 7
    %v2433 = vsub.s32 %v2430, %v2432
    %v2434 = vrot.slane %v2426, %v2433
    %v2436 = vunpack.c.l.s4 1934713408
    %v2437 = vunpack.c.0.s8 %v2436
    %v2438 = vlaneseq
    %v2439 = vshrl.u32 %v2438, 7
    %v2440 = vsub.s32 %v2437, %v2439
    %v2441 = vrot.slane %v2427, %v2440
    %v2442 = vcombine.low %v2386, %v2402
    %v2443 = vcombine.high %v2386, %v2402
    %v2445 = vunpack.c.l.s4 1934713408
    %v2446 = vunpack.c.0.s8 %v2445
    %v2447 = vlaneseq
    %v2448 = vshrl.u32 %v2447, 7
    %v2449 = vsub.s32 %v2446, %v2448
    %v2450 = vrot.slane %v2442, %v2449
    %v2452 = vunpack.c.l.s4 1934713408
    %v2453 = vunpack.c.0.s8 %v2452
    %v2454 = vlaneseq
    %v2455 = vshrl.u32 %v2454, 7
    %v2456 = vsub.s32 %v2453, %v2455
    %v2457 = vrot.slane %v2443, %v2456
    %v2458 = vcombine.low %v2393, %v2409
    %v2459 = vcombine.high %v2393, %v2409
    %v2461 = vunpack.c.l.s4 1934713408
    %v2462 = vunpack.c.0.s8 %v2461
    %v2463 = vlaneseq
    %v2464 = vshrl.u32 %v2463, 7
    %v2465 = vsub.s32 %v2462, %v2464
    %v2466 = vrot.slane %v2458, %v2465
    %v2468 = vunpack.c.l.s4 1934713408
    %v2469 = vunpack.c.0.s8 %v2468
    %v2470 = vlaneseq
    %v2471 = vshrl.u32 %v2470, 7
    %v2472 = vsub.s32 %v2469, %v2471
    %v2473 = vrot.slane %v2459, %v2472
    %v2474 = vcombine.low %v2418, %v2450
    %v2475 = vcombine.high %v2418, %v2450
    %v2476 = vcombine.low %v2425, %v2457
    %v2477 = vcombine.high %v2425, %v2457
    %v2478 = vcombine.low %v2434, %v2466
    %v2479 = vcombine.high %v2434, %v2466
    %v2480 = vcombine.low %v2441, %v2473
    %v2481 = vcombine.high %v2441, %v2473
    %v2482 = vcombine.low %v1669, %v1783
    %v2483 = vcombine.high %v1669, %v1783
    %v2485 = vunpack.c.l.s4 1983009808
    %v2486 = vunpack.c.0.s8 %v2485
    %v2487 = vlaneseq
    %v2488 = vshrl.u32 %v2487, 7
    %v2489 = vsub.s32 %v2486, %v2488
    %v2490 = vrot.slane %v2482, %v2489
    %v2492 = vunpack.c.l.s4 1983009808
    %v2493 = vunpack.c.0.s8 %v2492
    %v2494 = vlaneseq
    %v2495 = vshrl.u32 %v2494, 7
    %v2496 = vsub.s32 %v2493, %v2495
    %v2497 = vrot.slane %v2483, %v2496
    %v2498 = vcombine.low %v1726, %v1840
    %v2499 = vcombine.high %v1726, %v1840
    %v2501 = vunpack.c.l.s4 1983009808
    %v2502 = vunpack.c.0.s8 %v2501
    %v2503 = vlaneseq
    %v2504 = vshrl.u32 %v2503, 7
    %v2505 = vsub.s32 %v2502, %v2504
    %v2506 = vrot.slane %v2498, %v2505
    %v2508 = vunpack.c.l.s4 1983009808
    %v2509 = vunpack.c.0.s8 %v2508
    %v2510 = vlaneseq
    %v2511 = vshrl.u32 %v2510, 7
    %v2512 = vsub.s32 %v2509, %v2511
    %v2513 = vrot.slane %v2499, %v2512
    %v2514 = vcombine.low %v1897, %v2011
    %v2515 = vcombine.high %v1897, %v2011
    %v2517 = vunpack.c.l.s4 1983009808
    %v2518 = vunpack.c.0.s8 %v2517
    %v2519 = vlaneseq
    %v2520 = vshrl.u32 %v2519, 7
    %v2521 = vsub.s32 %v2518, %v2520
    %v2522 = vrot.slane %v2514, %v2521
    %v2524 = vunpack.c.l.s4 1983009808
    %v2525 = vunpack.c.0.s8 %v2524
    %v2526 = vlaneseq
    %v2527 = vshrl.u32 %v2526, 7
    %v2528 = vsub.s32 %v2525, %v2527
    %v2529 = vrot.slane %v2515, %v2528
    %v2530 = vcombine.low %v1954, %v2068
    %v2531 = vcombine.high %v1954, %v2068
    %v2533 = vunpack.c.l.s4 1983009808
    %v2534 = vunpack.c.0.s8 %v2533
    %v2535 = vlaneseq
    %v2536 = vshrl.u32 %v2535, 7
    %v2537 = vsub.s32 %v2534, %v2536
    %v2538 = vrot.slane %v2530, %v2537
    %v2540 = vunpack.c.l.s4 1983009808
    %v2541 = vunpack.c.0.s8 %v2540
    %v2542 = vlaneseq
    %v2543 = vshrl.u32 %v2542, 7
    %v2544 = vsub.s32 %v2541, %v2543
    %v2545 = vrot.slane %v2531, %v2544
    %v2546 = vcombine.low %v2490, %v2506
    %v2547 = vcombine.high %v2490, %v2506
    %v2549 = vunpack.c.l.s4 1934713408
    %v2550 = vunpack.c.0.s8 %v2549
    %v2551 = vlaneseq
    %v2552 = vshrl.u32 %v2551, 7
    %v2553 = vsub.s32 %v2550, %v2552
    %v2554 = vrot.slane %v2546, %v2553
    %v2556 = vunpack.c.l.s4 1934713408
    %v2557 = vunpack.c.0.s8 %v2556
    %v2558 = vlaneseq
    %v2559 = vshrl.u32 %v2558, 7
    %v2560 = vsub.s32 %v2557, %v2559
    %v2561 = vrot.slane %v2547, %v2560
    %v2562 = vcombine.low %v2497, %v2513
    %v2563 = vcombine.high %v2497, %v2513
    %v2565 = vunpack.c.l.s4 1934713408
    %v2566 = vunpack.c.0.s8 %v2565
    %v2567 = vlaneseq
    %v2568 = vshrl.u32 %v2567, 7
    %v2569 = vsub.s32 %v2566, %v2568
    %v2570 = vrot.slane %v2562, %v2569
    %v2572 = vunpack.c.l.s4 1934713408
    %v2573 = vunpack.c.0.s8 %v2572
    %v2574 = vlaneseq
    %v2575 = vshrl.u32 %v2574, 7
    %v2576 = vsub.s32 %v2573, %v2575
    %v2577 = vrot.slane %v2563, %v2576
    %v2578 = vcombine.low %v2522, %v2538
    %v2579 = vcombine.high %v2522, %v2538
    %v2581 = vunpack.c.l.s4 1934713408
    %v2582 = vunpack.c.0.s8 %v2581
    %v2583 = vlaneseq
    %v2584 = vshrl.u32 %v2583, 7
    %v2585 = vsub.s32 %v2582, %v2584
    %v2586 = vrot.slane %v2578, %v2585
    %v2588 = vunpack.c.l.s4 1934713408
    %v2589 = vunpack.c.0.s8 %v2588
    %v2590 = vlaneseq
    %v2591 = vshrl.u32 %v2590, 7
    %v2592 = vsub.s32 %v2589, %v2591
    %v2593 = vrot.slane %v2579, %v2592
    %v2594 = vcombine.low %v2529, %v2545
    %v2595 = vcombine.high %v2529, %v2545
    %v2597 = vunpack.c.l.s4 1934713408
    %v2598 = vunpack.c.0.s8 %v2597
    %v2599 = vlaneseq
    %v2600 = vshrl.u32 %v2599, 7
    %v2601 = vsub.s32 %v2598, %v2600
    %v2602 = vrot.slane %v2594, %v2601
    %v2604 = vunpack.c.l.s4 1934713408
    %v2605 = vunpack.c.0.s8 %v2604
    %v2606 = vlaneseq
    %v2607 = vshrl.u32 %v2606, 7
    %v2608 = vsub.s32 %v2605, %v2607
    %v2609 = vrot.slane %v2595, %v2608
    %v2610 = vcombine.low %v2554, %v2586
    %v2611 = vcombine.high %v2554, %v2586
    %v2612 = vcombine.low %v2561, %v2593
    %v2613 = vcombine.high %v2561, %v2593
    %v2614 = vcombine.low %v2570, %v2602
    %v2615 = vcombine.high %v2570, %v2602
    %v2616 = vcombine.low %v2577, %v2609
    %v2617 = vcombine.high %v2577, %v2609
    %v2618 = vcombine.low %v304, %v418
    %v2619 = vcombine.high %v304, %v418
    %v2621 = vunpack.c.l.s4 1983009808
    %v2622 = vunpack.c.0.s8 %v2621
    %v2623 = vlaneseq
    %v2624 = vshrl.u32 %v2623, 7
    %v2625 = vsub.s32 %v2622, %v2624
    %v2626 = vrot.slane %v2618, %v2625
    %v2628 = vunpack.c.l.s4 1983009808
    %v2629 = vunpack.c.0.s8 %v2628
    %v2630 = vlaneseq
    %v2631 = vshrl.u32 %v2630, 7
    %v2632 = vsub.s32 %v2629, %v2631
    %v2633 = vrot.slane %v2619, %v2632
    %v2634 = vcombine.low %v361, %v475
    %v2635 = vcombine.high %v361, %v475
    %v2637 = vunpack.c.l.s4 1983009808
    %v2638 = vunpack.c.0.s8 %v2637
    %v2639 = vlaneseq
    %v2640 = vshrl.u32 %v2639, 7
    %v2641 = vsub.s32 %v2638, %v2640
    %v2642 = vrot.slane %v2634, %v2641
    %v2644 = vunpack.c.l.s4 1983009808
    %v2645 = vunpack.c.0.s8 %v2644
    %v2646 = vlaneseq
    %v2647 = vshrl.u32 %v2646, 7
    %v2648 = vsub.s32 %v2645, %v2647
    %v2649 = vrot.slane %v2635, %v2648
    %v2650 = vcombine.low %v532, %v646
    %v2651 = vcombine.high %v532, %v646
    %v2653 = vunpack.c.l.s4 1983009808
    %v2654 = vunpack.c.0.s8 %v2653
    %v2655 = vlaneseq
    %v2656 = vshrl.u32 %v2655, 7
    %v2657 = vsub.s32 %v2654, %v2656
    %v2658 = vrot.slane %v2650, %v2657
    %v2660 = vunpack.c.l.s4 1983009808
    %v2661 = vunpack.c.0.s8 %v2660
    %v2662 = vlaneseq
    %v2663 = vshrl.u32 %v2662, 7
    %v2664 = vsub.s32 %v2661, %v2663
    %v2665 = vrot.slane %v2651, %v2664
    %v2666 = vcombine.low %v589, %v703
    %v2667 = vcombine.high %v589, %v703
    %v2669 = vunpack.c.l.s4 1983009808
    %v2670 = vunpack.c.0.s8 %v2669
    %v2671 = vlaneseq
    %v2672 = vshrl.u32 %v2671, 7
    %v2673 = vsub.s32 %v2670, %v2672
    %v2674 = vrot.slane %v2666, %v2673
    %v2676 = vunpack.c.l.s4 1983009808
    %v2677 = vunpack.c.0.s8 %v2676
    %v2678 = vlaneseq
    %v2679 = vshrl.u32 %v2678, 7
    %v2680 = vsub.s32 %v2677, %v2679
    %v2681 = vrot.slane %v2667, %v2680
    %v2682 = vcombine.low %v2626, %v2642
    %v2683 = vcombine.high %v2626, %v2642
    %v2685 = vunpack.c.l.s4 1934713408
    %v2686 = vunpack.c.0.s8 %v2685
    %v2687 = vlaneseq
    %v2688 = vshrl.u32 %v2687, 7
    %v2689 = vsub.s32 %v2686, %v2688
    %v2690 = vrot.slane %v2682, %v2689
    %v2692 = vunpack.c.l.s4 1934713408
    %v2693 = vunpack.c.0.s8 %v2692
    %v2694 = vlaneseq
    %v2695 = vshrl.u32 %v2694, 7
    %v2696 = vsub.s32 %v2693, %v2695
    %v2697 = vrot.slane %v2683, %v2696
    %v2698 = vcombine.low %v2633, %v2649
    %v2699 = vcombine.high %v2633, %v2649
    %v2701 = vunpack.c.l.s4 1934713408
    %v2702 = vunpack.c.0.s8 %v2701
    %v2703 = vlaneseq
    %v2704 = vshrl.u32 %v2703, 7
    %v2705 = vsub.s32 %v2702, %v2704
    %v2706 = vrot.slane %v2698, %v2705
    %v2708 = vunpack.c.l.s4 1934713408
    %v2709 = vunpack.c.0.s8 %v2708
    %v2710 = vlaneseq
    %v2711 = vshrl.u32 %v2710, 7
    %v2712 = vsub.s32 %v2709, %v2711
    %v2713 = vrot.slane %v2699, %v2712
    %v2714 = vcombine.low %v2658, %v2674
    %v2715 = vcombine.high %v2658, %v2674
    %v2717 = vunpack.c.l.s4 1934713408
    %v2718 = vunpack.c.0.s8 %v2717
    %v2719 = vlaneseq
    %v2720 = vshrl.u32 %v2719, 7
    %v2721 = vsub.s32 %v2718, %v2720
    %v2722 = vrot.slane %v2714, %v2721
    %v2724 = vunpack.c.l.s4 1934713408
    %v2725 = vunpack.c.0.s8 %v2724
    %v2726 = vlaneseq
    %v2727 = vshrl.u32 %v2726, 7
    %v2728 = vsub.s32 %v2725, %v2727
    %v2729 = vrot.slane %v2715, %v2728
    %v2730 = vcombine.low %v2665, %v2681
    %v2731 = vcombine.high %v2665, %v2681
    %v2733 = vunpack.c.l.s4 1934713408
    %v2734 = vunpack.c.0.s8 %v2733
    %v2735 = vlaneseq
    %v2736 = vshrl.u32 %v2735, 7
    %v2737 = vsub.s32 %v2734, %v2736
    %v2738 = vrot.slane %v2730, %v2737
    %v2740 = vunpack.c.l.s4 1934713408
    %v2741 = vunpack.c.0.s8 %v2740
    %v2742 = vlaneseq
    %v2743 = vshrl.u32 %v2742, 7
    %v2744 = vsub.s32 %v2741, %v2743
    %v2745 = vrot.slane %v2731, %v2744
    %v2746 = vcombine.low %v2690, %v2722
    %v2747 = vcombine.high %v2690, %v2722
    %v2748 = vcombine.low %v2697, %v2729
    %v2749 = vcombine.high %v2697, %v2729
    %v2750 = vcombine.low %v2706, %v2738
    %v2751 = vcombine.high %v2706, %v2738
    %v2752 = vcombine.low %v2713, %v2745
    %v2753 = vcombine.high %v2713, %v2745
    %v2754 = vcombine.low %v760, %v874
    %v2755 = vcombine.high %v760, %v874
    %v2757 = vunpack.c.l.s4 1983009808
    %v2758 = vunpack.c.0.s8 %v2757
    %v2759 = vlaneseq
    %v2760 = vshrl.u32 %v2759, 7
    %v2761 = vsub.s32 %v2758, %v2760
    %v2762 = vrot.slane %v2754, %v2761
    %v2764 = vunpack.c.l.s4 1983009808
    %v2765 = vunpack.c.0.s8 %v2764
    %v2766 = vlaneseq
    %v2767 = vshrl.u32 %v2766, 7
    %v2768 = vsub.s32 %v2765, %v2767
    %v2769 = vrot.slane %v2755, %v2768
    %v2770 = vcombine.low %v817, %v931
    %v2771 = vcombine.high %v817, %v931
    %v2773 = vunpack.c.l.s4 1983009808
    %v2774 = vunpack.c.0.s8 %v2773
    %v2775 = vlaneseq
    %v2776 = vshrl.u32 %v2775, 7
    %v2777 = vsub.s32 %v2774, %v2776
    %v2778 = vrot.slane %v2770, %v2777
    %v2780 = vunpack.c.l.s4 1983009808
    %v2781 = vunpack.c.0.s8 %v2780
    %v2782 = vlaneseq
    %v2783 = vshrl.u32 %v2782, 7
    %v2784 = vsub.s32 %v2781, %v2783
    %v2785 = vrot.slane %v2771, %v2784
    %v2786 = vcombine.low %v988, %v1102
    %v2787 = vcombine.high %v988, %v1102
    %v2789 = vunpack.c.l.s4 1983009808
    %v2790 = vunpack.c.0.s8 %v2789
    %v2791 = vlaneseq
    %v2792 = vshrl.u32 %v2791, 7
    %v2793 = vsub.s32 %v2790, %v2792
    %v2794 = vrot.slane %v2786, %v2793
    %v2796 = vunpack.c.l.s4 1983009808
    %v2797 = vunpack.c.0.s8 %v2796
    %v2798 = vlaneseq
    %v2799 = vshrl.u32 %v2798, 7
    %v2800 = vsub.s32 %v2797, %v2799
    %v2801 = vrot.slane %v2787, %v2800
    %v2802 = vcombine.low %v1045, %v1159
    %v2803 = vcombine.high %v1045, %v1159
    %v2805 = vunpack.c.l.s4 1983009808
    %v2806 = vunpack.c.0.s8 %v2805
    %v2807 = vlaneseq
    %v2808 = vshrl.u32 %v2807, 7
    %v2809 = vsub.s32 %v2806, %v2808
    %v2810 = vrot.slane %v2802, %v2809
    %v2812 = vunpack.c.l.s4 1983009808
    %v2813 = vunpack.c.0.s8 %v2812
    %v2814 = vlaneseq
    %v2815 = vshrl.u32 %v2814, 7
    %v2816 = vsub.s32 %v2813, %v2815
    %v2817 = vrot.slane %v2803, %v2816
    %v2818 = vcombine.low %v2762, %v2778
    %v2819 = vcombine.high %v2762, %v2778
    %v2821 = vunpack.c.l.s4 1934713408
    %v2822 = vunpack.c.0.s8 %v2821
    %v2823 = vlaneseq
    %v2824 = vshrl.u32 %v2823, 7
    %v2825 = vsub.s32 %v2822, %v2824
    %v2826 = vrot.slane %v2818, %v2825
    %v2828 = vunpack.c.l.s4 1934713408
    %v2829 = vunpack.c.0.s8 %v2828
    %v2830 = vlaneseq
    %v2831 = vshrl.u32 %v2830, 7
    %v2832 = vsub.s32 %v2829, %v2831
    %v2833 = vrot.slane %v2819, %v2832
    %v2834 = vcombine.low %v2769, %v2785
    %v2835 = vcombine.high %v2769, %v2785
    %v2837 = vunpack.c.l.s4 1934713408
    %v2838 = vunpack.c.0.s8 %v2837
    %v2839 = vlaneseq
    %v2840 = vshrl.u32 %v2839, 7
    %v2841 = vsub.s32 %v2838, %v2840
    %v2842 = vrot.slane %v2834, %v2841
    %v2844 = vunpack.c.l.s4 1934713408
    %v2845 = vunpack.c.0.s8 %v2844
    %v2846 = vlaneseq
    %v2847 = vshrl.u32 %v2846, 7
    %v2848 = vsub.s32 %v2845, %v2847
    %v2849 = vrot.slane %v2835, %v2848
    %v2850 = vcombine.low %v2794, %v2810
    %v2851 = vcombine.high %v2794, %v2810
    %v2853 = vunpack.c.l.s4 1934713408
    %v2854 = vunpack.c.0.s8 %v2853
    %v2855 = vlaneseq
    %v2856 = vshrl.u32 %v2855, 7
    %v2857 = vsub.s32 %v2854, %v2856
    %v2858 = vrot.slane %v2850, %v2857
    %v2860 = vunpack.c.l.s4 1934713408
    %v2861 = vunpack.c.0.s8 %v2860
    %v2862 = vlaneseq
    %v2863 = vshrl.u32 %v2862, 7
    %v2864 = vsub.s32 %v2861, %v2863
    %v2865 = vrot.slane %v2851, %v2864
    %v2866 = vcombine.low %v2801, %v2817
    %v2867 = vcombine.high %v2801, %v2817
    %v2869 = vunpack.c.l.s4 1934713408
    %v2870 = vunpack.c.0.s8 %v2869
    %v2871 = vlaneseq
    %v2872 = vshrl.u32 %v2871, 7
    %v2873 = vsub.s32 %v2870, %v2872
    %v2874 = vrot.slane %v2866, %v2873
    %v2876 = vunpack.c.l.s4 1934713408
    %v2877 = vunpack.c.0.s8 %v2876
    %v2878 = vlaneseq
    %v2879 = vshrl.u32 %v2878, 7
    %v2880 = vsub.s32 %v2877, %v2879
    %v2881 = vrot.slane %v2867, %v2880
    %v2882 = vcombine.low %v2826, %v2858
    %v2883 = vcombine.high %v2826, %v2858
    %v2884 = vcombine.low %v2833, %v2865
    %v2885 = vcombine.high %v2833, %v2865
    %v2886 = vcombine.low %v2842, %v2874
    %v2887 = vcombine.high %v2842, %v2874
    %v2888 = vcombine.low %v2849, %v2881
    %v2889 = vcombine.high %v2849, %v2881
    %v2890 = vcombine.low %v1216, %v1330
    %v2891 = vcombine.high %v1216, %v1330
    %v2893 = vunpack.c.l.s4 1983009808
    %v2894 = vunpack.c.0.s8 %v2893
    %v2895 = vlaneseq
    %v2896 = vshrl.u32 %v2895, 7
    %v2897 = vsub.s32 %v2894, %v2896
    %v2898 = vrot.slane %v2890, %v2897
    %v2900 = vunpack.c.l.s4 1983009808
    %v2901 = vunpack.c.0.s8 %v2900
    %v2902 = vlaneseq
    %v2903 = vshrl.u32 %v2902, 7
    %v2904 = vsub.s32 %v2901, %v2903
    %v2905 = vrot.slane %v2891, %v2904
    %v2906 = vcombine.low %v1273, %v1387
    %v2907 = vcombine.high %v1273, %v1387
    %v2909 = vunpack.c.l.s4 1983009808
    %v2910 = vunpack.c.0.s8 %v2909
    %v2911 = vlaneseq
    %v2912 = vshrl.u32 %v2911, 7
    %v2913 = vsub.s32 %v2910, %v2912
    %v2914 = vrot.slane %v2906, %v2913
    %v2916 = vunpack.c.l.s4 1983009808
    %v2917 = vunpack.c.0.s8 %v2916
    %v2918 = vlaneseq
    %v2919 = vshrl.u32 %v2918, 7
    %v2920 = vsub.s32 %v2917, %v2919
    %v2921 = vrot.slane %v2907, %v2920
    %v2922 = vcombine.low %v1444, %v1558
    %v2923 = vcombine.high %v1444, %v1558
    %v2925 = vunpack.c.l.s4 1983009808
    %v2926 = vunpack.c.0.s8 %v2925
    %v2927 = vlaneseq
    %v2928 = vshrl.u32 %v2927, 7
    %v2929 = vsub.s32 %v2926, %v2928
    %v2930 = vrot.slane %v2922, %v2929
    %v2932 = vunpack.c.l.s4 1983009808
    %v2933 = vunpack.c.0.s8 %v2932
    %v2934 = vlaneseq
    %v2935 = vshrl.u32 %v2934, 7
    %v2936 = vsub.s32 %v2933, %v2935
    %v2937 = vrot.slane %v2923, %v2936
    %v2938 = vcombine.low %v1501, %v1615
    %v2939 = vcombine.high %v1501, %v1615
    %v2941 = vunpack.c.l.s4 1983009808
    %v2942 = vunpack.c.0.s8 %v2941
    %v2943 = vlaneseq
    %v2944 = vshrl.u32 %v2943, 7
    %v2945 = vsub.s32 %v2942, %v2944
    %v2946 = vrot.slane %v2938, %v2945
    %v2948 = vunpack.c.l.s4 1983009808
    %v2949 = vunpack.c.0.s8 %v2948
    %v2950 = vlaneseq
    %v2951 = vshrl.u32 %v2950, 7
    %v2952 = vsub.s32 %v2949, %v2951
    %v2953 = vrot.slane %v2939, %v2952
    %v2954 = vcombine.low %v2898, %v2914
    %v2955 = vcombine.high %v2898, %v2914
    %v2957 = vunpack.c.l.s4 1934713408
    %v2958 = vunpack.c.0.s8 %v2957
    %v2959 = vlaneseq
    %v2960 = vshrl.u32 %v2959, 7
    %v2961 = vsub.s32 %v2958, %v2960
    %v2962 = vrot.slane %v2954, %v2961
    %v2964 = vunpack.c.l.s4 1934713408
    %v2965 = vunpack.c.0.s8 %v2964
    %v2966 = vlaneseq
    %v2967 = vshrl.u32 %v2966, 7
    %v2968 = vsub.s32 %v2965, %v2967
    %v2969 = vrot.slane %v2955, %v2968
    %v2970 = vcombine.low %v2905, %v2921
    %v2971 = vcombine.high %v2905, %v2921
    %v2973 = vunpack.c.l.s4 1934713408
    %v2974 = vunpack.c.0.s8 %v2973
    %v2975 = vlaneseq
    %v2976 = vshrl.u32 %v2975, 7
    %v2977 = vsub.s32 %v2974, %v2976
    %v2978 = vrot.slane %v2970, %v2977
    %v2980 = vunpack.c.l.s4 1934713408
    %v2981 = vunpack.c.0.s8 %v2980
    %v2982 = vlaneseq
    %v2983 = vshrl.u32 %v2982, 7
    %v2984 = vsub.s32 %v2981, %v2983
    %v2985 = vrot.slane %v2971, %v2984
    %v2986 = vcombine.low %v2930, %v2946
    %v2987 = vcombine.high %v2930, %v2946
    %v2989 = vunpack.c.l.s4 1934713408
    %v2990 = vunpack.c.0.s8 %v2989
    %v2991 = vlaneseq
    %v2992 = vshrl.u32 %v2991, 7
    %v2993 = vsub.s32 %v2990, %v2992
    %v2994 = vrot.slane %v2986, %v2993
    %v2996 = vunpack.c.l.s4 1934713408
    %v2997 = vunpack.c.0.s8 %v2996
    %v2998 = vlaneseq
    %v2999 = vshrl.u32 %v2998, 7
    %v3000 = vsub.s32 %v2997, %v2999
    %v3001 = vrot.slane %v2987, %v3000
    %v3002 = vcombine.low %v2937, %v2953
    %v3003 = vcombine.high %v2937, %v2953
    %v3005 = vunpack.c.l.s4 1934713408
    %v3006 = vunpack.c.0.s8 %v3005
    %v3007 = vlaneseq
    %v3008 = vshrl.u32 %v3007, 7
    %v3009 = vsub.s32 %v3006, %v3008
    %v3010 = vrot.slane %v3002, %v3009
    %v3012 = vunpack.c.l.s4 1934713408
    %v3013 = vunpack.c.0.s8 %v3012
    %v3014 = vlaneseq
    %v3015 = vshrl.u32 %v3014, 7
    %v3016 = vsub.s32 %v3013, %v3015
    %v3017 = vrot.slane %v3003, %v3016
    %v3018 = vcombine.low %v2962, %v2994
    %v3019 = vcombine.high %v2962, %v2994
    %v3020 = vcombine.low %v2969, %v3001
    %v3021 = vcombine.high %v2969, %v3001
    %v3022 = vcombine.low %v2978, %v3010
    %v3023 = vcombine.high %v2978, %v3010
    %v3024 = vcombine.low %v2985, %v3017
    %v3025 = vcombine.high %v2985, %v3017
    %v3026 = vcombine.low %v1672, %v1786
    %v3027 = vcombine.high %v1672, %v1786
    %v3029 = vunpack.c.l.s4 1983009808
    %v3030 = vunpack.c.0.s8 %v3029
    %v3031 = vlaneseq
    %v3032 = vshrl.u32 %v3031, 7
    %v3033 = vsub.s32 %v3030, %v3032
    %v3034 = vrot.slane %v3026, %v3033
    %v3036 = vunpack.c.l.s4 1983009808
    %v3037 = vunpack.c.0.s8 %v3036
    %v3038 = vlaneseq
    %v3039 = vshrl.u32 %v3038, 7
    %v3040 = vsub.s32 %v3037, %v3039
    %v3041 = vrot.slane %v3027, %v3040
    %v3042 = vcombine.low %v1729, %v1843
    %v3043 = vcombine.high %v1729, %v1843
    %v3045 = vunpack.c.l.s4 1983009808
    %v3046 = vunpack.c.0.s8 %v3045
    %v3047 = vlaneseq
    %v3048 = vshrl.u32 %v3047, 7
    %v3049 = vsub.s32 %v3046, %v3048
    %v3050 = vrot.slane %v3042, %v3049
    %v3052 = vunpack.c.l.s4 1983009808
    %v3053 = vunpack.c.0.s8 %v3052
    %v3054 = vlaneseq
    %v3055 = vshrl.u32 %v3054, 7
    %v3056 = vsub.s32 %v3053, %v3055
    %v3057 = vrot.slane %v3043, %v3056
    %v3058 = vcombine.low %v1900, %v2014
    %v3059 = vcombine.high %v1900, %v2014
    %v3061 = vunpack.c.l.s4 1983009808
    %v3062 = vunpack.c.0.s8 %v3061
    %v3063 = vlaneseq
    %v3064 = vshrl.u32 %v3063, 7
    %v3065 = vsub.s32 %v3062, %v3064
    %v3066 = vrot.slane %v3058, %v3065
    %v3068 = vunpack.c.l.s4 1983009808
    %v3069 = vunpack.c.0.s8 %v3068
    %v3070 = vlaneseq
    %v3071 = vshrl.u32 %v3070, 7
    %v3072 = vsub.s32 %v3069, %v3071
    %v3073 = vrot.slane %v3059, %v3072
    %v3074 = vcombine.low %v1957, %v2071
    %v3075 = vcombine.high %v1957, %v2071
    %v3077 = vunpack.c.l.s4 1983009808
    %v3078 = vunpack.c.0.s8 %v3077
    %v3079 = vlaneseq
    %v3080 = vshrl.u32 %v3079, 7
    %v3081 = vsub.s32 %v3078, %v3080
    %v3082 = vrot.slane %v3074, %v3081
    %v3084 = vunpack.c.l.s4 1983009808
    %v3085 = vunpack.c.0.s8 %v3084
    %v3086 = vlaneseq
    %v3087 = vshrl.u32 %v3086, 7
    %v3088 = vsub.s32 %v3085, %v3087
    %v3089 = vrot.slane %v3075, %v3088
    %v3090 = vcombine.low %v3034, %v3050
    %v3091 = vcombine.high %v3034, %v3050
    %v3093 = vunpack.c.l.s4 1934713408
    %v3094 = vunpack.c.0.s8 %v3093
    %v3095 = vlaneseq
    %v3096 = vshrl.u32 %v3095, 7
    %v3097 = vsub.s32 %v3094, %v3096
    %v3098 = vrot.slane %v3090, %v3097
    %v3100 = vunpack.c.l.s4 1934713408
    %v3101 = vunpack.c.0.s8 %v3100
    %v3102 = vlaneseq
    %v3103 = vshrl.u32 %v3102, 7
    %v3104 = vsub.s32 %v3101, %v3103
    %v3105 = vrot.slane %v3091, %v3104
    %v3106 = vcombine.low %v3041, %v3057
    %v3107 = vcombine.high %v3041, %v3057
    %v3109 = vunpack.c.l.s4 1934713408
    %v3110 = vunpack.c.0.s8 %v3109
    %v3111 = vlaneseq
    %v3112 = vshrl.u32 %v3111, 7
    %v3113 = vsub.s32 %v3110, %v3112
    %v3114 = vrot.slane %v3106, %v3113
    %v3116 = vunpack.c.l.s4 1934713408
    %v3117 = vunpack.c.0.s8 %v3116
    %v3118 = vlaneseq
    %v3119 = vshrl.u32 %v3118, 7
    %v3120 = vsub.s32 %v3117, %v3119
    %v3121 = vrot.slane %v3107, %v3120
    %v3122 = vcombine.low %v3066, %v3082
    %v3123 = vcombine.high %v3066, %v3082
    %v3125 = vunpack.c.l.s4 1934713408
    %v3126 = vunpack.c.0.s8 %v3125
    %v3127 = vlaneseq
    %v3128 = vshrl.u32 %v3127, 7
    %v3129 = vsub.s32 %v3126, %v3128
    %v3130 = vrot.slane %v3122, %v3129
    %v3132 = vunpack.c.l.s4 1934713408
    %v3133 = vunpack.c.0.s8 %v3132
    %v3134 = vlaneseq
    %v3135 = vshrl.u32 %v3134, 7
    %v3136 = vsub.s32 %v3133, %v3135
    %v3137 = vrot.slane %v3123, %v3136
    %v3138 = vcombine.low %v3073, %v3089
    %v3139 = vcombine.high %v3073, %v3089
    %v3141 = vunpack.c.l.s4 1934713408
    %v3142 = vunpack.c.0.s8 %v3141
    %v3143 = vlaneseq
    %v3144 = vshrl.u32 %v3143, 7
    %v3145 = vsub.s32 %v3142, %v3144
    %v3146 = vrot.slane %v3138, %v3145
    %v3148 = vunpack.c.l.s4 1934713408
    %v3149 = vunpack.c.0.s8 %v3148
    %v3150 = vlaneseq
    %v3151 = vshrl.u32 %v3150, 7
    %v3152 = vsub.s32 %v3149, %v3151
    %v3153 = vrot.slane %v3139, %v3152
    %v3154 = vcombine.low %v3098, %v3130
    %v3155 = vcombine.high %v3098, %v3130
    %v3156 = vcombine.low %v3105, %v3137
    %v3157 = vcombine.high %v3105, %v3137
    %v3158 = vcombine.low %v3114, %v3146
    %v3159 = vcombine.high %v3114, %v3146
    %v3160 = vcombine.low %v3121, %v3153
    %v3161 = vcombine.high %v3121, %v3153
    %3166 = vrot.lane.b32.xlu0 %v2203, 16
    %v3167 = vpop.permute.xlu0 %3166
    %3168 = vrot.lane.b32.xlu0 %v2339, 16
    %v3169 = vpop.permute.xlu0 %3168
    %3170 = vrot.lane.b32.xlu0 %v2475, 16
    %v3171 = vpop.permute.xlu0 %3170
    %3172 = vrot.lane.b32.xlu0 %v2611, 16
    %v3173 = vpop.permute.xlu0 %3172
    %3182 = vrot.lane.b32.xlu0 %v2204, 32
    %v3183 = vpop.permute.xlu0 %3182
    %3184 = vrot.lane.b32.xlu0 %v2340, 32
    %v3185 = vpop.permute.xlu0 %3184
    %3186 = vrot.lane.b32.xlu0 %v2476, 32
    %v3187 = vpop.permute.xlu0 %3186
    %3188 = vrot.lane.b32.xlu0 %v2612, 32
    %v3189 = vpop.permute.xlu0 %3188
    %3198 = vrot.lane.b32.xlu0 %v2205, 48
    %v3199 = vpop.permute.xlu0 %3198
    %3200 = vrot.lane.b32.xlu0 %v2341, 48
    %v3201 = vpop.permute.xlu0 %3200
    %3202 = vrot.lane.b32.xlu0 %v2477, 48
    %v3203 = vpop.permute.xlu0 %3202
    %3204 = vrot.lane.b32.xlu0 %v2613, 48
    %v3205 = vpop.permute.xlu0 %3204
    %3214 = vrot.lane.b32.xlu0 %v2206, 64
    %v3215 = vpop.permute.xlu0 %3214
    %3216 = vrot.lane.b32.xlu0 %v2342, 64
    %v3217 = vpop.permute.xlu0 %3216
    %3218 = vrot.lane.b32.xlu0 %v2478, 64
    %v3219 = vpop.permute.xlu0 %3218
    %3220 = vrot.lane.b32.xlu0 %v2614, 64
    %v3221 = vpop.permute.xlu0 %3220
    %3230 = vrot.lane.b32.xlu0 %v2207, 80
    %v3231 = vpop.permute.xlu0 %3230
    %3232 = vrot.lane.b32.xlu0 %v2343, 80
    %v3233 = vpop.permute.xlu0 %3232
    %3234 = vrot.lane.b32.xlu0 %v2479, 80
    %v3235 = vpop.permute.xlu0 %3234
    %3236 = vrot.lane.b32.xlu0 %v2615, 80
    %v3237 = vpop.permute.xlu0 %3236
    %3246 = vrot.lane.b32.xlu0 %v2208, 96
    %v3247 = vpop.permute.xlu0 %3246
    %3248 = vrot.lane.b32.xlu0 %v2344, 96
    %v3249 = vpop.permute.xlu0 %3248
    %3250 = vrot.lane.b32.xlu0 %v2480, 96
    %v3251 = vpop.permute.xlu0 %3250
    %3252 = vrot.lane.b32.xlu0 %v2616, 96
    %v3253 = vpop.permute.xlu0 %3252
    %3262 = vrot.lane.b32.xlu0 %v2209, 112
    %v3263 = vpop.permute.xlu0 %3262
    %3264 = vrot.lane.b32.xlu0 %v2345, 112
    %v3265 = vpop.permute.xlu0 %3264
    %3266 = vrot.lane.b32.xlu0 %v2481, 112
    %v3267 = vpop.permute.xlu0 %3266
    %3268 = vrot.lane.b32.xlu0 %v2617, 112
    %v3269 = vpop.permute.xlu0 %3268
    %3278 = vrot.lane.b32.xlu0 %v2747, 16
    %v3279 = vpop.permute.xlu0 %3278
    %3280 = vrot.lane.b32.xlu0 %v2883, 16
    %v3281 = vpop.permute.xlu0 %3280
    %3282 = vrot.lane.b32.xlu0 %v3019, 16
    %v3283 = vpop.permute.xlu0 %3282
    %3284 = vrot.lane.b32.xlu0 %v3155, 16
    %v3285 = vpop.permute.xlu0 %3284
    %3294 = vrot.lane.b32.xlu0 %v2748, 32
    %v3295 = vpop.permute.xlu0 %3294
    %3296 = vrot.lane.b32.xlu0 %v2884, 32
    %v3297 = vpop.permute.xlu0 %3296
    %3298 = vrot.lane.b32.xlu0 %v3020, 32
    %v3299 = vpop.permute.xlu0 %3298
    %3300 = vrot.lane.b32.xlu0 %v3156, 32
    %v3301 = vpop.permute.xlu0 %3300
    %3310 = vrot.lane.b32.xlu0 %v2749, 48
    %v3311 = vpop.permute.xlu0 %3310
    %3312 = vrot.lane.b32.xlu0 %v2885, 48
    %v3313 = vpop.permute.xlu0 %3312
    %3314 = vrot.lane.b32.xlu0 %v3021, 48
    %v3315 = vpop.permute.xlu0 %3314
    %3316 = vrot.lane.b32.xlu0 %v3157, 48
    %v3317 = vpop.permute.xlu0 %3316
    %3326 = vrot.lane.b32.xlu0 %v2750, 64
    %v3327 = vpop.permute.xlu0 %3326
    %3328 = vrot.lane.b32.xlu0 %v2886, 64
    %v3329 = vpop.permute.xlu0 %3328
    %3330 = vrot.lane.b32.xlu0 %v3022, 64
    %v3331 = vpop.permute.xlu0 %3330
    %3332 = vrot.lane.b32.xlu0 %v3158, 64
    %v3333 = vpop.permute.xlu0 %3332
    %3342 = vrot.lane.b32.xlu0 %v2751, 80
    %v3343 = vpop.permute.xlu0 %3342
    %3344 = vrot.lane.b32.xlu0 %v2887, 80
    %v3345 = vpop.permute.xlu0 %3344
    %3346 = vrot.lane.b32.xlu0 %v3023, 80
    %v3347 = vpop.permute.xlu0 %3346
    %3348 = vrot.lane.b32.xlu0 %v3159, 80
    %v3349 = vpop.permute.xlu0 %3348
    %3358 = vrot.lane.b32.xlu0 %v2752, 96
    %v3359 = vpop.permute.xlu0 %3358
    %3360 = vrot.lane.b32.xlu0 %v2888, 96
    %v3361 = vpop.permute.xlu0 %3360
    %3362 = vrot.lane.b32.xlu0 %v3024, 96
    %v3363 = vpop.permute.xlu0 %3362
    %3364 = vrot.lane.b32.xlu0 %v3160, 96
    %v3365 = vpop.permute.xlu0 %3364
    %3374 = vrot.lane.b32.xlu0 %v2753, 112
    %v3375 = vpop.permute.xlu0 %3374
    %3376 = vrot.lane.b32.xlu0 %v2889, 112
    %v3377 = vpop.permute.xlu0 %3376
    %3378 = vrot.lane.b32.xlu0 %v3025, 112
    %v3379 = vpop.permute.xlu0 %3378
    %3380 = vrot.lane.b32.xlu0 %v3161, 112
    %v3381 = vpop.permute.xlu0 %3380
    %v3386 = vsel %vm259, %v2202, %v3167
    %v3387 = vsel %vm259, %v2338, %v3169
    %v3388 = vsel %vm259, %v2474, %v3171
    %v3389 = vsel %vm259, %v2610, %v3173
    %vm3390 = vcmask 261120
    %v3391 = vsel %vm3390, %v3386, %v3183
    %v3392 = vsel %vm3390, %v3387, %v3185
    %v3393 = vsel %vm3390, %v3388, %v3187
    %v3394 = vsel %vm3390, %v3389, %v3189
    %vm3395 = vcmask 392192
    %v3396 = vsel %vm3395, %v3391, %v3199
    %v3397 = vsel %vm3395, %v3392, %v3201
    %v3398 = vsel %vm3395, %v3393, %v3203
    %v3399 = vsel %vm3395, %v3394, %v3205
    %vm3400 = vcmask 523264
    %v3401 = vsel %vm3400, %v3396, %v3215
    %v3402 = vsel %vm3400, %v3397, %v3217
    %v3403 = vsel %vm3400, %v3398, %v3219
    %v3404 = vsel %vm3400, %v3399, %v3221
    %vm3405 = vcmask 654336
    %v3406 = vsel %vm3405, %v3401, %v3231
    %v3407 = vsel %vm3405, %v3402, %v3233
    %v3408 = vsel %vm3405, %v3403, %v3235
    %v3409 = vsel %vm3405, %v3404, %v3237
    %vm3410 = vcmask 785408
    %v3411 = vsel %vm3410, %v3406, %v3247
    %v3412 = vsel %vm3410, %v3407, %v3249
    %v3413 = vsel %vm3410, %v3408, %v3251
    %v3414 = vsel %vm3410, %v3409, %v3253
    %vm3415 = vcmask 916480
    %v3416 = vsel %vm3415, %v3411, %v3263
    %v3417 = vsel %vm3415, %v3412, %v3265
    %v3418 = vsel %vm3415, %v3413, %v3267
    %v3419 = vsel %vm3415, %v3414, %v3269
    %v3420 = vsel %vm259, %v2746, %v3279
    %v3421 = vsel %vm259, %v2882, %v3281
    %v3422 = vsel %vm259, %v3018, %v3283
    %v3423 = vsel %vm259, %v3154, %v3285
    %v3424 = vsel %vm3390, %v3420, %v3295
    %v3425 = vsel %vm3390, %v3421, %v3297
    %v3426 = vsel %vm3390, %v3422, %v3299
    %v3427 = vsel %vm3390, %v3423, %v3301
    %v3428 = vsel %vm3395, %v3424, %v3311
    %v3429 = vsel %vm3395, %v3425, %v3313
    %v3430 = vsel %vm3395, %v3426, %v3315
    %v3431 = vsel %vm3395, %v3427, %v3317
    %v3432 = vsel %vm3400, %v3428, %v3327
    %v3433 = vsel %vm3400, %v3429, %v3329
    %v3434 = vsel %vm3400, %v3430, %v3331
    %v3435 = vsel %vm3400, %v3431, %v3333
    %v3436 = vsel %vm3405, %v3432, %v3343
    %v3437 = vsel %vm3405, %v3433, %v3345
    %v3438 = vsel %vm3405, %v3434, %v3347
    %v3439 = vsel %vm3405, %v3435, %v3349
    %v3440 = vsel %vm3410, %v3436, %v3359
    %v3441 = vsel %vm3410, %v3437, %v3361
    %v3442 = vsel %vm3410, %v3438, %v3363
    %v3443 = vsel %vm3410, %v3439, %v3365
    %v3444 = vsel %vm3415, %v3440, %v3375
    %v3445 = vsel %vm3415, %v3441, %v3377
    %v3446 = vsel %vm3415, %v3442, %v3379
    %v3447 = vsel %vm3415, %v3443, %v3381
    %v3448 = vadd.f32 %v3416, %v3417
    %v3449 = vadd.f32 %v3448, %v3418
    %v3450 = vadd.f32 %v3449, %v3419
    %v3451 = vrot.slane %v3450, 4
    %v3452 = vadd.f32 %v3450, %v3451
    %v3453 = vrot.slane %v3452, 2
    %v3454 = vadd.f32 %v3452, %v3453
    %v3455 = vrot.slane %v3454, 1
    %v3456 = vadd.f32 %v3454, %v3455
    %v3457 = vadd.f32 %v3444, %v3445
    %v3458 = vadd.f32 %v3457, %v3446
    %v3459 = vadd.f32 %v3458, %v3447
    %v3460 = vrot.slane %v3459, 4
    %v3461 = vadd.f32 %v3459, %v3460
    %v3462 = vrot.slane %v3461, 2
    %v3463 = vadd.f32 %v3461, %v3462
    %v3464 = vrot.slane %v3463, 1
    %v3465 = vadd.f32 %v3463, %v3464
    %v3466 = vrcp.pop 32.0
    %v3467 = vmul.f32 %v3456, %v3466
    %v3468 = vmul.f32 %v3465, %v3466
    %v3469 = vsub.f32 %v3416, %v3467
    %v3470 = vsub.f32 %v3444, %v3468
    %v3471 = vsub.f32 %v3417, %v3467
    %v3472 = vsub.f32 %v3445, %v3468
    %v3473 = vsub.f32 %v3418, %v3467
    %v3474 = vsub.f32 %v3446, %v3468
    %v3475 = vsub.f32 %v3419, %v3467
    %v3476 = vsub.f32 %v3447, %v3468
    %v3477 = vmul.f32 %v3469, %v3469
    %v3478 = vmul.f32 %v3470, %v3470
    %v3479 = vmul.f32 %v3471, %v3471
    %v3480 = vmul.f32 %v3472, %v3472
    %v3481 = vmul.f32 %v3473, %v3473
    %v3482 = vmul.f32 %v3474, %v3474
    %v3483 = vmul.f32 %v3475, %v3475
    %v3484 = vmul.f32 %v3476, %v3476
    %v3485 = vadd.f32 %v3477, %v3479
    %v3486 = vadd.f32 %v3485, %v3481
    %v3487 = vadd.f32 %v3486, %v3483
    %v3488 = vrot.slane %v3487, 4
    %v3489 = vadd.f32 %v3487, %v3488
    %v3490 = vrot.slane %v3489, 2
    %v3491 = vadd.f32 %v3489, %v3490
    %v3492 = vrot.slane %v3491, 1
    %v3493 = vadd.f32 %v3491, %v3492
    %v3494 = vadd.f32 %v3478, %v3480
    %v3495 = vadd.f32 %v3494, %v3482
    %v3496 = vadd.f32 %v3495, %v3484
    %v3497 = vrot.slane %v3496, 4
    %v3498 = vadd.f32 %v3496, %v3497
    %v3499 = vrot.slane %v3498, 2
    %v3500 = vadd.f32 %v3498, %v3499
    %v3501 = vrot.slane %v3500, 1
    %v3502 = vadd.f32 %v3500, %v3501
    %v3503 = vmul.f32 %v3493, %v3466
    %v3504 = vmul.f32 %v3502, %v3466
    %v3505 = vadd.f32 %v3503, 1e-05
    %v3506 = vadd.f32 %v3504, 1e-05
    %v3507 = vrsqrt.pop %v3505
    %v3508 = vrsqrt.pop %v3506
    %v3509 = vmul.f32 %v3469, %v3507
    %v3510 = vmul.f32 %v3470, %v3508
    %v3511 = vmul.f32 %v3471, %v3507
    %v3512 = vmul.f32 %v3472, %v3508
    %v3513 = vmul.f32 %v3473, %v3507
    %v3514 = vmul.f32 %v3474, %v3508
    %v3515 = vmul.f32 %v3475, %v3507
    %v3516 = vmul.f32 %v3476, %v3508
    %v3517 = vld [vmem:[#allocation8] sm:$0xff]
    %v3518 = vld [vmem:[#allocation8 + $0x8] sm:$0xff]
    %v3519 = vld [vmem:[#allocation8 + $0x10] sm:$0xff]
    %v3520 = vld [vmem:[#allocation8 + $0x18] sm:$0xff]
    %3522 = vset.pattern.permute.xlu0 0
    %3523 = vperm.xlu0 %3522, %v3517
    %v3524 = vpop.permute.xlu0 %3523
    %3527 = vset.pattern.permute.xlu0 0
    %3528 = vperm.xlu0 %3527, %v3518
    %v3529 = vpop.permute.xlu0 %3528
    %3532 = vset.pattern.permute.xlu0 0
    %3533 = vperm.xlu0 %3532, %v3519
    %v3534 = vpop.permute.xlu0 %3533
    %3537 = vset.pattern.permute.xlu0 0
    %3538 = vperm.xlu0 %3537, %v3520
    %v3539 = vpop.permute.xlu0 %3538
    %v3541 = vmul.f32 %v3509, %v3524
    %v3542 = vmul.f32 %v3510, %v3524
    %v3543 = vmul.f32 %v3511, %v3529
    %v3544 = vmul.f32 %v3512, %v3529
    %v3545 = vmul.f32 %v3513, %v3534
    %v3546 = vmul.f32 %v3514, %v3534
    %v3547 = vmul.f32 %v3515, %v3539
    %v3548 = vmul.f32 %v3516, %v3539
    %v3549 = vld [vmem:[#allocation10] sm:$0xff]
    %v3550 = vld [vmem:[#allocation10 + $0x8] sm:$0xff]
    %v3551 = vld [vmem:[#allocation10 + $0x10] sm:$0xff]
    %v3552 = vld [vmem:[#allocation10 + $0x18] sm:$0xff]
    %3554 = vset.pattern.permute.xlu0 0
    %3555 = vperm.xlu0 %3554, %v3549
    %v3556 = vpop.permute.xlu0 %3555
    %3559 = vset.pattern.permute.xlu0 0
    %3560 = vperm.xlu0 %3559, %v3550
    %v3561 = vpop.permute.xlu0 %3560
    %3564 = vset.pattern.permute.xlu0 0
    %3565 = vperm.xlu0 %3564, %v3551
    %v3566 = vpop.permute.xlu0 %3565
    %3569 = vset.pattern.permute.xlu0 0
    %3570 = vperm.xlu0 %3569, %v3552
    %v3571 = vpop.permute.xlu0 %3570
    %v3573 = vadd.f32 %v3541, %v3556
    %v3574 = vadd.f32 %v3542, %v3556
    %v3575 = vadd.f32 %v3543, %v3561
    %v3576 = vadd.f32 %v3544, %v3561
    %v3577 = vadd.f32 %v3545, %v3566
    %v3578 = vadd.f32 %v3546, %v3566
    %v3579 = vadd.f32 %v3547, %v3571
    %v3580 = vadd.f32 %v3548, %v3571
    %v3581 = vpack.c.bf16 %v3575, %v3573
    %v3582 = vpack.c.bf16 %v3576, %v3574
    %v3583 = vpack.c.bf16 %v3579, %v3577
    %v3584 = vpack.c.bf16 %v3580, %v3578
    %v3585 = vld [vmem:[#allocation11] sm:$0xf]
    %v3586 = vld [vmem:[#allocation11 + $0x4] sm:$0xf]
    %v3587 = vld [vmem:[#allocation11 + $0x8] sm:$0xf]
    %v3588 = vld [vmem:[#allocation11 + $0xc] sm:$0xf]
    %v3589 = vld [vmem:[#allocation13] sm:$0x1]
    %v3591 = vlaneseq
    %v3592 = vshrl.u32 %v3591, 7
    %v3593 = vsub.s32 0, %v3592
    %v3594 = vrot.slane %v3589, %v3593
    %3596 = vxpose.xlu0.c.b16.start [1/8] %v3581, 128
    %3597 = vxpose.xlu0.c.b16.cont [2/8] %v3583, 128
    %3598 = vxpose.xlu0.c.b16.cont [3/8] 0, 128
    %3599 = vxpose.xlu0.c.b16.cont [4/8] 0, 128
    %3600 = vxpose.xlu0.c.b16.cont [5/8] 0, 128
    %3601 = vxpose.xlu0.c.b16.cont [6/8] 0, 128
    %3602 = vxpose.xlu0.c.b16.cont [7/8] 0, 128
    %3603 = vxpose.xlu0.c.b16.end [8/8] 0, 128
    %v3604 = vpop.trf.xlu0
    %v3605 = vpop.trf.xlu0
    %v3606 = vpop.trf.xlu0
    %v3607 = vpop.trf.xlu0
    %v3608 = vpop.trf.xlu0
    %v3609 = vpop.trf.xlu0
    %v3610 = vpop.trf.xlu0
    %v3611 = vpop.trf.xlu0
    %3612 = vxpose.xlu0.c.b16.start [1/8] %v3582, 128
    %3613 = vxpose.xlu0.c.b16.cont [2/8] %v3584, 128
    %3614 = vxpose.xlu0.c.b16.cont [3/8] 0, 128
    %3615 = vxpose.xlu0.c.b16.cont [4/8] 0, 128
    %3616 = vxpose.xlu0.c.b16.cont [5/8] 0, 128
    %3617 = vxpose.xlu0.c.b16.cont [6/8] 0, 128
    %3618 = vxpose.xlu0.c.b16.cont [7/8] 0, 128
    %3619 = vxpose.xlu0.c.b16.end [8/8] 0, 128
    %v3620 = vpop.trf.xlu0
    %v3621 = vpop.trf.xlu0
    %v3622 = vpop.trf.xlu0
    %v3623 = vpop.trf.xlu0
    %v3624 = vpop.trf.xlu0
    %v3625 = vpop.trf.xlu0
    %v3626 = vpop.trf.xlu0
    %v3627 = vpop.trf.xlu0
    %v3632 = vunpack.c.l.b16 %v3585
    %v3633 = vunpack.c.l.b16 %v3586
    %v3634 = vunpack.c.l.b16 %v3587
    %v3635 = vunpack.c.l.b16 %v3588
    %v3636 = vpack.c.b16 %v3633, %v3632
    %v3637 = vpack.c.b16 %v3635, %v3634
    %v3641 = vsel %vm3390, %v3604, 0
    %v3644 = vsel %vm3390, %v3605, 0
    %v3647 = vsel %vm3390, %v3606, 0
    %v3650 = vsel %vm3390, %v3607, 0
    %v3653 = vsel %vm3390, %v3608, 0
    %v3656 = vsel %vm3390, %v3609, 0
    %v3659 = vsel %vm3390, %v3610, 0
    %v3662 = vsel %vm3390, %v3611, 0
    %v3665 = vsel %vm3390, %v3620, 0
    %v3668 = vsel %vm3390, %v3621, 0
    %v3671 = vsel %vm3390, %v3622, 0
    %v3674 = vsel %vm3390, %v3623, 0
    %v3677 = vsel %vm3390, %v3624, 0
    %v3680 = vsel %vm3390, %v3625, 0
    %v3683 = vsel %vm3390, %v3626, 0
    %v3686 = vsel %vm3390, %v3627, 0
    %3688 = vmatprep.subr.bf16.mxu0 0
    %3689 = vmatpush1.bf16.msra.mxu0 %v3636
    %3690 = vmatprep.subr.bf16.mxu0 0
    %3691 = vmatpush1.bf16.msra.mxu0 %v3637
    %3692 = vmatprep.subr.bf16.mxu0 0
    %3693 = vmatpush1.bf16.msra.mxu0 0
    %3694 = vmatprep.subr.bf16.mxu0 0
    %3695 = vmatpush1.bf16.msra.mxu0 0
    %3696 = vmatprep.subr.bf16.mxu0 0
    %3697 = vmatpush1.bf16.msra.mxu0 0
    %3698 = vmatprep.subr.bf16.mxu0 0
    %3699 = vmatpush1.bf16.msra.mxu0 0
    %3700 = vmatprep.subr.bf16.mxu0 0
    %3701 = vmatpush1.bf16.msra.mxu0 0
    %3702 = vmatprep.subr.bf16.mxu0 0
    %3703 = vmatpush1.bf16.msra.mxu0 0
    %3704 = vmatprep.subr.bf16.mxu0 0
    %3705 = vmatpush1.bf16.msra.mxu0 0
    %3706 = vmatprep.subr.bf16.mxu0 0
    %3707 = vmatpush1.bf16.msra.mxu0 0
    %3708 = vmatprep.subr.bf16.mxu0 0
    %3709 = vmatpush1.bf16.msra.mxu0 0
    %3710 = vmatprep.subr.bf16.mxu0 0
    %3711 = vmatpush1.bf16.msra.mxu0 0
    %3712 = vmatprep.subr.bf16.mxu0 0
    %3713 = vmatpush1.bf16.msra.mxu0 0
    %3714 = vmatprep.subr.bf16.mxu0 0
    %3715 = vmatpush1.bf16.msra.mxu0 0
    %3716 = vmatprep.subr.bf16.mxu0 0
    %3717 = vmatpush1.bf16.msra.mxu0 0
    %3718 = vmatprep.subr.bf16.mxu0 0
    %3719 = vmatpush1.bf16.msra.mxu0 0
    %3720 = vmatprep.mubr.bf16.mxu0 0
    %3721 = vmatmul.mubr.bf16.gmra.mrb[0].mxu0 %v3641
    %v3722 = vpop.f32.mrb[0].mxu0
    %v3723 = vadd.f32 %v3594, %v3722
    %v3724 = vpop.f32.mrb[0].mxu0
    %v3725 = vpop.f32.mrb[0].mxu0
    %v3726 = vadd.f32 %v3594, %v3725
    %v3727 = vpop.f32.mrb[0].mxu0
    %3728 = vmatprep.mubr.bf16.mxu0 0
    %3729 = vmatmul.mubr.bf16.gmra.mrb[0].mxu0 %v3644
    %v3730 = vpop.f32.mrb[0].mxu0
    %v3731 = vadd.f32 %v3594, %v3730
    %v3732 = vpop.f32.mrb[0].mxu0
    %v3733 = vpop.f32.mrb[0].mxu0
    %v3734 = vadd.f32 %v3594, %v3733
    %v3735 = vpop.f32.mrb[0].mxu0
    %3736 = vmatprep.mubr.bf16.mxu0 0
    %3737 = vmatmul.mubr.bf16.gmra.mrb[0].mxu0 %v3647
    %v3738 = vpop.f32.mrb[0].mxu0
    %v3739 = vadd.f32 %v3594, %v3738
    %v3740 = vpop.f32.mrb[0].mxu0
    %v3741 = vpop.f32.mrb[0].mxu0
    %v3742 = vadd.f32 %v3594, %v3741
    %v3743 = vpop.f32.mrb[0].mxu0
    %3744 = vmatprep.mubr.bf16.mxu0 0
    %3745 = vmatmul.mubr.bf16.gmra.mrb[0].mxu0 %v3650
    %v3746 = vpop.f32.mrb[0].mxu0
    %v3747 = vadd.f32 %v3594, %v3746
    %v3748 = vpop.f32.mrb[0].mxu0
    %v3749 = vpop.f32.mrb[0].mxu0
    %v3750 = vadd.f32 %v3594, %v3749
    %v3751 = vpop.f32.mrb[0].mxu0
    %3752 = vmatprep.mubr.bf16.mxu0 0
    %3753 = vmatmul.mubr.bf16.gmra.mrb[0].mxu0 %v3653
    %v3754 = vpop.f32.mrb[0].mxu0
    %v3755 = vadd.f32 %v3594, %v3754
    %v3756 = vpop.f32.mrb[0].mxu0
    %v3757 = vpop.f32.mrb[0].mxu0
    %v3758 = vadd.f32 %v3594, %v3757
    %v3759 = vpop.f32.mrb[0].mxu0
    %3760 = vmatprep.mubr.bf16.mxu0 0
    %3761 = vmatmul.mubr.bf16.gmra.mrb[0].mxu0 %v3656
    %v3762 = vpop.f32.mrb[0].mxu0
    %v3763 = vadd.f32 %v3594, %v3762
    %v3764 = vpop.f32.mrb[0].mxu0
    %v3765 = vpop.f32.mrb[0].mxu0
    %v3766 = vadd.f32 %v3594, %v3765
    %v3767 = vpop.f32.mrb[0].mxu0
    %3768 = vmatprep.mubr.bf16.mxu0 0
    %3769 = vmatmul.mubr.bf16.gmra.mrb[0].mxu0 %v3659
    %v3770 = vpop.f32.mrb[0].mxu0
    %v3771 = vadd.f32 %v3594, %v3770
    %v3772 = vpop.f32.mrb[0].mxu0
    %v3773 = vpop.f32.mrb[0].mxu0
    %v3774 = vadd.f32 %v3594, %v3773
    %v3775 = vpop.f32.mrb[0].mxu0
    %3776 = vmatprep.mubr.bf16.mxu0 0
    %3777 = vmatmul.mubr.bf16.gmra.mrb[0].mxu0 %v3662
    %v3778 = vpop.f32.mrb[0].mxu0
    %v3779 = vadd.f32 %v3594, %v3778
    %v3780 = vpop.f32.mrb[0].mxu0
    %v3781 = vpop.f32.mrb[0].mxu0
    %v3782 = vadd.f32 %v3594, %v3781
    %v3783 = vpop.f32.mrb[0].mxu0
    %3784 = vmatprep.mubr.bf16.mxu0 0
    %3785 = vmatmul.mubr.bf16.gmra.mrb[0].mxu0 %v3665
    %v3786 = vpop.f32.mrb[0].mxu0
    %v3787 = vadd.f32 %v3594, %v3786
    %v3788 = vpop.f32.mrb[0].mxu0
    %v3789 = vpop.f32.mrb[0].mxu0
    %v3790 = vadd.f32 %v3594, %v3789
    %v3791 = vpop.f32.mrb[0].mxu0
    %3792 = vmatprep.mubr.bf16.mxu0 0
    %3793 = vmatmul.mubr.bf16.gmra.mrb[0].mxu0 %v3668
    %v3794 = vpop.f32.mrb[0].mxu0
    %v3795 = vadd.f32 %v3594, %v3794
    %v3796 = vpop.f32.mrb[0].mxu0
    %v3797 = vpop.f32.mrb[0].mxu0
    %v3798 = vadd.f32 %v3594, %v3797
    %v3799 = vpop.f32.mrb[0].mxu0
    %3800 = vmatprep.mubr.bf16.mxu0 0
    %3801 = vmatmul.mubr.bf16.gmra.mrb[0].mxu0 %v3671
    %v3802 = vpop.f32.mrb[0].mxu0
    %v3803 = vadd.f32 %v3594, %v3802
    %v3804 = vpop.f32.mrb[0].mxu0
    %v3805 = vpop.f32.mrb[0].mxu0
    %v3806 = vadd.f32 %v3594, %v3805
    %v3807 = vpop.f32.mrb[0].mxu0
    %3808 = vmatprep.mubr.bf16.mxu0 0
    %3809 = vmatmul.mubr.bf16.gmra.mrb[0].mxu0 %v3674
    %v3810 = vpop.f32.mrb[0].mxu0
    %v3811 = vadd.f32 %v3594, %v3810
    %v3812 = vpop.f32.mrb[0].mxu0
    %v3813 = vpop.f32.mrb[0].mxu0
    %v3814 = vadd.f32 %v3594, %v3813
    %v3815 = vpop.f32.mrb[0].mxu0
    %3816 = vmatprep.mubr.bf16.mxu0 0
    %3817 = vmatmul.mubr.bf16.gmra.mrb[0].mxu0 %v3677
    %v3818 = vpop.f32.mrb[0].mxu0
    %v3819 = vadd.f32 %v3594, %v3818
    %v3820 = vpop.f32.mrb[0].mxu0
    %v3821 = vpop.f32.mrb[0].mxu0
    %v3822 = vadd.f32 %v3594, %v3821
    %v3823 = vpop.f32.mrb[0].mxu0
    %3824 = vmatprep.mubr.bf16.mxu0 0
    %3825 = vmatmul.mubr.bf16.gmra.mrb[0].mxu0 %v3680
    %v3826 = vpop.f32.mrb[0].mxu0
    %v3827 = vadd.f32 %v3594, %v3826
    %v3828 = vpop.f32.mrb[0].mxu0
    %v3829 = vpop.f32.mrb[0].mxu0
    %v3830 = vadd.f32 %v3594, %v3829
    %v3831 = vpop.f32.mrb[0].mxu0
    %3832 = vmatprep.mubr.bf16.mxu0 0
    %3833 = vmatmul.mubr.bf16.gmra.mrb[0].mxu0 %v3683
    %v3834 = vpop.f32.mrb[0].mxu0
    %v3835 = vadd.f32 %v3594, %v3834
    %v3836 = vpop.f32.mrb[0].mxu0
    %v3837 = vpop.f32.mrb[0].mxu0
    %v3838 = vadd.f32 %v3594, %v3837
    %v3839 = vpop.f32.mrb[0].mxu0
    %3840 = vmatprep.mubr.bf16.mxu0 0
    %3841 = vmatmul.mubr.bf16.gmra.mrb[0].mxu0 %v3686
    %v3842 = vpop.f32.mrb[0].mxu0
    %v3843 = vadd.f32 %v3594, %v3842
    %v3844 = vpop.f32.mrb[0].mxu0
    %v3845 = vpop.f32.mrb[0].mxu0
    %v3846 = vadd.f32 %v3594, %v3845
    %v3847 = vpop.f32.mrb[0].mxu0
    %3848 = vdwg.mxu0
    %v3849 = vld [vmem:[#allocation7] sm:$0xf]
    %v3850 = vld [vmem:[#allocation7 + $0x4] sm:$0xf]
    %v3851 = vld [vmem:[#allocation7 + $0x8] sm:$0xf]
    %v3852 = vld [vmem:[#allocation7 + $0xc] sm:$0xf]
    %v3853 = vld [vmem:[#allocation7 + $0x10] sm:$0xf]
    %v3854 = vld [vmem:[#allocation7 + $0x14] sm:$0xf]
    %v3855 = vld [vmem:[#allocation7 + $0x18] sm:$0xf]
    %v3856 = vld [vmem:[#allocation7 + $0x1c] sm:$0xf]
    %v3857 = vld [vmem:[#allocation7 + $0x20] sm:$0xf]
    %v3858 = vld [vmem:[#allocation7 + $0x24] sm:$0xf]
    %v3859 = vld [vmem:[#allocation7 + $0x28] sm:$0xf]
    %v3860 = vld [vmem:[#allocation7 + $0x2c] sm:$0xf]
    %v3861 = vld [vmem:[#allocation7 + $0x30] sm:$0xf]
    %v3862 = vld [vmem:[#allocation7 + $0x34] sm:$0xf]
    %v3863 = vld [vmem:[#allocation7 + $0x38] sm:$0xf]
    %v3864 = vld [vmem:[#allocation7 + $0x3c] sm:$0xf]
    %v3865 = vld [vmem:[#allocation7 + $0x40] sm:$0xf]
    %v3866 = vld [vmem:[#allocation7 + $0x44] sm:$0xf]
    %v3867 = vld [vmem:[#allocation7 + $0x48] sm:$0xf]
    %v3868 = vld [vmem:[#allocation7 + $0x4c] sm:$0xf]
    %v3869 = vld [vmem:[#allocation7 + $0x50] sm:$0xf]
    %v3870 = vld [vmem:[#allocation7 + $0x54] sm:$0xf]
    %v3871 = vld [vmem:[#allocation7 + $0x58] sm:$0xf]
    %v3872 = vld [vmem:[#allocation7 + $0x5c] sm:$0xf]
    %v3873 = vld [vmem:[#allocation7 + $0x60] sm:$0xf]
    %v3874 = vld [vmem:[#allocation7 + $0x64] sm:$0xf]
    %v3875 = vld [vmem:[#allocation7 + $0x68] sm:$0xf]
    %v3876 = vld [vmem:[#allocation7 + $0x6c] sm:$0xf]
    %v3877 = vld [vmem:[#allocation7 + $0x70] sm:$0xf]
    %v3878 = vld [vmem:[#allocation7 + $0x74] sm:$0xf]
    %v3879 = vld [vmem:[#allocation7 + $0x78] sm:$0xf]
    %v3880 = vld [vmem:[#allocation7 + $0x7c] sm:$0xf]
    %v3881 = vunpack.c.l.bf16 %v3849
    %v3882 = vunpack.c.l.bf16 %v3850
    %v3883 = vunpack.c.l.bf16 %v3851
    %v3884 = vunpack.c.l.bf16 %v3852
    %v3885 = vunpack.c.l.bf16 %v3853
    %v3886 = vunpack.c.l.bf16 %v3854
    %v3887 = vunpack.c.l.bf16 %v3855
    %v3888 = vunpack.c.l.bf16 %v3856
    %v3889 = vunpack.c.l.bf16 %v3857
    %v3890 = vunpack.c.l.bf16 %v3858
    %v3891 = vunpack.c.l.bf16 %v3859
    %v3892 = vunpack.c.l.bf16 %v3860
    %v3893 = vunpack.c.l.bf16 %v3861
    %v3894 = vunpack.c.l.bf16 %v3862
    %v3895 = vunpack.c.l.bf16 %v3863
    %v3896 = vunpack.c.l.bf16 %v3864
    %v3897 = vunpack.c.l.bf16 %v3865
    %v3898 = vunpack.c.l.bf16 %v3866
    %v3899 = vunpack.c.l.bf16 %v3867
    %v3900 = vunpack.c.l.bf16 %v3868
    %v3901 = vunpack.c.l.bf16 %v3869
    %v3902 = vunpack.c.l.bf16 %v3870
    %v3903 = vunpack.c.l.bf16 %v3871
    %v3904 = vunpack.c.l.bf16 %v3872
    %v3905 = vunpack.c.l.bf16 %v3873
    %v3906 = vunpack.c.l.bf16 %v3874
    %v3907 = vunpack.c.l.bf16 %v3875
    %v3908 = vunpack.c.l.bf16 %v3876
    %v3909 = vunpack.c.l.bf16 %v3877
    %v3910 = vunpack.c.l.bf16 %v3878
    %v3911 = vunpack.c.l.bf16 %v3879
    %v3912 = vunpack.c.l.bf16 %v3880
    %v3913 = vmul.f32 %v3723, %v3881
    %v3914 = vmul.f32 %v3726, %v3882
    %v3915 = vmul.f32 %v3731, %v3883
    %v3916 = vmul.f32 %v3734, %v3884
    %v3917 = vmul.f32 %v3739, %v3885
    %v3918 = vmul.f32 %v3742, %v3886
    %v3919 = vmul.f32 %v3747, %v3887
    %v3920 = vmul.f32 %v3750, %v3888
    %v3921 = vmul.f32 %v3755, %v3889
    %v3922 = vmul.f32 %v3758, %v3890
    %v3923 = vmul.f32 %v3763, %v3891
    %v3924 = vmul.f32 %v3766, %v3892
    %v3925 = vmul.f32 %v3771, %v3893
    %v3926 = vmul.f32 %v3774, %v3894
    %v3927 = vmul.f32 %v3779, %v3895
    %v3928 = vmul.f32 %v3782, %v3896
    %v3929 = vmul.f32 %v3787, %v3897
    %v3930 = vmul.f32 %v3790, %v3898
    %v3931 = vmul.f32 %v3795, %v3899
    %v3932 = vmul.f32 %v3798, %v3900
    %v3933 = vmul.f32 %v3803, %v3901
    %v3934 = vmul.f32 %v3806, %v3902
    %v3935 = vmul.f32 %v3811, %v3903
    %v3936 = vmul.f32 %v3814, %v3904
    %v3937 = vmul.f32 %v3819, %v3905
    %v3938 = vmul.f32 %v3822, %v3906
    %v3939 = vmul.f32 %v3827, %v3907
    %v3940 = vmul.f32 %v3830, %v3908
    %v3941 = vmul.f32 %v3835, %v3909
    %v3942 = vmul.f32 %v3838, %v3910
    %v3943 = vmul.f32 %v3843, %v3911
    %v3944 = vmul.f32 %v3846, %v3912
    %3945 = vst.msk [vmem:[#allocation14] sm:$0xff] %vm3390, %v3913
    %3946 = vst.msk [vmem:[#allocation14 + $0x8] sm:$0xff] %vm3390, %v3914
    %3947 = vst.msk [vmem:[#allocation14 + $0x10] sm:$0xff] %vm3390, %v3915
    %3948 = vst.msk [vmem:[#allocation14 + $0x18] sm:$0xff] %vm3390, %v3916
    %3949 = vst.msk [vmem:[#allocation14 + $0x20] sm:$0xff] %vm3390, %v3917
    %3950 = vst.msk [vmem:[#allocation14 + $0x28] sm:$0xff] %vm3390, %v3918
    %3951 = vst.msk [vmem:[#allocation14 + $0x30] sm:$0xff] %vm3390, %v3919
    %3952 = vst.msk [vmem:[#allocation14 + $0x38] sm:$0xff] %vm3390, %v3920
    %3953 = vst.msk [vmem:[#allocation14 + $0x40] sm:$0xff] %vm3390, %v3921
    %3954 = vst.msk [vmem:[#allocation14 + $0x48] sm:$0xff] %vm3390, %v3922
    %3955 = vst.msk [vmem:[#allocation14 + $0x50] sm:$0xff] %vm3390, %v3923
    %3956 = vst.msk [vmem:[#allocation14 + $0x58] sm:$0xff] %vm3390, %v3924
    %3957 = vst.msk [vmem:[#allocation14 + $0x60] sm:$0xff] %vm3390, %v3925
    %3958 = vst.msk [vmem:[#allocation14 + $0x68] sm:$0xff] %vm3390, %v3926
    %3959 = vst.msk [vmem:[#allocation14 + $0x70] sm:$0xff] %vm3390, %v3927
    %3960 = vst.msk [vmem:[#allocation14 + $0x78] sm:$0xff] %vm3390, %v3928
    %3961 = vst.msk [vmem:[#allocation14 + $0x80] sm:$0xff] %vm3390, %v3929
    %3962 = vst.msk [vmem:[#allocation14 + $0x88] sm:$0xff] %vm3390, %v3930
    %3963 = vst.msk [vmem:[#allocation14 + $0x90] sm:$0xff] %vm3390, %v3931
    %3964 = vst.msk [vmem:[#allocation14 + $0x98] sm:$0xff] %vm3390, %v3932
    %3965 = vst.msk [vmem:[#allocation14 + $0xa0] sm:$0xff] %vm3390, %v3933
    %3966 = vst.msk [vmem:[#allocation14 + $0xa8] sm:$0xff] %vm3390, %v3934
    %3967 = vst.msk [vmem:[#allocation14 + $0xb0] sm:$0xff] %vm3390, %v3935
    %3968 = vst.msk [vmem:[#allocation14 + $0xb8] sm:$0xff] %vm3390, %v3936
    %3969 = vst.msk [vmem:[#allocation14 + $0xc0] sm:$0xff] %vm3390, %v3937
    %3970 = vst.msk [vmem:[#allocation14 + $0xc8] sm:$0xff] %vm3390, %v3938
    %3971 = vst.msk [vmem:[#allocation14 + $0xd0] sm:$0xff] %vm3390, %v3939
    %3972 = vst.msk [vmem:[#allocation14 + $0xd8] sm:$0xff] %vm3390, %v3940
    %3973 = vst.msk [vmem:[#allocation14 + $0xe0] sm:$0xff] %vm3390, %v3941
    %3974 = vst.msk [vmem:[#allocation14 + $0xe8] sm:$0xff] %vm3390, %v3942
    %3975 = vst.msk [vmem:[#allocation14 + $0xf0] sm:$0xff] %vm3390, %v3943
    %3976 = vst.msk [vmem:[#allocation14 + $0xf8] sm:$0xff] %vm3390, %v3944
    // Predicated region
    $region58: #{triangle_multiplication.3} parent=1 // pred_check
      _
    $region59: #{triangle_multiplication.3} parent=1 // pred_check_branch
      %3978 = sbr.rel (0) target = $region61
    $region60: #{triangle_multiplication.3} parent=1 // pred_region
      %s3980 = ssub.s32 4096, 4096
      %3981 = vsyncadd [#allocation4], %s3980
      %s3982 = sshll.u32 [#allocation14], 4
      %s3983 = int_to_ptr.vmem [resolvable:$true] %s3982
      %3988 = dma.vmem_to_hbm [thread:$0]  %s3983, 4096, %s7, [#allocation4], 128, 128, 8
    $region61: #{triangle_multiplication.3} parent=1 // pred_fallthru
      _
    // Predicated region
    $region62: #{triangle_multiplication.3} parent=1 // pred_check
      _
    $region63: #{triangle_multiplication.3} parent=1 // pred_check_branch
      %3990 = sbr.rel (0) target = $region65
    $region64: #{triangle_multiplication.3} parent=1 // pred_region
      %3991 = dma.done [#allocation4], 4096
    $region65: #{triangle_multiplication.3} parent=1 // pred_fallthru
      _
    %3992 = vsyncpa [#allocation3], 1
    %3993 = vsyncpa [#allocation6], 1
    %3994 = vsyncpa [#allocation9], 1
    %3995 = vsyncpa [#allocation12], 1
    %3996 = vsyncpa [#allocation4], 1

</llo_original>
